<compile_context>
chip_gen: v7x
topology: tpu7x:2x2x1
jax: 0.10.0
libtpu: 0.0.40
codegen_flags: <defaults>
</compile_context>

<pallas_src>
import functools

import jax
import jax.numpy as jnp
from jax import lax
from jax.experimental import pallas as pl
from jax.experimental.pallas import tpu as pltpu


def _mbconv_kernel(x_ref, w1_ref, w2_ref, w3_ref, b1_ref, b2_ref, b3_ref,
                   o_ref, pad_ref, *, B, H, W, P):
    # x_ref  : (B*H*W, Cin)  f32   -- unpadded, flattened pixels of B images
    # o_ref  : (B*H*W, Cout) f32   -- Cout == Cin (downsample=None config)
    # pad_ref: (B*Np + 2*M, P) bf16 staging, Np=(H+2)*(W+2), M=W+3 halo margin
    HW = H * W
    Wp = W + 2
    Np = (H + 2) * Wp
    M = Wp + 1
    NT = B * Np

    # ---- stage 1: 1x1 conv (BN scale folded into w1) + bias + ReLU ---------
    xb = x_ref[...].astype(jnp.bfloat16)                           # (B*HW, Cin)
    h1 = jnp.dot(xb, w1_ref[...], preferred_element_type=jnp.float32)
    h1 = jnp.maximum(h1 + b1_ref[...], 0.0).astype(jnp.bfloat16)   # (B*HW, P)

    # ---- zero-pad h1 into the flat bf16 staging buffer ---------------------
    # Zero margins + padding ring every step; the real rows below overwrite
    # the interior.  (Do NOT hoist behind program_id==0: scratch is per-core.)
    pad_ref[...] = jnp.zeros_like(pad_ref)
    for b in range(B):
        for r in range(H):
            src = b * HW + r * W
            dst = M + b * Np + (r + 1) * Wp + 1
            pad_ref[dst:dst + W, :] = h1[src:src + W, :]

    # ---- stage 2: 3x3 conv (BN folded) via flat shifted-slice taps ----------
    w2 = w2_ref[...]                                                # (9P, P) bf16
    if P % 128 == 0:
        # Lane-dense channels: concat taps -> ONE K=9P MXU matmul.
        taps = []
        for ky in range(3):
            for kx in range(3):
                s = M + (ky - 1) * Wp + (kx - 1)
                taps.append(pad_ref[s:s + NT, :])
        col = jnp.concatenate(taps, axis=-1)                        # (NT, 9P)
        acc = jnp.dot(col, w2, preferred_element_type=jnp.float32)
    else:
        # Small P: 9 accumulating matmuls straight off the bf16 staging
        # buffer; no (NT, 9P) col materialisation (MXU cycles are free here).
        acc = None
        for ky in range(3):
            for kx in range(3):
                s = M + (ky - 1) * Wp + (kx - 1)
                k = 3 * ky + kx
                d = jnp.dot(pad_ref[s:s + NT, :], w2[k * P:(k + 1) * P, :],
                            preferred_element_type=jnp.float32)
                acc = d if acc is None else acc + d                 # (NT, P)

    # ---- gather real-pixel rows back to a compact (B*HW, P) slab ------------
    rows = []
    for b in range(B):
        for r in range(H):
            s = b * Np + (r + 1) * Wp + 1
            rows.append(acc[s:s + W, :])
    h2 = jnp.concatenate(rows, axis=0)                              # (B*HW, P)
    h2 = jnp.maximum(h2 + b2_ref[...], 0.0).astype(jnp.bfloat16)

    # ---- stage 3: 1x1 conv + bias, residual add, final ReLU -----------------
    h3 = jnp.dot(h2, w3_ref[...], preferred_element_type=jnp.float32)
    h3 = h3 + b3_ref[...]                                           # (B*HW, Cout)
    # Residual re-read from the VMEM-resident input block; single lane-dense
    # unmasked full-block store.
    o_ref[...] = jnp.maximum(h3 + x_ref[...], 0.0)


def mbconv_block(x, w1, w2, w3, s1, b1, s2, b2, s3, b3, *, images_per_step=None):
    """x: (N, H, W, Cin) float32 NHWC. Returns (N, H, W, 4*planes) float32."""
    N, H, W, Cin = x.shape
    P = w1.shape[1]
    Cout = 4 * P
    assert Cin == Cout, "downsample=None requires inplanes == planes * 4"

    HW = H * W
    Wp = W + 2
    Np = (H + 2) * Wp
    M = Wp + 1

    if images_per_step is None:
        images_per_step = 2 if N % 2 == 0 else 1
    B = images_per_step
    assert N % B == 0, "batch must be divisible by images_per_step"

    # Fold eval-mode BN scales into the conv weights; bf16 matmul operands.
    w1f = (w1 * s1).astype(jnp.bfloat16)                            # (Cin, P)
    w2f = (w2 * s2[0]).reshape(9 * P, P).astype(jnp.bfloat16)       # (9P, P)
    w3f = (w3 * s3).astype(jnp.bfloat16)                            # (P, Cout)

    # Free metadata reshape (no pad, no copy): lane-dense (pixels, channels).
    x2d = x.reshape(N * HW, Cin)

    kernel = functools.partial(_mbconv_kernel, B=B, H=H, W=W, P=P)

    grid_spec = pltpu.PrefetchScalarGridSpec(
        num_scalar_prefetch=0,
        grid=(N // B,),
        in_specs=[
            pl.BlockSpec((B * HW, Cin), lambda i: (i, 0)),          # x (unpadded)
            pl.BlockSpec((Cin, P), lambda i: (0, 0)),               # w1 (BN folded)
            pl.BlockSpec((9 * P, P), lambda i: (0, 0)),             # w2 (im2col)
            pl.BlockSpec((P, Cout), lambda i: (0, 0)),              # w3 (BN folded)
            pl.BlockSpec((1, P), lambda i: (0, 0)),                 # b1
            pl.BlockSpec((1, P), lambda i: (0, 0)),                 # b2
            pl.BlockSpec((1, Cout), lambda i: (0, 0)),              # b3
        ],
        out_specs=pl.BlockSpec((B * HW, Cout), lambda i: (i, 0)),
        scratch_shapes=[pltpu.VMEM((B * Np + 2 * M, P), jnp.bfloat16)],
    )

    out2d = pl.pallas_call(
        kernel,
        out_shape=jax.ShapeDtypeStruct((N * HW, Cout), jnp.float32),
        grid_spec=grid_spec,
        compiler_params=pltpu.CompilerParams(
            dimension_semantics=("parallel",),
            vmem_limit_bytes=32 * 1024 * 1024),
    )(x2d, w1f, w2f, w3f, b1, b2, b3)

    return out2d.reshape(N, H, W, Cout)


def fold_bn(gamma, beta, mean, var, eps=1e-5):
    scale = gamma / jnp.sqrt(var + eps)
    bias = beta - mean * scale
    return scale[None, :], bias[None, :]


def reference_mbconv(x, w1, w2, w3, s1, b1, s2, b2, s3, b3):
    """Pure-JAX NHWC reference with the same BN folding and the same bf16
    rounding points as the kernel (f32 accumulation everywhere)."""
    dn = ("NHWC", "HWIO", "NHWC")
    w1f = (w1 * s1).astype(jnp.bfloat16)
    w2f = (w2 * s2[0]).astype(jnp.bfloat16)
    w3f = (w3 * s3).astype(jnp.bfloat16)

    h = lax.conv_general_dilated(x.astype(jnp.bfloat16), w1f[None, None],
                                 (1, 1), "VALID", dimension_numbers=dn,
                                 preferred_element_type=jnp.float32)
    h = jax.nn.relu(h + b1[0])
    h = lax.conv_general_dilated(h.astype(jnp.bfloat16), w2f, (1, 1),
                                 [(1, 1), (1, 1)], dimension_numbers=dn,
                                 preferred_element_type=jnp.float32)
    h = jax.nn.relu(h + b2[0])
    h = lax.conv_general_dilated(h.astype(jnp.bfloat16), w3f[None, None],
                                 (1, 1), "VALID", dimension_numbers=dn,
                                 preferred_element_type=jnp.float32)
    h = h + b3[0]
    return jax.nn.relu(h + x)


if __name__ == "__main__":
    planes = 32                  # -> inplanes = Cout = 128 (lane-dense channels)
    inplanes = planes * 4        # residual path requires inplanes == planes * 4
    N, H, W = 4, 16, 16

    key = jax.random.PRNGKey(0)
    ks = jax.random.split(key, 16)

    x = jax.random.normal(ks[0], (N, H, W, inplanes), jnp.float32)

    # conv weights in NHWC-friendly layout:
    #   w1[Cin, P] (torch (P,Cin,1,1)), w2[ky,kx,cin,cout] (torch (P,P,3,3)),
    #   w3[P, 4P] (torch (4P,P,1,1))
    w1 = 0.1 * jax.random.normal(ks[1], (inplanes, planes), jnp.float32)
    w2 = 0.1 * jax.random.normal(ks[2], (3, 3, planes, planes), jnp.float32)
    w3 = 0.1 * jax.random.normal(ks[3], (planes, 4 * planes), jnp.float32)

    # Eval-mode BatchNorm running stats, folded to per-channel scale/bias.
    def bn_params(kg, kb, km, kv, c):
        gamma = 1.0 + 0.1 * jax.random.normal(kg, (c,), jnp.float32)
        beta = 0.1 * jax.random.normal(kb, (c,), jnp.float32)
        mean = 0.1 * jax.random.normal(km, (c,), jnp.float32)
        var = jax.nn.softplus(jax.random.normal(kv, (c,), jnp.float32)) + 0.5
        return fold_bn(gamma, beta, mean, var)

    s1, b1 = bn_params(ks[4], ks[5], ks[6], ks[7], planes)
    s2, b2 = bn_params(ks[8], ks[9], ks[10], ks[11], planes)
    s3, b3 = bn_params(ks[12], ks[13], ks[14], ks[15], 4 * planes)

    out = mbconv_block(x, w1, w2, w3, s1, b1, s2, b2, s3, b3)
    out = jax.block_until_ready(out)

    ref = reference_mbconv(x, w1, w2, w3, s1, b1, s2, b2, s3, b3)
    assert out.shape == (N, H, W, 4 * planes)
    # Both paths round matmul operands to bf16 at the same points and
    # accumulate in f32, so only accumulation-order noise remains.
    assert jnp.allclose(out, ref, rtol=1e-2, atol=1e-2), "mismatch vs reference"

    print("KERNEL_OK")
</pallas_src>

<mosaic_0001>
module attributes {stable_mosaic.version = 11 : i64} {
  func.func @_mbconv_kernel(%arg0: i32, %arg1: memref<512x128xf32, #tpu.memory_space<vmem>>, %arg2: memref<128x32xbf16, #tpu.memory_space<vmem>>, %arg3: memref<288x32xbf16, #tpu.memory_space<vmem>>, %arg4: memref<32x128xbf16, #tpu.memory_space<vmem>>, %arg5: memref<1x32xf32, #tpu.memory_space<vmem>>, %arg6: memref<1x32xf32, #tpu.memory_space<vmem>>, %arg7: memref<1x128xf32, #tpu.memory_space<vmem>>, %arg8: memref<512x128xf32, #tpu.memory_space<vmem>>, %arg9: memref<686x32xbf16, #tpu.memory_space<vmem>>) attributes {dimension_semantics = [#tpu.dimension_semantics<parallel>], iteration_bounds = array<i64: 2>, scalar_prefetch = 0 : i64, scratch_operands = 1 : i64, tpu.core_type = #tpu.core_type<tc>, window_params = [{transform_indices = @transform_0, window_bounds = array<i64: 512, 128>}, {pipeline_mode = #tpu.pipeline_mode<synchronous>, transform_indices = @transform_1, window_bounds = array<i64: 128, 32>}, {pipeline_mode = #tpu.pipeline_mode<synchronous>, transform_indices = @transform_2, window_bounds = array<i64: 288, 32>}, {pipeline_mode = #tpu.pipeline_mode<synchronous>, transform_indices = @transform_3, window_bounds = array<i64: 32, 128>}, {pipeline_mode = #tpu.pipeline_mode<synchronous>, transform_indices = @transform_4, window_bounds = array<i64: 1, 32>}, {pipeline_mode = #tpu.pipeline_mode<synchronous>, transform_indices = @transform_5, window_bounds = array<i64: 1, 32>}, {pipeline_mode = #tpu.pipeline_mode<synchronous>, transform_indices = @transform_6, window_bounds = array<i64: 1, 128>}, {transform_indices = @transform_7, window_bounds = array<i64: 512, 128>}]} {
    %c0 = arith.constant 0 : index
    %c0_0 = arith.constant 0 : index
    %0 = vector.load %arg1[%c0, %c0_0] : memref<512x128xf32, #tpu.memory_space<vmem>>, vector<512x128xf32>
    %1 = arith.truncf %0 : vector<512x128xf32> to vector<512x128xbf16>
    %c0_1 = arith.constant 0 : index
    %c0_2 = arith.constant 0 : index
    %2 = vector.load %arg2[%c0_1, %c0_2] : memref<128x32xbf16, #tpu.memory_space<vmem>>, vector<128x32xbf16>
    %cst = arith.constant dense<0.000000e+00> : vector<512x32xf32>
    %3 = tpu.matmul %1, %2, %cst {dimension_numbers = #tpu.dot_dimension_numbers<[1], [0], [0], [1], [0, 0, 1, 1], [], []>} : vector<512x128xbf16>, vector<128x32xbf16>, vector<512x32xf32> -> vector<512x32xf32>
    %c0_3 = arith.constant 0 : index
    %c0_4 = arith.constant 0 : index
    %4 = vector.load %arg5[%c0_3, %c0_4] : memref<1x32xf32, #tpu.memory_space<vmem>>, vector<1x32xf32>
    %5 = vector.broadcast %4 : vector<1x32xf32> to vector<512x32xf32>
    %6 = arith.addf %3, %5 : vector<512x32xf32>
    %cst_5 = arith.constant 0.000000e+00 : f32
    %7 = vector.broadcast %cst_5 : f32 to vector<512x32xf32>
    %8 = arith.maximumf %6, %7 : vector<512x32xf32>
    %9 = arith.truncf %8 : vector<512x32xf32> to vector<512x32xbf16>
    %cst_6 = arith.constant 0.000000e+00 : bf16
    %10 = vector.broadcast %cst_6 : bf16 to vector<686x32xbf16>
    %c0_7 = arith.constant 0 : index
    %c0_8 = arith.constant 0 : index
    %11 = vector.load %arg9[%c0_7, %c0_8] : memref<686x32xbf16, #tpu.memory_space<vmem>>, vector<686x32xbf16>
    tpu.vector_store %arg9[%c0_7, %c0_8], %10 {strides = array<i32>} : memref<686x32xbf16, #tpu.memory_space<vmem>>, vector<686x32xbf16>,
    %12 = vector.extract_strided_slice %9 {offsets = [0, 0], sizes = [16, 32], strides = [1, 1]} : vector<512x32xbf16> to vector<16x32xbf16>
    %c38 = arith.constant 38 : index
    %c0_9 = arith.constant 0 : index
    %13 = vector.load %arg9[%c38, %c0_9] : memref<686x32xbf16, #tpu.memory_space<vmem>>, vector<16x32xbf16>
    tpu.vector_store %arg9[%c38, %c0_9], %12 {strides = array<i32>} : memref<686x32xbf16, #tpu.memory_space<vmem>>, vector<16x32xbf16>,
    %14 = vector.extract_strided_slice %9 {offsets = [16, 0], sizes = [16, 32], strides = [1, 1]} : vector<512x32xbf16> to vector<16x32xbf16>
    %c56 = arith.constant 56 : index
    %c0_10 = arith.constant 0 : index
    %15 = vector.load %arg9[%c56, %c0_10] : memref<686x32xbf16, #tpu.memory_space<vmem>>, vector<16x32xbf16>
    tpu.vector_store %arg9[%c56, %c0_10], %14 {strides = array<i32>} : memref<686x32xbf16, #tpu.memory_space<vmem>>, vector<16x32xbf16>,
    %16 = vector.extract_strided_slice %9 {offsets = [32, 0], sizes = [16, 32], strides = [1, 1]} : vector<512x32xbf16> to vector<16x32xbf16>
    %c74 = arith.constant 74 : index
    %c0_11 = arith.constant 0 : index
    %17 = vector.load %arg9[%c74, %c0_11] : memref<686x32xbf16, #tpu.memory_space<vmem>>, vector<16x32xbf16>
    tpu.vector_store %arg9[%c74, %c0_11], %16 {strides = array<i32>} : memref<686x32xbf16, #tpu.memory_space<vmem>>, vector<16x32xbf16>,
    %18 = vector.extract_strided_slice %9 {offsets = [48, 0], sizes = [16, 32], strides = [1, 1]} : vector<512x32xbf16> to vector<16x32xbf16>
    %c92 = arith.constant 92 : index
    %c0_12 = arith.constant 0 : index
    %19 = vector.load %arg9[%c92, %c0_12] : memref<686x32xbf16, #tpu.memory_space<vmem>>, vector<16x32xbf16>
    tpu.vector_store %arg9[%c92, %c0_12], %18 {strides = array<i32>} : memref<686x32xbf16, #tpu.memory_space<vmem>>, vector<16x32xbf16>,
    %20 = vector.extract_strided_slice %9 {offsets = [64, 0], sizes = [16, 32], strides = [1, 1]} : vector<512x32xbf16> to vector<16x32xbf16>
    %c110 = arith.constant 110 : index
    %c0_13 = arith.constant 0 : index
    %21 = vector.load %arg9[%c110, %c0_13] : memref<686x32xbf16, #tpu.memory_space<vmem>>, vector<16x32xbf16>
    tpu.vector_store %arg9[%c110, %c0_13], %20 {strides = array<i32>} : memref<686x32xbf16, #tpu.memory_space<vmem>>, vector<16x32xbf16>,
    %22 = vector.extract_strided_slice %9 {offsets = [80, 0], sizes = [16, 32], strides = [1, 1]} : vector<512x32xbf16> to vector<16x32xbf16>
    %c128 = arith.constant 128 : index
    %c0_14 = arith.constant 0 : index
    %23 = vector.load %arg9[%c128, %c0_14] : memref<686x32xbf16, #tpu.memory_space<vmem>>, vector<16x32xbf16>
    tpu.vector_store %arg9[%c128, %c0_14], %22 {strides = array<i32>} : memref<686x32xbf16, #tpu.memory_space<vmem>>, vector<16x32xbf16>,
    %24 = vector.extract_strided_slice %9 {offsets = [96, 0], sizes = [16, 32], strides = [1, 1]} : vector<512x32xbf16> to vector<16x32xbf16>
    %c146 = arith.constant 146 : index
    %c0_15 = arith.constant 0 : index
    %25 = vector.load %arg9[%c146, %c0_15] : memref<686x32xbf16, #tpu.memory_space<vmem>>, vector<16x32xbf16>
    tpu.vector_store %arg9[%c146, %c0_15], %24 {strides = array<i32>} : memref<686x32xbf16, #tpu.memory_space<vmem>>, vector<16x32xbf16>,
    %26 = vector.extract_strided_slice %9 {offsets = [112, 0], sizes = [16, 32], strides = [1, 1]} : vector<512x32xbf16> to vector<16x32xbf16>
    %c164 = arith.constant 164 : index
    %c0_16 = arith.constant 0 : index
    %27 = vector.load %arg9[%c164, %c0_16] : memref<686x32xbf16, #tpu.memory_space<vmem>>, vector<16x32xbf16>
    tpu.vector_store %arg9[%c164, %c0_16], %26 {strides = array<i32>} : memref<686x32xbf16, #tpu.memory_space<vmem>>, vector<16x32xbf16>,
    %28 = vector.extract_strided_slice %9 {offsets = [128, 0], sizes = [16, 32], strides = [1, 1]} : vector<512x32xbf16> to vector<16x32xbf16>
    %c182 = arith.constant 182 : index
    %c0_17 = arith.constant 0 : index
    %29 = vector.load %arg9[%c182, %c0_17] : memref<686x32xbf16, #tpu.memory_space<vmem>>, vector<16x32xbf16>
    tpu.vector_store %arg9[%c182, %c0_17], %28 {strides = array<i32>} : memref<686x32xbf16, #tpu.memory_space<vmem>>, vector<16x32xbf16>,
    %30 = vector.extract_strided_slice %9 {offsets = [144, 0], sizes = [16, 32], strides = [1, 1]} : vector<512x32xbf16> to vector<16x32xbf16>
    %c200 = arith.constant 200 : index
    %c0_18 = arith.constant 0 : index
    %31 = vector.load %arg9[%c200, %c0_18] : memref<686x32xbf16, #tpu.memory_space<vmem>>, vector<16x32xbf16>
    tpu.vector_store %arg9[%c200, %c0_18], %30 {strides = array<i32>} : memref<686x32xbf16, #tpu.memory_space<vmem>>, vector<16x32xbf16>,
    %32 = vector.extract_strided_slice %9 {offsets = [160, 0], sizes = [16, 32], strides = [1, 1]} : vector<512x32xbf16> to vector<16x32xbf16>
    %c218 = arith.constant 218 : index
    %c0_19 = arith.constant 0 : index
    %33 = vector.load %arg9[%c218, %c0_19] : memref<686x32xbf16, #tpu.memory_space<vmem>>, vector<16x32xbf16>
    tpu.vector_store %arg9[%c218, %c0_19], %32 {strides = array<i32>} : memref<686x32xbf16, #tpu.memory_space<vmem>>, vector<16x32xbf16>,
    %34 = vector.extract_strided_slice %9 {offsets = [176, 0], sizes = [16, 32], strides = [1, 1]} : vector<512x32xbf16> to vector<16x32xbf16>
    %c236 = arith.constant 236 : index
    %c0_20 = arith.constant 0 : index
    %35 = vector.load %arg9[%c236, %c0_20] : memref<686x32xbf16, #tpu.memory_space<vmem>>, vector<16x32xbf16>
    tpu.vector_store %arg9[%c236, %c0_20], %34 {strides = array<i32>} : memref<686x32xbf16, #tpu.memory_space<vmem>>, vector<16x32xbf16>,
    %36 = vector.extract_strided_slice %9 {offsets = [192, 0], sizes = [16, 32], strides = [1, 1]} : vector<512x32xbf16> to vector<16x32xbf16>
    %c254 = arith.constant 254 : index
    %c0_21 = arith.constant 0 : index
    %37 = vector.load %arg9[%c254, %c0_21] : memref<686x32xbf16, #tpu.memory_space<vmem>>, vector<16x32xbf16>
    tpu.vector_store %arg9[%c254, %c0_21], %36 {strides = array<i32>} : memref<686x32xbf16, #tpu.memory_space<vmem>>, vector<16x32xbf16>,
    %38 = vector.extract_strided_slice %9 {offsets = [208, 0], sizes = [16, 32], strides = [1, 1]} : vector<512x32xbf16> to vector<16x32xbf16>
    %c272 = arith.constant 272 : index
    %c0_22 = arith.constant 0 : index
    %39 = vector.load %arg9[%c272, %c0_22] : memref<686x32xbf16, #tpu.memory_space<vmem>>, vector<16x32xbf16>
    tpu.vector_store %arg9[%c272, %c0_22], %38 {strides = array<i32>} : memref<686x32xbf16, #tpu.memory_space<vmem>>, vector<16x32xbf16>,
    %40 = vector.extract_strided_slice %9 {offsets = [224, 0], sizes = [16, 32], strides = [1, 1]} : vector<512x32xbf16> to vector<16x32xbf16>
    %c290 = arith.constant 290 : index
    %c0_23 = arith.constant 0 : index
    %41 = vector.load %arg9[%c290, %c0_23] : memref<686x32xbf16, #tpu.memory_space<vmem>>, vector<16x32xbf16>
    tpu.vector_store %arg9[%c290, %c0_23], %40 {strides = array<i32>} : memref<686x32xbf16, #tpu.memory_space<vmem>>, vector<16x32xbf16>,
    %42 = vector.extract_strided_slice %9 {offsets = [240, 0], sizes = [16, 32], strides = [1, 1]} : vector<512x32xbf16> to vector<16x32xbf16>
    %c308 = arith.constant 308 : index
    %c0_24 = arith.constant 0 : index
    %43 = vector.load %arg9[%c308, %c0_24] : memref<686x32xbf16, #tpu.memory_space<vmem>>, vector<16x32xbf16>
    tpu.vector_store %arg9[%c308, %c0_24], %42 {strides = array<i32>} : memref<686x32xbf16, #tpu.memory_space<vmem>>, vector<16x32xbf16>,
    %44 = vector.extract_strided_slice %9 {offsets = [256, 0], sizes = [16, 32], strides = [1, 1]} : vector<512x32xbf16> to vector<16x32xbf16>
    %c362 = arith.constant 362 : index
    %c0_25 = arith.constant 0 : index
    %45 = vector.load %arg9[%c362, %c0_25] : memref<686x32xbf16, #tpu.memory_space<vmem>>, vector<16x32xbf16>
    tpu.vector_store %arg9[%c362, %c0_25], %44 {strides = array<i32>} : memref<686x32xbf16, #tpu.memory_space<vmem>>, vector<16x32xbf16>,
    %46 = vector.extract_strided_slice %9 {offsets = [272, 0], sizes = [16, 32], strides = [1, 1]} : vector<512x32xbf16> to vector<16x32xbf16>
    %c380 = arith.constant 380 : index
    %c0_26 = arith.constant 0 : index
    %47 = vector.load %arg9[%c380, %c0_26] : memref<686x32xbf16, #tpu.memory_space<vmem>>, vector<16x32xbf16>
    tpu.vector_store %arg9[%c380, %c0_26], %46 {strides = array<i32>} : memref<686x32xbf16, #tpu.memory_space<vmem>>, vector<16x32xbf16>,
    %48 = vector.extract_strided_slice %9 {offsets = [288, 0], sizes = [16, 32], strides = [1, 1]} : vector<512x32xbf16> to vector<16x32xbf16>
    %c398 = arith.constant 398 : index
    %c0_27 = arith.constant 0 : index
    %49 = vector.load %arg9[%c398, %c0_27] : memref<686x32xbf16, #tpu.memory_space<vmem>>, vector<16x32xbf16>
    tpu.vector_store %arg9[%c398, %c0_27], %48 {strides = array<i32>} : memref<686x32xbf16, #tpu.memory_space<vmem>>, vector<16x32xbf16>,
    %50 = vector.extract_strided_slice %9 {offsets = [304, 0], sizes = [16, 32], strides = [1, 1]} : vector<512x32xbf16> to vector<16x32xbf16>
    %c416 = arith.constant 416 : index
    %c0_28 = arith.constant 0 : index
    %51 = vector.load %arg9[%c416, %c0_28] : memref<686x32xbf16, #tpu.memory_space<vmem>>, vector<16x32xbf16>
    tpu.vector_store %arg9[%c416, %c0_28], %50 {strides = array<i32>} : memref<686x32xbf16, #tpu.memory_space<vmem>>, vector<16x32xbf16>,
    %52 = vector.extract_strided_slice %9 {offsets = [320, 0], sizes = [16, 32], strides = [1, 1]} : vector<512x32xbf16> to vector<16x32xbf16>
    %c434 = arith.constant 434 : index
    %c0_29 = arith.constant 0 : index
    %53 = vector.load %arg9[%c434, %c0_29] : memref<686x32xbf16, #tpu.memory_space<vmem>>, vector<16x32xbf16>
    tpu.vector_store %arg9[%c434, %c0_29], %52 {strides = array<i32>} : memref<686x32xbf16, #tpu.memory_space<vmem>>, vector<16x32xbf16>,
    %54 = vector.extract_strided_slice %9 {offsets = [336, 0], sizes = [16, 32], strides = [1, 1]} : vector<512x32xbf16> to vector<16x32xbf16>
    %c452 = arith.constant 452 : index
    %c0_30 = arith.constant 0 : index
    %55 = vector.load %arg9[%c452, %c0_30] : memref<686x32xbf16, #tpu.memory_space<vmem>>, vector<16x32xbf16>
    tpu.vector_store %arg9[%c452, %c0_30], %54 {strides = array<i32>} : memref<686x32xbf16, #tpu.memory_space<vmem>>, vector<16x32xbf16>,
    %56 = vector.extract_strided_slice %9 {offsets = [352, 0], sizes = [16, 32], strides = [1, 1]} : vector<512x32xbf16> to vector<16x32xbf16>
    %c470 = arith.constant 470 : index
    %c0_31 = arith.constant 0 : index
    %57 = vector.load %arg9[%c470, %c0_31] : memref<686x32xbf16, #tpu.memory_space<vmem>>, vector<16x32xbf16>
    tpu.vector_store %arg9[%c470, %c0_31], %56 {strides = array<i32>} : memref<686x32xbf16, #tpu.memory_space<vmem>>, vector<16x32xbf16>,
    %58 = vector.extract_strided_slice %9 {offsets = [368, 0], sizes = [16, 32], strides = [1, 1]} : vector<512x32xbf16> to vector<16x32xbf16>
    %c488 = arith.constant 488 : index
    %c0_32 = arith.constant 0 : index
    %59 = vector.load %arg9[%c488, %c0_32] : memref<686x32xbf16, #tpu.memory_space<vmem>>, vector<16x32xbf16>
    tpu.vector_store %arg9[%c488, %c0_32], %58 {strides = array<i32>} : memref<686x32xbf16, #tpu.memory_space<vmem>>, vector<16x32xbf16>,
    %60 = vector.extract_strided_slice %9 {offsets = [384, 0], sizes = [16, 32], strides = [1, 1]} : vector<512x32xbf16> to vector<16x32xbf16>
    %c506 = arith.constant 506 : index
    %c0_33 = arith.constant 0 : index
    %61 = vector.load %arg9[%c506, %c0_33] : memref<686x32xbf16, #tpu.memory_space<vmem>>, vector<16x32xbf16>
    tpu.vector_store %arg9[%c506, %c0_33], %60 {strides = array<i32>} : memref<686x32xbf16, #tpu.memory_space<vmem>>, vector<16x32xbf16>,
    %62 = vector.extract_strided_slice %9 {offsets = [400, 0], sizes = [16, 32], strides = [1, 1]} : vector<512x32xbf16> to vector<16x32xbf16>
    %c524 = arith.constant 524 : index
    %c0_34 = arith.constant 0 : index
    %63 = vector.load %arg9[%c524, %c0_34] : memref<686x32xbf16, #tpu.memory_space<vmem>>, vector<16x32xbf16>
    tpu.vector_store %arg9[%c524, %c0_34], %62 {strides = array<i32>} : memref<686x32xbf16, #tpu.memory_space<vmem>>, vector<16x32xbf16>,
    %64 = vector.extract_strided_slice %9 {offsets = [416, 0], sizes = [16, 32], strides = [1, 1]} : vector<512x32xbf16> to vector<16x32xbf16>
    %c542 = arith.constant 542 : index
    %c0_35 = arith.constant 0 : index
    %65 = vector.load %arg9[%c542, %c0_35] : memref<686x32xbf16, #tpu.memory_space<vmem>>, vector<16x32xbf16>
    tpu.vector_store %arg9[%c542, %c0_35], %64 {strides = array<i32>} : memref<686x32xbf16, #tpu.memory_space<vmem>>, vector<16x32xbf16>,
    %66 = vector.extract_strided_slice %9 {offsets = [432, 0], sizes = [16, 32], strides = [1, 1]} : vector<512x32xbf16> to vector<16x32xbf16>
    %c560 = arith.constant 560 : index
    %c0_36 = arith.constant 0 : index
    %67 = vector.load %arg9[%c560, %c0_36] : memref<686x32xbf16, #tpu.memory_space<vmem>>, vector<16x32xbf16>
    tpu.vector_store %arg9[%c560, %c0_36], %66 {strides = array<i32>} : memref<686x32xbf16, #tpu.memory_space<vmem>>, vector<16x32xbf16>,
    %68 = vector.extract_strided_slice %9 {offsets = [448, 0], sizes = [16, 32], strides = [1, 1]} : vector<512x32xbf16> to vector<16x32xbf16>
    %c578 = arith.constant 578 : index
    %c0_37 = arith.constant 0 : index
    %69 = vector.load %arg9[%c578, %c0_37] : memref<686x32xbf16, #tpu.memory_space<vmem>>, vector<16x32xbf16>
    tpu.vector_store %arg9[%c578, %c0_37], %68 {strides = array<i32>} : memref<686x32xbf16, #tpu.memory_space<vmem>>, vector<16x32xbf16>,
    %70 = vector.extract_strided_slice %9 {offsets = [464, 0], sizes = [16, 32], strides = [1, 1]} : vector<512x32xbf16> to vector<16x32xbf16>
    %c596 = arith.constant 596 : index
    %c0_38 = arith.constant 0 : index
    %71 = vector.load %arg9[%c596, %c0_38] : memref<686x32xbf16, #tpu.memory_space<vmem>>, vector<16x32xbf16>
    tpu.vector_store %arg9[%c596, %c0_38], %70 {strides = array<i32>} : memref<686x32xbf16, #tpu.memory_space<vmem>>, vector<16x32xbf16>,
    %72 = vector.extract_strided_slice %9 {offsets = [480, 0], sizes = [16, 32], strides = [1, 1]} : vector<512x32xbf16> to vector<16x32xbf16>
    %c614 = arith.constant 614 : index
    %c0_39 = arith.constant 0 : index
    %73 = vector.load %arg9[%c614, %c0_39] : memref<686x32xbf16, #tpu.memory_space<vmem>>, vector<16x32xbf16>
    tpu.vector_store %arg9[%c614, %c0_39], %72 {strides = array<i32>} : memref<686x32xbf16, #tpu.memory_space<vmem>>, vector<16x32xbf16>,
    %74 = vector.extract_strided_slice %9 {offsets = [496, 0], sizes = [16, 32], strides = [1, 1]} : vector<512x32xbf16> to vector<16x32xbf16>
    %c632 = arith.constant 632 : index
    %c0_40 = arith.constant 0 : index
    %75 = vector.load %arg9[%c632, %c0_40] : memref<686x32xbf16, #tpu.memory_space<vmem>>, vector<16x32xbf16>
    tpu.vector_store %arg9[%c632, %c0_40], %74 {strides = array<i32>} : memref<686x32xbf16, #tpu.memory_space<vmem>>, vector<16x32xbf16>,
    %c0_41 = arith.constant 0 : index
    %c0_42 = arith.constant 0 : index
    %76 = vector.load %arg3[%c0_41, %c0_42] : memref<288x32xbf16, #tpu.memory_space<vmem>>, vector<288x32xbf16>
    %c0_43 = arith.constant 0 : index
    %c0_44 = arith.constant 0 : index
    %77 = vector.load %arg9[%c0_43, %c0_44] : memref<686x32xbf16, #tpu.memory_space<vmem>>, vector<648x32xbf16>
    %78 = vector.extract_strided_slice %76 {offsets = [0, 0], sizes = [32, 32], strides = [1, 1]} : vector<288x32xbf16> to vector<32x32xbf16>
    %cst_45 = arith.constant dense<0.000000e+00> : vector<648x32xf32>
    %79 = tpu.matmul %77, %78, %cst_45 {dimension_numbers = #tpu.dot_dimension_numbers<[1], [0], [0], [1], [0, 0, 1, 1], [], []>} : vector<648x32xbf16>, vector<32x32xbf16>, vector<648x32xf32> -> vector<648x32xf32>
    %c1 = arith.constant 1 : index
    %c0_46 = arith.constant 0 : index
    %80 = vector.load %arg9[%c1, %c0_46] : memref<686x32xbf16, #tpu.memory_space<vmem>>, vector<648x32xbf16>
    %81 = vector.extract_strided_slice %76 {offsets = [32, 0], sizes = [32, 32], strides = [1, 1]} : vector<288x32xbf16> to vector<32x32xbf16>
    %cst_47 = arith.constant dense<0.000000e+00> : vector<648x32xf32>
    %82 = tpu.matmul %80, %81, %cst_47 {dimension_numbers = #tpu.dot_dimension_numbers<[1], [0], [0], [1], [0, 0, 1, 1], [], []>} : vector<648x32xbf16>, vector<32x32xbf16>, vector<648x32xf32> -> vector<648x32xf32>
    %83 = arith.addf %79, %82 : vector<648x32xf32>
    %c2 = arith.constant 2 : index
    %c0_48 = arith.constant 0 : index
    %84 = vector.load %arg9[%c2, %c0_48] : memref<686x32xbf16, #tpu.memory_space<vmem>>, vector<648x32xbf16>
    %85 = vector.extract_strided_slice %76 {offsets = [64, 0], sizes = [32, 32], strides = [1, 1]} : vector<288x32xbf16> to vector<32x32xbf16>
    %cst_49 = arith.constant dense<0.000000e+00> : vector<648x32xf32>
    %86 = tpu.matmul %84, %85, %cst_49 {dimension_numbers = #tpu.dot_dimension_numbers<[1], [0], [0], [1], [0, 0, 1, 1], [], []>} : vector<648x32xbf16>, vector<32x32xbf16>, vector<648x32xf32> -> vector<648x32xf32>
    %87 = arith.addf %83, %86 : vector<648x32xf32>
    %c18 = arith.constant 18 : index
    %c0_50 = arith.constant 0 : index
    %88 = vector.load %arg9[%c18, %c0_50] : memref<686x32xbf16, #tpu.memory_space<vmem>>, vector<648x32xbf16>
    %89 = vector.extract_strided_slice %76 {offsets = [96, 0], sizes = [32, 32], strides = [1, 1]} : vector<288x32xbf16> to vector<32x32xbf16>
    %cst_51 = arith.constant dense<0.000000e+00> : vector<648x32xf32>
    %90 = tpu.matmul %88, %89, %cst_51 {dimension_numbers = #tpu.dot_dimension_numbers<[1], [0], [0], [1], [0, 0, 1, 1], [], []>} : vector<648x32xbf16>, vector<32x32xbf16>, vector<648x32xf32> -> vector<648x32xf32>
    %91 = arith.addf %87, %90 : vector<648x32xf32>
    %c19 = arith.constant 19 : index
    %c0_52 = arith.constant 0 : index
    %92 = vector.load %arg9[%c19, %c0_52] : memref<686x32xbf16, #tpu.memory_space<vmem>>, vector<648x32xbf16>
    %93 = vector.extract_strided_slice %76 {offsets = [128, 0], sizes = [32, 32], strides = [1, 1]} : vector<288x32xbf16> to vector<32x32xbf16>
    %cst_53 = arith.constant dense<0.000000e+00> : vector<648x32xf32>
    %94 = tpu.matmul %92, %93, %cst_53 {dimension_numbers = #tpu.dot_dimension_numbers<[1], [0], [0], [1], [0, 0, 1, 1], [], []>} : vector<648x32xbf16>, vector<32x32xbf16>, vector<648x32xf32> -> vector<648x32xf32>
    %95 = arith.addf %91, %94 : vector<648x32xf32>
    %c20 = arith.constant 20 : index
    %c0_54 = arith.constant 0 : index
    %96 = vector.load %arg9[%c20, %c0_54] : memref<686x32xbf16, #tpu.memory_space<vmem>>, vector<648x32xbf16>
    %97 = vector.extract_strided_slice %76 {offsets = [160, 0], sizes = [32, 32], strides = [1, 1]} : vector<288x32xbf16> to vector<32x32xbf16>
    %cst_55 = arith.constant dense<0.000000e+00> : vector<648x32xf32>
    %98 = tpu.matmul %96, %97, %cst_55 {dimension_numbers = #tpu.dot_dimension_numbers<[1], [0], [0], [1], [0, 0, 1, 1], [], []>} : vector<648x32xbf16>, vector<32x32xbf16>, vector<648x32xf32> -> vector<648x32xf32>
    %99 = arith.addf %95, %98 : vector<648x32xf32>
    %c36 = arith.constant 36 : index
    %c0_56 = arith.constant 0 : index
    %100 = vector.load %arg9[%c36, %c0_56] : memref<686x32xbf16, #tpu.memory_space<vmem>>, vector<648x32xbf16>
    %101 = vector.extract_strided_slice %76 {offsets = [192, 0], sizes = [32, 32], strides = [1, 1]} : vector<288x32xbf16> to vector<32x32xbf16>
    %cst_57 = arith.constant dense<0.000000e+00> : vector<648x32xf32>
    %102 = tpu.matmul %100, %101, %cst_57 {dimension_numbers = #tpu.dot_dimension_numbers<[1], [0], [0], [1], [0, 0, 1, 1], [], []>} : vector<648x32xbf16>, vector<32x32xbf16>, vector<648x32xf32> -> vector<648x32xf32>
    %103 = arith.addf %99, %102 : vector<648x32xf32>
    %c37 = arith.constant 37 : index
    %c0_58 = arith.constant 0 : index
    %104 = vector.load %arg9[%c37, %c0_58] : memref<686x32xbf16, #tpu.memory_space<vmem>>, vector<648x32xbf16>
    %105 = vector.extract_strided_slice %76 {offsets = [224, 0], sizes = [32, 32], strides = [1, 1]} : vector<288x32xbf16> to vector<32x32xbf16>
    %cst_59 = arith.constant dense<0.000000e+00> : vector<648x32xf32>
    %106 = tpu.matmul %104, %105, %cst_59 {dimension_numbers = #tpu.dot_dimension_numbers<[1], [0], [0], [1], [0, 0, 1, 1], [], []>} : vector<648x32xbf16>, vector<32x32xbf16>, vector<648x32xf32> -> vector<648x32xf32>
    %107 = arith.addf %103, %106 : vector<648x32xf32>
    %c38_60 = arith.constant 38 : index
    %c0_61 = arith.constant 0 : index
    %108 = vector.load %arg9[%c38_60, %c0_61] : memref<686x32xbf16, #tpu.memory_space<vmem>>, vector<648x32xbf16>
    %109 = vector.extract_strided_slice %76 {offsets = [256, 0], sizes = [32, 32], strides = [1, 1]} : vector<288x32xbf16> to vector<32x32xbf16>
    %cst_62 = arith.constant dense<0.000000e+00> : vector<648x32xf32>
    %110 = tpu.matmul %108, %109, %cst_62 {dimension_numbers = #tpu.dot_dimension_numbers<[1], [0], [0], [1], [0, 0, 1, 1], [], []>} : vector<648x32xbf16>, vector<32x32xbf16>, vector<648x32xf32> -> vector<648x32xf32>
    %111 = arith.addf %107, %110 : vector<648x32xf32>
    %112 = vector.extract_strided_slice %111 {offsets = [19, 0], sizes = [16, 32], strides = [1, 1]} : vector<648x32xf32> to vector<16x32xf32>
    %113 = vector.extract_strided_slice %111 {offsets = [37, 0], sizes = [16, 32], strides = [1, 1]} : vector<648x32xf32> to vector<16x32xf32>
    %114 = vector.extract_strided_slice %111 {offsets = [55, 0], sizes = [16, 32], strides = [1, 1]} : vector<648x32xf32> to vector<16x32xf32>
    %115 = vector.extract_strided_slice %111 {offsets = [73, 0], sizes = [16, 32], strides = [1, 1]} : vector<648x32xf32> to vector<16x32xf32>
    %116 = vector.extract_strided_slice %111 {offsets = [91, 0], sizes = [16, 32], strides = [1, 1]} : vector<648x32xf32> to vector<16x32xf32>
    %117 = vector.extract_strided_slice %111 {offsets = [109, 0], sizes = [16, 32], strides = [1, 1]} : vector<648x32xf32> to vector<16x32xf32>
    %118 = vector.extract_strided_slice %111 {offsets = [127, 0], sizes = [16, 32], strides = [1, 1]} : vector<648x32xf32> to vector<16x32xf32>
    %119 = vector.extract_strided_slice %111 {offsets = [145, 0], sizes = [16, 32], strides = [1, 1]} : vector<648x32xf32> to vector<16x32xf32>
    %120 = vector.extract_strided_slice %111 {offsets = [163, 0], sizes = [16, 32], strides = [1, 1]} : vector<648x32xf32> to vector<16x32xf32>
    %121 = vector.extract_strided_slice %111 {offsets = [181, 0], sizes = [16, 32], strides = [1, 1]} : vector<648x32xf32> to vector<16x32xf32>
    %122 = vector.extract_strided_slice %111 {offsets = [199, 0], sizes = [16, 32], strides = [1, 1]} : vector<648x32xf32> to vector<16x32xf32>
    %123 = vector.extract_strided_slice %111 {offsets = [217, 0], sizes = [16, 32], strides = [1, 1]} : vector<648x32xf32> to vector<16x32xf32>
    %124 = vector.extract_strided_slice %111 {offsets = [235, 0], sizes = [16, 32], strides = [1, 1]} : vector<648x32xf32> to vector<16x32xf32>
    %125 = vector.extract_strided_slice %111 {offsets = [253, 0], sizes = [16, 32], strides = [1, 1]} : vector<648x32xf32> to vector<16x32xf32>
    %126 = vector.extract_strided_slice %111 {offsets = [271, 0], sizes = [16, 32], strides = [1, 1]} : vector<648x32xf32> to vector<16x32xf32>
    %127 = vector.extract_strided_slice %111 {offsets = [289, 0], sizes = [16, 32], strides = [1, 1]} : vector<648x32xf32> to vector<16x32xf32>
    %128 = vector.extract_strided_slice %111 {offsets = [343, 0], sizes = [16, 32], strides = [1, 1]} : vector<648x32xf32> to vector<16x32xf32>
    %129 = vector.extract_strided_slice %111 {offsets = [361, 0], sizes = [16, 32], strides = [1, 1]} : vector<648x32xf32> to vector<16x32xf32>
    %130 = vector.extract_strided_slice %111 {offsets = [379, 0], sizes = [16, 32], strides = [1, 1]} : vector<648x32xf32> to vector<16x32xf32>
    %131 = vector.extract_strided_slice %111 {offsets = [397, 0], sizes = [16, 32], strides = [1, 1]} : vector<648x32xf32> to vector<16x32xf32>
    %132 = vector.extract_strided_slice %111 {offsets = [415, 0], sizes = [16, 32], strides = [1, 1]} : vector<648x32xf32> to vector<16x32xf32>
    %133 = vector.extract_strided_slice %111 {offsets = [433, 0], sizes = [16, 32], strides = [1, 1]} : vector<648x32xf32> to vector<16x32xf32>
    %134 = vector.extract_strided_slice %111 {offsets = [451, 0], sizes = [16, 32], strides = [1, 1]} : vector<648x32xf32> to vector<16x32xf32>
    %135 = vector.extract_strided_slice %111 {offsets = [469, 0], sizes = [16, 32], strides = [1, 1]} : vector<648x32xf32> to vector<16x32xf32>
    %136 = vector.extract_strided_slice %111 {offsets = [487, 0], sizes = [16, 32], strides = [1, 1]} : vector<648x32xf32> to vector<16x32xf32>
    %137 = vector.extract_strided_slice %111 {offsets = [505, 0], sizes = [16, 32], strides = [1, 1]} : vector<648x32xf32> to vector<16x32xf32>
    %138 = vector.extract_strided_slice %111 {offsets = [523, 0], sizes = [16, 32], strides = [1, 1]} : vector<648x32xf32> to vector<16x32xf32>
    %139 = vector.extract_strided_slice %111 {offsets = [541, 0], sizes = [16, 32], strides = [1, 1]} : vector<648x32xf32> to vector<16x32xf32>
    %140 = vector.extract_strided_slice %111 {offsets = [559, 0], sizes = [16, 32], strides = [1, 1]} : vector<648x32xf32> to vector<16x32xf32>
    %141 = vector.extract_strided_slice %111 {offsets = [577, 0], sizes = [16, 32], strides = [1, 1]} : vector<648x32xf32> to vector<16x32xf32>
    %142 = vector.extract_strided_slice %111 {offsets = [595, 0], sizes = [16, 32], strides = [1, 1]} : vector<648x32xf32> to vector<16x32xf32>
    %143 = vector.extract_strided_slice %111 {offsets = [613, 0], sizes = [16, 32], strides = [1, 1]} : vector<648x32xf32> to vector<16x32xf32>
    %144 = tpu.concatenate %112, %113, %114, %115, %116, %117, %118, %119, %120, %121, %122, %123, %124, %125, %126, %127 in 0 : vector<16x32xf32>, vector<16x32xf32>, vector<16x32xf32>, vector<16x32xf32>, vector<16x32xf32>, vector<16x32xf32>, vector<16x32xf32>, vector<16x32xf32>, vector<16x32xf32>, vector<16x32xf32>, vector<16x32xf32>, vector<16x32xf32>, vector<16x32xf32>, vector<16x32xf32>, vector<16x32xf32>, vector<16x32xf32> -> vector<256x32xf32>
    %145 = tpu.concatenate %128, %129, %130, %131, %132, %133, %134, %135, %136, %137, %138, %139, %140, %141, %142, %143 in 0 : vector<16x32xf32>, vector<16x32xf32>, vector<16x32xf32>, vector<16x32xf32>, vector<16x32xf32>, vector<16x32xf32>, vector<16x32xf32>, vector<16x32xf32>, vector<16x32xf32>, vector<16x32xf32>, vector<16x32xf32>, vector<16x32xf32>, vector<16x32xf32>, vector<16x32xf32>, vector<16x32xf32>, vector<16x32xf32> -> vector<256x32xf32>
    %146 = tpu.concatenate %144, %145 in 0 : vector<256x32xf32>, vector<256x32xf32> -> vector<512x32xf32>
    %c0_63 = arith.constant 0 : index
    %c0_64 = arith.constant 0 : index
    %147 = vector.load %arg6[%c0_63, %c0_64] : memref<1x32xf32, #tpu.memory_space<vmem>>, vector<1x32xf32>
    %148 = vector.broadcast %147 : vector<1x32xf32> to vector<512x32xf32>
    %149 = arith.addf %146, %148 : vector<512x32xf32>
    %cst_65 = arith.constant 0.000000e+00 : f32
    %150 = vector.broadcast %cst_65 : f32 to vector<512x32xf32>
    %151 = arith.maximumf %149, %150 : vector<512x32xf32>
    %152 = arith.truncf %151 : vector<512x32xf32> to vector<512x32xbf16>
    %c0_66 = arith.constant 0 : index
    %c0_67 = arith.constant 0 : index
    %153 = vector.load %arg4[%c0_66, %c0_67] : memref<32x128xbf16, #tpu.memory_space<vmem>>, vector<32x128xbf16>
    %cst_68 = arith.constant dense<0.000000e+00> : vector<512x128xf32>
    %154 = tpu.matmul %152, %153, %cst_68 {dimension_numbers = #tpu.dot_dimension_numbers<[1], [0], [0], [1], [0, 0, 1, 1], [], []>} : vector<512x32xbf16>, vector<32x128xbf16>, vector<512x128xf32> -> vector<512x128xf32>
    %c0_69 = arith.constant 0 : index
    %c0_70 = arith.constant 0 : index
    %155 = vector.load %arg7[%c0_69, %c0_70] : memref<1x128xf32, #tpu.memory_space<vmem>>, vector<1x128xf32>
    %156 = vector.broadcast %155 : vector<1x128xf32> to vector<512x128xf32>
    %157 = arith.addf %154, %156 : vector<512x128xf32>
    %c0_71 = arith.constant 0 : index
    %c0_72 = arith.constant 0 : index
    %158 = vector.load %arg1[%c0_71, %c0_72] : memref<512x128xf32, #tpu.memory_space<vmem>>, vector<512x128xf32>
    %159 = arith.addf %157, %158 : vector<512x128xf32>
    %cst_73 = arith.constant 0.000000e+00 : f32
    %160 = vector.broadcast %cst_73 : f32 to vector<512x128xf32>
    %161 = arith.maximumf %159, %160 : vector<512x128xf32>
    %c0_74 = arith.constant 0 : index
    %c0_75 = arith.constant 0 : index
    %162 = vector.load %arg8[%c0_74, %c0_75] : memref<512x128xf32, #tpu.memory_space<vmem>>, vector<512x128xf32>
    tpu.vector_store %arg8[%c0_74, %c0_75], %161 {strides = array<i32>} : memref<512x128xf32, #tpu.memory_space<vmem>>, vector<512x128xf32>,
    return
  }
  func.func @transform_0(%arg0: i32) -> (i32, i32) {
    %c0_i32 = arith.constant 0 : i32
    %c0_i32_0 = arith.constant 0 : i32
    return %arg0, %c0_i32 : i32, i32
  }
  func.func @transform_1(%arg0: i32) -> (i32, i32) {
    %c0_i32 = arith.constant 0 : i32
    %c0_i32_0 = arith.constant 0 : i32
    %c0_i32_1 = arith.constant 0 : i32
    return %c0_i32, %c0_i32_0 : i32, i32
  }
  func.func @transform_2(%arg0: i32) -> (i32, i32) {
    %c0_i32 = arith.constant 0 : i32
    %c0_i32_0 = arith.constant 0 : i32
    %c0_i32_1 = arith.constant 0 : i32
    return %c0_i32, %c0_i32_0 : i32, i32
  }
  func.func @transform_3(%arg0: i32) -> (i32, i32) {
    %c0_i32 = arith.constant 0 : i32
    %c0_i32_0 = arith.constant 0 : i32
    %c0_i32_1 = arith.constant 0 : i32
    return %c0_i32, %c0_i32_0 : i32, i32
  }
  func.func @transform_4(%arg0: i32) -> (i32, i32) {
    %c0_i32 = arith.constant 0 : i32
    %c0_i32_0 = arith.constant 0 : i32
    %c0_i32_1 = arith.constant 0 : i32
    return %c0_i32, %c0_i32_0 : i32, i32
  }
  func.func @transform_5(%arg0: i32) -> (i32, i32) {
    %c0_i32 = arith.constant 0 : i32
    %c0_i32_0 = arith.constant 0 : i32
    %c0_i32_1 = arith.constant 0 : i32
    return %c0_i32, %c0_i32_0 : i32, i32
  }
  func.func @transform_6(%arg0: i32) -> (i32, i32) {
    %c0_i32 = arith.constant 0 : i32
    %c0_i32_0 = arith.constant 0 : i32
    %c0_i32_1 = arith.constant 0 : i32
    return %c0_i32, %c0_i32_0 : i32, i32
  }
  func.func @transform_7(%arg0: i32) -> (i32, i32) {
    %c0_i32 = arith.constant 0 : i32
    %c0_i32_0 = arith.constant 0 : i32
    return %arg0, %c0_i32 : i32, i32
  }
}

</mosaic_0001>

<llo_original>
// kernel: tpu_custom_call.1
$region0: #{tpu_custom_call.1}
  #allocation0 [shape = 'u32[]', space=smem, size = 0x4, offset = 0x4, fixed_abs, tag = 'smem constant byte address 0x4 - core index']
  #allocation1 [shape = 'u32[144,128]{1,0:T(1,128)}', space=vmem, size = 0x12000, scoped, tag = 'internal scratch']
  #allocation2 [shape = 'bf16[686,32]{1,0:T(8,128)(2,1)}', space=vmem, size = 0x2b000, scoped, tag = 'scratch operand']
  %s0 = inlined_call_operand.hbm [shape: f32[1024,128], index: 0, kind: input, shape index: {}]
  %s1 = inlined_call_operand.vmem [shape: bf16[128,32], index: 1, kind: input, shape index: {}]
  %s2 = inlined_call_operand.vmem [shape: bf16[288,32], index: 2, kind: input, shape index: {}]
  %s3 = inlined_call_operand.vmem [shape: bf16[32,128], index: 3, kind: input, shape index: {}]
  %s4 = inlined_call_operand.vmem [shape: f32[1,32], index: 4, kind: input, shape index: {}]
  %s5 = inlined_call_operand.vmem [shape: f32[1,32], index: 5, kind: input, shape index: {}]
  %s6 = inlined_call_operand.vmem [shape: f32[1,128], index: 6, kind: input, shape index: {}]
  %s7 = inlined_call_operand.hbm [shape: f32[1024,128], index: 7, kind: output, shape index: {}]
  %s8 = sld [smem:[#allocation0]]
  $region65: #{tpu_custom_call.1} parent=0
    _
  %s10 = ssub.s32 1, %s8
  %s11 = scalar_select 0, %s10, %s8
  $region1: #{tpu_custom_call.1} parent=0
    #allocation3 [shape = 'u8[524288]{0}', space=vmem, size = 0x80000, scoped, tag = 'input window, operand 0']
    #allocation4 [shape = 's32[2]{0}', space=sflag, size = 0x8, scoped, tag = 'scoped memory for tpu_custom_call.1']
    #allocation5 [shape = 's32[2]{0}', space=sflag, size = 0x8, scoped, tag = 'scoped memory for tpu_custom_call.1']
    #allocation6 [shape = 'u8[524288]{0}', space=vmem, size = 0x80000, scoped, tag = 'output window, operand 0']
    %12 = vsyncpa [#allocation4], 0
    %s13 = scalar_lea.sflag [#allocation4], 1
    %14 = vsyncpa %s13, 0
    %15 = vsyncpa [#allocation5], 0
    %s16 = scalar_lea.sflag [#allocation5], 1
    %17 = vsyncpa %s16, 0
    loop: start=0, step=1, limit=4
    $region2: #{tpu_custom_call.1} parent=1 // loop_pre_header
      _
    $region3: #{tpu_custom_call.1} parent=1 // loop_header
      %s19 = sphi 0, %s23
      %p20 = scmp.ge.s32.totalorder %s19, 4
      %s29 = sphi 0, %s31
      %s32 = sphi 0, %s29
      %s33 = sphi 0, %s32
      %s49 = sphi 0, %s33
      %s53 = sphi 0, %s53
      %s55 = sphi 0, %s53
      %s56 = sphi 0, %s55
      %s70 = sphi 0, %s56
      %s74 = sphi 0, %s74
      %s76 = sphi 0, %s74
      %s77 = sphi 0, %s76
      %s91 = sphi 0, %s77
      %s95 = sphi 0, %s95
      %s97 = sphi 0, %s95
      %s98 = sphi 0, %s97
      %s112 = sphi 0, %s98
      %s116 = sphi 0, %s116
      %s118 = sphi 0, %s116
      %s119 = sphi 0, %s118
      %s133 = sphi 0, %s119
      %s137 = sphi 0, %s137
      %s139 = sphi 0, %s137
      %s140 = sphi 0, %s139
      %s154 = sphi 0, %s140
      %s158 = sphi 0, %s158
      %s160 = sphi 0, %s158
      %s161 = sphi 0, %s160
      %s175 = sphi 0, %s161
      %s181 = sphi 0, %s183
      %s184 = sphi 0, %s181
      %s185 = sphi 0, %s184
      %s201 = sphi 0, %s185
    $region4: #{tpu_custom_call.1} parent=1 // loop_header_branch
      %22 = sbr.rel (%p20) target = $region8
    $region5: #{tpu_custom_call.1} parent=1 // loop_body
      %s24 = ssub.s32 %s19, 1
      %s25 = ssub.s32 %s19, 2
      %s26 = sadd.s32 %s19, 1
      %s27 = ssub.s32 %s19, %s26
      %p28 = scmp.eq.s32.totalorder %s27, 0
      %s30 = sadd.s32 %s29, 1
      %s31 = scalar_select %p28, %s29, %s30
      %p34 = pneg %p28
      %p35 = scmp.eq.s32.totalorder %s19, 1
      %p36 = por %p34, %p35
      %p37 = scmp.ne.s32.totalorder %s29, %s32
      %p38 = scmp.eq.s32.totalorder %s19, 0
      %p39 = por %p37, %p38
      %p40 = scmp.ne.s32.totalorder %s29, %s32
      %p41 = scmp.eq.s32.totalorder %s24, 1
      %p42 = por %p40, %p41
      %p43 = scmp.ne.s32.totalorder %s32, %s33
      %p44 = scmp.eq.s32.totalorder %s24, 0
      %p45 = por %p43, %p44
      %p46 = scmp.ne.s32.totalorder %s32, %s33
      %p47 = scmp.eq.s32.totalorder %s25, 1
      %p48 = por %p46, %p47
      %p50 = scmp.ne.s32.totalorder %s33, %s49
      %p51 = scmp.eq.s32.totalorder %s25, 0
      %p52 = por %p50, %p51
      %s54 = sadd.s32 %s53, 1
      %p57 = scmp.eq.s32.totalorder %s19, 1
      %p58 = scmp.ne.s32.totalorder %s53, %s55
      %p59 = scmp.eq.s32.totalorder %s19, 0
      %p60 = por %p58, %p59
      %p61 = scmp.ne.s32.totalorder %s53, %s55
      %p62 = scmp.eq.s32.totalorder %s24, 1
      %p63 = por %p61, %p62
      %p64 = scmp.ne.s32.totalorder %s55, %s56
      %p65 = scmp.eq.s32.totalorder %s24, 0
      %p66 = por %p64, %p65
      %p67 = scmp.ne.s32.totalorder %s55, %s56
      %p68 = scmp.eq.s32.totalorder %s25, 1
      %p69 = por %p67, %p68
      %p71 = scmp.ne.s32.totalorder %s56, %s70
      %p72 = scmp.eq.s32.totalorder %s25, 0
      %p73 = por %p71, %p72
      %s75 = sadd.s32 %s74, 1
      %p78 = scmp.eq.s32.totalorder %s19, 1
      %p79 = scmp.ne.s32.totalorder %s74, %s76
      %p80 = scmp.eq.s32.totalorder %s19, 0
      %p81 = por %p79, %p80
      %p82 = scmp.ne.s32.totalorder %s74, %s76
      %p83 = scmp.eq.s32.totalorder %s24, 1
      %p84 = por %p82, %p83
      %p85 = scmp.ne.s32.totalorder %s76, %s77
      %p86 = scmp.eq.s32.totalorder %s24, 0
      %p87 = por %p85, %p86
      %p88 = scmp.ne.s32.totalorder %s76, %s77
      %p89 = scmp.eq.s32.totalorder %s25, 1
      %p90 = por %p88, %p89
      %p92 = scmp.ne.s32.totalorder %s77, %s91
      %p93 = scmp.eq.s32.totalorder %s25, 0
      %p94 = por %p92, %p93
      %s96 = sadd.s32 %s95, 1
      %p99 = scmp.eq.s32.totalorder %s19, 1
      %p100 = scmp.ne.s32.totalorder %s95, %s97
      %p101 = scmp.eq.s32.totalorder %s19, 0
      %p102 = por %p100, %p101
      %p103 = scmp.ne.s32.totalorder %s95, %s97
      %p104 = scmp.eq.s32.totalorder %s24, 1
      %p105 = por %p103, %p104
      %p106 = scmp.ne.s32.totalorder %s97, %s98
      %p107 = scmp.eq.s32.totalorder %s24, 0
      %p108 = por %p106, %p107
      %p109 = scmp.ne.s32.totalorder %s97, %s98
      %p110 = scmp.eq.s32.totalorder %s25, 1
      %p111 = por %p109, %p110
      %p113 = scmp.ne.s32.totalorder %s98, %s112
      %p114 = scmp.eq.s32.totalorder %s25, 0
      %p115 = por %p113, %p114
      %s117 = sadd.s32 %s116, 1
      %p120 = scmp.eq.s32.totalorder %s19, 1
      %p121 = scmp.ne.s32.totalorder %s116, %s118
      %p122 = scmp.eq.s32.totalorder %s19, 0
      %p123 = por %p121, %p122
      %p124 = scmp.ne.s32.totalorder %s116, %s118
      %p125 = scmp.eq.s32.totalorder %s24, 1
      %p126 = por %p124, %p125
      %p127 = scmp.ne.s32.totalorder %s118, %s119
      %p128 = scmp.eq.s32.totalorder %s24, 0
      %p129 = por %p127, %p128
      %p130 = scmp.ne.s32.totalorder %s118, %s119
      %p131 = scmp.eq.s32.totalorder %s25, 1
      %p132 = por %p130, %p131
      %p134 = scmp.ne.s32.totalorder %s119, %s133
      %p135 = scmp.eq.s32.totalorder %s25, 0
      %p136 = por %p134, %p135
      %s138 = sadd.s32 %s137, 1
      %p141 = scmp.eq.s32.totalorder %s19, 1
      %p142 = scmp.ne.s32.totalorder %s137, %s139
      %p143 = scmp.eq.s32.totalorder %s19, 0
      %p144 = por %p142, %p143
      %p145 = scmp.ne.s32.totalorder %s137, %s139
      %p146 = scmp.eq.s32.totalorder %s24, 1
      %p147 = por %p145, %p146
      %p148 = scmp.ne.s32.totalorder %s139, %s140
      %p149 = scmp.eq.s32.totalorder %s24, 0
      %p150 = por %p148, %p149
      %p151 = scmp.ne.s32.totalorder %s139, %s140
      %p152 = scmp.eq.s32.totalorder %s25, 1
      %p153 = por %p151, %p152
      %p155 = scmp.ne.s32.totalorder %s140, %s154
      %p156 = scmp.eq.s32.totalorder %s25, 0
      %p157 = por %p155, %p156
      %s159 = sadd.s32 %s158, 1
      %p162 = scmp.eq.s32.totalorder %s19, 1
      %p163 = scmp.ne.s32.totalorder %s158, %s160
      %p164 = scmp.eq.s32.totalorder %s19, 0
      %p165 = por %p163, %p164
      %p166 = scmp.ne.s32.totalorder %s158, %s160
      %p167 = scmp.eq.s32.totalorder %s24, 1
      %p168 = por %p166, %p167
      %p169 = scmp.ne.s32.totalorder %s160, %s161
      %p170 = scmp.eq.s32.totalorder %s24, 0
      %p171 = por %p169, %p170
      %p172 = scmp.ne.s32.totalorder %s160, %s161
      %p173 = scmp.eq.s32.totalorder %s25, 1
      %p174 = por %p172, %p173
      %p176 = scmp.ne.s32.totalorder %s161, %s175
      %p177 = scmp.eq.s32.totalorder %s25, 0
      %p178 = por %p176, %p177
      %s179 = ssub.s32 %s19, %s26
      %p180 = scmp.eq.s32.totalorder %s179, 0
      %s182 = sadd.s32 %s181, 1
      %s183 = scalar_select %p180, %s181, %s182
      %p186 = pneg %p180
      %p187 = scmp.eq.s32.totalorder %s19, 1
      %p188 = por %p186, %p187
      %p189 = scmp.ne.s32.totalorder %s181, %s184
      %p190 = scmp.eq.s32.totalorder %s19, 0
      %p191 = por %p189, %p190
      %p192 = scmp.ne.s32.totalorder %s181, %s184
      %p193 = scmp.eq.s32.totalorder %s24, 1
      %p194 = por %p192, %p193
      %p195 = scmp.ne.s32.totalorder %s184, %s185
      %p196 = scmp.eq.s32.totalorder %s24, 0
      %p197 = por %p195, %p196
      %p198 = scmp.ne.s32.totalorder %s184, %s185
      %p199 = scmp.eq.s32.totalorder %s25, 1
      %p200 = por %p198, %p199
      %p202 = scmp.ne.s32.totalorder %s185, %s201
      %p203 = scmp.eq.s32.totalorder %s25, 0
      %p204 = por %p202, %p203
      %p205 = scmp.le.s32.totalorder 1, %s19
      %p206 = scmp.lt.s32.totalorder %s19, 3
      %p207 = pnand %p205, %p206
      %p208 = pneg %p207
      // Predicated region
      $region9: #{tpu_custom_call.1} parent=5 // pred_check
        _
      $region10: #{tpu_custom_call.1} parent=5 // pred_check_branch
        %210 = sbr.rel (%p207) target = $region12
      $region11: #{tpu_custom_call.1} parent=5 // pred_region
        %s211 = ssub.s32 %s19, 1
        // Predicated region
        $region13: #{tpu_custom_call.1} parent=11 // pred_check
          %p212 = pneg %p66
        $region14: #{tpu_custom_call.1} parent=11 // pred_check_branch
          %214 = sbr.rel (%p212) target = $region16
        $region15: #{tpu_custom_call.1} parent=11 // pred_region
          _
        $region16: #{tpu_custom_call.1} parent=11 // pred_fallthru
          _
        // Predicated region
        $region17: #{tpu_custom_call.1} parent=11 // pred_check
          %p215 = pneg %p87
        $region18: #{tpu_custom_call.1} parent=11 // pred_check_branch
          %217 = sbr.rel (%p215) target = $region20
        $region19: #{tpu_custom_call.1} parent=11 // pred_region
          _
        $region20: #{tpu_custom_call.1} parent=11 // pred_fallthru
          _
        // Predicated region
        $region21: #{tpu_custom_call.1} parent=11 // pred_check
          %p218 = pneg %p108
        $region22: #{tpu_custom_call.1} parent=11 // pred_check_branch
          %220 = sbr.rel (%p218) target = $region24
        $region23: #{tpu_custom_call.1} parent=11 // pred_region
          _
        $region24: #{tpu_custom_call.1} parent=11 // pred_fallthru
          _
        // Predicated region
        $region25: #{tpu_custom_call.1} parent=11 // pred_check
          %p221 = pneg %p129
        $region26: #{tpu_custom_call.1} parent=11 // pred_check_branch
          %223 = sbr.rel (%p221) target = $region28
        $region27: #{tpu_custom_call.1} parent=11 // pred_region
          _
        $region28: #{tpu_custom_call.1} parent=11 // pred_fallthru
          _
        // Predicated region
        $region29: #{tpu_custom_call.1} parent=11 // pred_check
          %p224 = pneg %p150
        $region30: #{tpu_custom_call.1} parent=11 // pred_check_branch
          %226 = sbr.rel (%p224) target = $region32
        $region31: #{tpu_custom_call.1} parent=11 // pred_region
          _
        $region32: #{tpu_custom_call.1} parent=11 // pred_fallthru
          _
        // Predicated region
        $region33: #{tpu_custom_call.1} parent=11 // pred_check
          %p227 = pneg %p171
        $region34: #{tpu_custom_call.1} parent=11 // pred_check_branch
          %229 = sbr.rel (%p227) target = $region36
        $region35: #{tpu_custom_call.1} parent=11 // pred_region
          _
        $region36: #{tpu_custom_call.1} parent=11 // pred_fallthru
          _
      $region12: #{tpu_custom_call.1} parent=5 // pred_fallthru
        _
      %p230 = scmp.lt.s32.totalorder %s19, 2
      // Predicated region
      $region37: #{tpu_custom_call.1} parent=5 // pred_check
        %p231 = pneg %p230
      $region38: #{tpu_custom_call.1} parent=5 // pred_check_branch
        %233 = sbr.rel (%p231) target = $region40
      $region39: #{tpu_custom_call.1} parent=5 // pred_region
        // Predicated region
        $region41: #{tpu_custom_call.1} parent=39 // pred_check
          %p234 = pneg %p39
        $region42: #{tpu_custom_call.1} parent=39 // pred_check_branch
          %236 = sbr.rel (%p234) target = $region44
        $region43: #{tpu_custom_call.1} parent=39 // pred_region
          %s237 = sand.u32 %s29, 1
          %s238 = scalar_lea.sflag [#allocation4], %s237
          %s239 = sand.u32 %s29, 1
          %s240 = smul.addr %s239, 512
          %s241 = scalar_lea.vmem [#allocation3], %s240
          %s242 = smul.u32 64, %s19
          %s244 = ssub.s32 8192, 8192
          %245 = vsyncadd %s238, %s244
          %s246 = smul.addr %s242, 128
          %s247 = scalar_lea.hbm %s0, %s246
          %s248 = sshll.u32 %s241, 4
          %s249 = int_to_ptr.vmem [resolvable:$true] %s248
          %254 = dma.hbm_to_vmem [thread:$0]  %s247, 8192, %s249, %s238, 128, 128, 8
        $region44: #{tpu_custom_call.1} parent=39 // pred_fallthru
          _
      $region40: #{tpu_custom_call.1} parent=5 // pred_fallthru
        _
      %p255 = scmp.le.s32.totalorder 1, %s19
      %p256 = scmp.lt.s32.totalorder %s19, 3
      %p257 = pnand %p255, %p256
      %p258 = pneg %p257
      // Predicated region
      $region45: #{tpu_custom_call.1} parent=5 // pred_check
        _
      $region46: #{tpu_custom_call.1} parent=5 // pred_check_branch
        %260 = sbr.rel (%p257) target = $region48
      $region47: #{tpu_custom_call.1} parent=5 // pred_region
        %s261 = ssub.s32 %s19, 1
        %s262 = sand.u32 %s32, 1
        %s263 = scalar_lea.sflag [#allocation4], %s262
        %s264 = sand.u32 %s32, 1
        %s265 = smul.addr %s264, 512
        %s266 = scalar_lea.vmem [#allocation3], %s265
        // Predicated region
        $region49: #{tpu_custom_call.1} parent=47 // pred_check
          %p267 = pneg %p45
        $region50: #{tpu_custom_call.1} parent=47 // pred_check_branch
          %269 = sbr.rel (%p267) target = $region52
        $region51: #{tpu_custom_call.1} parent=47 // pred_region
          %270 = dma.done %s263, 8192
        $region52: #{tpu_custom_call.1} parent=47 // pred_fallthru
          _
        %s271 = sand.u32 %s32, 1
        %s272 = scalar_lea.sflag [#allocation4], %s271
        %s273 = sand.u32 %s32, 1
        %s274 = smul.addr %s273, 512
        %s275 = scalar_lea.vmem [#allocation3], %s274
        %p276 = pneg %p45
        %p277 = pneg %p42
        %p278 = pneg %p66
        %p279 = pneg %p63
        %p280 = pneg %p87
        %p281 = pneg %p84
        %p282 = pneg %p108
        %p283 = pneg %p105
        %p284 = pneg %p129
        %p285 = pneg %p126
        %p286 = pneg %p150
        %p287 = pneg %p147
        %p288 = pneg %p171
        %p289 = pneg %p168
        %p290 = pneg %p197
        %p291 = pneg %p194
        %s292 = sand.u32 %s184, 1
        %s293 = scalar_lea.sflag [#allocation5], %s292
        %s294 = sand.u32 %s184, 1
        %s295 = smul.addr %s294, 512
        %s296 = scalar_lea.vmem [#allocation6], %s295
        %s297 = smul.u32 64, %s24
        %s298 = smul.u32 64, %s24
        %v300 = vld [vmem:[%s266] sm:$0xff]
        %v301 = vld [vmem:[%s266 + $0x8] sm:$0xff]
        %v302 = vld [vmem:[%s266 + $0x10] sm:$0xff]
        %v303 = vld [vmem:[%s266 + $0x18] sm:$0xff]
        %v304 = vld [vmem:[%s266 + $0x20] sm:$0xff]
        %v305 = vld [vmem:[%s266 + $0x28] sm:$0xff]
        %v306 = vld [vmem:[%s266 + $0x30] sm:$0xff]
        %v307 = vld [vmem:[%s266 + $0x38] sm:$0xff]
        %v308 = vld [vmem:[%s266 + $0x40] sm:$0xff]
        %v309 = vld [vmem:[%s266 + $0x48] sm:$0xff]
        %v310 = vld [vmem:[%s266 + $0x50] sm:$0xff]
        %v311 = vld [vmem:[%s266 + $0x58] sm:$0xff]
        %v312 = vld [vmem:[%s266 + $0x60] sm:$0xff]
        %v313 = vld [vmem:[%s266 + $0x68] sm:$0xff]
        %v314 = vld [vmem:[%s266 + $0x70] sm:$0xff]
        %v315 = vld [vmem:[%s266 + $0x78] sm:$0xff]
        %v316 = vld [vmem:[%s266 + $0x80] sm:$0xff]
        %v317 = vld [vmem:[%s266 + $0x88] sm:$0xff]
        %v318 = vld [vmem:[%s266 + $0x90] sm:$0xff]
        %v319 = vld [vmem:[%s266 + $0x98] sm:$0xff]
        %v320 = vld [vmem:[%s266 + $0xa0] sm:$0xff]
        %v321 = vld [vmem:[%s266 + $0xa8] sm:$0xff]
        %v322 = vld [vmem:[%s266 + $0xb0] sm:$0xff]
        %v323 = vld [vmem:[%s266 + $0xb8] sm:$0xff]
        %v324 = vld [vmem:[%s266 + $0xc0] sm:$0xff]
        %v325 = vld [vmem:[%s266 + $0xc8] sm:$0xff]
        %v326 = vld [vmem:[%s266 + $0xd0] sm:$0xff]
        %v327 = vld [vmem:[%s266 + $0xd8] sm:$0xff]
        %v328 = vld [vmem:[%s266 + $0xe0] sm:$0xff]
        %v329 = vld [vmem:[%s266 + $0xe8] sm:$0xff]
        %v330 = vld [vmem:[%s266 + $0xf0] sm:$0xff]
        %v331 = vld [vmem:[%s266 + $0xf8] sm:$0xff]
        %v332 = vld [vmem:[%s266 + $0x100] sm:$0xff]
        %v333 = vld [vmem:[%s266 + $0x108] sm:$0xff]
        %v334 = vld [vmem:[%s266 + $0x110] sm:$0xff]
        %v335 = vld [vmem:[%s266 + $0x118] sm:$0xff]
        %v336 = vld [vmem:[%s266 + $0x120] sm:$0xff]
        %v337 = vld [vmem:[%s266 + $0x128] sm:$0xff]
        %v338 = vld [vmem:[%s266 + $0x130] sm:$0xff]
        %v339 = vld [vmem:[%s266 + $0x138] sm:$0xff]
        %v340 = vld [vmem:[%s266 + $0x140] sm:$0xff]
        %v341 = vld [vmem:[%s266 + $0x148] sm:$0xff]
        %v342 = vld [vmem:[%s266 + $0x150] sm:$0xff]
        %v343 = vld [vmem:[%s266 + $0x158] sm:$0xff]
        %v344 = vld [vmem:[%s266 + $0x160] sm:$0xff]
        %v345 = vld [vmem:[%s266 + $0x168] sm:$0xff]
        %v346 = vld [vmem:[%s266 + $0x170] sm:$0xff]
        %v347 = vld [vmem:[%s266 + $0x178] sm:$0xff]
        %v348 = vld [vmem:[%s266 + $0x180] sm:$0xff]
        %v349 = vld [vmem:[%s266 + $0x188] sm:$0xff]
        %v350 = vld [vmem:[%s266 + $0x190] sm:$0xff]
        %v351 = vld [vmem:[%s266 + $0x198] sm:$0xff]
        %v352 = vld [vmem:[%s266 + $0x1a0] sm:$0xff]
        %v353 = vld [vmem:[%s266 + $0x1a8] sm:$0xff]
        %v354 = vld [vmem:[%s266 + $0x1b0] sm:$0xff]
        %v355 = vld [vmem:[%s266 + $0x1b8] sm:$0xff]
        %v356 = vld [vmem:[%s266 + $0x1c0] sm:$0xff]
        %v357 = vld [vmem:[%s266 + $0x1c8] sm:$0xff]
        %v358 = vld [vmem:[%s266 + $0x1d0] sm:$0xff]
        %v359 = vld [vmem:[%s266 + $0x1d8] sm:$0xff]
        %v360 = vld [vmem:[%s266 + $0x1e0] sm:$0xff]
        %v361 = vld [vmem:[%s266 + $0x1e8] sm:$0xff]
        %v362 = vld [vmem:[%s266 + $0x1f0] sm:$0xff]
        %v363 = vld [vmem:[%s266 + $0x1f8] sm:$0xff]
        %v364 = vpack.c.bf16 %v301, %v300
        %v365 = vpack.c.bf16 %v303, %v302
        %v366 = vpack.c.bf16 %v305, %v304
        %v367 = vpack.c.bf16 %v307, %v306
        %v368 = vpack.c.bf16 %v309, %v308
        %v369 = vpack.c.bf16 %v311, %v310
        %v370 = vpack.c.bf16 %v313, %v312
        %v371 = vpack.c.bf16 %v315, %v314
        %v372 = vpack.c.bf16 %v317, %v316
        %v373 = vpack.c.bf16 %v319, %v318
        %v374 = vpack.c.bf16 %v321, %v320
        %v375 = vpack.c.bf16 %v323, %v322
        %v376 = vpack.c.bf16 %v325, %v324
        %v377 = vpack.c.bf16 %v327, %v326
        %v378 = vpack.c.bf16 %v329, %v328
        %v379 = vpack.c.bf16 %v331, %v330
        %v380 = vpack.c.bf16 %v333, %v332
        %v381 = vpack.c.bf16 %v335, %v334
        %v382 = vpack.c.bf16 %v337, %v336
        %v383 = vpack.c.bf16 %v339, %v338
        %v384 = vpack.c.bf16 %v341, %v340
        %v385 = vpack.c.bf16 %v343, %v342
        %v386 = vpack.c.bf16 %v345, %v344
        %v387 = vpack.c.bf16 %v347, %v346
        %v388 = vpack.c.bf16 %v349, %v348
        %v389 = vpack.c.bf16 %v351, %v350
        %v390 = vpack.c.bf16 %v353, %v352
        %v391 = vpack.c.bf16 %v355, %v354
        %v392 = vpack.c.bf16 %v357, %v356
        %v393 = vpack.c.bf16 %v359, %v358
        %v394 = vpack.c.bf16 %v361, %v360
        %v395 = vpack.c.bf16 %v363, %v362
        %v396 = vld [vmem:[%s1] sm:$0xf]
        %v397 = vld [vmem:[%s1 + $0x4] sm:$0xf]
        %v398 = vld [vmem:[%s1 + $0x8] sm:$0xf]
        %v399 = vld [vmem:[%s1 + $0xc] sm:$0xf]
        %v400 = vld [vmem:[%s1 + $0x10] sm:$0xf]
        %v401 = vld [vmem:[%s1 + $0x14] sm:$0xf]
        %v402 = vld [vmem:[%s1 + $0x18] sm:$0xf]
        %v403 = vld [vmem:[%s1 + $0x1c] sm:$0xf]
        %v404 = vld [vmem:[%s1 + $0x20] sm:$0xf]
        %v405 = vld [vmem:[%s1 + $0x24] sm:$0xf]
        %v406 = vld [vmem:[%s1 + $0x28] sm:$0xf]
        %v407 = vld [vmem:[%s1 + $0x2c] sm:$0xf]
        %v408 = vld [vmem:[%s1 + $0x30] sm:$0xf]
        %v409 = vld [vmem:[%s1 + $0x34] sm:$0xf]
        %v410 = vld [vmem:[%s1 + $0x38] sm:$0xf]
        %v411 = vld [vmem:[%s1 + $0x3c] sm:$0xf]
        %v412 = vld [vmem:[%s4] sm:$0x1]
        %v414 = vlaneseq
        %v415 = vshrl.u32 %v414, 7
        %v416 = vsub.s32 0, %v415
        %v417 = vrot.slane %v412, %v416
        %v435 = vunpack.c.l.b16 %v396
        %v436 = vunpack.c.l.b16 %v397
        %v437 = vunpack.c.l.b16 %v398
        %v438 = vunpack.c.l.b16 %v399
        %v439 = vunpack.c.l.b16 %v400
        %v440 = vunpack.c.l.b16 %v401
        %v441 = vunpack.c.l.b16 %v402
        %v442 = vunpack.c.l.b16 %v403
        %v443 = vunpack.c.l.b16 %v404
        %v444 = vunpack.c.l.b16 %v405
        %v445 = vunpack.c.l.b16 %v406
        %v446 = vunpack.c.l.b16 %v407
        %v447 = vunpack.c.l.b16 %v408
        %v448 = vunpack.c.l.b16 %v409
        %v449 = vunpack.c.l.b16 %v410
        %v450 = vunpack.c.l.b16 %v411
        %v451 = vpack.c.b16 %v436, %v435
        %v452 = vpack.c.b16 %v438, %v437
        %v453 = vpack.c.b16 %v440, %v439
        %v454 = vpack.c.b16 %v442, %v441
        %v455 = vpack.c.b16 %v444, %v443
        %v456 = vpack.c.b16 %v446, %v445
        %v457 = vpack.c.b16 %v448, %v447
        %v458 = vpack.c.b16 %v450, %v449
        %467 = vmatprep.subr.bf16.mxu0 0
        %468 = vmatpush1.bf16.msra.mxu0 %v451
        %469 = vmatprep.subr.bf16.mxu0 0
        %470 = vmatpush1.bf16.msra.mxu0 %v452
        %471 = vmatprep.subr.bf16.mxu0 0
        %472 = vmatpush1.bf16.msra.mxu0 %v453
        %473 = vmatprep.subr.bf16.mxu0 0
        %474 = vmatpush1.bf16.msra.mxu0 %v454
        %475 = vmatprep.subr.bf16.mxu0 0
        %476 = vmatpush1.bf16.msra.mxu0 %v455
        %477 = vmatprep.subr.bf16.mxu0 0
        %478 = vmatpush1.bf16.msra.mxu0 %v456
        %479 = vmatprep.subr.bf16.mxu0 0
        %480 = vmatpush1.bf16.msra.mxu0 %v457
        %481 = vmatprep.subr.bf16.mxu0 0
        %482 = vmatpush1.bf16.msra.mxu0 %v458
        %483 = vmatprep.subr.bf16.mxu0 0
        %484 = vmatpush1.bf16.msra.mxu0 0
        %485 = vmatprep.subr.bf16.mxu0 0
        %486 = vmatpush1.bf16.msra.mxu0 0
        %487 = vmatprep.subr.bf16.mxu0 0
        %488 = vmatpush1.bf16.msra.mxu0 0
        %489 = vmatprep.subr.bf16.mxu0 0
        %490 = vmatpush1.bf16.msra.mxu0 0
        %491 = vmatprep.subr.bf16.mxu0 0
        %492 = vmatpush1.bf16.msra.mxu0 0
        %493 = vmatprep.subr.bf16.mxu0 0
        %494 = vmatpush1.bf16.msra.mxu0 0
        %495 = vmatprep.subr.bf16.mxu0 0
        %496 = vmatpush1.bf16.msra.mxu0 0
        %497 = vmatprep.subr.bf16.mxu0 0
        %498 = vmatpush1.bf16.msra.mxu0 0
        %499 = vmatprep.mubr.bf16.mxu0 0
        %500 = vmatmul.mubr.bf16.gmra.mrb[0].mxu0 %v364
        %v501 = vpop.f32.mrb[0].mxu0
        %v502 = vadd.f32 %v417, %v501
        %v503 = vpop.f32.mrb[0].mxu0
        %v504 = vpop.f32.mrb[0].mxu0
        %v505 = vadd.f32 %v417, %v504
        %v506 = vpop.f32.mrb[0].mxu0
        %507 = vmatprep.mubr.bf16.mxu0 0
        %508 = vmatmul.mubr.bf16.gmra.mrb[0].mxu0 %v365
        %v509 = vpop.f32.mrb[0].mxu0
        %v510 = vadd.f32 %v417, %v509
        %v511 = vpop.f32.mrb[0].mxu0
        %v512 = vpop.f32.mrb[0].mxu0
        %v513 = vadd.f32 %v417, %v512
        %v514 = vpop.f32.mrb[0].mxu0
        %515 = vmatprep.mubr.bf16.mxu0 0
        %516 = vmatmul.mubr.bf16.gmra.mrb[0].mxu0 %v366
        %v517 = vpop.f32.mrb[0].mxu0
        %v518 = vadd.f32 %v417, %v517
        %v519 = vpop.f32.mrb[0].mxu0
        %v520 = vpop.f32.mrb[0].mxu0
        %v521 = vadd.f32 %v417, %v520
        %v522 = vpop.f32.mrb[0].mxu0
        %523 = vmatprep.mubr.bf16.mxu0 0
        %524 = vmatmul.mubr.bf16.gmra.mrb[0].mxu0 %v367
        %v525 = vpop.f32.mrb[0].mxu0
        %v526 = vadd.f32 %v417, %v525
        %v527 = vpop.f32.mrb[0].mxu0
        %v528 = vpop.f32.mrb[0].mxu0
        %v529 = vadd.f32 %v417, %v528
        %v530 = vpop.f32.mrb[0].mxu0
        %531 = vmatprep.mubr.bf16.mxu0 0
        %532 = vmatmul.mubr.bf16.gmra.mrb[0].mxu0 %v368
        %v533 = vpop.f32.mrb[0].mxu0
        %v534 = vadd.f32 %v417, %v533
        %v535 = vpop.f32.mrb[0].mxu0
        %v536 = vpop.f32.mrb[0].mxu0
        %v537 = vadd.f32 %v417, %v536
        %v538 = vpop.f32.mrb[0].mxu0
        %539 = vmatprep.mubr.bf16.mxu0 0
        %540 = vmatmul.mubr.bf16.gmra.mrb[0].mxu0 %v369
        %v541 = vpop.f32.mrb[0].mxu0
        %v542 = vadd.f32 %v417, %v541
        %v543 = vpop.f32.mrb[0].mxu0
        %v544 = vpop.f32.mrb[0].mxu0
        %v545 = vadd.f32 %v417, %v544
        %v546 = vpop.f32.mrb[0].mxu0
        %547 = vmatprep.mubr.bf16.mxu0 0
        %548 = vmatmul.mubr.bf16.gmra.mrb[0].mxu0 %v370
        %v549 = vpop.f32.mrb[0].mxu0
        %v550 = vadd.f32 %v417, %v549
        %v551 = vpop.f32.mrb[0].mxu0
        %v552 = vpop.f32.mrb[0].mxu0
        %v553 = vadd.f32 %v417, %v552
        %v554 = vpop.f32.mrb[0].mxu0
        %555 = vmatprep.mubr.bf16.mxu0 0
        %556 = vmatmul.mubr.bf16.gmra.mrb[0].mxu0 %v371
        %v557 = vpop.f32.mrb[0].mxu0
        %v558 = vadd.f32 %v417, %v557
        %v559 = vpop.f32.mrb[0].mxu0
        %v560 = vpop.f32.mrb[0].mxu0
        %v561 = vadd.f32 %v417, %v560
        %v562 = vpop.f32.mrb[0].mxu0
        %563 = vmatprep.mubr.bf16.mxu0 0
        %564 = vmatmul.mubr.bf16.gmra.mrb[0].mxu0 %v372
        %v565 = vpop.f32.mrb[0].mxu0
        %v566 = vadd.f32 %v417, %v565
        %v567 = vpop.f32.mrb[0].mxu0
        %v568 = vpop.f32.mrb[0].mxu0
        %v569 = vadd.f32 %v417, %v568
        %v570 = vpop.f32.mrb[0].mxu0
        %571 = vmatprep.mubr.bf16.mxu0 0
        %572 = vmatmul.mubr.bf16.gmra.mrb[0].mxu0 %v373
        %v573 = vpop.f32.mrb[0].mxu0
        %v574 = vadd.f32 %v417, %v573
        %v575 = vpop.f32.mrb[0].mxu0
        %v576 = vpop.f32.mrb[0].mxu0
        %v577 = vadd.f32 %v417, %v576
        %v578 = vpop.f32.mrb[0].mxu0
        %579 = vmatprep.mubr.bf16.mxu0 0
        %580 = vmatmul.mubr.bf16.gmra.mrb[0].mxu0 %v374
        %v581 = vpop.f32.mrb[0].mxu0
        %v582 = vadd.f32 %v417, %v581
        %v583 = vpop.f32.mrb[0].mxu0
        %v584 = vpop.f32.mrb[0].mxu0
        %v585 = vadd.f32 %v417, %v584
        %v586 = vpop.f32.mrb[0].mxu0
        %587 = vmatprep.mubr.bf16.mxu0 0
        %588 = vmatmul.mubr.bf16.gmra.mrb[0].mxu0 %v375
        %v589 = vpop.f32.mrb[0].mxu0
        %v590 = vadd.f32 %v417, %v589
        %v591 = vpop.f32.mrb[0].mxu0
        %v592 = vpop.f32.mrb[0].mxu0
        %v593 = vadd.f32 %v417, %v592
        %v594 = vpop.f32.mrb[0].mxu0
        %595 = vmatprep.mubr.bf16.mxu0 0
        %596 = vmatmul.mubr.bf16.gmra.mrb[0].mxu0 %v376
        %v597 = vpop.f32.mrb[0].mxu0
        %v598 = vadd.f32 %v417, %v597
        %v599 = vpop.f32.mrb[0].mxu0
        %v600 = vpop.f32.mrb[0].mxu0
        %v601 = vadd.f32 %v417, %v600
        %v602 = vpop.f32.mrb[0].mxu0
        %603 = vmatprep.mubr.bf16.mxu0 0
        %604 = vmatmul.mubr.bf16.gmra.mrb[0].mxu0 %v377
        %v605 = vpop.f32.mrb[0].mxu0
        %v606 = vadd.f32 %v417, %v605
        %v607 = vpop.f32.mrb[0].mxu0
        %v608 = vpop.f32.mrb[0].mxu0
        %v609 = vadd.f32 %v417, %v608
        %v610 = vpop.f32.mrb[0].mxu0
        %611 = vmatprep.mubr.bf16.mxu0 0
        %612 = vmatmul.mubr.bf16.gmra.mrb[0].mxu0 %v378
        %v613 = vpop.f32.mrb[0].mxu0
        %v614 = vadd.f32 %v417, %v613
        %v615 = vpop.f32.mrb[0].mxu0
        %v616 = vpop.f32.mrb[0].mxu0
        %v617 = vadd.f32 %v417, %v616
        %v618 = vpop.f32.mrb[0].mxu0
        %619 = vmatprep.mubr.bf16.mxu0 0
        %620 = vmatmul.mubr.bf16.gmra.mrb[0].mxu0 %v379
        %v621 = vpop.f32.mrb[0].mxu0
        %v622 = vadd.f32 %v417, %v621
        %v623 = vpop.f32.mrb[0].mxu0
        %v624 = vpop.f32.mrb[0].mxu0
        %v625 = vadd.f32 %v417, %v624
        %v626 = vpop.f32.mrb[0].mxu0
        %627 = vmatprep.mubr.bf16.mxu0 0
        %628 = vmatmul.mubr.bf16.gmra.mrb[0].mxu0 %v380
        %v629 = vpop.f32.mrb[0].mxu0
        %v630 = vadd.f32 %v417, %v629
        %v631 = vpop.f32.mrb[0].mxu0
        %v632 = vpop.f32.mrb[0].mxu0
        %v633 = vadd.f32 %v417, %v632
        %v634 = vpop.f32.mrb[0].mxu0
        %635 = vmatprep.mubr.bf16.mxu0 0
        %636 = vmatmul.mubr.bf16.gmra.mrb[0].mxu0 %v381
        %v637 = vpop.f32.mrb[0].mxu0
        %v638 = vadd.f32 %v417, %v637
        %v639 = vpop.f32.mrb[0].mxu0
        %v640 = vpop.f32.mrb[0].mxu0
        %v641 = vadd.f32 %v417, %v640
        %v642 = vpop.f32.mrb[0].mxu0
        %643 = vmatprep.mubr.bf16.mxu0 0
        %644 = vmatmul.mubr.bf16.gmra.mrb[0].mxu0 %v382
        %v645 = vpop.f32.mrb[0].mxu0
        %v646 = vadd.f32 %v417, %v645
        %v647 = vpop.f32.mrb[0].mxu0
        %v648 = vpop.f32.mrb[0].mxu0
        %v649 = vadd.f32 %v417, %v648
        %v650 = vpop.f32.mrb[0].mxu0
        %651 = vmatprep.mubr.bf16.mxu0 0
        %652 = vmatmul.mubr.bf16.gmra.mrb[0].mxu0 %v383
        %v653 = vpop.f32.mrb[0].mxu0
        %v654 = vadd.f32 %v417, %v653
        %v655 = vpop.f32.mrb[0].mxu0
        %v656 = vpop.f32.mrb[0].mxu0
        %v657 = vadd.f32 %v417, %v656
        %v658 = vpop.f32.mrb[0].mxu0
        %659 = vmatprep.mubr.bf16.mxu0 0
        %660 = vmatmul.mubr.bf16.gmra.mrb[0].mxu0 %v384
        %v661 = vpop.f32.mrb[0].mxu0
        %v662 = vadd.f32 %v417, %v661
        %v663 = vpop.f32.mrb[0].mxu0
        %v664 = vpop.f32.mrb[0].mxu0
        %v665 = vadd.f32 %v417, %v664
        %v666 = vpop.f32.mrb[0].mxu0
        %667 = vmatprep.mubr.bf16.mxu0 0
        %668 = vmatmul.mubr.bf16.gmra.mrb[0].mxu0 %v385
        %v669 = vpop.f32.mrb[0].mxu0
        %v670 = vadd.f32 %v417, %v669
        %v671 = vpop.f32.mrb[0].mxu0
        %v672 = vpop.f32.mrb[0].mxu0
        %v673 = vadd.f32 %v417, %v672
        %v674 = vpop.f32.mrb[0].mxu0
        %675 = vmatprep.mubr.bf16.mxu0 0
        %676 = vmatmul.mubr.bf16.gmra.mrb[0].mxu0 %v386
        %v677 = vpop.f32.mrb[0].mxu0
        %v678 = vadd.f32 %v417, %v677
        %v679 = vpop.f32.mrb[0].mxu0
        %v680 = vpop.f32.mrb[0].mxu0
        %v681 = vadd.f32 %v417, %v680
        %v682 = vpop.f32.mrb[0].mxu0
        %683 = vmatprep.mubr.bf16.mxu0 0
        %684 = vmatmul.mubr.bf16.gmra.mrb[0].mxu0 %v387
        %v685 = vpop.f32.mrb[0].mxu0
        %v686 = vadd.f32 %v417, %v685
        %v687 = vpop.f32.mrb[0].mxu0
        %v688 = vpop.f32.mrb[0].mxu0
        %v689 = vadd.f32 %v417, %v688
        %v690 = vpop.f32.mrb[0].mxu0
        %691 = vmatprep.mubr.bf16.mxu0 0
        %692 = vmatmul.mubr.bf16.gmra.mrb[0].mxu0 %v388
        %v693 = vpop.f32.mrb[0].mxu0
        %v694 = vadd.f32 %v417, %v693
        %v695 = vpop.f32.mrb[0].mxu0
        %v696 = vpop.f32.mrb[0].mxu0
        %v697 = vadd.f32 %v417, %v696
        %v698 = vpop.f32.mrb[0].mxu0
        %699 = vmatprep.mubr.bf16.mxu0 0
        %700 = vmatmul.mubr.bf16.gmra.mrb[0].mxu0 %v389
        %v701 = vpop.f32.mrb[0].mxu0
        %v702 = vadd.f32 %v417, %v701
        %v703 = vpop.f32.mrb[0].mxu0
        %v704 = vpop.f32.mrb[0].mxu0
        %v705 = vadd.f32 %v417, %v704
        %v706 = vpop.f32.mrb[0].mxu0
        %707 = vmatprep.mubr.bf16.mxu0 0
        %708 = vmatmul.mubr.bf16.gmra.mrb[0].mxu0 %v390
        %v709 = vpop.f32.mrb[0].mxu0
        %v710 = vadd.f32 %v417, %v709
        %v711 = vpop.f32.mrb[0].mxu0
        %v712 = vpop.f32.mrb[0].mxu0
        %v713 = vadd.f32 %v417, %v712
        %v714 = vpop.f32.mrb[0].mxu0
        %715 = vmatprep.mubr.bf16.mxu0 0
        %716 = vmatmul.mubr.bf16.gmra.mrb[0].mxu0 %v391
        %v717 = vpop.f32.mrb[0].mxu0
        %v718 = vadd.f32 %v417, %v717
        %v719 = vpop.f32.mrb[0].mxu0
        %v720 = vpop.f32.mrb[0].mxu0
        %v721 = vadd.f32 %v417, %v720
        %v722 = vpop.f32.mrb[0].mxu0
        %723 = vmatprep.mubr.bf16.mxu0 0
        %724 = vmatmul.mubr.bf16.gmra.mrb[0].mxu0 %v392
        %v725 = vpop.f32.mrb[0].mxu0
        %v726 = vadd.f32 %v417, %v725
        %v727 = vpop.f32.mrb[0].mxu0
        %v728 = vpop.f32.mrb[0].mxu0
        %v729 = vadd.f32 %v417, %v728
        %v730 = vpop.f32.mrb[0].mxu0
        %731 = vmatprep.mubr.bf16.mxu0 0
        %732 = vmatmul.mubr.bf16.gmra.mrb[0].mxu0 %v393
        %v733 = vpop.f32.mrb[0].mxu0
        %v734 = vadd.f32 %v417, %v733
        %v735 = vpop.f32.mrb[0].mxu0
        %v736 = vpop.f32.mrb[0].mxu0
        %v737 = vadd.f32 %v417, %v736
        %v738 = vpop.f32.mrb[0].mxu0
        %739 = vmatprep.mubr.bf16.mxu0 0
        %740 = vmatmul.mubr.bf16.gmra.mrb[0].mxu0 %v394
        %v741 = vpop.f32.mrb[0].mxu0
        %v742 = vadd.f32 %v417, %v741
        %v743 = vpop.f32.mrb[0].mxu0
        %v744 = vpop.f32.mrb[0].mxu0
        %v745 = vadd.f32 %v417, %v744
        %v746 = vpop.f32.mrb[0].mxu0
        %747 = vmatprep.mubr.bf16.mxu0 0
        %748 = vmatmul.mubr.bf16.gmra.mrb[0].mxu0 %v395
        %v749 = vpop.f32.mrb[0].mxu0
        %v750 = vadd.f32 %v417, %v749
        %v751 = vpop.f32.mrb[0].mxu0
        %v752 = vpop.f32.mrb[0].mxu0
        %v753 = vadd.f32 %v417, %v752
        %v754 = vpop.f32.mrb[0].mxu0
        %755 = vdwg.mxu0
        %v756 = vmax.f32 %v502, 0.0
        %v757 = vmax.f32 %v505, 0.0
        %v758 = vmax.f32 %v510, 0.0
        %v759 = vmax.f32 %v513, 0.0
        %v760 = vmax.f32 %v518, 0.0
        %v761 = vmax.f32 %v521, 0.0
        %v762 = vmax.f32 %v526, 0.0
        %v763 = vmax.f32 %v529, 0.0
        %v764 = vmax.f32 %v534, 0.0
        %v765 = vmax.f32 %v537, 0.0
        %v766 = vmax.f32 %v542, 0.0
        %v767 = vmax.f32 %v545, 0.0
        %v768 = vmax.f32 %v550, 0.0
        %v769 = vmax.f32 %v553, 0.0
        %v770 = vmax.f32 %v558, 0.0
        %v771 = vmax.f32 %v561, 0.0
        %v772 = vmax.f32 %v566, 0.0
        %v773 = vmax.f32 %v569, 0.0
        %v774 = vmax.f32 %v574, 0.0
        %v775 = vmax.f32 %v577, 0.0
        %v776 = vmax.f32 %v582, 0.0
        %v777 = vmax.f32 %v585, 0.0
        %v778 = vmax.f32 %v590, 0.0
        %v779 = vmax.f32 %v593, 0.0
        %v780 = vmax.f32 %v598, 0.0
        %v781 = vmax.f32 %v601, 0.0
        %v782 = vmax.f32 %v606, 0.0
        %v783 = vmax.f32 %v609, 0.0
        %v784 = vmax.f32 %v614, 0.0
        %v785 = vmax.f32 %v617, 0.0
        %v786 = vmax.f32 %v622, 0.0
        %v787 = vmax.f32 %v625, 0.0
        %v788 = vmax.f32 %v630, 0.0
        %v789 = vmax.f32 %v633, 0.0
        %v790 = vmax.f32 %v638, 0.0
        %v791 = vmax.f32 %v641, 0.0
        %v792 = vmax.f32 %v646, 0.0
        %v793 = vmax.f32 %v649, 0.0
        %v794 = vmax.f32 %v654, 0.0
        %v795 = vmax.f32 %v657, 0.0
        %v796 = vmax.f32 %v662, 0.0
        %v797 = vmax.f32 %v665, 0.0
        %v798 = vmax.f32 %v670, 0.0
        %v799 = vmax.f32 %v673, 0.0
        %v800 = vmax.f32 %v678, 0.0
        %v801 = vmax.f32 %v681, 0.0
        %v802 = vmax.f32 %v686, 0.0
        %v803 = vmax.f32 %v689, 0.0
        %v804 = vmax.f32 %v694, 0.0
        %v805 = vmax.f32 %v697, 0.0
        %v806 = vmax.f32 %v702, 0.0
        %v807 = vmax.f32 %v705, 0.0
        %v808 = vmax.f32 %v710, 0.0
        %v809 = vmax.f32 %v713, 0.0
        %v810 = vmax.f32 %v718, 0.0
        %v811 = vmax.f32 %v721, 0.0
        %v812 = vmax.f32 %v726, 0.0
        %v813 = vmax.f32 %v729, 0.0
        %v814 = vmax.f32 %v734, 0.0
        %v815 = vmax.f32 %v737, 0.0
        %v816 = vmax.f32 %v742, 0.0
        %v817 = vmax.f32 %v745, 0.0
        %v818 = vmax.f32 %v750, 0.0
        %v819 = vmax.f32 %v753, 0.0
        %v820 = vpack.c.bf16 %v757, %v756
        %v821 = vpack.c.bf16 %v759, %v758
        %v822 = vpack.c.bf16 %v761, %v760
        %v823 = vpack.c.bf16 %v763, %v762
        %v824 = vpack.c.bf16 %v765, %v764
        %v825 = vpack.c.bf16 %v767, %v766
        %v826 = vpack.c.bf16 %v769, %v768
        %v827 = vpack.c.bf16 %v771, %v770
        %v828 = vpack.c.bf16 %v773, %v772
        %v829 = vpack.c.bf16 %v775, %v774
        %v830 = vpack.c.bf16 %v777, %v776
        %v831 = vpack.c.bf16 %v779, %v778
        %v832 = vpack.c.bf16 %v781, %v780
        %v833 = vpack.c.bf16 %v783, %v782
        %v834 = vpack.c.bf16 %v785, %v784
        %v835 = vpack.c.bf16 %v787, %v786
        %v836 = vpack.c.bf16 %v789, %v788
        %v837 = vpack.c.bf16 %v791, %v790
        %v838 = vpack.c.bf16 %v793, %v792
        %v839 = vpack.c.bf16 %v795, %v794
        %v840 = vpack.c.bf16 %v797, %v796
        %v841 = vpack.c.bf16 %v799, %v798
        %v842 = vpack.c.bf16 %v801, %v800
        %v843 = vpack.c.bf16 %v803, %v802
        %v844 = vpack.c.bf16 %v805, %v804
        %v845 = vpack.c.bf16 %v807, %v806
        %v846 = vpack.c.bf16 %v809, %v808
        %v847 = vpack.c.bf16 %v811, %v810
        %v848 = vpack.c.bf16 %v813, %v812
        %v849 = vpack.c.bf16 %v815, %v814
        %v850 = vpack.c.bf16 %v817, %v816
        %v851 = vpack.c.bf16 %v819, %v818
        %vm852 = vcmask 257024
        %853 = vst.msk [vmem:[#allocation2] sm:$0xf] %vm852, 0
        %854 = vst.msk [vmem:[#allocation2 + $0x4] sm:$0xf] %vm852, 0
        %855 = vst.msk [vmem:[#allocation2 + $0x8] sm:$0xf] %vm852, 0
        %856 = vst.msk [vmem:[#allocation2 + $0xc] sm:$0xf] %vm852, 0
        %857 = vst.msk [vmem:[#allocation2 + $0x10] sm:$0xf] %vm852, 0
        %858 = vst.msk [vmem:[#allocation2 + $0x14] sm:$0xf] %vm852, 0
        %859 = vst.msk [vmem:[#allocation2 + $0x18] sm:$0xf] %vm852, 0
        %860 = vst.msk [vmem:[#allocation2 + $0x1c] sm:$0xf] %vm852, 0
        %861 = vst.msk [vmem:[#allocation2 + $0x20] sm:$0xf] %vm852, 0
        %862 = vst.msk [vmem:[#allocation2 + $0x24] sm:$0xf] %vm852, 0
        %863 = vst.msk [vmem:[#allocation2 + $0x28] sm:$0xf] %vm852, 0
        %864 = vst.msk [vmem:[#allocation2 + $0x2c] sm:$0xf] %vm852, 0
        %865 = vst.msk [vmem:[#allocation2 + $0x30] sm:$0xf] %vm852, 0
        %866 = vst.msk [vmem:[#allocation2 + $0x34] sm:$0xf] %vm852, 0
        %867 = vst.msk [vmem:[#allocation2 + $0x38] sm:$0xf] %vm852, 0
        %868 = vst.msk [vmem:[#allocation2 + $0x3c] sm:$0xf] %vm852, 0
        %869 = vst.msk [vmem:[#allocation2 + $0x40] sm:$0xf] %vm852, 0
        %870 = vst.msk [vmem:[#allocation2 + $0x44] sm:$0xf] %vm852, 0
        %871 = vst.msk [vmem:[#allocation2 + $0x48] sm:$0xf] %vm852, 0
        %872 = vst.msk [vmem:[#allocation2 + $0x4c] sm:$0xf] %vm852, 0
        %873 = vst.msk [vmem:[#allocation2 + $0x50] sm:$0xf] %vm852, 0
        %874 = vst.msk [vmem:[#allocation2 + $0x54] sm:$0xf] %vm852, 0
        %875 = vst.msk [vmem:[#allocation2 + $0x58] sm:$0xf] %vm852, 0
        %876 = vst.msk [vmem:[#allocation2 + $0x5c] sm:$0xf] %vm852, 0
        %877 = vst.msk [vmem:[#allocation2 + $0x60] sm:$0xf] %vm852, 0
        %878 = vst.msk [vmem:[#allocation2 + $0x64] sm:$0xf] %vm852, 0
        %879 = vst.msk [vmem:[#allocation2 + $0x68] sm:$0xf] %vm852, 0
        %880 = vst.msk [vmem:[#allocation2 + $0x6c] sm:$0xf] %vm852, 0
        %881 = vst.msk [vmem:[#allocation2 + $0x70] sm:$0xf] %vm852, 0
        %882 = vst.msk [vmem:[#allocation2 + $0x74] sm:$0xf] %vm852, 0
        %883 = vst.msk [vmem:[#allocation2 + $0x78] sm:$0xf] %vm852, 0
        %884 = vst.msk [vmem:[#allocation2 + $0x7c] sm:$0xf] %vm852, 0
        %885 = vst.msk [vmem:[#allocation2 + $0x80] sm:$0xf] %vm852, 0
        %886 = vst.msk [vmem:[#allocation2 + $0x84] sm:$0xf] %vm852, 0
        %887 = vst.msk [vmem:[#allocation2 + $0x88] sm:$0xf] %vm852, 0
        %888 = vst.msk [vmem:[#allocation2 + $0x8c] sm:$0xf] %vm852, 0
        %889 = vst.msk [vmem:[#allocation2 + $0x90] sm:$0xf] %vm852, 0
        %890 = vst.msk [vmem:[#allocation2 + $0x94] sm:$0xf] %vm852, 0
        %891 = vst.msk [vmem:[#allocation2 + $0x98] sm:$0xf] %vm852, 0
        %892 = vst.msk [vmem:[#allocation2 + $0x9c] sm:$0xf] %vm852, 0
        %893 = vst.msk [vmem:[#allocation2 + $0xa0] sm:$0xf] %vm852, 0
        %894 = vst.msk [vmem:[#allocation2 + $0xa4] sm:$0xf] %vm852, 0
        %895 = vst.msk [vmem:[#allocation2 + $0xa8] sm:$0xf] %vm852, 0
        %896 = vst.msk [vmem:[#allocation2 + $0xac] sm:$0xf] %vm852, 0
        %897 = vst.msk [vmem:[#allocation2 + $0xb0] sm:$0xf] %vm852, 0
        %898 = vst.msk [vmem:[#allocation2 + $0xb4] sm:$0xf] %vm852, 0
        %899 = vst.msk [vmem:[#allocation2 + $0xb8] sm:$0xf] %vm852, 0
        %900 = vst.msk [vmem:[#allocation2 + $0xbc] sm:$0xf] %vm852, 0
        %901 = vst.msk [vmem:[#allocation2 + $0xc0] sm:$0xf] %vm852, 0
        %902 = vst.msk [vmem:[#allocation2 + $0xc4] sm:$0xf] %vm852, 0
        %903 = vst.msk [vmem:[#allocation2 + $0xc8] sm:$0xf] %vm852, 0
        %904 = vst.msk [vmem:[#allocation2 + $0xcc] sm:$0xf] %vm852, 0
        %905 = vst.msk [vmem:[#allocation2 + $0xd0] sm:$0xf] %vm852, 0
        %906 = vst.msk [vmem:[#allocation2 + $0xd4] sm:$0xf] %vm852, 0
        %907 = vst.msk [vmem:[#allocation2 + $0xd8] sm:$0xf] %vm852, 0
        %908 = vst.msk [vmem:[#allocation2 + $0xdc] sm:$0xf] %vm852, 0
        %909 = vst.msk [vmem:[#allocation2 + $0xe0] sm:$0xf] %vm852, 0
        %910 = vst.msk [vmem:[#allocation2 + $0xe4] sm:$0xf] %vm852, 0
        %911 = vst.msk [vmem:[#allocation2 + $0xe8] sm:$0xf] %vm852, 0
        %912 = vst.msk [vmem:[#allocation2 + $0xec] sm:$0xf] %vm852, 0
        %913 = vst.msk [vmem:[#allocation2 + $0xf0] sm:$0xf] %vm852, 0
        %914 = vst.msk [vmem:[#allocation2 + $0xf4] sm:$0xf] %vm852, 0
        %915 = vst.msk [vmem:[#allocation2 + $0xf8] sm:$0xf] %vm852, 0
        %916 = vst.msk [vmem:[#allocation2 + $0xfc] sm:$0xf] %vm852, 0
        %917 = vst.msk [vmem:[#allocation2 + $0x100] sm:$0xf] %vm852, 0
        %918 = vst.msk [vmem:[#allocation2 + $0x104] sm:$0xf] %vm852, 0
        %919 = vst.msk [vmem:[#allocation2 + $0x108] sm:$0xf] %vm852, 0
        %920 = vst.msk [vmem:[#allocation2 + $0x10c] sm:$0xf] %vm852, 0
        %921 = vst.msk [vmem:[#allocation2 + $0x110] sm:$0xf] %vm852, 0
        %922 = vst.msk [vmem:[#allocation2 + $0x114] sm:$0xf] %vm852, 0
        %923 = vst.msk [vmem:[#allocation2 + $0x118] sm:$0xf] %vm852, 0
        %924 = vst.msk [vmem:[#allocation2 + $0x11c] sm:$0xf] %vm852, 0
        %925 = vst.msk [vmem:[#allocation2 + $0x120] sm:$0xf] %vm852, 0
        %926 = vst.msk [vmem:[#allocation2 + $0x124] sm:$0xf] %vm852, 0
        %927 = vst.msk [vmem:[#allocation2 + $0x128] sm:$0xf] %vm852, 0
        %928 = vst.msk [vmem:[#allocation2 + $0x12c] sm:$0xf] %vm852, 0
        %929 = vst.msk [vmem:[#allocation2 + $0x130] sm:$0xf] %vm852, 0
        %930 = vst.msk [vmem:[#allocation2 + $0x134] sm:$0xf] %vm852, 0
        %931 = vst.msk [vmem:[#allocation2 + $0x138] sm:$0xf] %vm852, 0
        %932 = vst.msk [vmem:[#allocation2 + $0x13c] sm:$0xf] %vm852, 0
        %933 = vst.msk [vmem:[#allocation2 + $0x140] sm:$0xf] %vm852, 0
        %934 = vst.msk [vmem:[#allocation2 + $0x144] sm:$0xf] %vm852, 0
        %935 = vst.msk [vmem:[#allocation2 + $0x148] sm:$0xf] %vm852, 0
        %936 = vst.msk [vmem:[#allocation2 + $0x14c] sm:$0xf] %vm852, 0
        %937 = vst.msk [vmem:[#allocation2 + $0x150] sm:$0xf] %vm852, 0
        %vm938 = vcmask 256000
        %939 = vst.msk [vmem:[#allocation2 + $0x154] sm:$0x7] %vm938, 0
        %v941 = vunpack.c.l.b16 %v820
        %v942 = vunpack.c.h.b16 %v820
        %v943 = vpack.c.b16 %v941, %v941
        %v944 = vpack.c.b16 %v942, %v942
        %vm945 = vcmask 1042432
        %vm946 = vcmask 1046532
        %vm947 = vmor %vm945, %vm946
        %v948 = vrot.slane %v943, 5
        %v949 = vrot.slane %v948, 4
        %v950 = vrot.slane %v944, 5
        %v951 = vsel %vm947, %v949, %v950
        %v952 = vrot.slane %v950, 4
        %vm956 = vcmask 257027
        %957 = vst.msk [vmem:[#allocation2 + $0x10] sm:$0x8] %vm956, %v948
        %958 = vst.msk [vmem:[#allocation2 + $0x14] sm:$0xf] %vm852, %v951
        %959 = vst.msk [vmem:[#allocation2 + $0x18] sm:$0x7] %vm938, %v952
        %v961 = vunpack.c.l.b16 %v821
        %v962 = vunpack.c.h.b16 %v821
        %v963 = vpack.c.b16 %v961, %v961
        %v964 = vpack.c.b16 %v962, %v962
        %967 = vst.msk [vmem:[#allocation2 + $0x1c] sm:$0xf] %vm852, %v963
        %968 = vst.msk [vmem:[#allocation2 + $0x20] sm:$0xf] %vm852, %v964
        %v970 = vunpack.c.l.b16 %v822
        %v971 = vunpack.c.h.b16 %v822
        %v972 = vpack.c.b16 %v970, %v970
        %v973 = vpack.c.b16 %v971, %v971
        %vm974 = vcmask 1040384
        %vm975 = vcmask 1044484
        %vm976 = vmor %vm974, %vm975
        %v977 = vrot.slane %v972, 7
        %v978 = vrot.slane %v977, 4
        %v979 = vrot.slane %v973, 7
        %v980 = vsel %vm976, %v978, %v979
        %v981 = vrot.slane %v979, 4
        %vm985 = vcmask 257025
        %986 = vst.msk [vmem:[#allocation2 + $0x24] sm:$0xe] %vm985, %v977
        %987 = vst.msk [vmem:[#allocation2 + $0x28] sm:$0xf] %vm852, %v980
        %vm988 = vcmask 253952
        %989 = vst.msk [vmem:[#allocation2 + $0x2c] sm:$0x1] %vm988, %v981
        %v991 = vunpack.c.l.b16 %v823
        %v992 = vunpack.c.h.b16 %v823
        %v993 = vpack.c.b16 %v991, %v991
        %v994 = vpack.c.b16 %v992, %v992
        %vm995 = vcmask 1041408
        %vm996 = vcmask 1045508
        %vm997 = vmor %vm995, %vm996
        %v998 = vrot.slane %v993, 6
        %v999 = vrot.slane %v998, 4
        %v1000 = vrot.slane %v994, 6
        %v1001 = vsel %vm997, %v999, %v1000
        %v1002 = vrot.slane %v1000, 4
        %vm1006 = vcmask 257026
        %1007 = vst.msk [vmem:[#allocation2 + $0x2c] sm:$0xc] %vm1006, %v998
        %1008 = vst.msk [vmem:[#allocation2 + $0x30] sm:$0xf] %vm852, %v1001
        %vm1009 = vcmask 254976
        %1010 = vst.msk [vmem:[#allocation2 + $0x34] sm:$0x3] %vm1009, %v1002
        %v1012 = vunpack.c.l.b16 %v824
        %v1013 = vunpack.c.h.b16 %v824
        %v1014 = vpack.c.b16 %v1012, %v1012
        %v1015 = vpack.c.b16 %v1013, %v1013
        %v1016 = vrot.slane %v1014, 5
        %v1017 = vrot.slane %v1016, 4
        %v1018 = vrot.slane %v1015, 5
        %v1019 = vsel %vm947, %v1017, %v1018
        %v1020 = vrot.slane %v1018, 4
        %1024 = vst.msk [vmem:[#allocation2 + $0x34] sm:$0x8] %vm956, %v1016
        %1025 = vst.msk [vmem:[#allocation2 + $0x38] sm:$0xf] %vm852, %v1019
        %1026 = vst.msk [vmem:[#allocation2 + $0x3c] sm:$0x7] %vm938, %v1020
        %v1028 = vunpack.c.l.b16 %v825
        %v1029 = vunpack.c.h.b16 %v825
        %v1030 = vpack.c.b16 %v1028, %v1028
        %v1031 = vpack.c.b16 %v1029, %v1029
        %1034 = vst.msk [vmem:[#allocation2 + $0x40] sm:$0xf] %vm852, %v1030
        %1035 = vst.msk [vmem:[#allocation2 + $0x44] sm:$0xf] %vm852, %v1031
        %v1037 = vunpack.c.l.b16 %v826
        %v1038 = vunpack.c.h.b16 %v826
        %v1039 = vpack.c.b16 %v1037, %v1037
        %v1040 = vpack.c.b16 %v1038, %v1038
        %v1041 = vrot.slane %v1039, 7
        %v1042 = vrot.slane %v1041, 4
        %v1043 = vrot.slane %v1040, 7
        %v1044 = vsel %vm976, %v1042, %v1043
        %v1045 = vrot.slane %v1043, 4
        %1049 = vst.msk [vmem:[#allocation2 + $0x48] sm:$0xe] %vm985, %v1041
        %1050 = vst.msk [vmem:[#allocation2 + $0x4c] sm:$0xf] %vm852, %v1044
        %1051 = vst.msk [vmem:[#allocation2 + $0x50] sm:$0x1] %vm988, %v1045
        %v1053 = vunpack.c.l.b16 %v827
        %v1054 = vunpack.c.h.b16 %v827
        %v1055 = vpack.c.b16 %v1053, %v1053
        %v1056 = vpack.c.b16 %v1054, %v1054
        %v1057 = vrot.slane %v1055, 6
        %v1058 = vrot.slane %v1057, 4
        %v1059 = vrot.slane %v1056, 6
        %v1060 = vsel %vm997, %v1058, %v1059
        %v1061 = vrot.slane %v1059, 4
        %1065 = vst.msk [vmem:[#allocation2 + $0x50] sm:$0xc] %vm1006, %v1057
        %1066 = vst.msk [vmem:[#allocation2 + $0x54] sm:$0xf] %vm852, %v1060
        %1067 = vst.msk [vmem:[#allocation2 + $0x58] sm:$0x3] %vm1009, %v1061
        %v1069 = vunpack.c.l.b16 %v828
        %v1070 = vunpack.c.h.b16 %v828
        %v1071 = vpack.c.b16 %v1069, %v1069
        %v1072 = vpack.c.b16 %v1070, %v1070
        %v1073 = vrot.slane %v1071, 5
        %v1074 = vrot.slane %v1073, 4
        %v1075 = vrot.slane %v1072, 5
        %v1076 = vsel %vm947, %v1074, %v1075
        %v1077 = vrot.slane %v1075, 4
        %1081 = vst.msk [vmem:[#allocation2 + $0x58] sm:$0x8] %vm956, %v1073
        %1082 = vst.msk [vmem:[#allocation2 + $0x5c] sm:$0xf] %vm852, %v1076
        %1083 = vst.msk [vmem:[#allocation2 + $0x60] sm:$0x7] %vm938, %v1077
        %v1085 = vunpack.c.l.b16 %v829
        %v1086 = vunpack.c.h.b16 %v829
        %v1087 = vpack.c.b16 %v1085, %v1085
        %v1088 = vpack.c.b16 %v1086, %v1086
        %1091 = vst.msk [vmem:[#allocation2 + $0x64] sm:$0xf] %vm852, %v1087
        %1092 = vst.msk [vmem:[#allocation2 + $0x68] sm:$0xf] %vm852, %v1088
        %v1094 = vunpack.c.l.b16 %v830
        %v1095 = vunpack.c.h.b16 %v830
        %v1096 = vpack.c.b16 %v1094, %v1094
        %v1097 = vpack.c.b16 %v1095, %v1095
        %v1098 = vrot.slane %v1096, 7
        %v1099 = vrot.slane %v1098, 4
        %v1100 = vrot.slane %v1097, 7
        %v1101 = vsel %vm976, %v1099, %v1100
        %v1102 = vrot.slane %v1100, 4
        %1106 = vst.msk [vmem:[#allocation2 + $0x6c] sm:$0xe] %vm985, %v1098
        %1107 = vst.msk [vmem:[#allocation2 + $0x70] sm:$0xf] %vm852, %v1101
        %1108 = vst.msk [vmem:[#allocation2 + $0x74] sm:$0x1] %vm988, %v1102
        %v1110 = vunpack.c.l.b16 %v831
        %v1111 = vunpack.c.h.b16 %v831
        %v1112 = vpack.c.b16 %v1110, %v1110
        %v1113 = vpack.c.b16 %v1111, %v1111
        %v1114 = vrot.slane %v1112, 6
        %v1115 = vrot.slane %v1114, 4
        %v1116 = vrot.slane %v1113, 6
        %v1117 = vsel %vm997, %v1115, %v1116
        %v1118 = vrot.slane %v1116, 4
        %1122 = vst.msk [vmem:[#allocation2 + $0x74] sm:$0xc] %vm1006, %v1114
        %1123 = vst.msk [vmem:[#allocation2 + $0x78] sm:$0xf] %vm852, %v1117
        %1124 = vst.msk [vmem:[#allocation2 + $0x7c] sm:$0x3] %vm1009, %v1118
        %v1126 = vunpack.c.l.b16 %v832
        %v1127 = vunpack.c.h.b16 %v832
        %v1128 = vpack.c.b16 %v1126, %v1126
        %v1129 = vpack.c.b16 %v1127, %v1127
        %v1130 = vrot.slane %v1128, 5
        %v1131 = vrot.slane %v1130, 4
        %v1132 = vrot.slane %v1129, 5
        %v1133 = vsel %vm947, %v1131, %v1132
        %v1134 = vrot.slane %v1132, 4
        %1138 = vst.msk [vmem:[#allocation2 + $0x7c] sm:$0x8] %vm956, %v1130
        %1139 = vst.msk [vmem:[#allocation2 + $0x80] sm:$0xf] %vm852, %v1133
        %1140 = vst.msk [vmem:[#allocation2 + $0x84] sm:$0x7] %vm938, %v1134
        %v1142 = vunpack.c.l.b16 %v833
        %v1143 = vunpack.c.h.b16 %v833
        %v1144 = vpack.c.b16 %v1142, %v1142
        %v1145 = vpack.c.b16 %v1143, %v1143
        %1148 = vst.msk [vmem:[#allocation2 + $0x88] sm:$0xf] %vm852, %v1144
        %1149 = vst.msk [vmem:[#allocation2 + $0x8c] sm:$0xf] %vm852, %v1145
        %v1151 = vunpack.c.l.b16 %v834
        %v1152 = vunpack.c.h.b16 %v834
        %v1153 = vpack.c.b16 %v1151, %v1151
        %v1154 = vpack.c.b16 %v1152, %v1152
        %v1155 = vrot.slane %v1153, 7
        %v1156 = vrot.slane %v1155, 4
        %v1157 = vrot.slane %v1154, 7
        %v1158 = vsel %vm976, %v1156, %v1157
        %v1159 = vrot.slane %v1157, 4
        %1163 = vst.msk [vmem:[#allocation2 + $0x90] sm:$0xe] %vm985, %v1155
        %1164 = vst.msk [vmem:[#allocation2 + $0x94] sm:$0xf] %vm852, %v1158
        %1165 = vst.msk [vmem:[#allocation2 + $0x98] sm:$0x1] %vm988, %v1159
        %v1167 = vunpack.c.l.b16 %v835
        %v1168 = vunpack.c.h.b16 %v835
        %v1169 = vpack.c.b16 %v1167, %v1167
        %v1170 = vpack.c.b16 %v1168, %v1168
        %v1171 = vrot.slane %v1169, 6
        %v1172 = vrot.slane %v1171, 4
        %v1173 = vrot.slane %v1170, 6
        %v1174 = vsel %vm997, %v1172, %v1173
        %v1175 = vrot.slane %v1173, 4
        %1179 = vst.msk [vmem:[#allocation2 + $0x98] sm:$0xc] %vm1006, %v1171
        %1180 = vst.msk [vmem:[#allocation2 + $0x9c] sm:$0xf] %vm852, %v1174
        %1181 = vst.msk [vmem:[#allocation2 + $0xa0] sm:$0x3] %vm1009, %v1175
        %v1183 = vunpack.c.l.b16 %v836
        %v1184 = vunpack.c.h.b16 %v836
        %v1185 = vpack.c.b16 %v1183, %v1183
        %v1186 = vpack.c.b16 %v1184, %v1184
        %v1187 = vrot.slane %v1185, 7
        %v1188 = vrot.slane %v1187, 4
        %v1189 = vrot.slane %v1186, 7
        %v1190 = vsel %vm976, %v1188, %v1189
        %v1191 = vrot.slane %v1189, 4
        %1195 = vst.msk [vmem:[#allocation2 + $0xb4] sm:$0xe] %vm985, %v1187
        %1196 = vst.msk [vmem:[#allocation2 + $0xb8] sm:$0xf] %vm852, %v1190
        %1197 = vst.msk [vmem:[#allocation2 + $0xbc] sm:$0x1] %vm988, %v1191
        %v1199 = vunpack.c.l.b16 %v837
        %v1200 = vunpack.c.h.b16 %v837
        %v1201 = vpack.c.b16 %v1199, %v1199
        %v1202 = vpack.c.b16 %v1200, %v1200
        %v1203 = vrot.slane %v1201, 6
        %v1204 = vrot.slane %v1203, 4
        %v1205 = vrot.slane %v1202, 6
        %v1206 = vsel %vm997, %v1204, %v1205
        %v1207 = vrot.slane %v1205, 4
        %1211 = vst.msk [vmem:[#allocation2 + $0xbc] sm:$0xc] %vm1006, %v1203
        %1212 = vst.msk [vmem:[#allocation2 + $0xc0] sm:$0xf] %vm852, %v1206
        %1213 = vst.msk [vmem:[#allocation2 + $0xc4] sm:$0x3] %vm1009, %v1207
        %v1215 = vunpack.c.l.b16 %v838
        %v1216 = vunpack.c.h.b16 %v838
        %v1217 = vpack.c.b16 %v1215, %v1215
        %v1218 = vpack.c.b16 %v1216, %v1216
        %v1219 = vrot.slane %v1217, 5
        %v1220 = vrot.slane %v1219, 4
        %v1221 = vrot.slane %v1218, 5
        %v1222 = vsel %vm947, %v1220, %v1221
        %v1223 = vrot.slane %v1221, 4
        %1227 = vst.msk [vmem:[#allocation2 + $0xc4] sm:$0x8] %vm956, %v1219
        %1228 = vst.msk [vmem:[#allocation2 + $0xc8] sm:$0xf] %vm852, %v1222
        %1229 = vst.msk [vmem:[#allocation2 + $0xcc] sm:$0x7] %vm938, %v1223
        %v1231 = vunpack.c.l.b16 %v839
        %v1232 = vunpack.c.h.b16 %v839
        %v1233 = vpack.c.b16 %v1231, %v1231
        %v1234 = vpack.c.b16 %v1232, %v1232
        %1237 = vst.msk [vmem:[#allocation2 + $0xd0] sm:$0xf] %vm852, %v1233
        %1238 = vst.msk [vmem:[#allocation2 + $0xd4] sm:$0xf] %vm852, %v1234
        %v1240 = vunpack.c.l.b16 %v840
        %v1241 = vunpack.c.h.b16 %v840
        %v1242 = vpack.c.b16 %v1240, %v1240
        %v1243 = vpack.c.b16 %v1241, %v1241
        %v1244 = vrot.slane %v1242, 7
        %v1245 = vrot.slane %v1244, 4
        %v1246 = vrot.slane %v1243, 7
        %v1247 = vsel %vm976, %v1245, %v1246
        %v1248 = vrot.slane %v1246, 4
        %1252 = vst.msk [vmem:[#allocation2 + $0xd8] sm:$0xe] %vm985, %v1244
        %1253 = vst.msk [vmem:[#allocation2 + $0xdc] sm:$0xf] %vm852, %v1247
        %1254 = vst.msk [vmem:[#allocation2 + $0xe0] sm:$0x1] %vm988, %v1248
        %v1256 = vunpack.c.l.b16 %v841
        %v1257 = vunpack.c.h.b16 %v841
        %v1258 = vpack.c.b16 %v1256, %v1256
        %v1259 = vpack.c.b16 %v1257, %v1257
        %v1260 = vrot.slane %v1258, 6
        %v1261 = vrot.slane %v1260, 4
        %v1262 = vrot.slane %v1259, 6
        %v1263 = vsel %vm997, %v1261, %v1262
        %v1264 = vrot.slane %v1262, 4
        %1268 = vst.msk [vmem:[#allocation2 + $0xe0] sm:$0xc] %vm1006, %v1260
        %1269 = vst.msk [vmem:[#allocation2 + $0xe4] sm:$0xf] %vm852, %v1263
        %1270 = vst.msk [vmem:[#allocation2 + $0xe8] sm:$0x3] %vm1009, %v1264
        %v1272 = vunpack.c.l.b16 %v842
        %v1273 = vunpack.c.h.b16 %v842
        %v1274 = vpack.c.b16 %v1272, %v1272
        %v1275 = vpack.c.b16 %v1273, %v1273
        %v1276 = vrot.slane %v1274, 5
        %v1277 = vrot.slane %v1276, 4
        %v1278 = vrot.slane %v1275, 5
        %v1279 = vsel %vm947, %v1277, %v1278
        %v1280 = vrot.slane %v1278, 4
        %1284 = vst.msk [vmem:[#allocation2 + $0xe8] sm:$0x8] %vm956, %v1276
        %1285 = vst.msk [vmem:[#allocation2 + $0xec] sm:$0xf] %vm852, %v1279
        %1286 = vst.msk [vmem:[#allocation2 + $0xf0] sm:$0x7] %vm938, %v1280
        %v1288 = vunpack.c.l.b16 %v843
        %v1289 = vunpack.c.h.b16 %v843
        %v1290 = vpack.c.b16 %v1288, %v1288
        %v1291 = vpack.c.b16 %v1289, %v1289
        %1294 = vst.msk [vmem:[#allocation2 + $0xf4] sm:$0xf] %vm852, %v1290
        %1295 = vst.msk [vmem:[#allocation2 + $0xf8] sm:$0xf] %vm852, %v1291
        %v1297 = vunpack.c.l.b16 %v844
        %v1298 = vunpack.c.h.b16 %v844
        %v1299 = vpack.c.b16 %v1297, %v1297
        %v1300 = vpack.c.b16 %v1298, %v1298
        %v1301 = vrot.slane %v1299, 7
        %v1302 = vrot.slane %v1301, 4
        %v1303 = vrot.slane %v1300, 7
        %v1304 = vsel %vm976, %v1302, %v1303
        %v1305 = vrot.slane %v1303, 4
        %1309 = vst.msk [vmem:[#allocation2 + $0xfc] sm:$0xe] %vm985, %v1301
        %1310 = vst.msk [vmem:[#allocation2 + $0x100] sm:$0xf] %vm852, %v1304
        %1311 = vst.msk [vmem:[#allocation2 + $0x104] sm:$0x1] %vm988, %v1305
        %v1313 = vunpack.c.l.b16 %v845
        %v1314 = vunpack.c.h.b16 %v845
        %v1315 = vpack.c.b16 %v1313, %v1313
        %v1316 = vpack.c.b16 %v1314, %v1314
        %v1317 = vrot.slane %v1315, 6
        %v1318 = vrot.slane %v1317, 4
        %v1319 = vrot.slane %v1316, 6
        %v1320 = vsel %vm997, %v1318, %v1319
        %v1321 = vrot.slane %v1319, 4
        %1325 = vst.msk [vmem:[#allocation2 + $0x104] sm:$0xc] %vm1006, %v1317
        %1326 = vst.msk [vmem:[#allocation2 + $0x108] sm:$0xf] %vm852, %v1320
        %1327 = vst.msk [vmem:[#allocation2 + $0x10c] sm:$0x3] %vm1009, %v1321
        %v1329 = vunpack.c.l.b16 %v846
        %v1330 = vunpack.c.h.b16 %v846
        %v1331 = vpack.c.b16 %v1329, %v1329
        %v1332 = vpack.c.b16 %v1330, %v1330
        %v1333 = vrot.slane %v1331, 5
        %v1334 = vrot.slane %v1333, 4
        %v1335 = vrot.slane %v1332, 5
        %v1336 = vsel %vm947, %v1334, %v1335
        %v1337 = vrot.slane %v1335, 4
        %1341 = vst.msk [vmem:[#allocation2 + $0x10c] sm:$0x8] %vm956, %v1333
        %1342 = vst.msk [vmem:[#allocation2 + $0x110] sm:$0xf] %vm852, %v1336
        %1343 = vst.msk [vmem:[#allocation2 + $0x114] sm:$0x7] %vm938, %v1337
        %v1345 = vunpack.c.l.b16 %v847
        %v1346 = vunpack.c.h.b16 %v847
        %v1347 = vpack.c.b16 %v1345, %v1345
        %v1348 = vpack.c.b16 %v1346, %v1346
        %1351 = vst.msk [vmem:[#allocation2 + $0x118] sm:$0xf] %vm852, %v1347
        %1352 = vst.msk [vmem:[#allocation2 + $0x11c] sm:$0xf] %vm852, %v1348
        %v1354 = vunpack.c.l.b16 %v848
        %v1355 = vunpack.c.h.b16 %v848
        %v1356 = vpack.c.b16 %v1354, %v1354
        %v1357 = vpack.c.b16 %v1355, %v1355
        %v1358 = vrot.slane %v1356, 7
        %v1359 = vrot.slane %v1358, 4
        %v1360 = vrot.slane %v1357, 7
        %v1361 = vsel %vm976, %v1359, %v1360
        %v1362 = vrot.slane %v1360, 4
        %1366 = vst.msk [vmem:[#allocation2 + $0x120] sm:$0xe] %vm985, %v1358
        %1367 = vst.msk [vmem:[#allocation2 + $0x124] sm:$0xf] %vm852, %v1361
        %1368 = vst.msk [vmem:[#allocation2 + $0x128] sm:$0x1] %vm988, %v1362
        %v1370 = vunpack.c.l.b16 %v849
        %v1371 = vunpack.c.h.b16 %v849
        %v1372 = vpack.c.b16 %v1370, %v1370
        %v1373 = vpack.c.b16 %v1371, %v1371
        %v1374 = vrot.slane %v1372, 6
        %v1375 = vrot.slane %v1374, 4
        %v1376 = vrot.slane %v1373, 6
        %v1377 = vsel %vm997, %v1375, %v1376
        %v1378 = vrot.slane %v1376, 4
        %1382 = vst.msk [vmem:[#allocation2 + $0x128] sm:$0xc] %vm1006, %v1374
        %1383 = vst.msk [vmem:[#allocation2 + $0x12c] sm:$0xf] %vm852, %v1377
        %1384 = vst.msk [vmem:[#allocation2 + $0x130] sm:$0x3] %vm1009, %v1378
        %v1386 = vunpack.c.l.b16 %v850
        %v1387 = vunpack.c.h.b16 %v850
        %v1388 = vpack.c.b16 %v1386, %v1386
        %v1389 = vpack.c.b16 %v1387, %v1387
        %v1390 = vrot.slane %v1388, 5
        %v1391 = vrot.slane %v1390, 4
        %v1392 = vrot.slane %v1389, 5
        %v1393 = vsel %vm947, %v1391, %v1392
        %v1394 = vrot.slane %v1392, 4
        %1398 = vst.msk [vmem:[#allocation2 + $0x130] sm:$0x8] %vm956, %v1390
        %1399 = vst.msk [vmem:[#allocation2 + $0x134] sm:$0xf] %vm852, %v1393
        %1400 = vst.msk [vmem:[#allocation2 + $0x138] sm:$0x7] %vm938, %v1394
        %v1402 = vunpack.c.l.b16 %v851
        %v1403 = vunpack.c.h.b16 %v851
        %v1404 = vpack.c.b16 %v1402, %v1402
        %v1405 = vpack.c.b16 %v1403, %v1403
        %1408 = vst.msk [vmem:[#allocation2 + $0x13c] sm:$0xf] %vm852, %v1404
        %1409 = vst.msk [vmem:[#allocation2 + $0x140] sm:$0xf] %vm852, %v1405
        %v1410 = vld [vmem:[%s2] sm:$0xf]
        %v1411 = vld [vmem:[%s2 + $0x4] sm:$0xf]
        %v1412 = vld [vmem:[%s2 + $0x8] sm:$0xf]
        %v1413 = vld [vmem:[%s2 + $0xc] sm:$0xf]
        %v1414 = vld [vmem:[%s2 + $0x10] sm:$0xf]
        %v1415 = vld [vmem:[%s2 + $0x14] sm:$0xf]
        %v1416 = vld [vmem:[%s2 + $0x18] sm:$0xf]
        %v1417 = vld [vmem:[%s2 + $0x1c] sm:$0xf]
        %v1418 = vld [vmem:[%s2 + $0x20] sm:$0xf]
        %v1419 = vld [vmem:[%s2 + $0x24] sm:$0xf]
        %v1420 = vld [vmem:[%s2 + $0x28] sm:$0xf]
        %v1421 = vld [vmem:[%s2 + $0x2c] sm:$0xf]
        %v1422 = vld [vmem:[%s2 + $0x30] sm:$0xf]
        %v1423 = vld [vmem:[%s2 + $0x34] sm:$0xf]
        %v1424 = vld [vmem:[%s2 + $0x38] sm:$0xf]
        %v1425 = vld [vmem:[%s2 + $0x3c] sm:$0xf]
        %v1426 = vld [vmem:[%s2 + $0x40] sm:$0xf]
        %v1427 = vld [vmem:[%s2 + $0x44] sm:$0xf]
        %v1428 = vld [vmem:[%s2 + $0x48] sm:$0xf]
        %v1429 = vld [vmem:[%s2 + $0x4c] sm:$0xf]
        %v1430 = vld [vmem:[%s2 + $0x50] sm:$0xf]
        %v1431 = vld [vmem:[%s2 + $0x54] sm:$0xf]
        %v1432 = vld [vmem:[%s2 + $0x58] sm:$0xf]
        %v1433 = vld [vmem:[%s2 + $0x5c] sm:$0xf]
        %v1434 = vld [vmem:[%s2 + $0x60] sm:$0xf]
        %v1435 = vld [vmem:[%s2 + $0x64] sm:$0xf]
        %v1436 = vld [vmem:[%s2 + $0x68] sm:$0xf]
        %v1437 = vld [vmem:[%s2 + $0x6c] sm:$0xf]
        %v1438 = vld [vmem:[%s2 + $0x70] sm:$0xf]
        %v1439 = vld [vmem:[%s2 + $0x74] sm:$0xf]
        %v1440 = vld [vmem:[%s2 + $0x78] sm:$0xf]
        %v1441 = vld [vmem:[%s2 + $0x7c] sm:$0xf]
        %v1442 = vld [vmem:[%s2 + $0x80] sm:$0xf]
        %v1443 = vld [vmem:[%s2 + $0x84] sm:$0xf]
        %v1444 = vld [vmem:[%s2 + $0x88] sm:$0xf]
        %v1445 = vld [vmem:[%s2 + $0x8c] sm:$0xf]
        %v1446 = vld [vmem:[#allocation2] sm:$0xf]
        %v1447 = vld [vmem:[#allocation2 + $0x4] sm:$0xf]
        %v1448 = vld [vmem:[#allocation2 + $0x8] sm:$0xf]
        %v1449 = vld [vmem:[#allocation2 + $0xc] sm:$0xf]
        %v1450 = vld [vmem:[#allocation2 + $0x10] sm:$0xf]
        %v1451 = vld [vmem:[#allocation2 + $0x14] sm:$0xf]
        %v1452 = vld [vmem:[#allocation2 + $0x18] sm:$0xf]
        %v1453 = vld [vmem:[#allocation2 + $0x1c] sm:$0xf]
        %v1454 = vld [vmem:[#allocation2 + $0x20] sm:$0xf]
        %v1455 = vld [vmem:[#allocation2 + $0x24] sm:$0xf]
        %v1456 = vld [vmem:[#allocation2 + $0x28] sm:$0xf]
        %v1457 = vld [vmem:[#allocation2 + $0x2c] sm:$0xf]
        %v1458 = vld [vmem:[#allocation2 + $0x30] sm:$0xf]
        %v1459 = vld [vmem:[#allocation2 + $0x34] sm:$0xf]
        %v1460 = vld [vmem:[#allocation2 + $0x38] sm:$0xf]
        %v1461 = vld [vmem:[#allocation2 + $0x3c] sm:$0xf]
        %v1462 = vld [vmem:[#allocation2 + $0x40] sm:$0xf]
        %v1463 = vld [vmem:[#allocation2 + $0x44] sm:$0xf]
        %v1464 = vld [vmem:[#allocation2 + $0x48] sm:$0xf]
        %v1465 = vld [vmem:[#allocation2 + $0x4c] sm:$0xf]
        %v1466 = vld [vmem:[#allocation2 + $0x50] sm:$0xf]
        %v1467 = vld [vmem:[#allocation2 + $0x54] sm:$0xf]
        %v1468 = vld [vmem:[#allocation2 + $0x58] sm:$0xf]
        %v1469 = vld [vmem:[#allocation2 + $0x5c] sm:$0xf]
        %v1470 = vld [vmem:[#allocation2 + $0x60] sm:$0xf]
        %v1471 = vld [vmem:[#allocation2 + $0x64] sm:$0xf]
        %v1472 = vld [vmem:[#allocation2 + $0x68] sm:$0xf]
        %v1473 = vld [vmem:[#allocation2 + $0x6c] sm:$0xf]
        %v1474 = vld [vmem:[#allocation2 + $0x70] sm:$0xf]
        %v1475 = vld [vmem:[#allocation2 + $0x74] sm:$0xf]
        %v1476 = vld [vmem:[#allocation2 + $0x78] sm:$0xf]
        %v1477 = vld [vmem:[#allocation2 + $0x7c] sm:$0xf]
        %v1478 = vld [vmem:[#allocation2 + $0x80] sm:$0xf]
        %v1479 = vld [vmem:[#allocation2 + $0x84] sm:$0xf]
        %v1480 = vld [vmem:[#allocation2 + $0x88] sm:$0xf]
        %v1481 = vld [vmem:[#allocation2 + $0x8c] sm:$0xf]
        %v1482 = vld [vmem:[#allocation2 + $0x90] sm:$0xf]
        %v1483 = vld [vmem:[#allocation2 + $0x94] sm:$0xf]
        %v1484 = vld [vmem:[#allocation2 + $0x98] sm:$0xf]
        %v1485 = vld [vmem:[#allocation2 + $0x9c] sm:$0xf]
        %v1486 = vld [vmem:[#allocation2 + $0xa0] sm:$0xf]
        %v1487 = vld [vmem:[#allocation2 + $0xa4] sm:$0xf]
        %v1488 = vld [vmem:[#allocation2 + $0xa8] sm:$0xf]
        %v1489 = vld [vmem:[#allocation2 + $0xac] sm:$0xf]
        %v1490 = vld [vmem:[#allocation2 + $0xb0] sm:$0xf]
        %v1491 = vld [vmem:[#allocation2 + $0xb4] sm:$0xf]
        %v1492 = vld [vmem:[#allocation2 + $0xb8] sm:$0xf]
        %v1493 = vld [vmem:[#allocation2 + $0xbc] sm:$0xf]
        %v1494 = vld [vmem:[#allocation2 + $0xc0] sm:$0xf]
        %v1495 = vld [vmem:[#allocation2 + $0xc4] sm:$0xf]
        %v1496 = vld [vmem:[#allocation2 + $0xc8] sm:$0xf]
        %v1497 = vld [vmem:[#allocation2 + $0xcc] sm:$0xf]
        %v1498 = vld [vmem:[#allocation2 + $0xd0] sm:$0xf]
        %v1499 = vld [vmem:[#allocation2 + $0xd4] sm:$0xf]
        %v1500 = vld [vmem:[#allocation2 + $0xd8] sm:$0xf]
        %v1501 = vld [vmem:[#allocation2 + $0xdc] sm:$0xf]
        %v1502 = vld [vmem:[#allocation2 + $0xe0] sm:$0xf]
        %v1503 = vld [vmem:[#allocation2 + $0xe4] sm:$0xf]
        %v1504 = vld [vmem:[#allocation2 + $0xe8] sm:$0xf]
        %v1505 = vld [vmem:[#allocation2 + $0xec] sm:$0xf]
        %v1506 = vld [vmem:[#allocation2 + $0xf0] sm:$0xf]
        %v1507 = vld [vmem:[#allocation2 + $0xf4] sm:$0xf]
        %v1508 = vld [vmem:[#allocation2 + $0xf8] sm:$0xf]
        %v1509 = vld [vmem:[#allocation2 + $0xfc] sm:$0xf]
        %v1510 = vld [vmem:[#allocation2 + $0x100] sm:$0xf]
        %v1511 = vld [vmem:[#allocation2 + $0x104] sm:$0xf]
        %v1512 = vld [vmem:[#allocation2 + $0x108] sm:$0xf]
        %v1513 = vld [vmem:[#allocation2 + $0x10c] sm:$0xf]
        %v1514 = vld [vmem:[#allocation2 + $0x110] sm:$0xf]
        %v1515 = vld [vmem:[#allocation2 + $0x114] sm:$0xf]
        %v1516 = vld [vmem:[#allocation2 + $0x118] sm:$0xf]
        %v1517 = vld [vmem:[#allocation2 + $0x11c] sm:$0xf]
        %v1518 = vld [vmem:[#allocation2 + $0x120] sm:$0xf]
        %v1519 = vld [vmem:[#allocation2 + $0x124] sm:$0xf]
        %v1520 = vld [vmem:[#allocation2 + $0x128] sm:$0xf]
        %v1521 = vld [vmem:[#allocation2 + $0x12c] sm:$0xf]
        %v1522 = vld [vmem:[#allocation2 + $0x130] sm:$0xf]
        %v1523 = vld [vmem:[#allocation2 + $0x134] sm:$0xf]
        %v1524 = vld [vmem:[#allocation2 + $0x138] sm:$0xf]
        %v1525 = vld [vmem:[#allocation2 + $0x13c] sm:$0xf]
        %v1526 = vld [vmem:[#allocation2 + $0x140] sm:$0xf]
        %v1527 = vld [vmem:[#allocation2 + $0x144] sm:$0x1]
        %v1610 = vunpack.c.l.b16 %v1446
        %v1611 = vunpack.c.l.b16 %v1447
        %v1612 = vunpack.c.l.b16 %v1448
        %v1613 = vunpack.c.l.b16 %v1449
        %v1614 = vunpack.c.l.b16 %v1450
        %v1615 = vunpack.c.l.b16 %v1451
        %v1616 = vunpack.c.l.b16 %v1452
        %v1617 = vunpack.c.l.b16 %v1453
        %v1618 = vunpack.c.l.b16 %v1454
        %v1619 = vunpack.c.l.b16 %v1455
        %v1620 = vunpack.c.l.b16 %v1456
        %v1621 = vunpack.c.l.b16 %v1457
        %v1622 = vunpack.c.l.b16 %v1458
        %v1623 = vunpack.c.l.b16 %v1459
        %v1624 = vunpack.c.l.b16 %v1460
        %v1625 = vunpack.c.l.b16 %v1461
        %v1626 = vunpack.c.l.b16 %v1462
        %v1627 = vunpack.c.l.b16 %v1463
        %v1628 = vunpack.c.l.b16 %v1464
        %v1629 = vunpack.c.l.b16 %v1465
        %v1630 = vunpack.c.l.b16 %v1466
        %v1631 = vunpack.c.l.b16 %v1467
        %v1632 = vunpack.c.l.b16 %v1468
        %v1633 = vunpack.c.l.b16 %v1469
        %v1634 = vunpack.c.l.b16 %v1470
        %v1635 = vunpack.c.l.b16 %v1471
        %v1636 = vunpack.c.l.b16 %v1472
        %v1637 = vunpack.c.l.b16 %v1473
        %v1638 = vunpack.c.l.b16 %v1474
        %v1639 = vunpack.c.l.b16 %v1475
        %v1640 = vunpack.c.l.b16 %v1476
        %v1641 = vunpack.c.l.b16 %v1477
        %v1642 = vunpack.c.l.b16 %v1478
        %v1643 = vunpack.c.l.b16 %v1479
        %v1644 = vunpack.c.l.b16 %v1480
        %v1645 = vunpack.c.l.b16 %v1481
        %v1646 = vunpack.c.l.b16 %v1482
        %v1647 = vunpack.c.l.b16 %v1483
        %v1648 = vunpack.c.l.b16 %v1484
        %v1649 = vunpack.c.l.b16 %v1485
        %v1650 = vunpack.c.l.b16 %v1486
        %v1651 = vunpack.c.l.b16 %v1487
        %v1652 = vunpack.c.l.b16 %v1488
        %v1653 = vunpack.c.l.b16 %v1489
        %v1654 = vunpack.c.l.b16 %v1490
        %v1655 = vunpack.c.l.b16 %v1491
        %v1656 = vunpack.c.l.b16 %v1492
        %v1657 = vunpack.c.l.b16 %v1493
        %v1658 = vunpack.c.l.b16 %v1494
        %v1659 = vunpack.c.l.b16 %v1495
        %v1660 = vunpack.c.l.b16 %v1496
        %v1661 = vunpack.c.l.b16 %v1497
        %v1662 = vunpack.c.l.b16 %v1498
        %v1663 = vunpack.c.l.b16 %v1499
        %v1664 = vunpack.c.l.b16 %v1500
        %v1665 = vunpack.c.l.b16 %v1501
        %v1666 = vunpack.c.l.b16 %v1502
        %v1667 = vunpack.c.l.b16 %v1503
        %v1668 = vunpack.c.l.b16 %v1504
        %v1669 = vunpack.c.l.b16 %v1505
        %v1670 = vunpack.c.l.b16 %v1506
        %v1671 = vunpack.c.l.b16 %v1507
        %v1672 = vunpack.c.l.b16 %v1508
        %v1673 = vunpack.c.l.b16 %v1509
        %v1674 = vunpack.c.l.b16 %v1510
        %v1675 = vunpack.c.l.b16 %v1511
        %v1676 = vunpack.c.l.b16 %v1512
        %v1677 = vunpack.c.l.b16 %v1513
        %v1678 = vunpack.c.l.b16 %v1514
        %v1679 = vunpack.c.l.b16 %v1515
        %v1680 = vunpack.c.l.b16 %v1516
        %v1681 = vunpack.c.l.b16 %v1517
        %v1682 = vunpack.c.l.b16 %v1518
        %v1683 = vunpack.c.l.b16 %v1519
        %v1684 = vunpack.c.l.b16 %v1520
        %v1685 = vunpack.c.l.b16 %v1521
        %v1686 = vunpack.c.l.b16 %v1522
        %v1687 = vunpack.c.l.b16 %v1523
        %v1688 = vunpack.c.l.b16 %v1524
        %v1689 = vunpack.c.l.b16 %v1525
        %v1690 = vunpack.c.l.b16 %v1526
        %v1691 = vunpack.c.l.b16 %v1527
        %v1692 = vpack.c.b16 %v1611, %v1610
        %v1693 = vpack.c.b16 %v1613, %v1612
        %v1694 = vpack.c.b16 %v1615, %v1614
        %v1695 = vpack.c.b16 %v1617, %v1616
        %v1696 = vpack.c.b16 %v1619, %v1618
        %v1697 = vpack.c.b16 %v1621, %v1620
        %v1698 = vpack.c.b16 %v1623, %v1622
        %v1699 = vpack.c.b16 %v1625, %v1624
        %v1700 = vpack.c.b16 %v1627, %v1626
        %v1701 = vpack.c.b16 %v1629, %v1628
        %v1702 = vpack.c.b16 %v1631, %v1630
        %v1703 = vpack.c.b16 %v1633, %v1632
        %v1704 = vpack.c.b16 %v1635, %v1634
        %v1705 = vpack.c.b16 %v1637, %v1636
        %v1706 = vpack.c.b16 %v1639, %v1638
        %v1707 = vpack.c.b16 %v1641, %v1640
        %v1708 = vpack.c.b16 %v1643, %v1642
        %v1709 = vpack.c.b16 %v1645, %v1644
        %v1710 = vpack.c.b16 %v1647, %v1646
        %v1711 = vpack.c.b16 %v1649, %v1648
        %v1712 = vpack.c.b16 %v1651, %v1650
        %v1713 = vpack.c.b16 %v1653, %v1652
        %v1714 = vpack.c.b16 %v1655, %v1654
        %v1715 = vpack.c.b16 %v1657, %v1656
        %v1716 = vpack.c.b16 %v1659, %v1658
        %v1717 = vpack.c.b16 %v1661, %v1660
        %v1718 = vpack.c.b16 %v1663, %v1662
        %v1719 = vpack.c.b16 %v1665, %v1664
        %v1720 = vpack.c.b16 %v1667, %v1666
        %v1721 = vpack.c.b16 %v1669, %v1668
        %v1722 = vpack.c.b16 %v1671, %v1670
        %v1723 = vpack.c.b16 %v1673, %v1672
        %v1724 = vpack.c.b16 %v1675, %v1674
        %v1725 = vpack.c.b16 %v1677, %v1676
        %v1726 = vpack.c.b16 %v1679, %v1678
        %v1727 = vpack.c.b16 %v1681, %v1680
        %v1728 = vpack.c.b16 %v1683, %v1682
        %v1729 = vpack.c.b16 %v1685, %v1684
        %v1730 = vpack.c.b16 %v1687, %v1686
        %v1731 = vpack.c.b16 %v1689, %v1688
        %v1732 = vpack.c.b16 %v1691, %v1690
        %vm1733 = vsmask.f32 7424
        %v1735 = vshrl.u32 %v1692, 16
        %v1737 = vshll.u32 %v1692, 16
        %v1739 = vrot.slane %v1737, 1
        %v1740 = vor.u32 %v1735, %v1739
        %v1742 = vshll.u32 %v1693, 16
        %v1744 = vrot.slane %v1742, 1
        %v1745 = vsel %vm1733, %v1740, %v1744
        %v1746 = vshrl.u32 %v1693, 16
        %v1748 = vor.u32 %v1746, %v1744
        %v1750 = vshll.u32 %v1694, 16
        %v1752 = vrot.slane %v1750, 1
        %v1753 = vsel %vm1733, %v1748, %v1752
        %v1754 = vshrl.u32 %v1694, 16
        %v1756 = vor.u32 %v1754, %v1752
        %v1758 = vshll.u32 %v1695, 16
        %v1760 = vrot.slane %v1758, 1
        %v1761 = vsel %vm1733, %v1756, %v1760
        %v1762 = vshrl.u32 %v1695, 16
        %v1764 = vor.u32 %v1762, %v1760
        %v1766 = vshll.u32 %v1696, 16
        %v1768 = vrot.slane %v1766, 1
        %v1769 = vsel %vm1733, %v1764, %v1768
        %v1770 = vshrl.u32 %v1696, 16
        %v1772 = vor.u32 %v1770, %v1768
        %v1774 = vshll.u32 %v1697, 16
        %v1776 = vrot.slane %v1774, 1
        %v1777 = vsel %vm1733, %v1772, %v1776
        %v1778 = vshrl.u32 %v1697, 16
        %v1780 = vor.u32 %v1778, %v1776
        %v1782 = vshll.u32 %v1698, 16
        %v1784 = vrot.slane %v1782, 1
        %v1785 = vsel %vm1733, %v1780, %v1784
        %v1786 = vshrl.u32 %v1698, 16
        %v1788 = vor.u32 %v1786, %v1784
        %v1790 = vshll.u32 %v1699, 16
        %v1792 = vrot.slane %v1790, 1
        %v1793 = vsel %vm1733, %v1788, %v1792
        %v1794 = vshrl.u32 %v1699, 16
        %v1796 = vor.u32 %v1794, %v1792
        %v1798 = vshll.u32 %v1700, 16
        %v1800 = vrot.slane %v1798, 1
        %v1801 = vsel %vm1733, %v1796, %v1800
        %v1802 = vshrl.u32 %v1700, 16
        %v1804 = vor.u32 %v1802, %v1800
        %v1806 = vshll.u32 %v1701, 16
        %v1808 = vrot.slane %v1806, 1
        %v1809 = vsel %vm1733, %v1804, %v1808
        %v1810 = vshrl.u32 %v1701, 16
        %v1812 = vor.u32 %v1810, %v1808
        %v1814 = vshll.u32 %v1702, 16
        %v1816 = vrot.slane %v1814, 1
        %v1817 = vsel %vm1733, %v1812, %v1816
        %v1818 = vshrl.u32 %v1702, 16
        %v1820 = vor.u32 %v1818, %v1816
        %v1822 = vshll.u32 %v1703, 16
        %v1824 = vrot.slane %v1822, 1
        %v1825 = vsel %vm1733, %v1820, %v1824
        %v1826 = vshrl.u32 %v1703, 16
        %v1828 = vor.u32 %v1826, %v1824
        %v1830 = vshll.u32 %v1704, 16
        %v1832 = vrot.slane %v1830, 1
        %v1833 = vsel %vm1733, %v1828, %v1832
        %v1834 = vshrl.u32 %v1704, 16
        %v1836 = vor.u32 %v1834, %v1832
        %v1838 = vshll.u32 %v1705, 16
        %v1840 = vrot.slane %v1838, 1
        %v1841 = vsel %vm1733, %v1836, %v1840
        %v1842 = vshrl.u32 %v1705, 16
        %v1844 = vor.u32 %v1842, %v1840
        %v1846 = vshll.u32 %v1706, 16
        %v1848 = vrot.slane %v1846, 1
        %v1849 = vsel %vm1733, %v1844, %v1848
        %v1850 = vshrl.u32 %v1706, 16
        %v1852 = vor.u32 %v1850, %v1848
        %v1854 = vshll.u32 %v1707, 16
        %v1856 = vrot.slane %v1854, 1
        %v1857 = vsel %vm1733, %v1852, %v1856
        %v1858 = vshrl.u32 %v1707, 16
        %v1860 = vor.u32 %v1858, %v1856
        %v1862 = vshll.u32 %v1708, 16
        %v1864 = vrot.slane %v1862, 1
        %v1865 = vsel %vm1733, %v1860, %v1864
        %v1866 = vshrl.u32 %v1708, 16
        %v1868 = vor.u32 %v1866, %v1864
        %v1870 = vshll.u32 %v1709, 16
        %v1872 = vrot.slane %v1870, 1
        %v1873 = vsel %vm1733, %v1868, %v1872
        %v1874 = vshrl.u32 %v1709, 16
        %v1876 = vor.u32 %v1874, %v1872
        %v1878 = vshll.u32 %v1710, 16
        %v1880 = vrot.slane %v1878, 1
        %v1881 = vsel %vm1733, %v1876, %v1880
        %v1882 = vshrl.u32 %v1710, 16
        %v1884 = vor.u32 %v1882, %v1880
        %v1886 = vshll.u32 %v1711, 16
        %v1888 = vrot.slane %v1886, 1
        %v1889 = vsel %vm1733, %v1884, %v1888
        %v1890 = vshrl.u32 %v1711, 16
        %v1892 = vor.u32 %v1890, %v1888
        %v1894 = vshll.u32 %v1712, 16
        %v1896 = vrot.slane %v1894, 1
        %v1897 = vsel %vm1733, %v1892, %v1896
        %v1898 = vshrl.u32 %v1712, 16
        %v1900 = vor.u32 %v1898, %v1896
        %v1902 = vshll.u32 %v1713, 16
        %v1904 = vrot.slane %v1902, 1
        %v1905 = vsel %vm1733, %v1900, %v1904
        %v1906 = vshrl.u32 %v1713, 16
        %v1908 = vor.u32 %v1906, %v1904
        %v1910 = vshll.u32 %v1714, 16
        %v1912 = vrot.slane %v1910, 1
        %v1913 = vsel %vm1733, %v1908, %v1912
        %v1914 = vshrl.u32 %v1714, 16
        %v1916 = vor.u32 %v1914, %v1912
        %v1918 = vshll.u32 %v1715, 16
        %v1920 = vrot.slane %v1918, 1
        %v1921 = vsel %vm1733, %v1916, %v1920
        %v1922 = vshrl.u32 %v1715, 16
        %v1924 = vor.u32 %v1922, %v1920
        %v1926 = vshll.u32 %v1716, 16
        %v1928 = vrot.slane %v1926, 1
        %v1929 = vsel %vm1733, %v1924, %v1928
        %v1930 = vshrl.u32 %v1716, 16
        %v1932 = vor.u32 %v1930, %v1928
        %v1934 = vshll.u32 %v1717, 16
        %v1936 = vrot.slane %v1934, 1
        %v1937 = vsel %vm1733, %v1932, %v1936
        %v1938 = vshrl.u32 %v1717, 16
        %v1940 = vor.u32 %v1938, %v1936
        %v1942 = vshll.u32 %v1718, 16
        %v1944 = vrot.slane %v1942, 1
        %v1945 = vsel %vm1733, %v1940, %v1944
        %v1946 = vshrl.u32 %v1718, 16
        %v1948 = vor.u32 %v1946, %v1944
        %v1950 = vshll.u32 %v1719, 16
        %v1952 = vrot.slane %v1950, 1
        %v1953 = vsel %vm1733, %v1948, %v1952
        %v1954 = vshrl.u32 %v1719, 16
        %v1956 = vor.u32 %v1954, %v1952
        %v1958 = vshll.u32 %v1720, 16
        %v1960 = vrot.slane %v1958, 1
        %v1961 = vsel %vm1733, %v1956, %v1960
        %v1962 = vshrl.u32 %v1720, 16
        %v1964 = vor.u32 %v1962, %v1960
        %v1966 = vshll.u32 %v1721, 16
        %v1968 = vrot.slane %v1966, 1
        %v1969 = vsel %vm1733, %v1964, %v1968
        %v1970 = vshrl.u32 %v1721, 16
        %v1972 = vor.u32 %v1970, %v1968
        %v1974 = vshll.u32 %v1722, 16
        %v1976 = vrot.slane %v1974, 1
        %v1977 = vsel %vm1733, %v1972, %v1976
        %v1978 = vshrl.u32 %v1722, 16
        %v1980 = vor.u32 %v1978, %v1976
        %v1982 = vshll.u32 %v1723, 16
        %v1984 = vrot.slane %v1982, 1
        %v1985 = vsel %vm1733, %v1980, %v1984
        %v1986 = vshrl.u32 %v1723, 16
        %v1988 = vor.u32 %v1986, %v1984
        %v1990 = vshll.u32 %v1724, 16
        %v1992 = vrot.slane %v1990, 1
        %v1993 = vsel %vm1733, %v1988, %v1992
        %v1994 = vshrl.u32 %v1724, 16
        %v1996 = vor.u32 %v1994, %v1992
        %v1998 = vshll.u32 %v1725, 16
        %v2000 = vrot.slane %v1998, 1
        %v2001 = vsel %vm1733, %v1996, %v2000
        %v2002 = vshrl.u32 %v1725, 16
        %v2004 = vor.u32 %v2002, %v2000
        %v2006 = vshll.u32 %v1726, 16
        %v2008 = vrot.slane %v2006, 1
        %v2009 = vsel %vm1733, %v2004, %v2008
        %v2010 = vshrl.u32 %v1726, 16
        %v2012 = vor.u32 %v2010, %v2008
        %v2014 = vshll.u32 %v1727, 16
        %v2016 = vrot.slane %v2014, 1
        %v2017 = vsel %vm1733, %v2012, %v2016
        %v2018 = vshrl.u32 %v1727, 16
        %v2020 = vor.u32 %v2018, %v2016
        %v2022 = vshll.u32 %v1728, 16
        %v2024 = vrot.slane %v2022, 1
        %v2025 = vsel %vm1733, %v2020, %v2024
        %v2026 = vshrl.u32 %v1728, 16
        %v2028 = vor.u32 %v2026, %v2024
        %v2030 = vshll.u32 %v1729, 16
        %v2032 = vrot.slane %v2030, 1
        %v2033 = vsel %vm1733, %v2028, %v2032
        %v2034 = vshrl.u32 %v1729, 16
        %v2036 = vor.u32 %v2034, %v2032
        %v2038 = vshll.u32 %v1730, 16
        %v2040 = vrot.slane %v2038, 1
        %v2041 = vsel %vm1733, %v2036, %v2040
        %v2042 = vshrl.u32 %v1730, 16
        %v2044 = vor.u32 %v2042, %v2040
        %v2046 = vshll.u32 %v1731, 16
        %v2048 = vrot.slane %v2046, 1
        %v2049 = vsel %vm1733, %v2044, %v2048
        %v2050 = vshrl.u32 %v1731, 16
        %v2052 = vor.u32 %v2050, %v2048
        %v2054 = vshll.u32 %v1732, 16
        %v2056 = vrot.slane %v2054, 1
        %v2057 = vsel %vm1733, %v2052, %v2056
        %v2058 = vshrl.u32 %v1732, 16
        %v2060 = vor.u32 %v2058, %v2056
        %v2065 = vunpack.c.l.b16 %v1414
        %v2066 = vunpack.c.l.b16 %v1415
        %v2067 = vunpack.c.l.b16 %v1416
        %v2068 = vunpack.c.l.b16 %v1417
        %v2069 = vpack.c.b16 %v2066, %v2065
        %v2070 = vpack.c.b16 %v2068, %v2067
        %vm2073 = vcmask 261120
        %v2075 = vsel %vm2073, %v1745, 0
        %v2078 = vsel %vm2073, %v1753, 0
        %v2081 = vsel %vm2073, %v1761, 0
        %v2084 = vsel %vm2073, %v1769, 0
        %v2087 = vsel %vm2073, %v1777, 0
        %v2090 = vsel %vm2073, %v1785, 0
        %v2093 = vsel %vm2073, %v1793, 0
        %v2096 = vsel %vm2073, %v1801, 0
        %v2099 = vsel %vm2073, %v1809, 0
        %v2102 = vsel %vm2073, %v1817, 0
        %v2105 = vsel %vm2073, %v1825, 0
        %v2108 = vsel %vm2073, %v1833, 0
        %v2111 = vsel %vm2073, %v1841, 0
        %v2114 = vsel %vm2073, %v1849, 0
        %v2117 = vsel %vm2073, %v1857, 0
        %v2120 = vsel %vm2073, %v1865, 0
        %v2123 = vsel %vm2073, %v1873, 0
        %v2126 = vsel %vm2073, %v1881, 0
        %v2129 = vsel %vm2073, %v1889, 0
        %v2132 = vsel %vm2073, %v1897, 0
        %v2135 = vsel %vm2073, %v1905, 0
        %v2138 = vsel %vm2073, %v1913, 0
        %v2141 = vsel %vm2073, %v1921, 0
        %v2144 = vsel %vm2073, %v1929, 0
        %v2147 = vsel %vm2073, %v1937, 0
        %v2150 = vsel %vm2073, %v1945, 0
        %v2153 = vsel %vm2073, %v1953, 0
        %v2156 = vsel %vm2073, %v1961, 0
        %v2159 = vsel %vm2073, %v1969, 0
        %v2162 = vsel %vm2073, %v1977, 0
        %v2165 = vsel %vm2073, %v1985, 0
        %v2168 = vsel %vm2073, %v1993, 0
        %v2171 = vsel %vm2073, %v2001, 0
        %v2174 = vsel %vm2073, %v2009, 0
        %v2177 = vsel %vm2073, %v2017, 0
        %v2180 = vsel %vm2073, %v2025, 0
        %v2183 = vsel %vm2073, %v2033, 0
        %v2186 = vsel %vm2073, %v2041, 0
        %v2189 = vsel %vm2073, %v2049, 0
        %v2192 = vsel %vm2073, %v2057, 0
        %v2195 = vsel %vm2073, %v2060, 0
        %2197 = vmatprep.subr.bf16.mxu0 0
        %2198 = vmatpush1.bf16.msra.mxu0 %v2069
        %2199 = vmatprep.subr.bf16.mxu0 0
        %2200 = vmatpush1.bf16.msra.mxu0 %v2070
        %2201 = vmatprep.subr.bf16.mxu0 0
        %2202 = vmatpush1.bf16.msra.mxu0 0
        %2203 = vmatprep.subr.bf16.mxu0 0
        %2204 = vmatpush1.bf16.msra.mxu0 0
        %2205 = vmatprep.subr.bf16.mxu0 0
        %2206 = vmatpush1.bf16.msra.mxu0 0
        %2207 = vmatprep.subr.bf16.mxu0 0
        %2208 = vmatpush1.bf16.msra.mxu0 0
        %2209 = vmatprep.subr.bf16.mxu0 0
        %2210 = vmatpush1.bf16.msra.mxu0 0
        %2211 = vmatprep.subr.bf16.mxu0 0
        %2212 = vmatpush1.bf16.msra.mxu0 0
        %2213 = vmatprep.subr.bf16.mxu0 0
        %2214 = vmatpush1.bf16.msra.mxu0 0
        %2215 = vmatprep.subr.bf16.mxu0 0
        %2216 = vmatpush1.bf16.msra.mxu0 0
        %2217 = vmatprep.subr.bf16.mxu0 0
        %2218 = vmatpush1.bf16.msra.mxu0 0
        %2219 = vmatprep.subr.bf16.mxu0 0
        %2220 = vmatpush1.bf16.msra.mxu0 0
        %2221 = vmatprep.subr.bf16.mxu0 0
        %2222 = vmatpush1.bf16.msra.mxu0 0
        %2223 = vmatprep.subr.bf16.mxu0 0
        %2224 = vmatpush1.bf16.msra.mxu0 0
        %2225 = vmatprep.subr.bf16.mxu0 0
        %2226 = vmatpush1.bf16.msra.mxu0 0
        %2227 = vmatprep.subr.bf16.mxu0 0
        %2228 = vmatpush1.bf16.msra.mxu0 0
        %2229 = vmatprep.mubr.bf16.mxu0 0
        %2230 = vmatmul.mubr.bf16.gmra.mrb[0].mxu0 %v2075
        %v2231 = vpop.f32.mrb[0].mxu0
        %v2232 = vpop.f32.mrb[0].mxu0
        %v2233 = vpop.f32.mrb[0].mxu0
        %v2234 = vpop.f32.mrb[0].mxu0
        %2235 = vmatprep.mubr.bf16.mxu0 0
        %2236 = vmatmul.mubr.bf16.gmra.mrb[0].mxu0 %v2078
        %v2237 = vpop.f32.mrb[0].mxu0
        %v2238 = vadd.f32 0.0, %v2237
        %v2239 = vpop.f32.mrb[0].mxu0
        %v2240 = vpop.f32.mrb[0].mxu0
        %v2241 = vadd.f32 0.0, %v2240
        %v2242 = vpop.f32.mrb[0].mxu0
        %2243 = vmatprep.mubr.bf16.mxu0 0
        %2244 = vmatmul.mubr.bf16.gmra.mrb[0].mxu0 %v2081
        %v2245 = vpop.f32.mrb[0].mxu0
        %v2246 = vadd.f32 0.0, %v2245
        %v2247 = vpop.f32.mrb[0].mxu0
        %v2248 = vpop.f32.mrb[0].mxu0
        %v2249 = vadd.f32 0.0, %v2248
        %v2250 = vpop.f32.mrb[0].mxu0
        %2251 = vmatprep.mubr.bf16.mxu0 0
        %2252 = vmatmul.mubr.bf16.gmra.mrb[0].mxu0 %v2084
        %v2253 = vpop.f32.mrb[0].mxu0
        %v2254 = vadd.f32 0.0, %v2253
        %v2255 = vpop.f32.mrb[0].mxu0
        %v2256 = vpop.f32.mrb[0].mxu0
        %v2257 = vadd.f32 0.0, %v2256
        %v2258 = vpop.f32.mrb[0].mxu0
        %2259 = vmatprep.mubr.bf16.mxu0 0
        %2260 = vmatmul.mubr.bf16.gmra.mrb[0].mxu0 %v2087
        %v2261 = vpop.f32.mrb[0].mxu0
        %v2262 = vadd.f32 0.0, %v2261
        %v2263 = vpop.f32.mrb[0].mxu0
        %v2264 = vpop.f32.mrb[0].mxu0
        %v2265 = vadd.f32 0.0, %v2264
        %v2266 = vpop.f32.mrb[0].mxu0
        %2267 = vmatprep.mubr.bf16.mxu0 0
        %2268 = vmatmul.mubr.bf16.gmra.mrb[0].mxu0 %v2090
        %v2269 = vpop.f32.mrb[0].mxu0
        %v2270 = vadd.f32 0.0, %v2269
        %v2271 = vpop.f32.mrb[0].mxu0
        %v2272 = vpop.f32.mrb[0].mxu0
        %v2273 = vadd.f32 0.0, %v2272
        %v2274 = vpop.f32.mrb[0].mxu0
        %2275 = vmatprep.mubr.bf16.mxu0 0
        %2276 = vmatmul.mubr.bf16.gmra.mrb[0].mxu0 %v2093
        %v2277 = vpop.f32.mrb[0].mxu0
        %v2278 = vadd.f32 0.0, %v2277
        %v2279 = vpop.f32.mrb[0].mxu0
        %v2280 = vpop.f32.mrb[0].mxu0
        %v2281 = vadd.f32 0.0, %v2280
        %v2282 = vpop.f32.mrb[0].mxu0
        %2283 = vmatprep.mubr.bf16.mxu0 0
        %2284 = vmatmul.mubr.bf16.gmra.mrb[0].mxu0 %v2096
        %v2285 = vpop.f32.mrb[0].mxu0
        %v2286 = vadd.f32 0.0, %v2285
        %v2287 = vpop.f32.mrb[0].mxu0
        %v2288 = vpop.f32.mrb[0].mxu0
        %v2289 = vadd.f32 0.0, %v2288
        %v2290 = vpop.f32.mrb[0].mxu0
        %2291 = vmatprep.mubr.bf16.mxu0 0
        %2292 = vmatmul.mubr.bf16.gmra.mrb[0].mxu0 %v2099
        %v2293 = vpop.f32.mrb[0].mxu0
        %v2294 = vadd.f32 0.0, %v2293
        %v2295 = vpop.f32.mrb[0].mxu0
        %v2296 = vpop.f32.mrb[0].mxu0
        %v2297 = vadd.f32 0.0, %v2296
        %v2298 = vpop.f32.mrb[0].mxu0
        %2299 = vmatprep.mubr.bf16.mxu0 0
        %2300 = vmatmul.mubr.bf16.gmra.mrb[0].mxu0 %v2102
        %v2301 = vpop.f32.mrb[0].mxu0
        %v2302 = vadd.f32 0.0, %v2301
        %v2303 = vpop.f32.mrb[0].mxu0
        %v2304 = vpop.f32.mrb[0].mxu0
        %v2305 = vadd.f32 0.0, %v2304
        %v2306 = vpop.f32.mrb[0].mxu0
        %2307 = vmatprep.mubr.bf16.mxu0 0
        %2308 = vmatmul.mubr.bf16.gmra.mrb[0].mxu0 %v2105
        %v2309 = vpop.f32.mrb[0].mxu0
        %v2310 = vadd.f32 0.0, %v2309
        %v2311 = vpop.f32.mrb[0].mxu0
        %v2312 = vpop.f32.mrb[0].mxu0
        %v2313 = vadd.f32 0.0, %v2312
        %v2314 = vpop.f32.mrb[0].mxu0
        %2315 = vmatprep.mubr.bf16.mxu0 0
        %2316 = vmatmul.mubr.bf16.gmra.mrb[0].mxu0 %v2108
        %v2317 = vpop.f32.mrb[0].mxu0
        %v2318 = vadd.f32 0.0, %v2317
        %v2319 = vpop.f32.mrb[0].mxu0
        %v2320 = vpop.f32.mrb[0].mxu0
        %v2321 = vadd.f32 0.0, %v2320
        %v2322 = vpop.f32.mrb[0].mxu0
        %2323 = vmatprep.mubr.bf16.mxu0 0
        %2324 = vmatmul.mubr.bf16.gmra.mrb[0].mxu0 %v2111
        %v2325 = vpop.f32.mrb[0].mxu0
        %v2326 = vadd.f32 0.0, %v2325
        %v2327 = vpop.f32.mrb[0].mxu0
        %v2328 = vpop.f32.mrb[0].mxu0
        %v2329 = vadd.f32 0.0, %v2328
        %v2330 = vpop.f32.mrb[0].mxu0
        %2331 = vmatprep.mubr.bf16.mxu0 0
        %2332 = vmatmul.mubr.bf16.gmra.mrb[0].mxu0 %v2114
        %v2333 = vpop.f32.mrb[0].mxu0
        %v2334 = vadd.f32 0.0, %v2333
        %v2335 = vpop.f32.mrb[0].mxu0
        %v2336 = vpop.f32.mrb[0].mxu0
        %v2337 = vadd.f32 0.0, %v2336
        %v2338 = vpop.f32.mrb[0].mxu0
        %2339 = vmatprep.mubr.bf16.mxu0 0
        %2340 = vmatmul.mubr.bf16.gmra.mrb[0].mxu0 %v2117
        %v2341 = vpop.f32.mrb[0].mxu0
        %v2342 = vadd.f32 0.0, %v2341
        %v2343 = vpop.f32.mrb[0].mxu0
        %v2344 = vpop.f32.mrb[0].mxu0
        %v2345 = vadd.f32 0.0, %v2344
        %v2346 = vpop.f32.mrb[0].mxu0
        %2347 = vmatprep.mubr.bf16.mxu0 0
        %2348 = vmatmul.mubr.bf16.gmra.mrb[0].mxu0 %v2120
        %v2349 = vpop.f32.mrb[0].mxu0
        %v2350 = vadd.f32 0.0, %v2349
        %v2351 = vpop.f32.mrb[0].mxu0
        %v2352 = vpop.f32.mrb[0].mxu0
        %v2353 = vadd.f32 0.0, %v2352
        %v2354 = vpop.f32.mrb[0].mxu0
        %2355 = vmatprep.mubr.bf16.mxu0 0
        %2356 = vmatmul.mubr.bf16.gmra.mrb[0].mxu0 %v2123
        %v2357 = vpop.f32.mrb[0].mxu0
        %v2358 = vadd.f32 0.0, %v2357
        %v2359 = vpop.f32.mrb[0].mxu0
        %v2360 = vpop.f32.mrb[0].mxu0
        %v2361 = vadd.f32 0.0, %v2360
        %v2362 = vpop.f32.mrb[0].mxu0
        %2363 = vmatprep.mubr.bf16.mxu0 0
        %2364 = vmatmul.mubr.bf16.gmra.mrb[0].mxu0 %v2126
        %v2365 = vpop.f32.mrb[0].mxu0
        %v2366 = vadd.f32 0.0, %v2365
        %v2367 = vpop.f32.mrb[0].mxu0
        %v2368 = vpop.f32.mrb[0].mxu0
        %v2369 = vadd.f32 0.0, %v2368
        %v2370 = vpop.f32.mrb[0].mxu0
        %2371 = vmatprep.mubr.bf16.mxu0 0
        %2372 = vmatmul.mubr.bf16.gmra.mrb[0].mxu0 %v2129
        %v2373 = vpop.f32.mrb[0].mxu0
        %v2374 = vadd.f32 0.0, %v2373
        %v2375 = vpop.f32.mrb[0].mxu0
        %v2376 = vpop.f32.mrb[0].mxu0
        %v2377 = vadd.f32 0.0, %v2376
        %v2378 = vpop.f32.mrb[0].mxu0
        %2379 = vmatprep.mubr.bf16.mxu0 0
        %2380 = vmatmul.mubr.bf16.gmra.mrb[0].mxu0 %v2132
        %v2381 = vpop.f32.mrb[0].mxu0
        %v2382 = vadd.f32 0.0, %v2381
        %v2383 = vpop.f32.mrb[0].mxu0
        %v2384 = vpop.f32.mrb[0].mxu0
        %v2385 = vpop.f32.mrb[0].mxu0
        %2386 = vmatprep.mubr.bf16.mxu0 0
        %2387 = vmatmul.mubr.bf16.gmra.mrb[0].mxu0 %v2135
        %v2388 = vpop.f32.mrb[0].mxu0
        %v2389 = vpop.f32.mrb[0].mxu0
        %v2390 = vpop.f32.mrb[0].mxu0
        %v2391 = vpop.f32.mrb[0].mxu0
        %2392 = vmatprep.mubr.bf16.mxu0 0
        %2393 = vmatmul.mubr.bf16.gmra.mrb[0].mxu0 %v2138
        %v2394 = vpop.f32.mrb[0].mxu0
        %v2395 = vadd.f32 0.0, %v2394
        %v2396 = vpop.f32.mrb[0].mxu0
        %v2397 = vpop.f32.mrb[0].mxu0
        %v2398 = vadd.f32 0.0, %v2397
        %v2399 = vpop.f32.mrb[0].mxu0
        %2400 = vmatprep.mubr.bf16.mxu0 0
        %2401 = vmatmul.mubr.bf16.gmra.mrb[0].mxu0 %v2141
        %v2402 = vpop.f32.mrb[0].mxu0
        %v2403 = vadd.f32 0.0, %v2402
        %v2404 = vpop.f32.mrb[0].mxu0
        %v2405 = vpop.f32.mrb[0].mxu0
        %v2406 = vadd.f32 0.0, %v2405
        %v2407 = vpop.f32.mrb[0].mxu0
        %2408 = vmatprep.mubr.bf16.mxu0 0
        %2409 = vmatmul.mubr.bf16.gmra.mrb[0].mxu0 %v2144
        %v2410 = vpop.f32.mrb[0].mxu0
        %v2411 = vadd.f32 0.0, %v2410
        %v2412 = vpop.f32.mrb[0].mxu0
        %v2413 = vpop.f32.mrb[0].mxu0
        %v2414 = vadd.f32 0.0, %v2413
        %v2415 = vpop.f32.mrb[0].mxu0
        %2416 = vmatprep.mubr.bf16.mxu0 0
        %2417 = vmatmul.mubr.bf16.gmra.mrb[0].mxu0 %v2147
        %v2418 = vpop.f32.mrb[0].mxu0
        %v2419 = vadd.f32 0.0, %v2418
        %v2420 = vpop.f32.mrb[0].mxu0
        %v2421 = vpop.f32.mrb[0].mxu0
        %v2422 = vadd.f32 0.0, %v2421
        %v2423 = vpop.f32.mrb[0].mxu0
        %2424 = vmatprep.mubr.bf16.mxu0 0
        %2425 = vmatmul.mubr.bf16.gmra.mrb[0].mxu0 %v2150
        %v2426 = vpop.f32.mrb[0].mxu0
        %v2427 = vadd.f32 0.0, %v2426
        %v2428 = vpop.f32.mrb[0].mxu0
        %v2429 = vpop.f32.mrb[0].mxu0
        %v2430 = vadd.f32 0.0, %v2429
        %v2431 = vpop.f32.mrb[0].mxu0
        %2432 = vmatprep.mubr.bf16.mxu0 0
        %2433 = vmatmul.mubr.bf16.gmra.mrb[0].mxu0 %v2153
        %v2434 = vpop.f32.mrb[0].mxu0
        %v2435 = vadd.f32 0.0, %v2434
        %v2436 = vpop.f32.mrb[0].mxu0
        %v2437 = vpop.f32.mrb[0].mxu0
        %v2438 = vadd.f32 0.0, %v2437
        %v2439 = vpop.f32.mrb[0].mxu0
        %2440 = vmatprep.mubr.bf16.mxu0 0
        %2441 = vmatmul.mubr.bf16.gmra.mrb[0].mxu0 %v2156
        %v2442 = vpop.f32.mrb[0].mxu0
        %v2443 = vadd.f32 0.0, %v2442
        %v2444 = vpop.f32.mrb[0].mxu0
        %v2445 = vpop.f32.mrb[0].mxu0
        %v2446 = vadd.f32 0.0, %v2445
        %v2447 = vpop.f32.mrb[0].mxu0
        %2448 = vmatprep.mubr.bf16.mxu0 0
        %2449 = vmatmul.mubr.bf16.gmra.mrb[0].mxu0 %v2159
        %v2450 = vpop.f32.mrb[0].mxu0
        %v2451 = vadd.f32 0.0, %v2450
        %v2452 = vpop.f32.mrb[0].mxu0
        %v2453 = vpop.f32.mrb[0].mxu0
        %v2454 = vadd.f32 0.0, %v2453
        %v2455 = vpop.f32.mrb[0].mxu0
        %2456 = vmatprep.mubr.bf16.mxu0 0
        %2457 = vmatmul.mubr.bf16.gmra.mrb[0].mxu0 %v2162
        %v2458 = vpop.f32.mrb[0].mxu0
        %v2459 = vadd.f32 0.0, %v2458
        %v2460 = vpop.f32.mrb[0].mxu0
        %v2461 = vpop.f32.mrb[0].mxu0
        %v2462 = vadd.f32 0.0, %v2461
        %v2463 = vpop.f32.mrb[0].mxu0
        %2464 = vmatprep.mubr.bf16.mxu0 0
        %2465 = vmatmul.mubr.bf16.gmra.mrb[0].mxu0 %v2165
        %v2466 = vpop.f32.mrb[0].mxu0
        %v2467 = vadd.f32 0.0, %v2466
        %v2468 = vpop.f32.mrb[0].mxu0
        %v2469 = vpop.f32.mrb[0].mxu0
        %v2470 = vadd.f32 0.0, %v2469
        %v2471 = vpop.f32.mrb[0].mxu0
        %2472 = vmatprep.mubr.bf16.mxu0 0
        %2473 = vmatmul.mubr.bf16.gmra.mrb[0].mxu0 %v2168
        %v2474 = vpop.f32.mrb[0].mxu0
        %v2475 = vadd.f32 0.0, %v2474
        %v2476 = vpop.f32.mrb[0].mxu0
        %v2477 = vpop.f32.mrb[0].mxu0
        %v2478 = vadd.f32 0.0, %v2477
        %v2479 = vpop.f32.mrb[0].mxu0
        %2480 = vmatprep.mubr.bf16.mxu0 0
        %2481 = vmatmul.mubr.bf16.gmra.mrb[0].mxu0 %v2171
        %v2482 = vpop.f32.mrb[0].mxu0
        %v2483 = vadd.f32 0.0, %v2482
        %v2484 = vpop.f32.mrb[0].mxu0
        %v2485 = vpop.f32.mrb[0].mxu0
        %v2486 = vadd.f32 0.0, %v2485
        %v2487 = vpop.f32.mrb[0].mxu0
        %2488 = vmatprep.mubr.bf16.mxu0 0
        %2489 = vmatmul.mubr.bf16.gmra.mrb[0].mxu0 %v2174
        %v2490 = vpop.f32.mrb[0].mxu0
        %v2491 = vadd.f32 0.0, %v2490
        %v2492 = vpop.f32.mrb[0].mxu0
        %v2493 = vpop.f32.mrb[0].mxu0
        %v2494 = vadd.f32 0.0, %v2493
        %v2495 = vpop.f32.mrb[0].mxu0
        %2496 = vmatprep.mubr.bf16.mxu0 0
        %2497 = vmatmul.mubr.bf16.gmra.mrb[0].mxu0 %v2177
        %v2498 = vpop.f32.mrb[0].mxu0
        %v2499 = vadd.f32 0.0, %v2498
        %v2500 = vpop.f32.mrb[0].mxu0
        %v2501 = vpop.f32.mrb[0].mxu0
        %v2502 = vadd.f32 0.0, %v2501
        %v2503 = vpop.f32.mrb[0].mxu0
        %2504 = vmatprep.mubr.bf16.mxu0 0
        %2505 = vmatmul.mubr.bf16.gmra.mrb[0].mxu0 %v2180
        %v2506 = vpop.f32.mrb[0].mxu0
        %v2507 = vadd.f32 0.0, %v2506
        %v2508 = vpop.f32.mrb[0].mxu0
        %v2509 = vpop.f32.mrb[0].mxu0
        %v2510 = vadd.f32 0.0, %v2509
        %v2511 = vpop.f32.mrb[0].mxu0
        %2512 = vmatprep.mubr.bf16.mxu0 0
        %2513 = vmatmul.mubr.bf16.gmra.mrb[0].mxu0 %v2183
        %v2514 = vpop.f32.mrb[0].mxu0
        %v2515 = vadd.f32 0.0, %v2514
        %v2516 = vpop.f32.mrb[0].mxu0
        %v2517 = vpop.f32.mrb[0].mxu0
        %v2518 = vadd.f32 0.0, %v2517
        %v2519 = vpop.f32.mrb[0].mxu0
        %2520 = vmatprep.mubr.bf16.mxu0 0
        %2521 = vmatmul.mubr.bf16.gmra.mrb[0].mxu0 %v2186
        %v2522 = vpop.f32.mrb[0].mxu0
        %v2523 = vadd.f32 0.0, %v2522
        %v2524 = vpop.f32.mrb[0].mxu0
        %v2525 = vpop.f32.mrb[0].mxu0
        %v2526 = vadd.f32 0.0, %v2525
        %v2527 = vpop.f32.mrb[0].mxu0
        %2528 = vmatprep.mubr.bf16.mxu0 0
        %2529 = vmatmul.mubr.bf16.gmra.mrb[0].mxu0 %v2189
        %v2530 = vpop.f32.mrb[0].mxu0
        %v2531 = vadd.f32 0.0, %v2530
        %v2532 = vpop.f32.mrb[0].mxu0
        %v2533 = vpop.f32.mrb[0].mxu0
        %v2534 = vadd.f32 0.0, %v2533
        %v2535 = vpop.f32.mrb[0].mxu0
        %2536 = vmatprep.mubr.bf16.mxu0 0
        %2537 = vmatmul.mubr.bf16.gmra.mrb[0].mxu0 %v2192
        %v2538 = vpop.f32.mrb[0].mxu0
        %v2539 = vadd.f32 0.0, %v2538
        %v2540 = vpop.f32.mrb[0].mxu0
        %v2541 = vpop.f32.mrb[0].mxu0
        %v2542 = vpop.f32.mrb[0].mxu0
        %2543 = vmatprep.mubr.bf16.mxu0 0
        %2544 = vmatmul.mubr.bf16.gmra.mrb[0].mxu0 %v2195
        %v2545 = vpop.f32.mrb[0].mxu0
        %v2546 = vpop.f32.mrb[0].mxu0
        %v2547 = vpop.f32.mrb[0].mxu0
        %v2548 = vpop.f32.mrb[0].mxu0
        %2549 = vdwg.mxu0
        %v2550 = vpack.c.b16 %v1690, %v1690
        %v2555 = vunpack.c.l.b16 %v1410
        %v2556 = vunpack.c.l.b16 %v1411
        %v2557 = vunpack.c.l.b16 %v1412
        %v2558 = vunpack.c.l.b16 %v1413
        %v2559 = vpack.c.b16 %v2556, %v2555
        %v2560 = vpack.c.b16 %v2558, %v2557
        %v2563 = vsel %vm2073, %v1692, 0
        %v2565 = vsel %vm2073, %v1693, 0
        %v2567 = vsel %vm2073, %v1694, 0
        %v2569 = vsel %vm2073, %v1695, 0
        %v2571 = vsel %vm2073, %v1696, 0
        %v2573 = vsel %vm2073, %v1697, 0
        %v2575 = vsel %vm2073, %v1698, 0
        %v2577 = vsel %vm2073, %v1699, 0
        %v2579 = vsel %vm2073, %v1700, 0
        %v2581 = vsel %vm2073, %v1701, 0
        %v2583 = vsel %vm2073, %v1702, 0
        %v2585 = vsel %vm2073, %v1703, 0
        %v2587 = vsel %vm2073, %v1704, 0
        %v2589 = vsel %vm2073, %v1705, 0
        %v2591 = vsel %vm2073, %v1706, 0
        %v2593 = vsel %vm2073, %v1707, 0
        %v2595 = vsel %vm2073, %v1708, 0
        %v2597 = vsel %vm2073, %v1709, 0
        %v2599 = vsel %vm2073, %v1710, 0
        %v2601 = vsel %vm2073, %v1711, 0
        %v2603 = vsel %vm2073, %v1712, 0
        %v2605 = vsel %vm2073, %v1713, 0
        %v2607 = vsel %vm2073, %v1714, 0
        %v2609 = vsel %vm2073, %v1715, 0
        %v2611 = vsel %vm2073, %v1716, 0
        %v2613 = vsel %vm2073, %v1717, 0
        %v2615 = vsel %vm2073, %v1718, 0
        %v2617 = vsel %vm2073, %v1719, 0
        %v2619 = vsel %vm2073, %v1720, 0
        %v2621 = vsel %vm2073, %v1721, 0
        %v2623 = vsel %vm2073, %v1722, 0
        %v2625 = vsel %vm2073, %v1723, 0
        %v2627 = vsel %vm2073, %v1724, 0
        %v2629 = vsel %vm2073, %v1725, 0
        %v2631 = vsel %vm2073, %v1726, 0
        %v2633 = vsel %vm2073, %v1727, 0
        %v2635 = vsel %vm2073, %v1728, 0
        %v2637 = vsel %vm2073, %v1729, 0
        %v2639 = vsel %vm2073, %v1730, 0
        %v2641 = vsel %vm2073, %v1731, 0
        %v2644 = vsel %vm2073, %v2550, 0
        %2646 = vmatprep.subr.bf16.mxu0 0
        %2647 = vmatpush1.bf16.msra.mxu0 %v2559
        %2648 = vmatprep.subr.bf16.mxu0 0
        %2649 = vmatpush1.bf16.msra.mxu0 %v2560
        %2650 = vmatprep.subr.bf16.mxu0 0
        %2651 = vmatpush1.bf16.msra.mxu0 0
        %2652 = vmatprep.subr.bf16.mxu0 0
        %2653 = vmatpush1.bf16.msra.mxu0 0
        %2654 = vmatprep.subr.bf16.mxu0 0
        %2655 = vmatpush1.bf16.msra.mxu0 0
        %2656 = vmatprep.subr.bf16.mxu0 0
        %2657 = vmatpush1.bf16.msra.mxu0 0
        %2658 = vmatprep.subr.bf16.mxu0 0
        %2659 = vmatpush1.bf16.msra.mxu0 0
        %2660 = vmatprep.subr.bf16.mxu0 0
        %2661 = vmatpush1.bf16.msra.mxu0 0
        %2662 = vmatprep.subr.bf16.mxu0 0
        %2663 = vmatpush1.bf16.msra.mxu0 0
        %2664 = vmatprep.subr.bf16.mxu0 0
        %2665 = vmatpush1.bf16.msra.mxu0 0
        %2666 = vmatprep.subr.bf16.mxu0 0
        %2667 = vmatpush1.bf16.msra.mxu0 0
        %2668 = vmatprep.subr.bf16.mxu0 0
        %2669 = vmatpush1.bf16.msra.mxu0 0
        %2670 = vmatprep.subr.bf16.mxu0 0
        %2671 = vmatpush1.bf16.msra.mxu0 0
        %2672 = vmatprep.subr.bf16.mxu0 0
        %2673 = vmatpush1.bf16.msra.mxu0 0
        %2674 = vmatprep.subr.bf16.mxu0 0
        %2675 = vmatpush1.bf16.msra.mxu0 0
        %2676 = vmatprep.subr.bf16.mxu0 0
        %2677 = vmatpush1.bf16.msra.mxu0 0
        %2678 = vmatprep.mubr.bf16.mxu0 0
        %2679 = vmatmul.mubr.bf16.gmra.mrb[0].mxu0 %v2563
        %v2680 = vpop.f32.mrb[0].mxu0
        %v2681 = vpop.f32.mrb[0].mxu0
        %v2682 = vpop.f32.mrb[0].mxu0
        %v2683 = vpop.f32.mrb[0].mxu0
        %2684 = vmatprep.mubr.bf16.mxu0 0
        %2685 = vmatmul.mubr.bf16.gmra.mrb[0].mxu0 %v2565
        %v2686 = vpop.f32.mrb[0].mxu0
        %v2687 = vadd.f32 %v2238, %v2686
        %v2688 = vpop.f32.mrb[0].mxu0
        %v2689 = vpop.f32.mrb[0].mxu0
        %v2690 = vadd.f32 %v2241, %v2689
        %v2691 = vpop.f32.mrb[0].mxu0
        %2692 = vmatprep.mubr.bf16.mxu0 0
        %2693 = vmatmul.mubr.bf16.gmra.mrb[0].mxu0 %v2567
        %v2694 = vpop.f32.mrb[0].mxu0
        %v2695 = vadd.f32 %v2246, %v2694
        %v2696 = vpop.f32.mrb[0].mxu0
        %v2697 = vpop.f32.mrb[0].mxu0
        %v2698 = vadd.f32 %v2249, %v2697
        %v2699 = vpop.f32.mrb[0].mxu0
        %2700 = vmatprep.mubr.bf16.mxu0 0
        %2701 = vmatmul.mubr.bf16.gmra.mrb[0].mxu0 %v2569
        %v2702 = vpop.f32.mrb[0].mxu0
        %v2703 = vadd.f32 %v2254, %v2702
        %v2704 = vpop.f32.mrb[0].mxu0
        %v2705 = vpop.f32.mrb[0].mxu0
        %v2706 = vadd.f32 %v2257, %v2705
        %v2707 = vpop.f32.mrb[0].mxu0
        %2708 = vmatprep.mubr.bf16.mxu0 0
        %2709 = vmatmul.mubr.bf16.gmra.mrb[0].mxu0 %v2571
        %v2710 = vpop.f32.mrb[0].mxu0
        %v2711 = vadd.f32 %v2262, %v2710
        %v2712 = vpop.f32.mrb[0].mxu0
        %v2713 = vpop.f32.mrb[0].mxu0
        %v2714 = vadd.f32 %v2265, %v2713
        %v2715 = vpop.f32.mrb[0].mxu0
        %2716 = vmatprep.mubr.bf16.mxu0 0
        %2717 = vmatmul.mubr.bf16.gmra.mrb[0].mxu0 %v2573
        %v2718 = vpop.f32.mrb[0].mxu0
        %v2719 = vadd.f32 %v2270, %v2718
        %v2720 = vpop.f32.mrb[0].mxu0
        %v2721 = vpop.f32.mrb[0].mxu0
        %v2722 = vadd.f32 %v2273, %v2721
        %v2723 = vpop.f32.mrb[0].mxu0
        %2724 = vmatprep.mubr.bf16.mxu0 0
        %2725 = vmatmul.mubr.bf16.gmra.mrb[0].mxu0 %v2575
        %v2726 = vpop.f32.mrb[0].mxu0
        %v2727 = vadd.f32 %v2278, %v2726
        %v2728 = vpop.f32.mrb[0].mxu0
        %v2729 = vpop.f32.mrb[0].mxu0
        %v2730 = vadd.f32 %v2281, %v2729
        %v2731 = vpop.f32.mrb[0].mxu0
        %2732 = vmatprep.mubr.bf16.mxu0 0
        %2733 = vmatmul.mubr.bf16.gmra.mrb[0].mxu0 %v2577
        %v2734 = vpop.f32.mrb[0].mxu0
        %v2735 = vadd.f32 %v2286, %v2734
        %v2736 = vpop.f32.mrb[0].mxu0
        %v2737 = vpop.f32.mrb[0].mxu0
        %v2738 = vadd.f32 %v2289, %v2737
        %v2739 = vpop.f32.mrb[0].mxu0
        %2740 = vmatprep.mubr.bf16.mxu0 0
        %2741 = vmatmul.mubr.bf16.gmra.mrb[0].mxu0 %v2579
        %v2742 = vpop.f32.mrb[0].mxu0
        %v2743 = vadd.f32 %v2294, %v2742
        %v2744 = vpop.f32.mrb[0].mxu0
        %v2745 = vpop.f32.mrb[0].mxu0
        %v2746 = vadd.f32 %v2297, %v2745
        %v2747 = vpop.f32.mrb[0].mxu0
        %2748 = vmatprep.mubr.bf16.mxu0 0
        %2749 = vmatmul.mubr.bf16.gmra.mrb[0].mxu0 %v2581
        %v2750 = vpop.f32.mrb[0].mxu0
        %v2751 = vadd.f32 %v2302, %v2750
        %v2752 = vpop.f32.mrb[0].mxu0
        %v2753 = vpop.f32.mrb[0].mxu0
        %v2754 = vadd.f32 %v2305, %v2753
        %v2755 = vpop.f32.mrb[0].mxu0
        %2756 = vmatprep.mubr.bf16.mxu0 0
        %2757 = vmatmul.mubr.bf16.gmra.mrb[0].mxu0 %v2583
        %v2758 = vpop.f32.mrb[0].mxu0
        %v2759 = vadd.f32 %v2310, %v2758
        %v2760 = vpop.f32.mrb[0].mxu0
        %v2761 = vpop.f32.mrb[0].mxu0
        %v2762 = vadd.f32 %v2313, %v2761
        %v2763 = vpop.f32.mrb[0].mxu0
        %2764 = vmatprep.mubr.bf16.mxu0 0
        %2765 = vmatmul.mubr.bf16.gmra.mrb[0].mxu0 %v2585
        %v2766 = vpop.f32.mrb[0].mxu0
        %v2767 = vadd.f32 %v2318, %v2766
        %v2768 = vpop.f32.mrb[0].mxu0
        %v2769 = vpop.f32.mrb[0].mxu0
        %v2770 = vadd.f32 %v2321, %v2769
        %v2771 = vpop.f32.mrb[0].mxu0
        %2772 = vmatprep.mubr.bf16.mxu0 0
        %2773 = vmatmul.mubr.bf16.gmra.mrb[0].mxu0 %v2587
        %v2774 = vpop.f32.mrb[0].mxu0
        %v2775 = vadd.f32 %v2326, %v2774
        %v2776 = vpop.f32.mrb[0].mxu0
        %v2777 = vpop.f32.mrb[0].mxu0
        %v2778 = vadd.f32 %v2329, %v2777
        %v2779 = vpop.f32.mrb[0].mxu0
        %2780 = vmatprep.mubr.bf16.mxu0 0
        %2781 = vmatmul.mubr.bf16.gmra.mrb[0].mxu0 %v2589
        %v2782 = vpop.f32.mrb[0].mxu0
        %v2783 = vadd.f32 %v2334, %v2782
        %v2784 = vpop.f32.mrb[0].mxu0
        %v2785 = vpop.f32.mrb[0].mxu0
        %v2786 = vadd.f32 %v2337, %v2785
        %v2787 = vpop.f32.mrb[0].mxu0
        %2788 = vmatprep.mubr.bf16.mxu0 0
        %2789 = vmatmul.mubr.bf16.gmra.mrb[0].mxu0 %v2591
        %v2790 = vpop.f32.mrb[0].mxu0
        %v2791 = vadd.f32 %v2342, %v2790
        %v2792 = vpop.f32.mrb[0].mxu0
        %v2793 = vpop.f32.mrb[0].mxu0
        %v2794 = vadd.f32 %v2345, %v2793
        %v2795 = vpop.f32.mrb[0].mxu0
        %2796 = vmatprep.mubr.bf16.mxu0 0
        %2797 = vmatmul.mubr.bf16.gmra.mrb[0].mxu0 %v2593
        %v2798 = vpop.f32.mrb[0].mxu0
        %v2799 = vadd.f32 %v2350, %v2798
        %v2800 = vpop.f32.mrb[0].mxu0
        %v2801 = vpop.f32.mrb[0].mxu0
        %v2802 = vadd.f32 %v2353, %v2801
        %v2803 = vpop.f32.mrb[0].mxu0
        %2804 = vmatprep.mubr.bf16.mxu0 0
        %2805 = vmatmul.mubr.bf16.gmra.mrb[0].mxu0 %v2595
        %v2806 = vpop.f32.mrb[0].mxu0
        %v2807 = vadd.f32 %v2358, %v2806
        %v2808 = vpop.f32.mrb[0].mxu0
        %v2809 = vpop.f32.mrb[0].mxu0
        %v2810 = vadd.f32 %v2361, %v2809
        %v2811 = vpop.f32.mrb[0].mxu0
        %2812 = vmatprep.mubr.bf16.mxu0 0
        %2813 = vmatmul.mubr.bf16.gmra.mrb[0].mxu0 %v2597
        %v2814 = vpop.f32.mrb[0].mxu0
        %v2815 = vadd.f32 %v2366, %v2814
        %v2816 = vpop.f32.mrb[0].mxu0
        %v2817 = vpop.f32.mrb[0].mxu0
        %v2818 = vadd.f32 %v2369, %v2817
        %v2819 = vpop.f32.mrb[0].mxu0
        %2820 = vmatprep.mubr.bf16.mxu0 0
        %2821 = vmatmul.mubr.bf16.gmra.mrb[0].mxu0 %v2599
        %v2822 = vpop.f32.mrb[0].mxu0
        %v2823 = vadd.f32 %v2374, %v2822
        %v2824 = vpop.f32.mrb[0].mxu0
        %v2825 = vpop.f32.mrb[0].mxu0
        %v2826 = vadd.f32 %v2377, %v2825
        %v2827 = vpop.f32.mrb[0].mxu0
        %2828 = vmatprep.mubr.bf16.mxu0 0
        %2829 = vmatmul.mubr.bf16.gmra.mrb[0].mxu0 %v2601
        %v2830 = vpop.f32.mrb[0].mxu0
        %v2831 = vadd.f32 %v2382, %v2830
        %v2832 = vpop.f32.mrb[0].mxu0
        %v2833 = vpop.f32.mrb[0].mxu0
        %v2834 = vpop.f32.mrb[0].mxu0
        %2835 = vmatprep.mubr.bf16.mxu0 0
        %2836 = vmatmul.mubr.bf16.gmra.mrb[0].mxu0 %v2603
        %v2837 = vpop.f32.mrb[0].mxu0
        %v2838 = vpop.f32.mrb[0].mxu0
        %v2839 = vpop.f32.mrb[0].mxu0
        %v2840 = vpop.f32.mrb[0].mxu0
        %2841 = vmatprep.mubr.bf16.mxu0 0
        %2842 = vmatmul.mubr.bf16.gmra.mrb[0].mxu0 %v2605
        %v2843 = vpop.f32.mrb[0].mxu0
        %v2844 = vadd.f32 %v2395, %v2843
        %v2845 = vpop.f32.mrb[0].mxu0
        %v2846 = vpop.f32.mrb[0].mxu0
        %v2847 = vadd.f32 %v2398, %v2846
        %v2848 = vpop.f32.mrb[0].mxu0
        %2849 = vmatprep.mubr.bf16.mxu0 0
        %2850 = vmatmul.mubr.bf16.gmra.mrb[0].mxu0 %v2607
        %v2851 = vpop.f32.mrb[0].mxu0
        %v2852 = vadd.f32 %v2403, %v2851
        %v2853 = vpop.f32.mrb[0].mxu0
        %v2854 = vpop.f32.mrb[0].mxu0
        %v2855 = vadd.f32 %v2406, %v2854
        %v2856 = vpop.f32.mrb[0].mxu0
        %2857 = vmatprep.mubr.bf16.mxu0 0
        %2858 = vmatmul.mubr.bf16.gmra.mrb[0].mxu0 %v2609
        %v2859 = vpop.f32.mrb[0].mxu0
        %v2860 = vadd.f32 %v2411, %v2859
        %v2861 = vpop.f32.mrb[0].mxu0
        %v2862 = vpop.f32.mrb[0].mxu0
        %v2863 = vadd.f32 %v2414, %v2862
        %v2864 = vpop.f32.mrb[0].mxu0
        %2865 = vmatprep.mubr.bf16.mxu0 0
        %2866 = vmatmul.mubr.bf16.gmra.mrb[0].mxu0 %v2611
        %v2867 = vpop.f32.mrb[0].mxu0
        %v2868 = vadd.f32 %v2419, %v2867
        %v2869 = vpop.f32.mrb[0].mxu0
        %v2870 = vpop.f32.mrb[0].mxu0
        %v2871 = vadd.f32 %v2422, %v2870
        %v2872 = vpop.f32.mrb[0].mxu0
        %2873 = vmatprep.mubr.bf16.mxu0 0
        %2874 = vmatmul.mubr.bf16.gmra.mrb[0].mxu0 %v2613
        %v2875 = vpop.f32.mrb[0].mxu0
        %v2876 = vadd.f32 %v2427, %v2875
        %v2877 = vpop.f32.mrb[0].mxu0
        %v2878 = vpop.f32.mrb[0].mxu0
        %v2879 = vadd.f32 %v2430, %v2878
        %v2880 = vpop.f32.mrb[0].mxu0
        %2881 = vmatprep.mubr.bf16.mxu0 0
        %2882 = vmatmul.mubr.bf16.gmra.mrb[0].mxu0 %v2615
        %v2883 = vpop.f32.mrb[0].mxu0
        %v2884 = vadd.f32 %v2435, %v2883
        %v2885 = vpop.f32.mrb[0].mxu0
        %v2886 = vpop.f32.mrb[0].mxu0
        %v2887 = vadd.f32 %v2438, %v2886
        %v2888 = vpop.f32.mrb[0].mxu0
        %2889 = vmatprep.mubr.bf16.mxu0 0
        %2890 = vmatmul.mubr.bf16.gmra.mrb[0].mxu0 %v2617
        %v2891 = vpop.f32.mrb[0].mxu0
        %v2892 = vadd.f32 %v2443, %v2891
        %v2893 = vpop.f32.mrb[0].mxu0
        %v2894 = vpop.f32.mrb[0].mxu0
        %v2895 = vadd.f32 %v2446, %v2894
        %v2896 = vpop.f32.mrb[0].mxu0
        %2897 = vmatprep.mubr.bf16.mxu0 0
        %2898 = vmatmul.mubr.bf16.gmra.mrb[0].mxu0 %v2619
        %v2899 = vpop.f32.mrb[0].mxu0
        %v2900 = vadd.f32 %v2451, %v2899
        %v2901 = vpop.f32.mrb[0].mxu0
        %v2902 = vpop.f32.mrb[0].mxu0
        %v2903 = vadd.f32 %v2454, %v2902
        %v2904 = vpop.f32.mrb[0].mxu0
        %2905 = vmatprep.mubr.bf16.mxu0 0
        %2906 = vmatmul.mubr.bf16.gmra.mrb[0].mxu0 %v2621
        %v2907 = vpop.f32.mrb[0].mxu0
        %v2908 = vadd.f32 %v2459, %v2907
        %v2909 = vpop.f32.mrb[0].mxu0
        %v2910 = vpop.f32.mrb[0].mxu0
        %v2911 = vadd.f32 %v2462, %v2910
        %v2912 = vpop.f32.mrb[0].mxu0
        %2913 = vmatprep.mubr.bf16.mxu0 0
        %2914 = vmatmul.mubr.bf16.gmra.mrb[0].mxu0 %v2623
        %v2915 = vpop.f32.mrb[0].mxu0
        %v2916 = vadd.f32 %v2467, %v2915
        %v2917 = vpop.f32.mrb[0].mxu0
        %v2918 = vpop.f32.mrb[0].mxu0
        %v2919 = vadd.f32 %v2470, %v2918
        %v2920 = vpop.f32.mrb[0].mxu0
        %2921 = vmatprep.mubr.bf16.mxu0 0
        %2922 = vmatmul.mubr.bf16.gmra.mrb[0].mxu0 %v2625
        %v2923 = vpop.f32.mrb[0].mxu0
        %v2924 = vadd.f32 %v2475, %v2923
        %v2925 = vpop.f32.mrb[0].mxu0
        %v2926 = vpop.f32.mrb[0].mxu0
        %v2927 = vadd.f32 %v2478, %v2926
        %v2928 = vpop.f32.mrb[0].mxu0
        %2929 = vmatprep.mubr.bf16.mxu0 0
        %2930 = vmatmul.mubr.bf16.gmra.mrb[0].mxu0 %v2627
        %v2931 = vpop.f32.mrb[0].mxu0
        %v2932 = vadd.f32 %v2483, %v2931
        %v2933 = vpop.f32.mrb[0].mxu0
        %v2934 = vpop.f32.mrb[0].mxu0
        %v2935 = vadd.f32 %v2486, %v2934
        %v2936 = vpop.f32.mrb[0].mxu0
        %2937 = vmatprep.mubr.bf16.mxu0 0
        %2938 = vmatmul.mubr.bf16.gmra.mrb[0].mxu0 %v2629
        %v2939 = vpop.f32.mrb[0].mxu0
        %v2940 = vadd.f32 %v2491, %v2939
        %v2941 = vpop.f32.mrb[0].mxu0
        %v2942 = vpop.f32.mrb[0].mxu0
        %v2943 = vadd.f32 %v2494, %v2942
        %v2944 = vpop.f32.mrb[0].mxu0
        %2945 = vmatprep.mubr.bf16.mxu0 0
        %2946 = vmatmul.mubr.bf16.gmra.mrb[0].mxu0 %v2631
        %v2947 = vpop.f32.mrb[0].mxu0
        %v2948 = vadd.f32 %v2499, %v2947
        %v2949 = vpop.f32.mrb[0].mxu0
        %v2950 = vpop.f32.mrb[0].mxu0
        %v2951 = vadd.f32 %v2502, %v2950
        %v2952 = vpop.f32.mrb[0].mxu0
        %2953 = vmatprep.mubr.bf16.mxu0 0
        %2954 = vmatmul.mubr.bf16.gmra.mrb[0].mxu0 %v2633
        %v2955 = vpop.f32.mrb[0].mxu0
        %v2956 = vadd.f32 %v2507, %v2955
        %v2957 = vpop.f32.mrb[0].mxu0
        %v2958 = vpop.f32.mrb[0].mxu0
        %v2959 = vadd.f32 %v2510, %v2958
        %v2960 = vpop.f32.mrb[0].mxu0
        %2961 = vmatprep.mubr.bf16.mxu0 0
        %2962 = vmatmul.mubr.bf16.gmra.mrb[0].mxu0 %v2635
        %v2963 = vpop.f32.mrb[0].mxu0
        %v2964 = vadd.f32 %v2515, %v2963
        %v2965 = vpop.f32.mrb[0].mxu0
        %v2966 = vpop.f32.mrb[0].mxu0
        %v2967 = vadd.f32 %v2518, %v2966
        %v2968 = vpop.f32.mrb[0].mxu0
        %2969 = vmatprep.mubr.bf16.mxu0 0
        %2970 = vmatmul.mubr.bf16.gmra.mrb[0].mxu0 %v2637
        %v2971 = vpop.f32.mrb[0].mxu0
        %v2972 = vadd.f32 %v2523, %v2971
        %v2973 = vpop.f32.mrb[0].mxu0
        %v2974 = vpop.f32.mrb[0].mxu0
        %v2975 = vadd.f32 %v2526, %v2974
        %v2976 = vpop.f32.mrb[0].mxu0
        %2977 = vmatprep.mubr.bf16.mxu0 0
        %2978 = vmatmul.mubr.bf16.gmra.mrb[0].mxu0 %v2639
        %v2979 = vpop.f32.mrb[0].mxu0
        %v2980 = vadd.f32 %v2531, %v2979
        %v2981 = vpop.f32.mrb[0].mxu0
        %v2982 = vpop.f32.mrb[0].mxu0
        %v2983 = vadd.f32 %v2534, %v2982
        %v2984 = vpop.f32.mrb[0].mxu0
        %2985 = vmatprep.mubr.bf16.mxu0 0
        %2986 = vmatmul.mubr.bf16.gmra.mrb[0].mxu0 %v2641
        %v2987 = vpop.f32.mrb[0].mxu0
        %v2988 = vadd.f32 %v2539, %v2987
        %v2989 = vpop.f32.mrb[0].mxu0
        %v2990 = vpop.f32.mrb[0].mxu0
        %v2991 = vpop.f32.mrb[0].mxu0
        %2992 = vmatprep.mubr.bf16.mxu0 0
        %2993 = vmatmul.mubr.bf16.gmra.mrb[0].mxu0 %v2644
        %v2994 = vpop.f32.mrb[0].mxu0
        %v2995 = vpop.f32.mrb[0].mxu0
        %v2996 = vpop.f32.mrb[0].mxu0
        %v2997 = vpop.f32.mrb[0].mxu0
        %2998 = vdwg.mxu0
        %v2999 = vld [vmem:[#allocation2] sm:$0xe]
        %v3001 = vunpack.c.l.b16 %v2999
        %v3002 = vpack.c.b16 %v1611, %v3001
        %vm3003 = vcmask 1046528
        %v3004 = vrot.slane %v3002, 1
        %v3005 = vrot.slane %v1693, 1
        %v3006 = vsel %vm3003, %v3004, %v3005
        %v3007 = vrot.slane %v1694, 1
        %v3008 = vsel %vm3003, %v3005, %v3007
        %v3009 = vrot.slane %v1695, 1
        %v3010 = vsel %vm3003, %v3007, %v3009
        %v3011 = vrot.slane %v1696, 1
        %v3012 = vsel %vm3003, %v3009, %v3011
        %v3013 = vrot.slane %v1697, 1
        %v3014 = vsel %vm3003, %v3011, %v3013
        %v3015 = vrot.slane %v1698, 1
        %v3016 = vsel %vm3003, %v3013, %v3015
        %v3017 = vrot.slane %v1699, 1
        %v3018 = vsel %vm3003, %v3015, %v3017
        %v3019 = vrot.slane %v1700, 1
        %v3020 = vsel %vm3003, %v3017, %v3019
        %v3021 = vrot.slane %v1701, 1
        %v3022 = vsel %vm3003, %v3019, %v3021
        %v3023 = vrot.slane %v1702, 1
        %v3024 = vsel %vm3003, %v3021, %v3023
        %v3025 = vrot.slane %v1703, 1
        %v3026 = vsel %vm3003, %v3023, %v3025
        %v3027 = vrot.slane %v1704, 1
        %v3028 = vsel %vm3003, %v3025, %v3027
        %v3029 = vrot.slane %v1705, 1
        %v3030 = vsel %vm3003, %v3027, %v3029
        %v3031 = vrot.slane %v1706, 1
        %v3032 = vsel %vm3003, %v3029, %v3031
        %v3033 = vrot.slane %v1707, 1
        %v3034 = vsel %vm3003, %v3031, %v3033
        %v3035 = vrot.slane %v1708, 1
        %v3036 = vsel %vm3003, %v3033, %v3035
        %v3037 = vrot.slane %v1709, 1
        %v3038 = vsel %vm3003, %v3035, %v3037
        %v3039 = vrot.slane %v1710, 1
        %v3040 = vsel %vm3003, %v3037, %v3039
        %v3041 = vrot.slane %v1711, 1
        %v3042 = vsel %vm3003, %v3039, %v3041
        %v3043 = vrot.slane %v1712, 1
        %v3044 = vsel %vm3003, %v3041, %v3043
        %v3045 = vrot.slane %v1713, 1
        %v3046 = vsel %vm3003, %v3043, %v3045
        %v3047 = vrot.slane %v1714, 1
        %v3048 = vsel %vm3003, %v3045, %v3047
        %v3049 = vrot.slane %v1715, 1
        %v3050 = vsel %vm3003, %v3047, %v3049
        %v3051 = vrot.slane %v1716, 1
        %v3052 = vsel %vm3003, %v3049, %v3051
        %v3053 = vrot.slane %v1717, 1
        %v3054 = vsel %vm3003, %v3051, %v3053
        %v3055 = vrot.slane %v1718, 1
        %v3056 = vsel %vm3003, %v3053, %v3055
        %v3057 = vrot.slane %v1719, 1
        %v3058 = vsel %vm3003, %v3055, %v3057
        %v3059 = vrot.slane %v1720, 1
        %v3060 = vsel %vm3003, %v3057, %v3059
        %v3061 = vrot.slane %v1721, 1
        %v3062 = vsel %vm3003, %v3059, %v3061
        %v3063 = vrot.slane %v1722, 1
        %v3064 = vsel %vm3003, %v3061, %v3063
        %v3065 = vrot.slane %v1723, 1
        %v3066 = vsel %vm3003, %v3063, %v3065
        %v3067 = vrot.slane %v1724, 1
        %v3068 = vsel %vm3003, %v3065, %v3067
        %v3069 = vrot.slane %v1725, 1
        %v3070 = vsel %vm3003, %v3067, %v3069
        %v3071 = vrot.slane %v1726, 1
        %v3072 = vsel %vm3003, %v3069, %v3071
        %v3073 = vrot.slane %v1727, 1
        %v3074 = vsel %vm3003, %v3071, %v3073
        %v3075 = vrot.slane %v1728, 1
        %v3076 = vsel %vm3003, %v3073, %v3075
        %v3077 = vrot.slane %v1729, 1
        %v3078 = vsel %vm3003, %v3075, %v3077
        %v3079 = vrot.slane %v1730, 1
        %v3080 = vsel %vm3003, %v3077, %v3079
        %v3081 = vrot.slane %v1731, 1
        %v3082 = vsel %vm3003, %v3079, %v3081
        %v3083 = vrot.slane %v1732, 1
        %v3084 = vsel %vm3003, %v3081, %v3083
        %v3089 = vunpack.c.l.b16 %v1418
        %v3090 = vunpack.c.l.b16 %v1419
        %v3091 = vunpack.c.l.b16 %v1420
        %v3092 = vunpack.c.l.b16 %v1421
        %v3093 = vpack.c.b16 %v3090, %v3089
        %v3094 = vpack.c.b16 %v3092, %v3091
        %v3098 = vsel %vm2073, %v3006, 0
        %v3101 = vsel %vm2073, %v3008, 0
        %v3104 = vsel %vm2073, %v3010, 0
        %v3107 = vsel %vm2073, %v3012, 0
        %v3110 = vsel %vm2073, %v3014, 0
        %v3113 = vsel %vm2073, %v3016, 0
        %v3116 = vsel %vm2073, %v3018, 0
        %v3119 = vsel %vm2073, %v3020, 0
        %v3122 = vsel %vm2073, %v3022, 0
        %v3125 = vsel %vm2073, %v3024, 0
        %v3128 = vsel %vm2073, %v3026, 0
        %v3131 = vsel %vm2073, %v3028, 0
        %v3134 = vsel %vm2073, %v3030, 0
        %v3137 = vsel %vm2073, %v3032, 0
        %v3140 = vsel %vm2073, %v3034, 0
        %v3143 = vsel %vm2073, %v3036, 0
        %v3146 = vsel %vm2073, %v3038, 0
        %v3149 = vsel %vm2073, %v3040, 0
        %v3152 = vsel %vm2073, %v3042, 0
        %v3155 = vsel %vm2073, %v3044, 0
        %v3158 = vsel %vm2073, %v3046, 0
        %v3161 = vsel %vm2073, %v3048, 0
        %v3164 = vsel %vm2073, %v3050, 0
        %v3167 = vsel %vm2073, %v3052, 0
        %v3170 = vsel %vm2073, %v3054, 0
        %v3173 = vsel %vm2073, %v3056, 0
        %v3176 = vsel %vm2073, %v3058, 0
        %v3179 = vsel %vm2073, %v3060, 0
        %v3182 = vsel %vm2073, %v3062, 0
        %v3185 = vsel %vm2073, %v3064, 0
        %v3188 = vsel %vm2073, %v3066, 0
        %v3191 = vsel %vm2073, %v3068, 0
        %v3194 = vsel %vm2073, %v3070, 0
        %v3197 = vsel %vm2073, %v3072, 0
        %v3200 = vsel %vm2073, %v3074, 0
        %v3203 = vsel %vm2073, %v3076, 0
        %v3206 = vsel %vm2073, %v3078, 0
        %v3209 = vsel %vm2073, %v3080, 0
        %v3212 = vsel %vm2073, %v3082, 0
        %v3215 = vsel %vm2073, %v3084, 0
        %v3218 = vsel %vm2073, %v3083, 0
        %3220 = vmatprep.subr.bf16.mxu0 0
        %3221 = vmatpush1.bf16.msra.mxu0 %v3093
        %3222 = vmatprep.subr.bf16.mxu0 0
        %3223 = vmatpush1.bf16.msra.mxu0 %v3094
        %3224 = vmatprep.subr.bf16.mxu0 0
        %3225 = vmatpush1.bf16.msra.mxu0 0
        %3226 = vmatprep.subr.bf16.mxu0 0
        %3227 = vmatpush1.bf16.msra.mxu0 0
        %3228 = vmatprep.subr.bf16.mxu0 0
        %3229 = vmatpush1.bf16.msra.mxu0 0
        %3230 = vmatprep.subr.bf16.mxu0 0
        %3231 = vmatpush1.bf16.msra.mxu0 0
        %3232 = vmatprep.subr.bf16.mxu0 0
        %3233 = vmatpush1.bf16.msra.mxu0 0
        %3234 = vmatprep.subr.bf16.mxu0 0
        %3235 = vmatpush1.bf16.msra.mxu0 0
        %3236 = vmatprep.subr.bf16.mxu0 0
        %3237 = vmatpush1.bf16.msra.mxu0 0
        %3238 = vmatprep.subr.bf16.mxu0 0
        %3239 = vmatpush1.bf16.msra.mxu0 0
        %3240 = vmatprep.subr.bf16.mxu0 0
        %3241 = vmatpush1.bf16.msra.mxu0 0
        %3242 = vmatprep.subr.bf16.mxu0 0
        %3243 = vmatpush1.bf16.msra.mxu0 0
        %3244 = vmatprep.subr.bf16.mxu0 0
        %3245 = vmatpush1.bf16.msra.mxu0 0
        %3246 = vmatprep.subr.bf16.mxu0 0
        %3247 = vmatpush1.bf16.msra.mxu0 0
        %3248 = vmatprep.subr.bf16.mxu0 0
        %3249 = vmatpush1.bf16.msra.mxu0 0
        %3250 = vmatprep.subr.bf16.mxu0 0
        %3251 = vmatpush1.bf16.msra.mxu0 0
        %3252 = vmatprep.mubr.bf16.mxu0 0
        %3253 = vmatmul.mubr.bf16.gmra.mrb[0].mxu0 %v3098
        %v3254 = vpop.f32.mrb[0].mxu0
        %v3255 = vpop.f32.mrb[0].mxu0
        %v3256 = vpop.f32.mrb[0].mxu0
        %v3257 = vpop.f32.mrb[0].mxu0
        %3258 = vmatprep.mubr.bf16.mxu0 0
        %3259 = vmatmul.mubr.bf16.gmra.mrb[0].mxu0 %v3101
        %v3260 = vpop.f32.mrb[0].mxu0
        %v3261 = vadd.f32 0.0, %v3260
        %v3262 = vpop.f32.mrb[0].mxu0
        %v3263 = vpop.f32.mrb[0].mxu0
        %v3264 = vadd.f32 0.0, %v3263
        %v3265 = vpop.f32.mrb[0].mxu0
        %3266 = vmatprep.mubr.bf16.mxu0 0
        %3267 = vmatmul.mubr.bf16.gmra.mrb[0].mxu0 %v3104
        %v3268 = vpop.f32.mrb[0].mxu0
        %v3269 = vadd.f32 0.0, %v3268
        %v3270 = vpop.f32.mrb[0].mxu0
        %v3271 = vpop.f32.mrb[0].mxu0
        %v3272 = vadd.f32 0.0, %v3271
        %v3273 = vpop.f32.mrb[0].mxu0
        %3274 = vmatprep.mubr.bf16.mxu0 0
        %3275 = vmatmul.mubr.bf16.gmra.mrb[0].mxu0 %v3107
        %v3276 = vpop.f32.mrb[0].mxu0
        %v3277 = vadd.f32 0.0, %v3276
        %v3278 = vpop.f32.mrb[0].mxu0
        %v3279 = vpop.f32.mrb[0].mxu0
        %v3280 = vadd.f32 0.0, %v3279
        %v3281 = vpop.f32.mrb[0].mxu0
        %3282 = vmatprep.mubr.bf16.mxu0 0
        %3283 = vmatmul.mubr.bf16.gmra.mrb[0].mxu0 %v3110
        %v3284 = vpop.f32.mrb[0].mxu0
        %v3285 = vadd.f32 0.0, %v3284
        %v3286 = vpop.f32.mrb[0].mxu0
        %v3287 = vpop.f32.mrb[0].mxu0
        %v3288 = vadd.f32 0.0, %v3287
        %v3289 = vpop.f32.mrb[0].mxu0
        %3290 = vmatprep.mubr.bf16.mxu0 0
        %3291 = vmatmul.mubr.bf16.gmra.mrb[0].mxu0 %v3113
        %v3292 = vpop.f32.mrb[0].mxu0
        %v3293 = vadd.f32 0.0, %v3292
        %v3294 = vpop.f32.mrb[0].mxu0
        %v3295 = vpop.f32.mrb[0].mxu0
        %v3296 = vadd.f32 0.0, %v3295
        %v3297 = vpop.f32.mrb[0].mxu0
        %3298 = vmatprep.mubr.bf16.mxu0 0
        %3299 = vmatmul.mubr.bf16.gmra.mrb[0].mxu0 %v3116
        %v3300 = vpop.f32.mrb[0].mxu0
        %v3301 = vadd.f32 0.0, %v3300
        %v3302 = vpop.f32.mrb[0].mxu0
        %v3303 = vpop.f32.mrb[0].mxu0
        %v3304 = vadd.f32 0.0, %v3303
        %v3305 = vpop.f32.mrb[0].mxu0
        %3306 = vmatprep.mubr.bf16.mxu0 0
        %3307 = vmatmul.mubr.bf16.gmra.mrb[0].mxu0 %v3119
        %v3308 = vpop.f32.mrb[0].mxu0
        %v3309 = vadd.f32 0.0, %v3308
        %v3310 = vpop.f32.mrb[0].mxu0
        %v3311 = vpop.f32.mrb[0].mxu0
        %v3312 = vadd.f32 0.0, %v3311
        %v3313 = vpop.f32.mrb[0].mxu0
        %3314 = vmatprep.mubr.bf16.mxu0 0
        %3315 = vmatmul.mubr.bf16.gmra.mrb[0].mxu0 %v3122
        %v3316 = vpop.f32.mrb[0].mxu0
        %v3317 = vadd.f32 0.0, %v3316
        %v3318 = vpop.f32.mrb[0].mxu0
        %v3319 = vpop.f32.mrb[0].mxu0
        %v3320 = vadd.f32 0.0, %v3319
        %v3321 = vpop.f32.mrb[0].mxu0
        %3322 = vmatprep.mubr.bf16.mxu0 0
        %3323 = vmatmul.mubr.bf16.gmra.mrb[0].mxu0 %v3125
        %v3324 = vpop.f32.mrb[0].mxu0
        %v3325 = vadd.f32 0.0, %v3324
        %v3326 = vpop.f32.mrb[0].mxu0
        %v3327 = vpop.f32.mrb[0].mxu0
        %v3328 = vadd.f32 0.0, %v3327
        %v3329 = vpop.f32.mrb[0].mxu0
        %3330 = vmatprep.mubr.bf16.mxu0 0
        %3331 = vmatmul.mubr.bf16.gmra.mrb[0].mxu0 %v3128
        %v3332 = vpop.f32.mrb[0].mxu0
        %v3333 = vadd.f32 0.0, %v3332
        %v3334 = vpop.f32.mrb[0].mxu0
        %v3335 = vpop.f32.mrb[0].mxu0
        %v3336 = vadd.f32 0.0, %v3335
        %v3337 = vpop.f32.mrb[0].mxu0
        %3338 = vmatprep.mubr.bf16.mxu0 0
        %3339 = vmatmul.mubr.bf16.gmra.mrb[0].mxu0 %v3131
        %v3340 = vpop.f32.mrb[0].mxu0
        %v3341 = vadd.f32 0.0, %v3340
        %v3342 = vpop.f32.mrb[0].mxu0
        %v3343 = vpop.f32.mrb[0].mxu0
        %v3344 = vadd.f32 0.0, %v3343
        %v3345 = vpop.f32.mrb[0].mxu0
        %3346 = vmatprep.mubr.bf16.mxu0 0
        %3347 = vmatmul.mubr.bf16.gmra.mrb[0].mxu0 %v3134
        %v3348 = vpop.f32.mrb[0].mxu0
        %v3349 = vadd.f32 0.0, %v3348
        %v3350 = vpop.f32.mrb[0].mxu0
        %v3351 = vpop.f32.mrb[0].mxu0
        %v3352 = vadd.f32 0.0, %v3351
        %v3353 = vpop.f32.mrb[0].mxu0
        %3354 = vmatprep.mubr.bf16.mxu0 0
        %3355 = vmatmul.mubr.bf16.gmra.mrb[0].mxu0 %v3137
        %v3356 = vpop.f32.mrb[0].mxu0
        %v3357 = vadd.f32 0.0, %v3356
        %v3358 = vpop.f32.mrb[0].mxu0
        %v3359 = vpop.f32.mrb[0].mxu0
        %v3360 = vadd.f32 0.0, %v3359
        %v3361 = vpop.f32.mrb[0].mxu0
        %3362 = vmatprep.mubr.bf16.mxu0 0
        %3363 = vmatmul.mubr.bf16.gmra.mrb[0].mxu0 %v3140
        %v3364 = vpop.f32.mrb[0].mxu0
        %v3365 = vadd.f32 0.0, %v3364
        %v3366 = vpop.f32.mrb[0].mxu0
        %v3367 = vpop.f32.mrb[0].mxu0
        %v3368 = vadd.f32 0.0, %v3367
        %v3369 = vpop.f32.mrb[0].mxu0
        %3370 = vmatprep.mubr.bf16.mxu0 0
        %3371 = vmatmul.mubr.bf16.gmra.mrb[0].mxu0 %v3143
        %v3372 = vpop.f32.mrb[0].mxu0
        %v3373 = vadd.f32 0.0, %v3372
        %v3374 = vpop.f32.mrb[0].mxu0
        %v3375 = vpop.f32.mrb[0].mxu0
        %v3376 = vadd.f32 0.0, %v3375
        %v3377 = vpop.f32.mrb[0].mxu0
        %3378 = vmatprep.mubr.bf16.mxu0 0
        %3379 = vmatmul.mubr.bf16.gmra.mrb[0].mxu0 %v3146
        %v3380 = vpop.f32.mrb[0].mxu0
        %v3381 = vadd.f32 0.0, %v3380
        %v3382 = vpop.f32.mrb[0].mxu0
        %v3383 = vpop.f32.mrb[0].mxu0
        %v3384 = vadd.f32 0.0, %v3383
        %v3385 = vpop.f32.mrb[0].mxu0
        %3386 = vmatprep.mubr.bf16.mxu0 0
        %3387 = vmatmul.mubr.bf16.gmra.mrb[0].mxu0 %v3149
        %v3388 = vpop.f32.mrb[0].mxu0
        %v3389 = vadd.f32 0.0, %v3388
        %v3390 = vpop.f32.mrb[0].mxu0
        %v3391 = vpop.f32.mrb[0].mxu0
        %v3392 = vadd.f32 0.0, %v3391
        %v3393 = vpop.f32.mrb[0].mxu0
        %3394 = vmatprep.mubr.bf16.mxu0 0
        %3395 = vmatmul.mubr.bf16.gmra.mrb[0].mxu0 %v3152
        %v3396 = vpop.f32.mrb[0].mxu0
        %v3397 = vadd.f32 0.0, %v3396
        %v3398 = vpop.f32.mrb[0].mxu0
        %v3399 = vpop.f32.mrb[0].mxu0
        %v3400 = vadd.f32 0.0, %v3399
        %v3401 = vpop.f32.mrb[0].mxu0
        %3402 = vmatprep.mubr.bf16.mxu0 0
        %3403 = vmatmul.mubr.bf16.gmra.mrb[0].mxu0 %v3155
        %v3404 = vpop.f32.mrb[0].mxu0
        %v3405 = vadd.f32 0.0, %v3404
        %v3406 = vpop.f32.mrb[0].mxu0
        %v3407 = vpop.f32.mrb[0].mxu0
        %v3408 = vpop.f32.mrb[0].mxu0
        %3409 = vmatprep.mubr.bf16.mxu0 0
        %3410 = vmatmul.mubr.bf16.gmra.mrb[0].mxu0 %v3158
        %v3411 = vpop.f32.mrb[0].mxu0
        %v3412 = vpop.f32.mrb[0].mxu0
        %v3413 = vpop.f32.mrb[0].mxu0
        %v3414 = vpop.f32.mrb[0].mxu0
        %3415 = vmatprep.mubr.bf16.mxu0 0
        %3416 = vmatmul.mubr.bf16.gmra.mrb[0].mxu0 %v3161
        %v3417 = vpop.f32.mrb[0].mxu0
        %v3418 = vadd.f32 0.0, %v3417
        %v3419 = vpop.f32.mrb[0].mxu0
        %v3420 = vpop.f32.mrb[0].mxu0
        %v3421 = vadd.f32 0.0, %v3420
        %v3422 = vpop.f32.mrb[0].mxu0
        %3423 = vmatprep.mubr.bf16.mxu0 0
        %3424 = vmatmul.mubr.bf16.gmra.mrb[0].mxu0 %v3164
        %v3425 = vpop.f32.mrb[0].mxu0
        %v3426 = vadd.f32 0.0, %v3425
        %v3427 = vpop.f32.mrb[0].mxu0
        %v3428 = vpop.f32.mrb[0].mxu0
        %v3429 = vadd.f32 0.0, %v3428
        %v3430 = vpop.f32.mrb[0].mxu0
        %3431 = vmatprep.mubr.bf16.mxu0 0
        %3432 = vmatmul.mubr.bf16.gmra.mrb[0].mxu0 %v3167
        %v3433 = vpop.f32.mrb[0].mxu0
        %v3434 = vadd.f32 0.0, %v3433
        %v3435 = vpop.f32.mrb[0].mxu0
        %v3436 = vpop.f32.mrb[0].mxu0
        %v3437 = vadd.f32 0.0, %v3436
        %v3438 = vpop.f32.mrb[0].mxu0
        %3439 = vmatprep.mubr.bf16.mxu0 0
        %3440 = vmatmul.mubr.bf16.gmra.mrb[0].mxu0 %v3170
        %v3441 = vpop.f32.mrb[0].mxu0
        %v3442 = vadd.f32 0.0, %v3441
        %v3443 = vpop.f32.mrb[0].mxu0
        %v3444 = vpop.f32.mrb[0].mxu0
        %v3445 = vadd.f32 0.0, %v3444
        %v3446 = vpop.f32.mrb[0].mxu0
        %3447 = vmatprep.mubr.bf16.mxu0 0
        %3448 = vmatmul.mubr.bf16.gmra.mrb[0].mxu0 %v3173
        %v3449 = vpop.f32.mrb[0].mxu0
        %v3450 = vadd.f32 0.0, %v3449
        %v3451 = vpop.f32.mrb[0].mxu0
        %v3452 = vpop.f32.mrb[0].mxu0
        %v3453 = vadd.f32 0.0, %v3452
        %v3454 = vpop.f32.mrb[0].mxu0
        %3455 = vmatprep.mubr.bf16.mxu0 0
        %3456 = vmatmul.mubr.bf16.gmra.mrb[0].mxu0 %v3176
        %v3457 = vpop.f32.mrb[0].mxu0
        %v3458 = vadd.f32 0.0, %v3457
        %v3459 = vpop.f32.mrb[0].mxu0
        %v3460 = vpop.f32.mrb[0].mxu0
        %v3461 = vadd.f32 0.0, %v3460
        %v3462 = vpop.f32.mrb[0].mxu0
        %3463 = vmatprep.mubr.bf16.mxu0 0
        %3464 = vmatmul.mubr.bf16.gmra.mrb[0].mxu0 %v3179
        %v3465 = vpop.f32.mrb[0].mxu0
        %v3466 = vadd.f32 0.0, %v3465
        %v3467 = vpop.f32.mrb[0].mxu0
        %v3468 = vpop.f32.mrb[0].mxu0
        %v3469 = vadd.f32 0.0, %v3468
        %v3470 = vpop.f32.mrb[0].mxu0
        %3471 = vmatprep.mubr.bf16.mxu0 0
        %3472 = vmatmul.mubr.bf16.gmra.mrb[0].mxu0 %v3182
        %v3473 = vpop.f32.mrb[0].mxu0
        %v3474 = vadd.f32 0.0, %v3473
        %v3475 = vpop.f32.mrb[0].mxu0
        %v3476 = vpop.f32.mrb[0].mxu0
        %v3477 = vadd.f32 0.0, %v3476
        %v3478 = vpop.f32.mrb[0].mxu0
        %3479 = vmatprep.mubr.bf16.mxu0 0
        %3480 = vmatmul.mubr.bf16.gmra.mrb[0].mxu0 %v3185
        %v3481 = vpop.f32.mrb[0].mxu0
        %v3482 = vadd.f32 0.0, %v3481
        %v3483 = vpop.f32.mrb[0].mxu0
        %v3484 = vpop.f32.mrb[0].mxu0
        %v3485 = vadd.f32 0.0, %v3484
        %v3486 = vpop.f32.mrb[0].mxu0
        %3487 = vmatprep.mubr.bf16.mxu0 0
        %3488 = vmatmul.mubr.bf16.gmra.mrb[0].mxu0 %v3188
        %v3489 = vpop.f32.mrb[0].mxu0
        %v3490 = vadd.f32 0.0, %v3489
        %v3491 = vpop.f32.mrb[0].mxu0
        %v3492 = vpop.f32.mrb[0].mxu0
        %v3493 = vadd.f32 0.0, %v3492
        %v3494 = vpop.f32.mrb[0].mxu0
        %3495 = vmatprep.mubr.bf16.mxu0 0
        %3496 = vmatmul.mubr.bf16.gmra.mrb[0].mxu0 %v3191
        %v3497 = vpop.f32.mrb[0].mxu0
        %v3498 = vadd.f32 0.0, %v3497
        %v3499 = vpop.f32.mrb[0].mxu0
        %v3500 = vpop.f32.mrb[0].mxu0
        %v3501 = vadd.f32 0.0, %v3500
        %v3502 = vpop.f32.mrb[0].mxu0
        %3503 = vmatprep.mubr.bf16.mxu0 0
        %3504 = vmatmul.mubr.bf16.gmra.mrb[0].mxu0 %v3194
        %v3505 = vpop.f32.mrb[0].mxu0
        %v3506 = vadd.f32 0.0, %v3505
        %v3507 = vpop.f32.mrb[0].mxu0
        %v3508 = vpop.f32.mrb[0].mxu0
        %v3509 = vadd.f32 0.0, %v3508
        %v3510 = vpop.f32.mrb[0].mxu0
        %3511 = vmatprep.mubr.bf16.mxu0 0
        %3512 = vmatmul.mubr.bf16.gmra.mrb[0].mxu0 %v3197
        %v3513 = vpop.f32.mrb[0].mxu0
        %v3514 = vadd.f32 0.0, %v3513
        %v3515 = vpop.f32.mrb[0].mxu0
        %v3516 = vpop.f32.mrb[0].mxu0
        %v3517 = vadd.f32 0.0, %v3516
        %v3518 = vpop.f32.mrb[0].mxu0
        %3519 = vmatprep.mubr.bf16.mxu0 0
        %3520 = vmatmul.mubr.bf16.gmra.mrb[0].mxu0 %v3200
        %v3521 = vpop.f32.mrb[0].mxu0
        %v3522 = vadd.f32 0.0, %v3521
        %v3523 = vpop.f32.mrb[0].mxu0
        %v3524 = vpop.f32.mrb[0].mxu0
        %v3525 = vadd.f32 0.0, %v3524
        %v3526 = vpop.f32.mrb[0].mxu0
        %3527 = vmatprep.mubr.bf16.mxu0 0
        %3528 = vmatmul.mubr.bf16.gmra.mrb[0].mxu0 %v3203
        %v3529 = vpop.f32.mrb[0].mxu0
        %v3530 = vadd.f32 0.0, %v3529
        %v3531 = vpop.f32.mrb[0].mxu0
        %v3532 = vpop.f32.mrb[0].mxu0
        %v3533 = vadd.f32 0.0, %v3532
        %v3534 = vpop.f32.mrb[0].mxu0
        %3535 = vmatprep.mubr.bf16.mxu0 0
        %3536 = vmatmul.mubr.bf16.gmra.mrb[0].mxu0 %v3206
        %v3537 = vpop.f32.mrb[0].mxu0
        %v3538 = vadd.f32 0.0, %v3537
        %v3539 = vpop.f32.mrb[0].mxu0
        %v3540 = vpop.f32.mrb[0].mxu0
        %v3541 = vadd.f32 0.0, %v3540
        %v3542 = vpop.f32.mrb[0].mxu0
        %3543 = vmatprep.mubr.bf16.mxu0 0
        %3544 = vmatmul.mubr.bf16.gmra.mrb[0].mxu0 %v3209
        %v3545 = vpop.f32.mrb[0].mxu0
        %v3546 = vadd.f32 0.0, %v3545
        %v3547 = vpop.f32.mrb[0].mxu0
        %v3548 = vpop.f32.mrb[0].mxu0
        %v3549 = vadd.f32 0.0, %v3548
        %v3550 = vpop.f32.mrb[0].mxu0
        %3551 = vmatprep.mubr.bf16.mxu0 0
        %3552 = vmatmul.mubr.bf16.gmra.mrb[0].mxu0 %v3212
        %v3553 = vpop.f32.mrb[0].mxu0
        %v3554 = vadd.f32 0.0, %v3553
        %v3555 = vpop.f32.mrb[0].mxu0
        %v3556 = vpop.f32.mrb[0].mxu0
        %v3557 = vadd.f32 0.0, %v3556
        %v3558 = vpop.f32.mrb[0].mxu0
        %3559 = vmatprep.mubr.bf16.mxu0 0
        %3560 = vmatmul.mubr.bf16.gmra.mrb[0].mxu0 %v3215
        %v3561 = vpop.f32.mrb[0].mxu0
        %v3562 = vadd.f32 0.0, %v3561
        %v3563 = vpop.f32.mrb[0].mxu0
        %v3564 = vpop.f32.mrb[0].mxu0
        %v3565 = vpop.f32.mrb[0].mxu0
        %3566 = vmatprep.mubr.bf16.mxu0 0
        %3567 = vmatmul.mubr.bf16.gmra.mrb[0].mxu0 %v3218
        %v3568 = vpop.f32.mrb[0].mxu0
        %v3569 = vpop.f32.mrb[0].mxu0
        %v3570 = vpop.f32.mrb[0].mxu0
        %v3571 = vpop.f32.mrb[0].mxu0
        %3572 = vdwg.mxu0
        %v3573 = vadd.f32 %v2687, %v3261
        %v3574 = vadd.f32 %v2690, %v3264
        %v3575 = vadd.f32 %v2695, %v3269
        %v3576 = vadd.f32 %v2698, %v3272
        %v3577 = vadd.f32 %v2703, %v3277
        %v3578 = vadd.f32 %v2706, %v3280
        %v3579 = vadd.f32 %v2711, %v3285
        %v3580 = vadd.f32 %v2714, %v3288
        %v3581 = vadd.f32 %v2719, %v3293
        %v3582 = vadd.f32 %v2722, %v3296
        %v3583 = vadd.f32 %v2727, %v3301
        %v3584 = vadd.f32 %v2730, %v3304
        %v3585 = vadd.f32 %v2735, %v3309
        %v3586 = vadd.f32 %v2738, %v3312
        %v3587 = vadd.f32 %v2743, %v3317
        %v3588 = vadd.f32 %v2746, %v3320
        %v3589 = vadd.f32 %v2751, %v3325
        %v3590 = vadd.f32 %v2754, %v3328
        %v3591 = vadd.f32 %v2759, %v3333
        %v3592 = vadd.f32 %v2762, %v3336
        %v3593 = vadd.f32 %v2767, %v3341
        %v3594 = vadd.f32 %v2770, %v3344
        %v3595 = vadd.f32 %v2775, %v3349
        %v3596 = vadd.f32 %v2778, %v3352
        %v3597 = vadd.f32 %v2783, %v3357
        %v3598 = vadd.f32 %v2786, %v3360
        %v3599 = vadd.f32 %v2791, %v3365
        %v3600 = vadd.f32 %v2794, %v3368
        %v3601 = vadd.f32 %v2799, %v3373
        %v3602 = vadd.f32 %v2802, %v3376
        %v3603 = vadd.f32 %v2807, %v3381
        %v3604 = vadd.f32 %v2810, %v3384
        %v3605 = vadd.f32 %v2815, %v3389
        %v3606 = vadd.f32 %v2818, %v3392
        %v3607 = vadd.f32 %v2823, %v3397
        %v3608 = vadd.f32 %v2826, %v3400
        %v3609 = vadd.f32 %v2831, %v3405
        %v3610 = vadd.f32 %v2844, %v3418
        %v3611 = vadd.f32 %v2847, %v3421
        %v3612 = vadd.f32 %v2852, %v3426
        %v3613 = vadd.f32 %v2855, %v3429
        %v3614 = vadd.f32 %v2860, %v3434
        %v3615 = vadd.f32 %v2863, %v3437
        %v3616 = vadd.f32 %v2868, %v3442
        %v3617 = vadd.f32 %v2871, %v3445
        %v3618 = vadd.f32 %v2876, %v3450
        %v3619 = vadd.f32 %v2879, %v3453
        %v3620 = vadd.f32 %v2884, %v3458
        %v3621 = vadd.f32 %v2887, %v3461
        %v3622 = vadd.f32 %v2892, %v3466
        %v3623 = vadd.f32 %v2895, %v3469
        %v3624 = vadd.f32 %v2900, %v3474
        %v3625 = vadd.f32 %v2903, %v3477
        %v3626 = vadd.f32 %v2908, %v3482
        %v3627 = vadd.f32 %v2911, %v3485
        %v3628 = vadd.f32 %v2916, %v3490
        %v3629 = vadd.f32 %v2919, %v3493
        %v3630 = vadd.f32 %v2924, %v3498
        %v3631 = vadd.f32 %v2927, %v3501
        %v3632 = vadd.f32 %v2932, %v3506
        %v3633 = vadd.f32 %v2935, %v3509
        %v3634 = vadd.f32 %v2940, %v3514
        %v3635 = vadd.f32 %v2943, %v3517
        %v3636 = vadd.f32 %v2948, %v3522
        %v3637 = vadd.f32 %v2951, %v3525
        %v3638 = vadd.f32 %v2956, %v3530
        %v3639 = vadd.f32 %v2959, %v3533
        %v3640 = vadd.f32 %v2964, %v3538
        %v3641 = vadd.f32 %v2967, %v3541
        %v3642 = vadd.f32 %v2972, %v3546
        %v3643 = vadd.f32 %v2975, %v3549
        %v3644 = vadd.f32 %v2980, %v3554
        %v3645 = vadd.f32 %v2983, %v3557
        %v3646 = vadd.f32 %v2988, %v3562
        %v3647 = vld [vmem:[#allocation2 + $0x8] sm:$0xe]
        %v3648 = vld [vmem:[#allocation2 + $0xc] sm:$0xf]
        %v3649 = vld [vmem:[#allocation2 + $0x10] sm:$0xf]
        %v3650 = vld [vmem:[#allocation2 + $0x14] sm:$0xf]
        %v3651 = vld [vmem:[#allocation2 + $0x18] sm:$0xf]
        %v3652 = vld [vmem:[#allocation2 + $0x1c] sm:$0xf]
        %v3653 = vld [vmem:[#allocation2 + $0x20] sm:$0xf]
        %v3654 = vld [vmem:[#allocation2 + $0x24] sm:$0xf]
        %v3655 = vld [vmem:[#allocation2 + $0x28] sm:$0xf]
        %v3656 = vld [vmem:[#allocation2 + $0x2c] sm:$0xf]
        %v3657 = vld [vmem:[#allocation2 + $0x30] sm:$0xf]
        %v3658 = vld [vmem:[#allocation2 + $0x34] sm:$0xf]
        %v3659 = vld [vmem:[#allocation2 + $0x38] sm:$0xf]
        %v3660 = vld [vmem:[#allocation2 + $0x3c] sm:$0xf]
        %v3661 = vld [vmem:[#allocation2 + $0x40] sm:$0xf]
        %v3662 = vld [vmem:[#allocation2 + $0x44] sm:$0xf]
        %v3663 = vld [vmem:[#allocation2 + $0x48] sm:$0xf]
        %v3664 = vld [vmem:[#allocation2 + $0x4c] sm:$0xf]
        %v3665 = vld [vmem:[#allocation2 + $0x50] sm:$0xf]
        %v3666 = vld [vmem:[#allocation2 + $0x54] sm:$0xf]
        %v3667 = vld [vmem:[#allocation2 + $0x58] sm:$0xf]
        %v3668 = vld [vmem:[#allocation2 + $0x5c] sm:$0xf]
        %v3669 = vld [vmem:[#allocation2 + $0x60] sm:$0xf]
        %v3670 = vld [vmem:[#allocation2 + $0x64] sm:$0xf]
        %v3671 = vld [vmem:[#allocation2 + $0x68] sm:$0xf]
        %v3672 = vld [vmem:[#allocation2 + $0x6c] sm:$0xf]
        %v3673 = vld [vmem:[#allocation2 + $0x70] sm:$0xf]
        %v3674 = vld [vmem:[#allocation2 + $0x74] sm:$0xf]
        %v3675 = vld [vmem:[#allocation2 + $0x78] sm:$0xf]
        %v3676 = vld [vmem:[#allocation2 + $0x7c] sm:$0xf]
        %v3677 = vld [vmem:[#allocation2 + $0x80] sm:$0xf]
        %v3678 = vld [vmem:[#allocation2 + $0x84] sm:$0xf]
        %v3679 = vld [vmem:[#allocation2 + $0x88] sm:$0xf]
        %v3680 = vld [vmem:[#allocation2 + $0x8c] sm:$0xf]
        %v3681 = vld [vmem:[#allocation2 + $0x90] sm:$0xf]
        %v3682 = vld [vmem:[#allocation2 + $0x94] sm:$0xf]
        %v3683 = vld [vmem:[#allocation2 + $0x98] sm:$0xf]
        %v3684 = vld [vmem:[#allocation2 + $0x9c] sm:$0xf]
        %v3685 = vld [vmem:[#allocation2 + $0xa0] sm:$0xf]
        %v3686 = vld [vmem:[#allocation2 + $0xa4] sm:$0xf]
        %v3687 = vld [vmem:[#allocation2 + $0xa8] sm:$0xf]
        %v3688 = vld [vmem:[#allocation2 + $0xac] sm:$0xf]
        %v3689 = vld [vmem:[#allocation2 + $0xb0] sm:$0xf]
        %v3690 = vld [vmem:[#allocation2 + $0xb4] sm:$0xf]
        %v3691 = vld [vmem:[#allocation2 + $0xb8] sm:$0xf]
        %v3692 = vld [vmem:[#allocation2 + $0xbc] sm:$0xf]
        %v3693 = vld [vmem:[#allocation2 + $0xc0] sm:$0xf]
        %v3694 = vld [vmem:[#allocation2 + $0xc4] sm:$0xf]
        %v3695 = vld [vmem:[#allocation2 + $0xc8] sm:$0xf]
        %v3696 = vld [vmem:[#allocation2 + $0xcc] sm:$0xf]
        %v3697 = vld [vmem:[#allocation2 + $0xd0] sm:$0xf]
        %v3698 = vld [vmem:[#allocation2 + $0xd4] sm:$0xf]
        %v3699 = vld [vmem:[#allocation2 + $0xd8] sm:$0xf]
        %v3700 = vld [vmem:[#allocation2 + $0xdc] sm:$0xf]
        %v3701 = vld [vmem:[#allocation2 + $0xe0] sm:$0xf]
        %v3702 = vld [vmem:[#allocation2 + $0xe4] sm:$0xf]
        %v3703 = vld [vmem:[#allocation2 + $0xe8] sm:$0xf]
        %v3704 = vld [vmem:[#allocation2 + $0xec] sm:$0xf]
        %v3705 = vld [vmem:[#allocation2 + $0xf0] sm:$0xf]
        %v3706 = vld [vmem:[#allocation2 + $0xf4] sm:$0xf]
        %v3707 = vld [vmem:[#allocation2 + $0xf8] sm:$0xf]
        %v3708 = vld [vmem:[#allocation2 + $0xfc] sm:$0xf]
        %v3709 = vld [vmem:[#allocation2 + $0x100] sm:$0xf]
        %v3710 = vld [vmem:[#allocation2 + $0x104] sm:$0xf]
        %v3711 = vld [vmem:[#allocation2 + $0x108] sm:$0xf]
        %v3712 = vld [vmem:[#allocation2 + $0x10c] sm:$0xf]
        %v3713 = vld [vmem:[#allocation2 + $0x110] sm:$0xf]
        %v3714 = vld [vmem:[#allocation2 + $0x114] sm:$0xf]
        %v3715 = vld [vmem:[#allocation2 + $0x118] sm:$0xf]
        %v3716 = vld [vmem:[#allocation2 + $0x11c] sm:$0xf]
        %v3717 = vld [vmem:[#allocation2 + $0x120] sm:$0xf]
        %v3718 = vld [vmem:[#allocation2 + $0x124] sm:$0xf]
        %v3719 = vld [vmem:[#allocation2 + $0x128] sm:$0xf]
        %v3720 = vld [vmem:[#allocation2 + $0x12c] sm:$0xf]
        %v3721 = vld [vmem:[#allocation2 + $0x130] sm:$0xf]
        %v3722 = vld [vmem:[#allocation2 + $0x134] sm:$0xf]
        %v3723 = vld [vmem:[#allocation2 + $0x138] sm:$0xf]
        %v3724 = vld [vmem:[#allocation2 + $0x13c] sm:$0xf]
        %v3725 = vld [vmem:[#allocation2 + $0x140] sm:$0xf]
        %v3726 = vld [vmem:[#allocation2 + $0x144] sm:$0xf]
        %v3727 = vld [vmem:[#allocation2 + $0x148] sm:$0xf]
        %v3728 = vld [vmem:[#allocation2 + $0x14c] sm:$0x1]
        %v3811 = vunpack.c.l.b16 %v3647
        %v3812 = vunpack.c.l.b16 %v3648
        %v3813 = vunpack.c.l.b16 %v3649
        %v3814 = vunpack.c.l.b16 %v3650
        %v3815 = vunpack.c.l.b16 %v3651
        %v3816 = vunpack.c.l.b16 %v3652
        %v3817 = vunpack.c.l.b16 %v3653
        %v3818 = vunpack.c.l.b16 %v3654
        %v3819 = vunpack.c.l.b16 %v3655
        %v3820 = vunpack.c.l.b16 %v3656
        %v3821 = vunpack.c.l.b16 %v3657
        %v3822 = vunpack.c.l.b16 %v3658
        %v3823 = vunpack.c.l.b16 %v3659
        %v3824 = vunpack.c.l.b16 %v3660
        %v3825 = vunpack.c.l.b16 %v3661
        %v3826 = vunpack.c.l.b16 %v3662
        %v3827 = vunpack.c.l.b16 %v3663
        %v3828 = vunpack.c.l.b16 %v3664
        %v3829 = vunpack.c.l.b16 %v3665
        %v3830 = vunpack.c.l.b16 %v3666
        %v3831 = vunpack.c.l.b16 %v3667
        %v3832 = vunpack.c.l.b16 %v3668
        %v3833 = vunpack.c.l.b16 %v3669
        %v3834 = vunpack.c.l.b16 %v3670
        %v3835 = vunpack.c.l.b16 %v3671
        %v3836 = vunpack.c.l.b16 %v3672
        %v3837 = vunpack.c.l.b16 %v3673
        %v3838 = vunpack.c.l.b16 %v3674
        %v3839 = vunpack.c.l.b16 %v3675
        %v3840 = vunpack.c.l.b16 %v3676
        %v3841 = vunpack.c.l.b16 %v3677
        %v3842 = vunpack.c.l.b16 %v3678
        %v3843 = vunpack.c.l.b16 %v3679
        %v3844 = vunpack.c.l.b16 %v3680
        %v3845 = vunpack.c.l.b16 %v3681
        %v3846 = vunpack.c.l.b16 %v3682
        %v3847 = vunpack.c.l.b16 %v3683
        %v3848 = vunpack.c.l.b16 %v3684
        %v3849 = vunpack.c.l.b16 %v3685
        %v3850 = vunpack.c.l.b16 %v3686
        %v3851 = vunpack.c.l.b16 %v3687
        %v3852 = vunpack.c.l.b16 %v3688
        %v3853 = vunpack.c.l.b16 %v3689
        %v3854 = vunpack.c.l.b16 %v3690
        %v3855 = vunpack.c.l.b16 %v3691
        %v3856 = vunpack.c.l.b16 %v3692
        %v3857 = vunpack.c.l.b16 %v3693
        %v3858 = vunpack.c.l.b16 %v3694
        %v3859 = vunpack.c.l.b16 %v3695
        %v3860 = vunpack.c.l.b16 %v3696
        %v3861 = vunpack.c.l.b16 %v3697
        %v3862 = vunpack.c.l.b16 %v3698
        %v3863 = vunpack.c.l.b16 %v3699
        %v3864 = vunpack.c.l.b16 %v3700
        %v3865 = vunpack.c.l.b16 %v3701
        %v3866 = vunpack.c.l.b16 %v3702
        %v3867 = vunpack.c.l.b16 %v3703
        %v3868 = vunpack.c.l.b16 %v3704
        %v3869 = vunpack.c.l.b16 %v3705
        %v3870 = vunpack.c.l.b16 %v3706
        %v3871 = vunpack.c.l.b16 %v3707
        %v3872 = vunpack.c.l.b16 %v3708
        %v3873 = vunpack.c.l.b16 %v3709
        %v3874 = vunpack.c.l.b16 %v3710
        %v3875 = vunpack.c.l.b16 %v3711
        %v3876 = vunpack.c.l.b16 %v3712
        %v3877 = vunpack.c.l.b16 %v3713
        %v3878 = vunpack.c.l.b16 %v3714
        %v3879 = vunpack.c.l.b16 %v3715
        %v3880 = vunpack.c.l.b16 %v3716
        %v3881 = vunpack.c.l.b16 %v3717
        %v3882 = vunpack.c.l.b16 %v3718
        %v3883 = vunpack.c.l.b16 %v3719
        %v3884 = vunpack.c.l.b16 %v3720
        %v3885 = vunpack.c.l.b16 %v3721
        %v3886 = vunpack.c.l.b16 %v3722
        %v3887 = vunpack.c.l.b16 %v3723
        %v3888 = vunpack.c.l.b16 %v3724
        %v3889 = vunpack.c.l.b16 %v3725
        %v3890 = vunpack.c.l.b16 %v3726
        %v3891 = vunpack.c.l.b16 %v3727
        %v3892 = vunpack.c.l.b16 %v3728
        %v3893 = vpack.c.b16 %v3812, %v3811
        %v3894 = vpack.c.b16 %v3814, %v3813
        %v3895 = vpack.c.b16 %v3816, %v3815
        %v3896 = vpack.c.b16 %v3818, %v3817
        %v3897 = vpack.c.b16 %v3820, %v3819
        %v3898 = vpack.c.b16 %v3822, %v3821
        %v3899 = vpack.c.b16 %v3824, %v3823
        %v3900 = vpack.c.b16 %v3826, %v3825
        %v3901 = vpack.c.b16 %v3828, %v3827
        %v3902 = vpack.c.b16 %v3830, %v3829
        %v3903 = vpack.c.b16 %v3832, %v3831
        %v3904 = vpack.c.b16 %v3834, %v3833
        %v3905 = vpack.c.b16 %v3836, %v3835
        %v3906 = vpack.c.b16 %v3838, %v3837
        %v3907 = vpack.c.b16 %v3840, %v3839
        %v3908 = vpack.c.b16 %v3842, %v3841
        %v3909 = vpack.c.b16 %v3844, %v3843
        %v3910 = vpack.c.b16 %v3846, %v3845
        %v3911 = vpack.c.b16 %v3848, %v3847
        %v3912 = vpack.c.b16 %v3850, %v3849
        %v3913 = vpack.c.b16 %v3852, %v3851
        %v3914 = vpack.c.b16 %v3854, %v3853
        %v3915 = vpack.c.b16 %v3856, %v3855
        %v3916 = vpack.c.b16 %v3858, %v3857
        %v3917 = vpack.c.b16 %v3860, %v3859
        %v3918 = vpack.c.b16 %v3862, %v3861
        %v3919 = vpack.c.b16 %v3864, %v3863
        %v3920 = vpack.c.b16 %v3866, %v3865
        %v3921 = vpack.c.b16 %v3868, %v3867
        %v3922 = vpack.c.b16 %v3870, %v3869
        %v3923 = vpack.c.b16 %v3872, %v3871
        %v3924 = vpack.c.b16 %v3874, %v3873
        %v3925 = vpack.c.b16 %v3876, %v3875
        %v3926 = vpack.c.b16 %v3878, %v3877
        %v3927 = vpack.c.b16 %v3880, %v3879
        %v3928 = vpack.c.b16 %v3882, %v3881
        %v3929 = vpack.c.b16 %v3884, %v3883
        %v3930 = vpack.c.b16 %v3886, %v3885
        %v3931 = vpack.c.b16 %v3888, %v3887
        %v3932 = vpack.c.b16 %v3890, %v3889
        %v3933 = vpack.c.b16 %v3892, %v3891
        %v3934 = vrot.slane %v3893, 1
        %v3935 = vrot.slane %v3894, 1
        %v3936 = vsel %vm3003, %v3934, %v3935
        %v3937 = vrot.slane %v3895, 1
        %v3938 = vsel %vm3003, %v3935, %v3937
        %v3939 = vrot.slane %v3896, 1
        %v3940 = vsel %vm3003, %v3937, %v3939
        %v3941 = vrot.slane %v3897, 1
        %v3942 = vsel %vm3003, %v3939, %v3941
        %v3943 = vrot.slane %v3898, 1
        %v3944 = vsel %vm3003, %v3941, %v3943
        %v3945 = vrot.slane %v3899, 1
        %v3946 = vsel %vm3003, %v3943, %v3945
        %v3947 = vrot.slane %v3900, 1
        %v3948 = vsel %vm3003, %v3945, %v3947
        %v3949 = vrot.slane %v3901, 1
        %v3950 = vsel %vm3003, %v3947, %v3949
        %v3951 = vrot.slane %v3902, 1
        %v3952 = vsel %vm3003, %v3949, %v3951
        %v3953 = vrot.slane %v3903, 1
        %v3954 = vsel %vm3003, %v3951, %v3953
        %v3955 = vrot.slane %v3904, 1
        %v3956 = vsel %vm3003, %v3953, %v3955
        %v3957 = vrot.slane %v3905, 1
        %v3958 = vsel %vm3003, %v3955, %v3957
        %v3959 = vrot.slane %v3906, 1
        %v3960 = vsel %vm3003, %v3957, %v3959
        %v3961 = vrot.slane %v3907, 1
        %v3962 = vsel %vm3003, %v3959, %v3961
        %v3963 = vrot.slane %v3908, 1
        %v3964 = vsel %vm3003, %v3961, %v3963
        %v3965 = vrot.slane %v3909, 1
        %v3966 = vsel %vm3003, %v3963, %v3965
        %v3967 = vrot.slane %v3910, 1
        %v3968 = vsel %vm3003, %v3965, %v3967
        %v3969 = vrot.slane %v3911, 1
        %v3970 = vsel %vm3003, %v3967, %v3969
        %v3971 = vrot.slane %v3912, 1
        %v3972 = vsel %vm3003, %v3969, %v3971
        %v3973 = vrot.slane %v3913, 1
        %v3974 = vsel %vm3003, %v3971, %v3973
        %v3975 = vrot.slane %v3914, 1
        %v3976 = vsel %vm3003, %v3973, %v3975
        %v3977 = vrot.slane %v3915, 1
        %v3978 = vsel %vm3003, %v3975, %v3977
        %v3979 = vrot.slane %v3916, 1
        %v3980 = vsel %vm3003, %v3977, %v3979
        %v3981 = vrot.slane %v3917, 1
        %v3982 = vsel %vm3003, %v3979, %v3981
        %v3983 = vrot.slane %v3918, 1
        %v3984 = vsel %vm3003, %v3981, %v3983
        %v3985 = vrot.slane %v3919, 1
        %v3986 = vsel %vm3003, %v3983, %v3985
        %v3987 = vrot.slane %v3920, 1
        %v3988 = vsel %vm3003, %v3985, %v3987
        %v3989 = vrot.slane %v3921, 1
        %v3990 = vsel %vm3003, %v3987, %v3989
        %v3991 = vrot.slane %v3922, 1
        %v3992 = vsel %vm3003, %v3989, %v3991
        %v3993 = vrot.slane %v3923, 1
        %v3994 = vsel %vm3003, %v3991, %v3993
        %v3995 = vrot.slane %v3924, 1
        %v3996 = vsel %vm3003, %v3993, %v3995
        %v3997 = vrot.slane %v3925, 1
        %v3998 = vsel %vm3003, %v3995, %v3997
        %v3999 = vrot.slane %v3926, 1
        %v4000 = vsel %vm3003, %v3997, %v3999
        %v4001 = vrot.slane %v3927, 1
        %v4002 = vsel %vm3003, %v3999, %v4001
        %v4003 = vrot.slane %v3928, 1
        %v4004 = vsel %vm3003, %v4001, %v4003
        %v4005 = vrot.slane %v3929, 1
        %v4006 = vsel %vm3003, %v4003, %v4005
        %v4007 = vrot.slane %v3930, 1
        %v4008 = vsel %vm3003, %v4005, %v4007
        %v4009 = vrot.slane %v3931, 1
        %v4010 = vsel %vm3003, %v4007, %v4009
        %v4011 = vrot.slane %v3932, 1
        %v4012 = vsel %vm3003, %v4009, %v4011
        %v4013 = vrot.slane %v3933, 1
        %v4014 = vsel %vm3003, %v4011, %v4013
        %v4019 = vunpack.c.l.b16 %v1422
        %v4020 = vunpack.c.l.b16 %v1423
        %v4021 = vunpack.c.l.b16 %v1424
        %v4022 = vunpack.c.l.b16 %v1425
        %v4023 = vpack.c.b16 %v4020, %v4019
        %v4024 = vpack.c.b16 %v4022, %v4021
        %v4028 = vsel %vm2073, %v3936, 0
        %v4031 = vsel %vm2073, %v3938, 0
        %v4034 = vsel %vm2073, %v3940, 0
        %v4037 = vsel %vm2073, %v3942, 0
        %v4040 = vsel %vm2073, %v3944, 0
        %v4043 = vsel %vm2073, %v3946, 0
        %v4046 = vsel %vm2073, %v3948, 0
        %v4049 = vsel %vm2073, %v3950, 0
        %v4052 = vsel %vm2073, %v3952, 0
        %v4055 = vsel %vm2073, %v3954, 0
        %v4058 = vsel %vm2073, %v3956, 0
        %v4061 = vsel %vm2073, %v3958, 0
        %v4064 = vsel %vm2073, %v3960, 0
        %v4067 = vsel %vm2073, %v3962, 0
        %v4070 = vsel %vm2073, %v3964, 0
        %v4073 = vsel %vm2073, %v3966, 0
        %v4076 = vsel %vm2073, %v3968, 0
        %v4079 = vsel %vm2073, %v3970, 0
        %v4082 = vsel %vm2073, %v3972, 0
        %v4085 = vsel %vm2073, %v3974, 0
        %v4088 = vsel %vm2073, %v3976, 0
        %v4091 = vsel %vm2073, %v3978, 0
        %v4094 = vsel %vm2073, %v3980, 0
        %v4097 = vsel %vm2073, %v3982, 0
        %v4100 = vsel %vm2073, %v3984, 0
        %v4103 = vsel %vm2073, %v3986, 0
        %v4106 = vsel %vm2073, %v3988, 0
        %v4109 = vsel %vm2073, %v3990, 0
        %v4112 = vsel %vm2073, %v3992, 0
        %v4115 = vsel %vm2073, %v3994, 0
        %v4118 = vsel %vm2073, %v3996, 0
        %v4121 = vsel %vm2073, %v3998, 0
        %v4124 = vsel %vm2073, %v4000, 0
        %v4127 = vsel %vm2073, %v4002, 0
        %v4130 = vsel %vm2073, %v4004, 0
        %v4133 = vsel %vm2073, %v4006, 0
        %v4136 = vsel %vm2073, %v4008, 0
        %v4139 = vsel %vm2073, %v4010, 0
        %v4142 = vsel %vm2073, %v4012, 0
        %v4145 = vsel %vm2073, %v4014, 0
        %v4148 = vsel %vm2073, %v4013, 0
        %4150 = vmatprep.subr.bf16.mxu0 0
        %4151 = vmatpush1.bf16.msra.mxu0 %v4023
        %4152 = vmatprep.subr.bf16.mxu0 0
        %4153 = vmatpush1.bf16.msra.mxu0 %v4024
        %4154 = vmatprep.subr.bf16.mxu0 0
        %4155 = vmatpush1.bf16.msra.mxu0 0
        %4156 = vmatprep.subr.bf16.mxu0 0
        %4157 = vmatpush1.bf16.msra.mxu0 0
        %4158 = vmatprep.subr.bf16.mxu0 0
        %4159 = vmatpush1.bf16.msra.mxu0 0
        %4160 = vmatprep.subr.bf16.mxu0 0
        %4161 = vmatpush1.bf16.msra.mxu0 0
        %4162 = vmatprep.subr.bf16.mxu0 0
        %4163 = vmatpush1.bf16.msra.mxu0 0
        %4164 = vmatprep.subr.bf16.mxu0 0
        %4165 = vmatpush1.bf16.msra.mxu0 0
        %4166 = vmatprep.subr.bf16.mxu0 0
        %4167 = vmatpush1.bf16.msra.mxu0 0
        %4168 = vmatprep.subr.bf16.mxu0 0
        %4169 = vmatpush1.bf16.msra.mxu0 0
        %4170 = vmatprep.subr.bf16.mxu0 0
        %4171 = vmatpush1.bf16.msra.mxu0 0
        %4172 = vmatprep.subr.bf16.mxu0 0
        %4173 = vmatpush1.bf16.msra.mxu0 0
        %4174 = vmatprep.subr.bf16.mxu0 0
        %4175 = vmatpush1.bf16.msra.mxu0 0
        %4176 = vmatprep.subr.bf16.mxu0 0
        %4177 = vmatpush1.bf16.msra.mxu0 0
        %4178 = vmatprep.subr.bf16.mxu0 0
        %4179 = vmatpush1.bf16.msra.mxu0 0
        %4180 = vmatprep.subr.bf16.mxu0 0
        %4181 = vmatpush1.bf16.msra.mxu0 0
        %4182 = vmatprep.mubr.bf16.mxu0 0
        %4183 = vmatmul.mubr.bf16.gmra.mrb[0].mxu0 %v4028
        %v4184 = vpop.f32.mrb[0].mxu0
        %v4185 = vpop.f32.mrb[0].mxu0
        %v4186 = vpop.f32.mrb[0].mxu0
        %v4187 = vpop.f32.mrb[0].mxu0
        %4188 = vmatprep.mubr.bf16.mxu0 0
        %4189 = vmatmul.mubr.bf16.gmra.mrb[0].mxu0 %v4031
        %v4190 = vpop.f32.mrb[0].mxu0
        %v4191 = vadd.f32 0.0, %v4190
        %v4192 = vpop.f32.mrb[0].mxu0
        %v4193 = vpop.f32.mrb[0].mxu0
        %v4194 = vadd.f32 0.0, %v4193
        %v4195 = vpop.f32.mrb[0].mxu0
        %4196 = vmatprep.mubr.bf16.mxu0 0
        %4197 = vmatmul.mubr.bf16.gmra.mrb[0].mxu0 %v4034
        %v4198 = vpop.f32.mrb[0].mxu0
        %v4199 = vadd.f32 0.0, %v4198
        %v4200 = vpop.f32.mrb[0].mxu0
        %v4201 = vpop.f32.mrb[0].mxu0
        %v4202 = vadd.f32 0.0, %v4201
        %v4203 = vpop.f32.mrb[0].mxu0
        %4204 = vmatprep.mubr.bf16.mxu0 0
        %4205 = vmatmul.mubr.bf16.gmra.mrb[0].mxu0 %v4037
        %v4206 = vpop.f32.mrb[0].mxu0
        %v4207 = vadd.f32 0.0, %v4206
        %v4208 = vpop.f32.mrb[0].mxu0
        %v4209 = vpop.f32.mrb[0].mxu0
        %v4210 = vadd.f32 0.0, %v4209
        %v4211 = vpop.f32.mrb[0].mxu0
        %4212 = vmatprep.mubr.bf16.mxu0 0
        %4213 = vmatmul.mubr.bf16.gmra.mrb[0].mxu0 %v4040
        %v4214 = vpop.f32.mrb[0].mxu0
        %v4215 = vadd.f32 0.0, %v4214
        %v4216 = vpop.f32.mrb[0].mxu0
        %v4217 = vpop.f32.mrb[0].mxu0
        %v4218 = vadd.f32 0.0, %v4217
        %v4219 = vpop.f32.mrb[0].mxu0
        %4220 = vmatprep.mubr.bf16.mxu0 0
        %4221 = vmatmul.mubr.bf16.gmra.mrb[0].mxu0 %v4043
        %v4222 = vpop.f32.mrb[0].mxu0
        %v4223 = vadd.f32 0.0, %v4222
        %v4224 = vpop.f32.mrb[0].mxu0
        %v4225 = vpop.f32.mrb[0].mxu0
        %v4226 = vadd.f32 0.0, %v4225
        %v4227 = vpop.f32.mrb[0].mxu0
        %4228 = vmatprep.mubr.bf16.mxu0 0
        %4229 = vmatmul.mubr.bf16.gmra.mrb[0].mxu0 %v4046
        %v4230 = vpop.f32.mrb[0].mxu0
        %v4231 = vadd.f32 0.0, %v4230
        %v4232 = vpop.f32.mrb[0].mxu0
        %v4233 = vpop.f32.mrb[0].mxu0
        %v4234 = vadd.f32 0.0, %v4233
        %v4235 = vpop.f32.mrb[0].mxu0
        %4236 = vmatprep.mubr.bf16.mxu0 0
        %4237 = vmatmul.mubr.bf16.gmra.mrb[0].mxu0 %v4049
        %v4238 = vpop.f32.mrb[0].mxu0
        %v4239 = vadd.f32 0.0, %v4238
        %v4240 = vpop.f32.mrb[0].mxu0
        %v4241 = vpop.f32.mrb[0].mxu0
        %v4242 = vadd.f32 0.0, %v4241
        %v4243 = vpop.f32.mrb[0].mxu0
        %4244 = vmatprep.mubr.bf16.mxu0 0
        %4245 = vmatmul.mubr.bf16.gmra.mrb[0].mxu0 %v4052
        %v4246 = vpop.f32.mrb[0].mxu0
        %v4247 = vadd.f32 0.0, %v4246
        %v4248 = vpop.f32.mrb[0].mxu0
        %v4249 = vpop.f32.mrb[0].mxu0
        %v4250 = vadd.f32 0.0, %v4249
        %v4251 = vpop.f32.mrb[0].mxu0
        %4252 = vmatprep.mubr.bf16.mxu0 0
        %4253 = vmatmul.mubr.bf16.gmra.mrb[0].mxu0 %v4055
        %v4254 = vpop.f32.mrb[0].mxu0
        %v4255 = vadd.f32 0.0, %v4254
        %v4256 = vpop.f32.mrb[0].mxu0
        %v4257 = vpop.f32.mrb[0].mxu0
        %v4258 = vadd.f32 0.0, %v4257
        %v4259 = vpop.f32.mrb[0].mxu0
        %4260 = vmatprep.mubr.bf16.mxu0 0
        %4261 = vmatmul.mubr.bf16.gmra.mrb[0].mxu0 %v4058
        %v4262 = vpop.f32.mrb[0].mxu0
        %v4263 = vadd.f32 0.0, %v4262
        %v4264 = vpop.f32.mrb[0].mxu0
        %v4265 = vpop.f32.mrb[0].mxu0
        %v4266 = vadd.f32 0.0, %v4265
        %v4267 = vpop.f32.mrb[0].mxu0
        %4268 = vmatprep.mubr.bf16.mxu0 0
        %4269 = vmatmul.mubr.bf16.gmra.mrb[0].mxu0 %v4061
        %v4270 = vpop.f32.mrb[0].mxu0
        %v4271 = vadd.f32 0.0, %v4270
        %v4272 = vpop.f32.mrb[0].mxu0
        %v4273 = vpop.f32.mrb[0].mxu0
        %v4274 = vadd.f32 0.0, %v4273
        %v4275 = vpop.f32.mrb[0].mxu0
        %4276 = vmatprep.mubr.bf16.mxu0 0
        %4277 = vmatmul.mubr.bf16.gmra.mrb[0].mxu0 %v4064
        %v4278 = vpop.f32.mrb[0].mxu0
        %v4279 = vadd.f32 0.0, %v4278
        %v4280 = vpop.f32.mrb[0].mxu0
        %v4281 = vpop.f32.mrb[0].mxu0
        %v4282 = vadd.f32 0.0, %v4281
        %v4283 = vpop.f32.mrb[0].mxu0
        %4284 = vmatprep.mubr.bf16.mxu0 0
        %4285 = vmatmul.mubr.bf16.gmra.mrb[0].mxu0 %v4067
        %v4286 = vpop.f32.mrb[0].mxu0
        %v4287 = vadd.f32 0.0, %v4286
        %v4288 = vpop.f32.mrb[0].mxu0
        %v4289 = vpop.f32.mrb[0].mxu0
        %v4290 = vadd.f32 0.0, %v4289
        %v4291 = vpop.f32.mrb[0].mxu0
        %4292 = vmatprep.mubr.bf16.mxu0 0
        %4293 = vmatmul.mubr.bf16.gmra.mrb[0].mxu0 %v4070
        %v4294 = vpop.f32.mrb[0].mxu0
        %v4295 = vadd.f32 0.0, %v4294
        %v4296 = vpop.f32.mrb[0].mxu0
        %v4297 = vpop.f32.mrb[0].mxu0
        %v4298 = vadd.f32 0.0, %v4297
        %v4299 = vpop.f32.mrb[0].mxu0
        %4300 = vmatprep.mubr.bf16.mxu0 0
        %4301 = vmatmul.mubr.bf16.gmra.mrb[0].mxu0 %v4073
        %v4302 = vpop.f32.mrb[0].mxu0
        %v4303 = vadd.f32 0.0, %v4302
        %v4304 = vpop.f32.mrb[0].mxu0
        %v4305 = vpop.f32.mrb[0].mxu0
        %v4306 = vadd.f32 0.0, %v4305
        %v4307 = vpop.f32.mrb[0].mxu0
        %4308 = vmatprep.mubr.bf16.mxu0 0
        %4309 = vmatmul.mubr.bf16.gmra.mrb[0].mxu0 %v4076
        %v4310 = vpop.f32.mrb[0].mxu0
        %v4311 = vadd.f32 0.0, %v4310
        %v4312 = vpop.f32.mrb[0].mxu0
        %v4313 = vpop.f32.mrb[0].mxu0
        %v4314 = vadd.f32 0.0, %v4313
        %v4315 = vpop.f32.mrb[0].mxu0
        %4316 = vmatprep.mubr.bf16.mxu0 0
        %4317 = vmatmul.mubr.bf16.gmra.mrb[0].mxu0 %v4079
        %v4318 = vpop.f32.mrb[0].mxu0
        %v4319 = vadd.f32 0.0, %v4318
        %v4320 = vpop.f32.mrb[0].mxu0
        %v4321 = vpop.f32.mrb[0].mxu0
        %v4322 = vadd.f32 0.0, %v4321
        %v4323 = vpop.f32.mrb[0].mxu0
        %4324 = vmatprep.mubr.bf16.mxu0 0
        %4325 = vmatmul.mubr.bf16.gmra.mrb[0].mxu0 %v4082
        %v4326 = vpop.f32.mrb[0].mxu0
        %v4327 = vadd.f32 0.0, %v4326
        %v4328 = vpop.f32.mrb[0].mxu0
        %v4329 = vpop.f32.mrb[0].mxu0
        %v4330 = vadd.f32 0.0, %v4329
        %v4331 = vpop.f32.mrb[0].mxu0
        %4332 = vmatprep.mubr.bf16.mxu0 0
        %4333 = vmatmul.mubr.bf16.gmra.mrb[0].mxu0 %v4085
        %v4334 = vpop.f32.mrb[0].mxu0
        %v4335 = vadd.f32 0.0, %v4334
        %v4336 = vpop.f32.mrb[0].mxu0
        %v4337 = vpop.f32.mrb[0].mxu0
        %v4338 = vpop.f32.mrb[0].mxu0
        %4339 = vmatprep.mubr.bf16.mxu0 0
        %4340 = vmatmul.mubr.bf16.gmra.mrb[0].mxu0 %v4088
        %v4341 = vpop.f32.mrb[0].mxu0
        %v4342 = vpop.f32.mrb[0].mxu0
        %v4343 = vpop.f32.mrb[0].mxu0
        %v4344 = vpop.f32.mrb[0].mxu0
        %4345 = vmatprep.mubr.bf16.mxu0 0
        %4346 = vmatmul.mubr.bf16.gmra.mrb[0].mxu0 %v4091
        %v4347 = vpop.f32.mrb[0].mxu0
        %v4348 = vadd.f32 0.0, %v4347
        %v4349 = vpop.f32.mrb[0].mxu0
        %v4350 = vpop.f32.mrb[0].mxu0
        %v4351 = vadd.f32 0.0, %v4350
        %v4352 = vpop.f32.mrb[0].mxu0
        %4353 = vmatprep.mubr.bf16.mxu0 0
        %4354 = vmatmul.mubr.bf16.gmra.mrb[0].mxu0 %v4094
        %v4355 = vpop.f32.mrb[0].mxu0
        %v4356 = vadd.f32 0.0, %v4355
        %v4357 = vpop.f32.mrb[0].mxu0
        %v4358 = vpop.f32.mrb[0].mxu0
        %v4359 = vadd.f32 0.0, %v4358
        %v4360 = vpop.f32.mrb[0].mxu0
        %4361 = vmatprep.mubr.bf16.mxu0 0
        %4362 = vmatmul.mubr.bf16.gmra.mrb[0].mxu0 %v4097
        %v4363 = vpop.f32.mrb[0].mxu0
        %v4364 = vadd.f32 0.0, %v4363
        %v4365 = vpop.f32.mrb[0].mxu0
        %v4366 = vpop.f32.mrb[0].mxu0
        %v4367 = vadd.f32 0.0, %v4366
        %v4368 = vpop.f32.mrb[0].mxu0
        %4369 = vmatprep.mubr.bf16.mxu0 0
        %4370 = vmatmul.mubr.bf16.gmra.mrb[0].mxu0 %v4100
        %v4371 = vpop.f32.mrb[0].mxu0
        %v4372 = vadd.f32 0.0, %v4371
        %v4373 = vpop.f32.mrb[0].mxu0
        %v4374 = vpop.f32.mrb[0].mxu0
        %v4375 = vadd.f32 0.0, %v4374
        %v4376 = vpop.f32.mrb[0].mxu0
        %4377 = vmatprep.mubr.bf16.mxu0 0
        %4378 = vmatmul.mubr.bf16.gmra.mrb[0].mxu0 %v4103
        %v4379 = vpop.f32.mrb[0].mxu0
        %v4380 = vadd.f32 0.0, %v4379
        %v4381 = vpop.f32.mrb[0].mxu0
        %v4382 = vpop.f32.mrb[0].mxu0
        %v4383 = vadd.f32 0.0, %v4382
        %v4384 = vpop.f32.mrb[0].mxu0
        %4385 = vmatprep.mubr.bf16.mxu0 0
        %4386 = vmatmul.mubr.bf16.gmra.mrb[0].mxu0 %v4106
        %v4387 = vpop.f32.mrb[0].mxu0
        %v4388 = vadd.f32 0.0, %v4387
        %v4389 = vpop.f32.mrb[0].mxu0
        %v4390 = vpop.f32.mrb[0].mxu0
        %v4391 = vadd.f32 0.0, %v4390
        %v4392 = vpop.f32.mrb[0].mxu0
        %4393 = vmatprep.mubr.bf16.mxu0 0
        %4394 = vmatmul.mubr.bf16.gmra.mrb[0].mxu0 %v4109
        %v4395 = vpop.f32.mrb[0].mxu0
        %v4396 = vadd.f32 0.0, %v4395
        %v4397 = vpop.f32.mrb[0].mxu0
        %v4398 = vpop.f32.mrb[0].mxu0
        %v4399 = vadd.f32 0.0, %v4398
        %v4400 = vpop.f32.mrb[0].mxu0
        %4401 = vmatprep.mubr.bf16.mxu0 0
        %4402 = vmatmul.mubr.bf16.gmra.mrb[0].mxu0 %v4112
        %v4403 = vpop.f32.mrb[0].mxu0
        %v4404 = vadd.f32 0.0, %v4403
        %v4405 = vpop.f32.mrb[0].mxu0
        %v4406 = vpop.f32.mrb[0].mxu0
        %v4407 = vadd.f32 0.0, %v4406
        %v4408 = vpop.f32.mrb[0].mxu0
        %4409 = vmatprep.mubr.bf16.mxu0 0
        %4410 = vmatmul.mubr.bf16.gmra.mrb[0].mxu0 %v4115
        %v4411 = vpop.f32.mrb[0].mxu0
        %v4412 = vadd.f32 0.0, %v4411
        %v4413 = vpop.f32.mrb[0].mxu0
        %v4414 = vpop.f32.mrb[0].mxu0
        %v4415 = vadd.f32 0.0, %v4414
        %v4416 = vpop.f32.mrb[0].mxu0
        %4417 = vmatprep.mubr.bf16.mxu0 0
        %4418 = vmatmul.mubr.bf16.gmra.mrb[0].mxu0 %v4118
        %v4419 = vpop.f32.mrb[0].mxu0
        %v4420 = vadd.f32 0.0, %v4419
        %v4421 = vpop.f32.mrb[0].mxu0
        %v4422 = vpop.f32.mrb[0].mxu0
        %v4423 = vadd.f32 0.0, %v4422
        %v4424 = vpop.f32.mrb[0].mxu0
        %4425 = vmatprep.mubr.bf16.mxu0 0
        %4426 = vmatmul.mubr.bf16.gmra.mrb[0].mxu0 %v4121
        %v4427 = vpop.f32.mrb[0].mxu0
        %v4428 = vadd.f32 0.0, %v4427
        %v4429 = vpop.f32.mrb[0].mxu0
        %v4430 = vpop.f32.mrb[0].mxu0
        %v4431 = vadd.f32 0.0, %v4430
        %v4432 = vpop.f32.mrb[0].mxu0
        %4433 = vmatprep.mubr.bf16.mxu0 0
        %4434 = vmatmul.mubr.bf16.gmra.mrb[0].mxu0 %v4124
        %v4435 = vpop.f32.mrb[0].mxu0
        %v4436 = vadd.f32 0.0, %v4435
        %v4437 = vpop.f32.mrb[0].mxu0
        %v4438 = vpop.f32.mrb[0].mxu0
        %v4439 = vadd.f32 0.0, %v4438
        %v4440 = vpop.f32.mrb[0].mxu0
        %4441 = vmatprep.mubr.bf16.mxu0 0
        %4442 = vmatmul.mubr.bf16.gmra.mrb[0].mxu0 %v4127
        %v4443 = vpop.f32.mrb[0].mxu0
        %v4444 = vadd.f32 0.0, %v4443
        %v4445 = vpop.f32.mrb[0].mxu0
        %v4446 = vpop.f32.mrb[0].mxu0
        %v4447 = vadd.f32 0.0, %v4446
        %v4448 = vpop.f32.mrb[0].mxu0
        %4449 = vmatprep.mubr.bf16.mxu0 0
        %4450 = vmatmul.mubr.bf16.gmra.mrb[0].mxu0 %v4130
        %v4451 = vpop.f32.mrb[0].mxu0
        %v4452 = vadd.f32 0.0, %v4451
        %v4453 = vpop.f32.mrb[0].mxu0
        %v4454 = vpop.f32.mrb[0].mxu0
        %v4455 = vadd.f32 0.0, %v4454
        %v4456 = vpop.f32.mrb[0].mxu0
        %4457 = vmatprep.mubr.bf16.mxu0 0
        %4458 = vmatmul.mubr.bf16.gmra.mrb[0].mxu0 %v4133
        %v4459 = vpop.f32.mrb[0].mxu0
        %v4460 = vadd.f32 0.0, %v4459
        %v4461 = vpop.f32.mrb[0].mxu0
        %v4462 = vpop.f32.mrb[0].mxu0
        %v4463 = vadd.f32 0.0, %v4462
        %v4464 = vpop.f32.mrb[0].mxu0
        %4465 = vmatprep.mubr.bf16.mxu0 0
        %4466 = vmatmul.mubr.bf16.gmra.mrb[0].mxu0 %v4136
        %v4467 = vpop.f32.mrb[0].mxu0
        %v4468 = vadd.f32 0.0, %v4467
        %v4469 = vpop.f32.mrb[0].mxu0
        %v4470 = vpop.f32.mrb[0].mxu0
        %v4471 = vadd.f32 0.0, %v4470
        %v4472 = vpop.f32.mrb[0].mxu0
        %4473 = vmatprep.mubr.bf16.mxu0 0
        %4474 = vmatmul.mubr.bf16.gmra.mrb[0].mxu0 %v4139
        %v4475 = vpop.f32.mrb[0].mxu0
        %v4476 = vadd.f32 0.0, %v4475
        %v4477 = vpop.f32.mrb[0].mxu0
        %v4478 = vpop.f32.mrb[0].mxu0
        %v4479 = vadd.f32 0.0, %v4478
        %v4480 = vpop.f32.mrb[0].mxu0
        %4481 = vmatprep.mubr.bf16.mxu0 0
        %4482 = vmatmul.mubr.bf16.gmra.mrb[0].mxu0 %v4142
        %v4483 = vpop.f32.mrb[0].mxu0
        %v4484 = vadd.f32 0.0, %v4483
        %v4485 = vpop.f32.mrb[0].mxu0
        %v4486 = vpop.f32.mrb[0].mxu0
        %v4487 = vadd.f32 0.0, %v4486
        %v4488 = vpop.f32.mrb[0].mxu0
        %4489 = vmatprep.mubr.bf16.mxu0 0
        %4490 = vmatmul.mubr.bf16.gmra.mrb[0].mxu0 %v4145
        %v4491 = vpop.f32.mrb[0].mxu0
        %v4492 = vadd.f32 0.0, %v4491
        %v4493 = vpop.f32.mrb[0].mxu0
        %v4494 = vpop.f32.mrb[0].mxu0
        %v4495 = vpop.f32.mrb[0].mxu0
        %4496 = vmatprep.mubr.bf16.mxu0 0
        %4497 = vmatmul.mubr.bf16.gmra.mrb[0].mxu0 %v4148
        %v4498 = vpop.f32.mrb[0].mxu0
        %v4499 = vpop.f32.mrb[0].mxu0
        %v4500 = vpop.f32.mrb[0].mxu0
        %v4501 = vpop.f32.mrb[0].mxu0
        %4502 = vdwg.mxu0
        %v4503 = vadd.f32 %v3573, %v4191
        %v4504 = vadd.f32 %v3574, %v4194
        %v4505 = vadd.f32 %v3575, %v4199
        %v4506 = vadd.f32 %v3576, %v4202
        %v4507 = vadd.f32 %v3577, %v4207
        %v4508 = vadd.f32 %v3578, %v4210
        %v4509 = vadd.f32 %v3579, %v4215
        %v4510 = vadd.f32 %v3580, %v4218
        %v4511 = vadd.f32 %v3581, %v4223
        %v4512 = vadd.f32 %v3582, %v4226
        %v4513 = vadd.f32 %v3583, %v4231
        %v4514 = vadd.f32 %v3584, %v4234
        %v4515 = vadd.f32 %v3585, %v4239
        %v4516 = vadd.f32 %v3586, %v4242
        %v4517 = vadd.f32 %v3587, %v4247
        %v4518 = vadd.f32 %v3588, %v4250
        %v4519 = vadd.f32 %v3589, %v4255
        %v4520 = vadd.f32 %v3590, %v4258
        %v4521 = vadd.f32 %v3591, %v4263
        %v4522 = vadd.f32 %v3592, %v4266
        %v4523 = vadd.f32 %v3593, %v4271
        %v4524 = vadd.f32 %v3594, %v4274
        %v4525 = vadd.f32 %v3595, %v4279
        %v4526 = vadd.f32 %v3596, %v4282
        %v4527 = vadd.f32 %v3597, %v4287
        %v4528 = vadd.f32 %v3598, %v4290
        %v4529 = vadd.f32 %v3599, %v4295
        %v4530 = vadd.f32 %v3600, %v4298
        %v4531 = vadd.f32 %v3601, %v4303
        %v4532 = vadd.f32 %v3602, %v4306
        %v4533 = vadd.f32 %v3603, %v4311
        %v4534 = vadd.f32 %v3604, %v4314
        %v4535 = vadd.f32 %v3605, %v4319
        %v4536 = vadd.f32 %v3606, %v4322
        %v4537 = vadd.f32 %v3607, %v4327
        %v4538 = vadd.f32 %v3608, %v4330
        %v4539 = vadd.f32 %v3609, %v4335
        %v4540 = vadd.f32 %v3610, %v4348
        %v4541 = vadd.f32 %v3611, %v4351
        %v4542 = vadd.f32 %v3612, %v4356
        %v4543 = vadd.f32 %v3613, %v4359
        %v4544 = vadd.f32 %v3614, %v4364
        %v4545 = vadd.f32 %v3615, %v4367
        %v4546 = vadd.f32 %v3616, %v4372
        %v4547 = vadd.f32 %v3617, %v4375
        %v4548 = vadd.f32 %v3618, %v4380
        %v4549 = vadd.f32 %v3619, %v4383
        %v4550 = vadd.f32 %v3620, %v4388
        %v4551 = vadd.f32 %v3621, %v4391
        %v4552 = vadd.f32 %v3622, %v4396
        %v4553 = vadd.f32 %v3623, %v4399
        %v4554 = vadd.f32 %v3624, %v4404
        %v4555 = vadd.f32 %v3625, %v4407
        %v4556 = vadd.f32 %v3626, %v4412
        %v4557 = vadd.f32 %v3627, %v4415
        %v4558 = vadd.f32 %v3628, %v4420
        %v4559 = vadd.f32 %v3629, %v4423
        %v4560 = vadd.f32 %v3630, %v4428
        %v4561 = vadd.f32 %v3631, %v4431
        %v4562 = vadd.f32 %v3632, %v4436
        %v4563 = vadd.f32 %v3633, %v4439
        %v4564 = vadd.f32 %v3634, %v4444
        %v4565 = vadd.f32 %v3635, %v4447
        %v4566 = vadd.f32 %v3636, %v4452
        %v4567 = vadd.f32 %v3637, %v4455
        %v4568 = vadd.f32 %v3638, %v4460
        %v4569 = vadd.f32 %v3639, %v4463
        %v4570 = vadd.f32 %v3640, %v4468
        %v4571 = vadd.f32 %v3641, %v4471
        %v4572 = vadd.f32 %v3642, %v4476
        %v4573 = vadd.f32 %v3643, %v4479
        %v4574 = vadd.f32 %v3644, %v4484
        %v4575 = vadd.f32 %v3645, %v4487
        %v4576 = vadd.f32 %v3646, %v4492
        %v4577 = vld [vmem:[#allocation2 + $0x14c] sm:$0x3]
        %v4579 = vunpack.c.l.b16 %v4577
        %v4580 = vpack.c.b16 %v4579, %v3891
        %vm4581 = vsmask.f32 6400
        %v4583 = vshrl.u32 %v3893, 16
        %v4585 = vrot.slane %v4583, 1
        %v4586 = vshll.u32 %v3893, 16
        %v4588 = vrot.slane %v4586, 2
        %v4589 = vor.u32 %v4585, %v4588
        %v4591 = vshrl.u32 %v3894, 16
        %v4593 = vrot.slane %v4591, 1
        %v4594 = vshll.u32 %v3894, 16
        %v4596 = vrot.slane %v4594, 2
        %v4597 = vor.u32 %v4593, %v4596
        %v4598 = vsel %vm4581, %v4589, %v4597
        %v4600 = vshrl.u32 %v3895, 16
        %v4602 = vrot.slane %v4600, 1
        %v4603 = vshll.u32 %v3895, 16
        %v4605 = vrot.slane %v4603, 2
        %v4606 = vor.u32 %v4602, %v4605
        %v4607 = vsel %vm4581, %v4597, %v4606
        %v4609 = vshrl.u32 %v3896, 16
        %v4611 = vrot.slane %v4609, 1
        %v4612 = vshll.u32 %v3896, 16
        %v4614 = vrot.slane %v4612, 2
        %v4615 = vor.u32 %v4611, %v4614
        %v4616 = vsel %vm4581, %v4606, %v4615
        %v4618 = vshrl.u32 %v3897, 16
        %v4620 = vrot.slane %v4618, 1
        %v4621 = vshll.u32 %v3897, 16
        %v4623 = vrot.slane %v4621, 2
        %v4624 = vor.u32 %v4620, %v4623
        %v4625 = vsel %vm4581, %v4615, %v4624
        %v4627 = vshrl.u32 %v3898, 16
        %v4629 = vrot.slane %v4627, 1
        %v4630 = vshll.u32 %v3898, 16
        %v4632 = vrot.slane %v4630, 2
        %v4633 = vor.u32 %v4629, %v4632
        %v4634 = vsel %vm4581, %v4624, %v4633
        %v4636 = vshrl.u32 %v3899, 16
        %v4638 = vrot.slane %v4636, 1
        %v4639 = vshll.u32 %v3899, 16
        %v4641 = vrot.slane %v4639, 2
        %v4642 = vor.u32 %v4638, %v4641
        %v4643 = vsel %vm4581, %v4633, %v4642
        %v4645 = vshrl.u32 %v3900, 16
        %v4647 = vrot.slane %v4645, 1
        %v4648 = vshll.u32 %v3900, 16
        %v4650 = vrot.slane %v4648, 2
        %v4651 = vor.u32 %v4647, %v4650
        %v4652 = vsel %vm4581, %v4642, %v4651
        %v4654 = vshrl.u32 %v3901, 16
        %v4656 = vrot.slane %v4654, 1
        %v4657 = vshll.u32 %v3901, 16
        %v4659 = vrot.slane %v4657, 2
        %v4660 = vor.u32 %v4656, %v4659
        %v4661 = vsel %vm4581, %v4651, %v4660
        %v4663 = vshrl.u32 %v3902, 16
        %v4665 = vrot.slane %v4663, 1
        %v4666 = vshll.u32 %v3902, 16
        %v4668 = vrot.slane %v4666, 2
        %v4669 = vor.u32 %v4665, %v4668
        %v4670 = vsel %vm4581, %v4660, %v4669
        %v4672 = vshrl.u32 %v3903, 16
        %v4674 = vrot.slane %v4672, 1
        %v4675 = vshll.u32 %v3903, 16
        %v4677 = vrot.slane %v4675, 2
        %v4678 = vor.u32 %v4674, %v4677
        %v4679 = vsel %vm4581, %v4669, %v4678
        %v4681 = vshrl.u32 %v3904, 16
        %v4683 = vrot.slane %v4681, 1
        %v4684 = vshll.u32 %v3904, 16
        %v4686 = vrot.slane %v4684, 2
        %v4687 = vor.u32 %v4683, %v4686
        %v4688 = vsel %vm4581, %v4678, %v4687
        %v4690 = vshrl.u32 %v3905, 16
        %v4692 = vrot.slane %v4690, 1
        %v4693 = vshll.u32 %v3905, 16
        %v4695 = vrot.slane %v4693, 2
        %v4696 = vor.u32 %v4692, %v4695
        %v4697 = vsel %vm4581, %v4687, %v4696
        %v4699 = vshrl.u32 %v3906, 16
        %v4701 = vrot.slane %v4699, 1
        %v4702 = vshll.u32 %v3906, 16
        %v4704 = vrot.slane %v4702, 2
        %v4705 = vor.u32 %v4701, %v4704
        %v4706 = vsel %vm4581, %v4696, %v4705
        %v4708 = vshrl.u32 %v3907, 16
        %v4710 = vrot.slane %v4708, 1
        %v4711 = vshll.u32 %v3907, 16
        %v4713 = vrot.slane %v4711, 2
        %v4714 = vor.u32 %v4710, %v4713
        %v4715 = vsel %vm4581, %v4705, %v4714
        %v4717 = vshrl.u32 %v3908, 16
        %v4719 = vrot.slane %v4717, 1
        %v4720 = vshll.u32 %v3908, 16
        %v4722 = vrot.slane %v4720, 2
        %v4723 = vor.u32 %v4719, %v4722
        %v4724 = vsel %vm4581, %v4714, %v4723
        %v4726 = vshrl.u32 %v3909, 16
        %v4728 = vrot.slane %v4726, 1
        %v4729 = vshll.u32 %v3909, 16
        %v4731 = vrot.slane %v4729, 2
        %v4732 = vor.u32 %v4728, %v4731
        %v4733 = vsel %vm4581, %v4723, %v4732
        %v4735 = vshrl.u32 %v3910, 16
        %v4737 = vrot.slane %v4735, 1
        %v4738 = vshll.u32 %v3910, 16
        %v4740 = vrot.slane %v4738, 2
        %v4741 = vor.u32 %v4737, %v4740
        %v4742 = vsel %vm4581, %v4732, %v4741
        %v4744 = vshrl.u32 %v3911, 16
        %v4746 = vrot.slane %v4744, 1
        %v4747 = vshll.u32 %v3911, 16
        %v4749 = vrot.slane %v4747, 2
        %v4750 = vor.u32 %v4746, %v4749
        %v4751 = vsel %vm4581, %v4741, %v4750
        %v4753 = vshrl.u32 %v3912, 16
        %v4755 = vrot.slane %v4753, 1
        %v4756 = vshll.u32 %v3912, 16
        %v4758 = vrot.slane %v4756, 2
        %v4759 = vor.u32 %v4755, %v4758
        %v4760 = vsel %vm4581, %v4750, %v4759
        %v4762 = vshrl.u32 %v3913, 16
        %v4764 = vrot.slane %v4762, 1
        %v4765 = vshll.u32 %v3913, 16
        %v4767 = vrot.slane %v4765, 2
        %v4768 = vor.u32 %v4764, %v4767
        %v4769 = vsel %vm4581, %v4759, %v4768
        %v4771 = vshrl.u32 %v3914, 16
        %v4773 = vrot.slane %v4771, 1
        %v4774 = vshll.u32 %v3914, 16
        %v4776 = vrot.slane %v4774, 2
        %v4777 = vor.u32 %v4773, %v4776
        %v4778 = vsel %vm4581, %v4768, %v4777
        %v4780 = vshrl.u32 %v3915, 16
        %v4782 = vrot.slane %v4780, 1
        %v4783 = vshll.u32 %v3915, 16
        %v4785 = vrot.slane %v4783, 2
        %v4786 = vor.u32 %v4782, %v4785
        %v4787 = vsel %vm4581, %v4777, %v4786
        %v4789 = vshrl.u32 %v3916, 16
        %v4791 = vrot.slane %v4789, 1
        %v4792 = vshll.u32 %v3916, 16
        %v4794 = vrot.slane %v4792, 2
        %v4795 = vor.u32 %v4791, %v4794
        %v4796 = vsel %vm4581, %v4786, %v4795
        %v4798 = vshrl.u32 %v3917, 16
        %v4800 = vrot.slane %v4798, 1
        %v4801 = vshll.u32 %v3917, 16
        %v4803 = vrot.slane %v4801, 2
        %v4804 = vor.u32 %v4800, %v4803
        %v4805 = vsel %vm4581, %v4795, %v4804
        %v4807 = vshrl.u32 %v3918, 16
        %v4809 = vrot.slane %v4807, 1
        %v4810 = vshll.u32 %v3918, 16
        %v4812 = vrot.slane %v4810, 2
        %v4813 = vor.u32 %v4809, %v4812
        %v4814 = vsel %vm4581, %v4804, %v4813
        %v4816 = vshrl.u32 %v3919, 16
        %v4818 = vrot.slane %v4816, 1
        %v4819 = vshll.u32 %v3919, 16
        %v4821 = vrot.slane %v4819, 2
        %v4822 = vor.u32 %v4818, %v4821
        %v4823 = vsel %vm4581, %v4813, %v4822
        %v4825 = vshrl.u32 %v3920, 16
        %v4827 = vrot.slane %v4825, 1
        %v4828 = vshll.u32 %v3920, 16
        %v4830 = vrot.slane %v4828, 2
        %v4831 = vor.u32 %v4827, %v4830
        %v4832 = vsel %vm4581, %v4822, %v4831
        %v4834 = vshrl.u32 %v3921, 16
        %v4836 = vrot.slane %v4834, 1
        %v4837 = vshll.u32 %v3921, 16
        %v4839 = vrot.slane %v4837, 2
        %v4840 = vor.u32 %v4836, %v4839
        %v4841 = vsel %vm4581, %v4831, %v4840
        %v4843 = vshrl.u32 %v3922, 16
        %v4845 = vrot.slane %v4843, 1
        %v4846 = vshll.u32 %v3922, 16
        %v4848 = vrot.slane %v4846, 2
        %v4849 = vor.u32 %v4845, %v4848
        %v4850 = vsel %vm4581, %v4840, %v4849
        %v4852 = vshrl.u32 %v3923, 16
        %v4854 = vrot.slane %v4852, 1
        %v4855 = vshll.u32 %v3923, 16
        %v4857 = vrot.slane %v4855, 2
        %v4858 = vor.u32 %v4854, %v4857
        %v4859 = vsel %vm4581, %v4849, %v4858
        %v4861 = vshrl.u32 %v3924, 16
        %v4863 = vrot.slane %v4861, 1
        %v4864 = vshll.u32 %v3924, 16
        %v4866 = vrot.slane %v4864, 2
        %v4867 = vor.u32 %v4863, %v4866
        %v4868 = vsel %vm4581, %v4858, %v4867
        %v4870 = vshrl.u32 %v3925, 16
        %v4872 = vrot.slane %v4870, 1
        %v4873 = vshll.u32 %v3925, 16
        %v4875 = vrot.slane %v4873, 2
        %v4876 = vor.u32 %v4872, %v4875
        %v4877 = vsel %vm4581, %v4867, %v4876
        %v4879 = vshrl.u32 %v3926, 16
        %v4881 = vrot.slane %v4879, 1
        %v4882 = vshll.u32 %v3926, 16
        %v4884 = vrot.slane %v4882, 2
        %v4885 = vor.u32 %v4881, %v4884
        %v4886 = vsel %vm4581, %v4876, %v4885
        %v4888 = vshrl.u32 %v3927, 16
        %v4890 = vrot.slane %v4888, 1
        %v4891 = vshll.u32 %v3927, 16
        %v4893 = vrot.slane %v4891, 2
        %v4894 = vor.u32 %v4890, %v4893
        %v4895 = vsel %vm4581, %v4885, %v4894
        %v4897 = vshrl.u32 %v3928, 16
        %v4899 = vrot.slane %v4897, 1
        %v4900 = vshll.u32 %v3928, 16
        %v4902 = vrot.slane %v4900, 2
        %v4903 = vor.u32 %v4899, %v4902
        %v4904 = vsel %vm4581, %v4894, %v4903
        %v4906 = vshrl.u32 %v3929, 16
        %v4908 = vrot.slane %v4906, 1
        %v4909 = vshll.u32 %v3929, 16
        %v4911 = vrot.slane %v4909, 2
        %v4912 = vor.u32 %v4908, %v4911
        %v4913 = vsel %vm4581, %v4903, %v4912
        %v4915 = vshrl.u32 %v3930, 16
        %v4917 = vrot.slane %v4915, 1
        %v4918 = vshll.u32 %v3930, 16
        %v4920 = vrot.slane %v4918, 2
        %v4921 = vor.u32 %v4917, %v4920
        %v4922 = vsel %vm4581, %v4912, %v4921
        %v4924 = vshrl.u32 %v3931, 16
        %v4926 = vrot.slane %v4924, 1
        %v4927 = vshll.u32 %v3931, 16
        %v4929 = vrot.slane %v4927, 2
        %v4930 = vor.u32 %v4926, %v4929
        %v4931 = vsel %vm4581, %v4921, %v4930
        %v4933 = vshrl.u32 %v3932, 16
        %v4935 = vrot.slane %v4933, 1
        %v4936 = vshll.u32 %v3932, 16
        %v4938 = vrot.slane %v4936, 2
        %v4939 = vor.u32 %v4935, %v4938
        %v4940 = vsel %vm4581, %v4930, %v4939
        %v4942 = vshrl.u32 %v4580, 16
        %v4944 = vrot.slane %v4942, 1
        %v4945 = vshll.u32 %v4580, 16
        %v4947 = vrot.slane %v4945, 2
        %v4948 = vor.u32 %v4944, %v4947
        %v4949 = vsel %vm4581, %v4939, %v4948
        %v4954 = vunpack.c.l.b16 %v1426
        %v4955 = vunpack.c.l.b16 %v1427
        %v4956 = vunpack.c.l.b16 %v1428
        %v4957 = vunpack.c.l.b16 %v1429
        %v4958 = vpack.c.b16 %v4955, %v4954
        %v4959 = vpack.c.b16 %v4957, %v4956
        %v4963 = vsel %vm2073, %v4598, 0
        %v4966 = vsel %vm2073, %v4607, 0
        %v4969 = vsel %vm2073, %v4616, 0
        %v4972 = vsel %vm2073, %v4625, 0
        %v4975 = vsel %vm2073, %v4634, 0
        %v4978 = vsel %vm2073, %v4643, 0
        %v4981 = vsel %vm2073, %v4652, 0
        %v4984 = vsel %vm2073, %v4661, 0
        %v4987 = vsel %vm2073, %v4670, 0
        %v4990 = vsel %vm2073, %v4679, 0
        %v4993 = vsel %vm2073, %v4688, 0
        %v4996 = vsel %vm2073, %v4697, 0
        %v4999 = vsel %vm2073, %v4706, 0
        %v5002 = vsel %vm2073, %v4715, 0
        %v5005 = vsel %vm2073, %v4724, 0
        %v5008 = vsel %vm2073, %v4733, 0
        %v5011 = vsel %vm2073, %v4742, 0
        %v5014 = vsel %vm2073, %v4751, 0
        %v5017 = vsel %vm2073, %v4760, 0
        %v5020 = vsel %vm2073, %v4769, 0
        %v5023 = vsel %vm2073, %v4778, 0
        %v5026 = vsel %vm2073, %v4787, 0
        %v5029 = vsel %vm2073, %v4796, 0
        %v5032 = vsel %vm2073, %v4805, 0
        %v5035 = vsel %vm2073, %v4814, 0
        %v5038 = vsel %vm2073, %v4823, 0
        %v5041 = vsel %vm2073, %v4832, 0
        %v5044 = vsel %vm2073, %v4841, 0
        %v5047 = vsel %vm2073, %v4850, 0
        %v5050 = vsel %vm2073, %v4859, 0
        %v5053 = vsel %vm2073, %v4868, 0
        %v5056 = vsel %vm2073, %v4877, 0
        %v5059 = vsel %vm2073, %v4886, 0
        %v5062 = vsel %vm2073, %v4895, 0
        %v5065 = vsel %vm2073, %v4904, 0
        %v5068 = vsel %vm2073, %v4913, 0
        %v5071 = vsel %vm2073, %v4922, 0
        %v5074 = vsel %vm2073, %v4931, 0
        %v5077 = vsel %vm2073, %v4940, 0
        %v5080 = vsel %vm2073, %v4949, 0
        %v5083 = vsel %vm2073, %v4948, 0
        %5085 = vmatprep.subr.bf16.mxu0 0
        %5086 = vmatpush1.bf16.msra.mxu0 %v4958
        %5087 = vmatprep.subr.bf16.mxu0 0
        %5088 = vmatpush1.bf16.msra.mxu0 %v4959
        %5089 = vmatprep.subr.bf16.mxu0 0
        %5090 = vmatpush1.bf16.msra.mxu0 0
        %5091 = vmatprep.subr.bf16.mxu0 0
        %5092 = vmatpush1.bf16.msra.mxu0 0
        %5093 = vmatprep.subr.bf16.mxu0 0
        %5094 = vmatpush1.bf16.msra.mxu0 0
        %5095 = vmatprep.subr.bf16.mxu0 0
        %5096 = vmatpush1.bf16.msra.mxu0 0
        %5097 = vmatprep.subr.bf16.mxu0 0
        %5098 = vmatpush1.bf16.msra.mxu0 0
        %5099 = vmatprep.subr.bf16.mxu0 0
        %5100 = vmatpush1.bf16.msra.mxu0 0
        %5101 = vmatprep.subr.bf16.mxu0 0
        %5102 = vmatpush1.bf16.msra.mxu0 0
        %5103 = vmatprep.subr.bf16.mxu0 0
        %5104 = vmatpush1.bf16.msra.mxu0 0
        %5105 = vmatprep.subr.bf16.mxu0 0
        %5106 = vmatpush1.bf16.msra.mxu0 0
        %5107 = vmatprep.subr.bf16.mxu0 0
        %5108 = vmatpush1.bf16.msra.mxu0 0
        %5109 = vmatprep.subr.bf16.mxu0 0
        %5110 = vmatpush1.bf16.msra.mxu0 0
        %5111 = vmatprep.subr.bf16.mxu0 0
        %5112 = vmatpush1.bf16.msra.mxu0 0
        %5113 = vmatprep.subr.bf16.mxu0 0
        %5114 = vmatpush1.bf16.msra.mxu0 0
        %5115 = vmatprep.subr.bf16.mxu0 0
        %5116 = vmatpush1.bf16.msra.mxu0 0
        %5117 = vmatprep.mubr.bf16.mxu0 0
        %5118 = vmatmul.mubr.bf16.gmra.mrb[0].mxu0 %v4963
        %v5119 = vpop.f32.mrb[0].mxu0
        %v5120 = vpop.f32.mrb[0].mxu0
        %v5121 = vpop.f32.mrb[0].mxu0
        %v5122 = vpop.f32.mrb[0].mxu0
        %5123 = vmatprep.mubr.bf16.mxu0 0
        %5124 = vmatmul.mubr.bf16.gmra.mrb[0].mxu0 %v4966
        %v5125 = vpop.f32.mrb[0].mxu0
        %v5126 = vadd.f32 0.0, %v5125
        %v5127 = vpop.f32.mrb[0].mxu0
        %v5128 = vpop.f32.mrb[0].mxu0
        %v5129 = vadd.f32 0.0, %v5128
        %v5130 = vpop.f32.mrb[0].mxu0
        %5131 = vmatprep.mubr.bf16.mxu0 0
        %5132 = vmatmul.mubr.bf16.gmra.mrb[0].mxu0 %v4969
        %v5133 = vpop.f32.mrb[0].mxu0
        %v5134 = vadd.f32 0.0, %v5133
        %v5135 = vpop.f32.mrb[0].mxu0
        %v5136 = vpop.f32.mrb[0].mxu0
        %v5137 = vadd.f32 0.0, %v5136
        %v5138 = vpop.f32.mrb[0].mxu0
        %5139 = vmatprep.mubr.bf16.mxu0 0
        %5140 = vmatmul.mubr.bf16.gmra.mrb[0].mxu0 %v4972
        %v5141 = vpop.f32.mrb[0].mxu0
        %v5142 = vadd.f32 0.0, %v5141
        %v5143 = vpop.f32.mrb[0].mxu0
        %v5144 = vpop.f32.mrb[0].mxu0
        %v5145 = vadd.f32 0.0, %v5144
        %v5146 = vpop.f32.mrb[0].mxu0
        %5147 = vmatprep.mubr.bf16.mxu0 0
        %5148 = vmatmul.mubr.bf16.gmra.mrb[0].mxu0 %v4975
        %v5149 = vpop.f32.mrb[0].mxu0
        %v5150 = vadd.f32 0.0, %v5149
        %v5151 = vpop.f32.mrb[0].mxu0
        %v5152 = vpop.f32.mrb[0].mxu0
        %v5153 = vadd.f32 0.0, %v5152
        %v5154 = vpop.f32.mrb[0].mxu0
        %5155 = vmatprep.mubr.bf16.mxu0 0
        %5156 = vmatmul.mubr.bf16.gmra.mrb[0].mxu0 %v4978
        %v5157 = vpop.f32.mrb[0].mxu0
        %v5158 = vadd.f32 0.0, %v5157
        %v5159 = vpop.f32.mrb[0].mxu0
        %v5160 = vpop.f32.mrb[0].mxu0
        %v5161 = vadd.f32 0.0, %v5160
        %v5162 = vpop.f32.mrb[0].mxu0
        %5163 = vmatprep.mubr.bf16.mxu0 0
        %5164 = vmatmul.mubr.bf16.gmra.mrb[0].mxu0 %v4981
        %v5165 = vpop.f32.mrb[0].mxu0
        %v5166 = vadd.f32 0.0, %v5165
        %v5167 = vpop.f32.mrb[0].mxu0
        %v5168 = vpop.f32.mrb[0].mxu0
        %v5169 = vadd.f32 0.0, %v5168
        %v5170 = vpop.f32.mrb[0].mxu0
        %5171 = vmatprep.mubr.bf16.mxu0 0
        %5172 = vmatmul.mubr.bf16.gmra.mrb[0].mxu0 %v4984
        %v5173 = vpop.f32.mrb[0].mxu0
        %v5174 = vadd.f32 0.0, %v5173
        %v5175 = vpop.f32.mrb[0].mxu0
        %v5176 = vpop.f32.mrb[0].mxu0
        %v5177 = vadd.f32 0.0, %v5176
        %v5178 = vpop.f32.mrb[0].mxu0
        %5179 = vmatprep.mubr.bf16.mxu0 0
        %5180 = vmatmul.mubr.bf16.gmra.mrb[0].mxu0 %v4987
        %v5181 = vpop.f32.mrb[0].mxu0
        %v5182 = vadd.f32 0.0, %v5181
        %v5183 = vpop.f32.mrb[0].mxu0
        %v5184 = vpop.f32.mrb[0].mxu0
        %v5185 = vadd.f32 0.0, %v5184
        %v5186 = vpop.f32.mrb[0].mxu0
        %5187 = vmatprep.mubr.bf16.mxu0 0
        %5188 = vmatmul.mubr.bf16.gmra.mrb[0].mxu0 %v4990
        %v5189 = vpop.f32.mrb[0].mxu0
        %v5190 = vadd.f32 0.0, %v5189
        %v5191 = vpop.f32.mrb[0].mxu0
        %v5192 = vpop.f32.mrb[0].mxu0
        %v5193 = vadd.f32 0.0, %v5192
        %v5194 = vpop.f32.mrb[0].mxu0
        %5195 = vmatprep.mubr.bf16.mxu0 0
        %5196 = vmatmul.mubr.bf16.gmra.mrb[0].mxu0 %v4993
        %v5197 = vpop.f32.mrb[0].mxu0
        %v5198 = vadd.f32 0.0, %v5197
        %v5199 = vpop.f32.mrb[0].mxu0
        %v5200 = vpop.f32.mrb[0].mxu0
        %v5201 = vadd.f32 0.0, %v5200
        %v5202 = vpop.f32.mrb[0].mxu0
        %5203 = vmatprep.mubr.bf16.mxu0 0
        %5204 = vmatmul.mubr.bf16.gmra.mrb[0].mxu0 %v4996
        %v5205 = vpop.f32.mrb[0].mxu0
        %v5206 = vadd.f32 0.0, %v5205
        %v5207 = vpop.f32.mrb[0].mxu0
        %v5208 = vpop.f32.mrb[0].mxu0
        %v5209 = vadd.f32 0.0, %v5208
        %v5210 = vpop.f32.mrb[0].mxu0
        %5211 = vmatprep.mubr.bf16.mxu0 0
        %5212 = vmatmul.mubr.bf16.gmra.mrb[0].mxu0 %v4999
        %v5213 = vpop.f32.mrb[0].mxu0
        %v5214 = vadd.f32 0.0, %v5213
        %v5215 = vpop.f32.mrb[0].mxu0
        %v5216 = vpop.f32.mrb[0].mxu0
        %v5217 = vadd.f32 0.0, %v5216
        %v5218 = vpop.f32.mrb[0].mxu0
        %5219 = vmatprep.mubr.bf16.mxu0 0
        %5220 = vmatmul.mubr.bf16.gmra.mrb[0].mxu0 %v5002
        %v5221 = vpop.f32.mrb[0].mxu0
        %v5222 = vadd.f32 0.0, %v5221
        %v5223 = vpop.f32.mrb[0].mxu0
        %v5224 = vpop.f32.mrb[0].mxu0
        %v5225 = vadd.f32 0.0, %v5224
        %v5226 = vpop.f32.mrb[0].mxu0
        %5227 = vmatprep.mubr.bf16.mxu0 0
        %5228 = vmatmul.mubr.bf16.gmra.mrb[0].mxu0 %v5005
        %v5229 = vpop.f32.mrb[0].mxu0
        %v5230 = vadd.f32 0.0, %v5229
        %v5231 = vpop.f32.mrb[0].mxu0
        %v5232 = vpop.f32.mrb[0].mxu0
        %v5233 = vadd.f32 0.0, %v5232
        %v5234 = vpop.f32.mrb[0].mxu0
        %5235 = vmatprep.mubr.bf16.mxu0 0
        %5236 = vmatmul.mubr.bf16.gmra.mrb[0].mxu0 %v5008
        %v5237 = vpop.f32.mrb[0].mxu0
        %v5238 = vadd.f32 0.0, %v5237
        %v5239 = vpop.f32.mrb[0].mxu0
        %v5240 = vpop.f32.mrb[0].mxu0
        %v5241 = vadd.f32 0.0, %v5240
        %v5242 = vpop.f32.mrb[0].mxu0
        %5243 = vmatprep.mubr.bf16.mxu0 0
        %5244 = vmatmul.mubr.bf16.gmra.mrb[0].mxu0 %v5011
        %v5245 = vpop.f32.mrb[0].mxu0
        %v5246 = vadd.f32 0.0, %v5245
        %v5247 = vpop.f32.mrb[0].mxu0
        %v5248 = vpop.f32.mrb[0].mxu0
        %v5249 = vadd.f32 0.0, %v5248
        %v5250 = vpop.f32.mrb[0].mxu0
        %5251 = vmatprep.mubr.bf16.mxu0 0
        %5252 = vmatmul.mubr.bf16.gmra.mrb[0].mxu0 %v5014
        %v5253 = vpop.f32.mrb[0].mxu0
        %v5254 = vadd.f32 0.0, %v5253
        %v5255 = vpop.f32.mrb[0].mxu0
        %v5256 = vpop.f32.mrb[0].mxu0
        %v5257 = vadd.f32 0.0, %v5256
        %v5258 = vpop.f32.mrb[0].mxu0
        %5259 = vmatprep.mubr.bf16.mxu0 0
        %5260 = vmatmul.mubr.bf16.gmra.mrb[0].mxu0 %v5017
        %v5261 = vpop.f32.mrb[0].mxu0
        %v5262 = vadd.f32 0.0, %v5261
        %v5263 = vpop.f32.mrb[0].mxu0
        %v5264 = vpop.f32.mrb[0].mxu0
        %v5265 = vadd.f32 0.0, %v5264
        %v5266 = vpop.f32.mrb[0].mxu0
        %5267 = vmatprep.mubr.bf16.mxu0 0
        %5268 = vmatmul.mubr.bf16.gmra.mrb[0].mxu0 %v5020
        %v5269 = vpop.f32.mrb[0].mxu0
        %v5270 = vadd.f32 0.0, %v5269
        %v5271 = vpop.f32.mrb[0].mxu0
        %v5272 = vpop.f32.mrb[0].mxu0
        %v5273 = vpop.f32.mrb[0].mxu0
        %5274 = vmatprep.mubr.bf16.mxu0 0
        %5275 = vmatmul.mubr.bf16.gmra.mrb[0].mxu0 %v5023
        %v5276 = vpop.f32.mrb[0].mxu0
        %v5277 = vpop.f32.mrb[0].mxu0
        %v5278 = vpop.f32.mrb[0].mxu0
        %v5279 = vpop.f32.mrb[0].mxu0
        %5280 = vmatprep.mubr.bf16.mxu0 0
        %5281 = vmatmul.mubr.bf16.gmra.mrb[0].mxu0 %v5026
        %v5282 = vpop.f32.mrb[0].mxu0
        %v5283 = vadd.f32 0.0, %v5282
        %v5284 = vpop.f32.mrb[0].mxu0
        %v5285 = vpop.f32.mrb[0].mxu0
        %v5286 = vadd.f32 0.0, %v5285
        %v5287 = vpop.f32.mrb[0].mxu0
        %5288 = vmatprep.mubr.bf16.mxu0 0
        %5289 = vmatmul.mubr.bf16.gmra.mrb[0].mxu0 %v5029
        %v5290 = vpop.f32.mrb[0].mxu0
        %v5291 = vadd.f32 0.0, %v5290
        %v5292 = vpop.f32.mrb[0].mxu0
        %v5293 = vpop.f32.mrb[0].mxu0
        %v5294 = vadd.f32 0.0, %v5293
        %v5295 = vpop.f32.mrb[0].mxu0
        %5296 = vmatprep.mubr.bf16.mxu0 0
        %5297 = vmatmul.mubr.bf16.gmra.mrb[0].mxu0 %v5032
        %v5298 = vpop.f32.mrb[0].mxu0
        %v5299 = vadd.f32 0.0, %v5298
        %v5300 = vpop.f32.mrb[0].mxu0
        %v5301 = vpop.f32.mrb[0].mxu0
        %v5302 = vadd.f32 0.0, %v5301
        %v5303 = vpop.f32.mrb[0].mxu0
        %5304 = vmatprep.mubr.bf16.mxu0 0
        %5305 = vmatmul.mubr.bf16.gmra.mrb[0].mxu0 %v5035
        %v5306 = vpop.f32.mrb[0].mxu0
        %v5307 = vadd.f32 0.0, %v5306
        %v5308 = vpop.f32.mrb[0].mxu0
        %v5309 = vpop.f32.mrb[0].mxu0
        %v5310 = vadd.f32 0.0, %v5309
        %v5311 = vpop.f32.mrb[0].mxu0
        %5312 = vmatprep.mubr.bf16.mxu0 0
        %5313 = vmatmul.mubr.bf16.gmra.mrb[0].mxu0 %v5038
        %v5314 = vpop.f32.mrb[0].mxu0
        %v5315 = vadd.f32 0.0, %v5314
        %v5316 = vpop.f32.mrb[0].mxu0
        %v5317 = vpop.f32.mrb[0].mxu0
        %v5318 = vadd.f32 0.0, %v5317
        %v5319 = vpop.f32.mrb[0].mxu0
        %5320 = vmatprep.mubr.bf16.mxu0 0
        %5321 = vmatmul.mubr.bf16.gmra.mrb[0].mxu0 %v5041
        %v5322 = vpop.f32.mrb[0].mxu0
        %v5323 = vadd.f32 0.0, %v5322
        %v5324 = vpop.f32.mrb[0].mxu0
        %v5325 = vpop.f32.mrb[0].mxu0
        %v5326 = vadd.f32 0.0, %v5325
        %v5327 = vpop.f32.mrb[0].mxu0
        %5328 = vmatprep.mubr.bf16.mxu0 0
        %5329 = vmatmul.mubr.bf16.gmra.mrb[0].mxu0 %v5044
        %v5330 = vpop.f32.mrb[0].mxu0
        %v5331 = vadd.f32 0.0, %v5330
        %v5332 = vpop.f32.mrb[0].mxu0
        %v5333 = vpop.f32.mrb[0].mxu0
        %v5334 = vadd.f32 0.0, %v5333
        %v5335 = vpop.f32.mrb[0].mxu0
        %5336 = vmatprep.mubr.bf16.mxu0 0
        %5337 = vmatmul.mubr.bf16.gmra.mrb[0].mxu0 %v5047
        %v5338 = vpop.f32.mrb[0].mxu0
        %v5339 = vadd.f32 0.0, %v5338
        %v5340 = vpop.f32.mrb[0].mxu0
        %v5341 = vpop.f32.mrb[0].mxu0
        %v5342 = vadd.f32 0.0, %v5341
        %v5343 = vpop.f32.mrb[0].mxu0
        %5344 = vmatprep.mubr.bf16.mxu0 0
        %5345 = vmatmul.mubr.bf16.gmra.mrb[0].mxu0 %v5050
        %v5346 = vpop.f32.mrb[0].mxu0
        %v5347 = vadd.f32 0.0, %v5346
        %v5348 = vpop.f32.mrb[0].mxu0
        %v5349 = vpop.f32.mrb[0].mxu0
        %v5350 = vadd.f32 0.0, %v5349
        %v5351 = vpop.f32.mrb[0].mxu0
        %5352 = vmatprep.mubr.bf16.mxu0 0
        %5353 = vmatmul.mubr.bf16.gmra.mrb[0].mxu0 %v5053
        %v5354 = vpop.f32.mrb[0].mxu0
        %v5355 = vadd.f32 0.0, %v5354
        %v5356 = vpop.f32.mrb[0].mxu0
        %v5357 = vpop.f32.mrb[0].mxu0
        %v5358 = vadd.f32 0.0, %v5357
        %v5359 = vpop.f32.mrb[0].mxu0
        %5360 = vmatprep.mubr.bf16.mxu0 0
        %5361 = vmatmul.mubr.bf16.gmra.mrb[0].mxu0 %v5056
        %v5362 = vpop.f32.mrb[0].mxu0
        %v5363 = vadd.f32 0.0, %v5362
        %v5364 = vpop.f32.mrb[0].mxu0
        %v5365 = vpop.f32.mrb[0].mxu0
        %v5366 = vadd.f32 0.0, %v5365
        %v5367 = vpop.f32.mrb[0].mxu0
        %5368 = vmatprep.mubr.bf16.mxu0 0
        %5369 = vmatmul.mubr.bf16.gmra.mrb[0].mxu0 %v5059
        %v5370 = vpop.f32.mrb[0].mxu0
        %v5371 = vadd.f32 0.0, %v5370
        %v5372 = vpop.f32.mrb[0].mxu0
        %v5373 = vpop.f32.mrb[0].mxu0
        %v5374 = vadd.f32 0.0, %v5373
        %v5375 = vpop.f32.mrb[0].mxu0
        %5376 = vmatprep.mubr.bf16.mxu0 0
        %5377 = vmatmul.mubr.bf16.gmra.mrb[0].mxu0 %v5062
        %v5378 = vpop.f32.mrb[0].mxu0
        %v5379 = vadd.f32 0.0, %v5378
        %v5380 = vpop.f32.mrb[0].mxu0
        %v5381 = vpop.f32.mrb[0].mxu0
        %v5382 = vadd.f32 0.0, %v5381
        %v5383 = vpop.f32.mrb[0].mxu0
        %5384 = vmatprep.mubr.bf16.mxu0 0
        %5385 = vmatmul.mubr.bf16.gmra.mrb[0].mxu0 %v5065
        %v5386 = vpop.f32.mrb[0].mxu0
        %v5387 = vadd.f32 0.0, %v5386
        %v5388 = vpop.f32.mrb[0].mxu0
        %v5389 = vpop.f32.mrb[0].mxu0
        %v5390 = vadd.f32 0.0, %v5389
        %v5391 = vpop.f32.mrb[0].mxu0
        %5392 = vmatprep.mubr.bf16.mxu0 0
        %5393 = vmatmul.mubr.bf16.gmra.mrb[0].mxu0 %v5068
        %v5394 = vpop.f32.mrb[0].mxu0
        %v5395 = vadd.f32 0.0, %v5394
        %v5396 = vpop.f32.mrb[0].mxu0
        %v5397 = vpop.f32.mrb[0].mxu0
        %v5398 = vadd.f32 0.0, %v5397
        %v5399 = vpop.f32.mrb[0].mxu0
        %5400 = vmatprep.mubr.bf16.mxu0 0
        %5401 = vmatmul.mubr.bf16.gmra.mrb[0].mxu0 %v5071
        %v5402 = vpop.f32.mrb[0].mxu0
        %v5403 = vadd.f32 0.0, %v5402
        %v5404 = vpop.f32.mrb[0].mxu0
        %v5405 = vpop.f32.mrb[0].mxu0
        %v5406 = vadd.f32 0.0, %v5405
        %v5407 = vpop.f32.mrb[0].mxu0
        %5408 = vmatprep.mubr.bf16.mxu0 0
        %5409 = vmatmul.mubr.bf16.gmra.mrb[0].mxu0 %v5074
        %v5410 = vpop.f32.mrb[0].mxu0
        %v5411 = vadd.f32 0.0, %v5410
        %v5412 = vpop.f32.mrb[0].mxu0
        %v5413 = vpop.f32.mrb[0].mxu0
        %v5414 = vadd.f32 0.0, %v5413
        %v5415 = vpop.f32.mrb[0].mxu0
        %5416 = vmatprep.mubr.bf16.mxu0 0
        %5417 = vmatmul.mubr.bf16.gmra.mrb[0].mxu0 %v5077
        %v5418 = vpop.f32.mrb[0].mxu0
        %v5419 = vadd.f32 0.0, %v5418
        %v5420 = vpop.f32.mrb[0].mxu0
        %v5421 = vpop.f32.mrb[0].mxu0
        %v5422 = vadd.f32 0.0, %v5421
        %v5423 = vpop.f32.mrb[0].mxu0
        %5424 = vmatprep.mubr.bf16.mxu0 0
        %5425 = vmatmul.mubr.bf16.gmra.mrb[0].mxu0 %v5080
        %v5426 = vpop.f32.mrb[0].mxu0
        %v5427 = vadd.f32 0.0, %v5426
        %v5428 = vpop.f32.mrb[0].mxu0
        %v5429 = vpop.f32.mrb[0].mxu0
        %v5430 = vpop.f32.mrb[0].mxu0
        %5431 = vmatprep.mubr.bf16.mxu0 0
        %5432 = vmatmul.mubr.bf16.gmra.mrb[0].mxu0 %v5083
        %v5433 = vpop.f32.mrb[0].mxu0
        %v5434 = vpop.f32.mrb[0].mxu0
        %v5435 = vpop.f32.mrb[0].mxu0
        %v5436 = vpop.f32.mrb[0].mxu0
        %5437 = vdwg.mxu0
        %v5438 = vadd.f32 %v4503, %v5126
        %v5439 = vadd.f32 %v4504, %v5129
        %v5440 = vadd.f32 %v4505, %v5134
        %v5441 = vadd.f32 %v4506, %v5137
        %v5442 = vadd.f32 %v4507, %v5142
        %v5443 = vadd.f32 %v4508, %v5145
        %v5444 = vadd.f32 %v4509, %v5150
        %v5445 = vadd.f32 %v4510, %v5153
        %v5446 = vadd.f32 %v4511, %v5158
        %v5447 = vadd.f32 %v4512, %v5161
        %v5448 = vadd.f32 %v4513, %v5166
        %v5449 = vadd.f32 %v4514, %v5169
        %v5450 = vadd.f32 %v4515, %v5174
        %v5451 = vadd.f32 %v4516, %v5177
        %v5452 = vadd.f32 %v4517, %v5182
        %v5453 = vadd.f32 %v4518, %v5185
        %v5454 = vadd.f32 %v4519, %v5190
        %v5455 = vadd.f32 %v4520, %v5193
        %v5456 = vadd.f32 %v4521, %v5198
        %v5457 = vadd.f32 %v4522, %v5201
        %v5458 = vadd.f32 %v4523, %v5206
        %v5459 = vadd.f32 %v4524, %v5209
        %v5460 = vadd.f32 %v4525, %v5214
        %v5461 = vadd.f32 %v4526, %v5217
        %v5462 = vadd.f32 %v4527, %v5222
        %v5463 = vadd.f32 %v4528, %v5225
        %v5464 = vadd.f32 %v4529, %v5230
        %v5465 = vadd.f32 %v4530, %v5233
        %v5466 = vadd.f32 %v4531, %v5238
        %v5467 = vadd.f32 %v4532, %v5241
        %v5468 = vadd.f32 %v4533, %v5246
        %v5469 = vadd.f32 %v4534, %v5249
        %v5470 = vadd.f32 %v4535, %v5254
        %v5471 = vadd.f32 %v4536, %v5257
        %v5472 = vadd.f32 %v4537, %v5262
        %v5473 = vadd.f32 %v4538, %v5265
        %v5474 = vadd.f32 %v4539, %v5270
        %v5475 = vadd.f32 %v4540, %v5283
        %v5476 = vadd.f32 %v4541, %v5286
        %v5477 = vadd.f32 %v4542, %v5291
        %v5478 = vadd.f32 %v4543, %v5294
        %v5479 = vadd.f32 %v4544, %v5299
        %v5480 = vadd.f32 %v4545, %v5302
        %v5481 = vadd.f32 %v4546, %v5307
        %v5482 = vadd.f32 %v4547, %v5310
        %v5483 = vadd.f32 %v4548, %v5315
        %v5484 = vadd.f32 %v4549, %v5318
        %v5485 = vadd.f32 %v4550, %v5323
        %v5486 = vadd.f32 %v4551, %v5326
        %v5487 = vadd.f32 %v4552, %v5331
        %v5488 = vadd.f32 %v4553, %v5334
        %v5489 = vadd.f32 %v4554, %v5339
        %v5490 = vadd.f32 %v4555, %v5342
        %v5491 = vadd.f32 %v4556, %v5347
        %v5492 = vadd.f32 %v4557, %v5350
        %v5493 = vadd.f32 %v4558, %v5355
        %v5494 = vadd.f32 %v4559, %v5358
        %v5495 = vadd.f32 %v4560, %v5363
        %v5496 = vadd.f32 %v4561, %v5366
        %v5497 = vadd.f32 %v4562, %v5371
        %v5498 = vadd.f32 %v4563, %v5374
        %v5499 = vadd.f32 %v4564, %v5379
        %v5500 = vadd.f32 %v4565, %v5382
        %v5501 = vadd.f32 %v4566, %v5387
        %v5502 = vadd.f32 %v4567, %v5390
        %v5503 = vadd.f32 %v4568, %v5395
        %v5504 = vadd.f32 %v4569, %v5398
        %v5505 = vadd.f32 %v4570, %v5403
        %v5506 = vadd.f32 %v4571, %v5406
        %v5507 = vadd.f32 %v4572, %v5411
        %v5508 = vadd.f32 %v4573, %v5414
        %v5509 = vadd.f32 %v4574, %v5419
        %v5510 = vadd.f32 %v4575, %v5422
        %v5511 = vadd.f32 %v4576, %v5427
        %v5512 = vld [vmem:[#allocation2 + $0x8] sm:$0xc]
        %v5514 = vunpack.c.l.b16 %v5512
        %v5515 = vpack.c.b16 %v3812, %v5514
        %vm5516 = vcmask 1045504
        %v5517 = vrot.slane %v5515, 2
        %v5518 = vrot.slane %v3894, 2
        %v5519 = vsel %vm5516, %v5517, %v5518
        %v5520 = vrot.slane %v3895, 2
        %v5521 = vsel %vm5516, %v5518, %v5520
        %v5522 = vrot.slane %v3896, 2
        %v5523 = vsel %vm5516, %v5520, %v5522
        %v5524 = vrot.slane %v3897, 2
        %v5525 = vsel %vm5516, %v5522, %v5524
        %v5526 = vrot.slane %v3898, 2
        %v5527 = vsel %vm5516, %v5524, %v5526
        %v5528 = vrot.slane %v3899, 2
        %v5529 = vsel %vm5516, %v5526, %v5528
        %v5530 = vrot.slane %v3900, 2
        %v5531 = vsel %vm5516, %v5528, %v5530
        %v5532 = vrot.slane %v3901, 2
        %v5533 = vsel %vm5516, %v5530, %v5532
        %v5534 = vrot.slane %v3902, 2
        %v5535 = vsel %vm5516, %v5532, %v5534
        %v5536 = vrot.slane %v3903, 2
        %v5537 = vsel %vm5516, %v5534, %v5536
        %v5538 = vrot.slane %v3904, 2
        %v5539 = vsel %vm5516, %v5536, %v5538
        %v5540 = vrot.slane %v3905, 2
        %v5541 = vsel %vm5516, %v5538, %v5540
        %v5542 = vrot.slane %v3906, 2
        %v5543 = vsel %vm5516, %v5540, %v5542
        %v5544 = vrot.slane %v3907, 2
        %v5545 = vsel %vm5516, %v5542, %v5544
        %v5546 = vrot.slane %v3908, 2
        %v5547 = vsel %vm5516, %v5544, %v5546
        %v5548 = vrot.slane %v3909, 2
        %v5549 = vsel %vm5516, %v5546, %v5548
        %v5550 = vrot.slane %v3910, 2
        %v5551 = vsel %vm5516, %v5548, %v5550
        %v5552 = vrot.slane %v3911, 2
        %v5553 = vsel %vm5516, %v5550, %v5552
        %v5554 = vrot.slane %v3912, 2
        %v5555 = vsel %vm5516, %v5552, %v5554
        %v5556 = vrot.slane %v3913, 2
        %v5557 = vsel %vm5516, %v5554, %v5556
        %v5558 = vrot.slane %v3914, 2
        %v5559 = vsel %vm5516, %v5556, %v5558
        %v5560 = vrot.slane %v3915, 2
        %v5561 = vsel %vm5516, %v5558, %v5560
        %v5562 = vrot.slane %v3916, 2
        %v5563 = vsel %vm5516, %v5560, %v5562
        %v5564 = vrot.slane %v3917, 2
        %v5565 = vsel %vm5516, %v5562, %v5564
        %v5566 = vrot.slane %v3918, 2
        %v5567 = vsel %vm5516, %v5564, %v5566
        %v5568 = vrot.slane %v3919, 2
        %v5569 = vsel %vm5516, %v5566, %v5568
        %v5570 = vrot.slane %v3920, 2
        %v5571 = vsel %vm5516, %v5568, %v5570
        %v5572 = vrot.slane %v3921, 2
        %v5573 = vsel %vm5516, %v5570, %v5572
        %v5574 = vrot.slane %v3922, 2
        %v5575 = vsel %vm5516, %v5572, %v5574
        %v5576 = vrot.slane %v3923, 2
        %v5577 = vsel %vm5516, %v5574, %v5576
        %v5578 = vrot.slane %v3924, 2
        %v5579 = vsel %vm5516, %v5576, %v5578
        %v5580 = vrot.slane %v3925, 2
        %v5581 = vsel %vm5516, %v5578, %v5580
        %v5582 = vrot.slane %v3926, 2
        %v5583 = vsel %vm5516, %v5580, %v5582
        %v5584 = vrot.slane %v3927, 2
        %v5585 = vsel %vm5516, %v5582, %v5584
        %v5586 = vrot.slane %v3928, 2
        %v5587 = vsel %vm5516, %v5584, %v5586
        %v5588 = vrot.slane %v3929, 2
        %v5589 = vsel %vm5516, %v5586, %v5588
        %v5590 = vrot.slane %v3930, 2
        %v5591 = vsel %vm5516, %v5588, %v5590
        %v5592 = vrot.slane %v3931, 2
        %v5593 = vsel %vm5516, %v5590, %v5592
        %v5594 = vrot.slane %v3932, 2
        %v5595 = vsel %vm5516, %v5592, %v5594
        %v5596 = vrot.slane %v4580, 2
        %v5597 = vsel %vm5516, %v5594, %v5596
        %v5602 = vunpack.c.l.b16 %v1430
        %v5603 = vunpack.c.l.b16 %v1431
        %v5604 = vunpack.c.l.b16 %v1432
        %v5605 = vunpack.c.l.b16 %v1433
        %v5606 = vpack.c.b16 %v5603, %v5602
        %v5607 = vpack.c.b16 %v5605, %v5604
        %v5611 = vsel %vm2073, %v5519, 0
        %v5614 = vsel %vm2073, %v5521, 0
        %v5617 = vsel %vm2073, %v5523, 0
        %v5620 = vsel %vm2073, %v5525, 0
        %v5623 = vsel %vm2073, %v5527, 0
        %v5626 = vsel %vm2073, %v5529, 0
        %v5629 = vsel %vm2073, %v5531, 0
        %v5632 = vsel %vm2073, %v5533, 0
        %v5635 = vsel %vm2073, %v5535, 0
        %v5638 = vsel %vm2073, %v5537, 0
        %v5641 = vsel %vm2073, %v5539, 0
        %v5644 = vsel %vm2073, %v5541, 0
        %v5647 = vsel %vm2073, %v5543, 0
        %v5650 = vsel %vm2073, %v5545, 0
        %v5653 = vsel %vm2073, %v5547, 0
        %v5656 = vsel %vm2073, %v5549, 0
        %v5659 = vsel %vm2073, %v5551, 0
        %v5662 = vsel %vm2073, %v5553, 0
        %v5665 = vsel %vm2073, %v5555, 0
        %v5668 = vsel %vm2073, %v5557, 0
        %v5671 = vsel %vm2073, %v5559, 0
        %v5674 = vsel %vm2073, %v5561, 0
        %v5677 = vsel %vm2073, %v5563, 0
        %v5680 = vsel %vm2073, %v5565, 0
        %v5683 = vsel %vm2073, %v5567, 0
        %v5686 = vsel %vm2073, %v5569, 0
        %v5689 = vsel %vm2073, %v5571, 0
        %v5692 = vsel %vm2073, %v5573, 0
        %v5695 = vsel %vm2073, %v5575, 0
        %v5698 = vsel %vm2073, %v5577, 0
        %v5701 = vsel %vm2073, %v5579, 0
        %v5704 = vsel %vm2073, %v5581, 0
        %v5707 = vsel %vm2073, %v5583, 0
        %v5710 = vsel %vm2073, %v5585, 0
        %v5713 = vsel %vm2073, %v5587, 0
        %v5716 = vsel %vm2073, %v5589, 0
        %v5719 = vsel %vm2073, %v5591, 0
        %v5722 = vsel %vm2073, %v5593, 0
        %v5725 = vsel %vm2073, %v5595, 0
        %v5728 = vsel %vm2073, %v5597, 0
        %v5731 = vsel %vm2073, %v5596, 0
        %5733 = vmatprep.subr.bf16.mxu0 0
        %5734 = vmatpush1.bf16.msra.mxu0 %v5606
        %5735 = vmatprep.subr.bf16.mxu0 0
        %5736 = vmatpush1.bf16.msra.mxu0 %v5607
        %5737 = vmatprep.subr.bf16.mxu0 0
        %5738 = vmatpush1.bf16.msra.mxu0 0
        %5739 = vmatprep.subr.bf16.mxu0 0
        %5740 = vmatpush1.bf16.msra.mxu0 0
        %5741 = vmatprep.subr.bf16.mxu0 0
        %5742 = vmatpush1.bf16.msra.mxu0 0
        %5743 = vmatprep.subr.bf16.mxu0 0
        %5744 = vmatpush1.bf16.msra.mxu0 0
        %5745 = vmatprep.subr.bf16.mxu0 0
        %5746 = vmatpush1.bf16.msra.mxu0 0
        %5747 = vmatprep.subr.bf16.mxu0 0
        %5748 = vmatpush1.bf16.msra.mxu0 0
        %5749 = vmatprep.subr.bf16.mxu0 0
        %5750 = vmatpush1.bf16.msra.mxu0 0
        %5751 = vmatprep.subr.bf16.mxu0 0
        %5752 = vmatpush1.bf16.msra.mxu0 0
        %5753 = vmatprep.subr.bf16.mxu0 0
        %5754 = vmatpush1.bf16.msra.mxu0 0
        %5755 = vmatprep.subr.bf16.mxu0 0
        %5756 = vmatpush1.bf16.msra.mxu0 0
        %5757 = vmatprep.subr.bf16.mxu0 0
        %5758 = vmatpush1.bf16.msra.mxu0 0
        %5759 = vmatprep.subr.bf16.mxu0 0
        %5760 = vmatpush1.bf16.msra.mxu0 0
        %5761 = vmatprep.subr.bf16.mxu0 0
        %5762 = vmatpush1.bf16.msra.mxu0 0
        %5763 = vmatprep.subr.bf16.mxu0 0
        %5764 = vmatpush1.bf16.msra.mxu0 0
        %5765 = vmatprep.mubr.bf16.mxu0 0
        %5766 = vmatmul.mubr.bf16.gmra.mrb[0].mxu0 %v5611
        %v5767 = vpop.f32.mrb[0].mxu0
        %v5768 = vpop.f32.mrb[0].mxu0
        %v5769 = vpop.f32.mrb[0].mxu0
        %v5770 = vpop.f32.mrb[0].mxu0
        %5771 = vmatprep.mubr.bf16.mxu0 0
        %5772 = vmatmul.mubr.bf16.gmra.mrb[0].mxu0 %v5614
        %v5773 = vpop.f32.mrb[0].mxu0
        %v5774 = vadd.f32 0.0, %v5773
        %v5775 = vpop.f32.mrb[0].mxu0
        %v5776 = vpop.f32.mrb[0].mxu0
        %v5777 = vadd.f32 0.0, %v5776
        %v5778 = vpop.f32.mrb[0].mxu0
        %5779 = vmatprep.mubr.bf16.mxu0 0
        %5780 = vmatmul.mubr.bf16.gmra.mrb[0].mxu0 %v5617
        %v5781 = vpop.f32.mrb[0].mxu0
        %v5782 = vadd.f32 0.0, %v5781
        %v5783 = vpop.f32.mrb[0].mxu0
        %v5784 = vpop.f32.mrb[0].mxu0
        %v5785 = vadd.f32 0.0, %v5784
        %v5786 = vpop.f32.mrb[0].mxu0
        %5787 = vmatprep.mubr.bf16.mxu0 0
        %5788 = vmatmul.mubr.bf16.gmra.mrb[0].mxu0 %v5620
        %v5789 = vpop.f32.mrb[0].mxu0
        %v5790 = vadd.f32 0.0, %v5789
        %v5791 = vpop.f32.mrb[0].mxu0
        %v5792 = vpop.f32.mrb[0].mxu0
        %v5793 = vadd.f32 0.0, %v5792
        %v5794 = vpop.f32.mrb[0].mxu0
        %5795 = vmatprep.mubr.bf16.mxu0 0
        %5796 = vmatmul.mubr.bf16.gmra.mrb[0].mxu0 %v5623
        %v5797 = vpop.f32.mrb[0].mxu0
        %v5798 = vadd.f32 0.0, %v5797
        %v5799 = vpop.f32.mrb[0].mxu0
        %v5800 = vpop.f32.mrb[0].mxu0
        %v5801 = vadd.f32 0.0, %v5800
        %v5802 = vpop.f32.mrb[0].mxu0
        %5803 = vmatprep.mubr.bf16.mxu0 0
        %5804 = vmatmul.mubr.bf16.gmra.mrb[0].mxu0 %v5626
        %v5805 = vpop.f32.mrb[0].mxu0
        %v5806 = vadd.f32 0.0, %v5805
        %v5807 = vpop.f32.mrb[0].mxu0
        %v5808 = vpop.f32.mrb[0].mxu0
        %v5809 = vadd.f32 0.0, %v5808
        %v5810 = vpop.f32.mrb[0].mxu0
        %5811 = vmatprep.mubr.bf16.mxu0 0
        %5812 = vmatmul.mubr.bf16.gmra.mrb[0].mxu0 %v5629
        %v5813 = vpop.f32.mrb[0].mxu0
        %v5814 = vadd.f32 0.0, %v5813
        %v5815 = vpop.f32.mrb[0].mxu0
        %v5816 = vpop.f32.mrb[0].mxu0
        %v5817 = vadd.f32 0.0, %v5816
        %v5818 = vpop.f32.mrb[0].mxu0
        %5819 = vmatprep.mubr.bf16.mxu0 0
        %5820 = vmatmul.mubr.bf16.gmra.mrb[0].mxu0 %v5632
        %v5821 = vpop.f32.mrb[0].mxu0
        %v5822 = vadd.f32 0.0, %v5821
        %v5823 = vpop.f32.mrb[0].mxu0
        %v5824 = vpop.f32.mrb[0].mxu0
        %v5825 = vadd.f32 0.0, %v5824
        %v5826 = vpop.f32.mrb[0].mxu0
        %5827 = vmatprep.mubr.bf16.mxu0 0
        %5828 = vmatmul.mubr.bf16.gmra.mrb[0].mxu0 %v5635
        %v5829 = vpop.f32.mrb[0].mxu0
        %v5830 = vadd.f32 0.0, %v5829
        %v5831 = vpop.f32.mrb[0].mxu0
        %v5832 = vpop.f32.mrb[0].mxu0
        %v5833 = vadd.f32 0.0, %v5832
        %v5834 = vpop.f32.mrb[0].mxu0
        %5835 = vmatprep.mubr.bf16.mxu0 0
        %5836 = vmatmul.mubr.bf16.gmra.mrb[0].mxu0 %v5638
        %v5837 = vpop.f32.mrb[0].mxu0
        %v5838 = vadd.f32 0.0, %v5837
        %v5839 = vpop.f32.mrb[0].mxu0
        %v5840 = vpop.f32.mrb[0].mxu0
        %v5841 = vadd.f32 0.0, %v5840
        %v5842 = vpop.f32.mrb[0].mxu0
        %5843 = vmatprep.mubr.bf16.mxu0 0
        %5844 = vmatmul.mubr.bf16.gmra.mrb[0].mxu0 %v5641
        %v5845 = vpop.f32.mrb[0].mxu0
        %v5846 = vadd.f32 0.0, %v5845
        %v5847 = vpop.f32.mrb[0].mxu0
        %v5848 = vpop.f32.mrb[0].mxu0
        %v5849 = vadd.f32 0.0, %v5848
        %v5850 = vpop.f32.mrb[0].mxu0
        %5851 = vmatprep.mubr.bf16.mxu0 0
        %5852 = vmatmul.mubr.bf16.gmra.mrb[0].mxu0 %v5644
        %v5853 = vpop.f32.mrb[0].mxu0
        %v5854 = vadd.f32 0.0, %v5853
        %v5855 = vpop.f32.mrb[0].mxu0
        %v5856 = vpop.f32.mrb[0].mxu0
        %v5857 = vadd.f32 0.0, %v5856
        %v5858 = vpop.f32.mrb[0].mxu0
        %5859 = vmatprep.mubr.bf16.mxu0 0
        %5860 = vmatmul.mubr.bf16.gmra.mrb[0].mxu0 %v5647
        %v5861 = vpop.f32.mrb[0].mxu0
        %v5862 = vadd.f32 0.0, %v5861
        %v5863 = vpop.f32.mrb[0].mxu0
        %v5864 = vpop.f32.mrb[0].mxu0
        %v5865 = vadd.f32 0.0, %v5864
        %v5866 = vpop.f32.mrb[0].mxu0
        %5867 = vmatprep.mubr.bf16.mxu0 0
        %5868 = vmatmul.mubr.bf16.gmra.mrb[0].mxu0 %v5650
        %v5869 = vpop.f32.mrb[0].mxu0
        %v5870 = vadd.f32 0.0, %v5869
        %v5871 = vpop.f32.mrb[0].mxu0
        %v5872 = vpop.f32.mrb[0].mxu0
        %v5873 = vadd.f32 0.0, %v5872
        %v5874 = vpop.f32.mrb[0].mxu0
        %5875 = vmatprep.mubr.bf16.mxu0 0
        %5876 = vmatmul.mubr.bf16.gmra.mrb[0].mxu0 %v5653
        %v5877 = vpop.f32.mrb[0].mxu0
        %v5878 = vadd.f32 0.0, %v5877
        %v5879 = vpop.f32.mrb[0].mxu0
        %v5880 = vpop.f32.mrb[0].mxu0
        %v5881 = vadd.f32 0.0, %v5880
        %v5882 = vpop.f32.mrb[0].mxu0
        %5883 = vmatprep.mubr.bf16.mxu0 0
        %5884 = vmatmul.mubr.bf16.gmra.mrb[0].mxu0 %v5656
        %v5885 = vpop.f32.mrb[0].mxu0
        %v5886 = vadd.f32 0.0, %v5885
        %v5887 = vpop.f32.mrb[0].mxu0
        %v5888 = vpop.f32.mrb[0].mxu0
        %v5889 = vadd.f32 0.0, %v5888
        %v5890 = vpop.f32.mrb[0].mxu0
        %5891 = vmatprep.mubr.bf16.mxu0 0
        %5892 = vmatmul.mubr.bf16.gmra.mrb[0].mxu0 %v5659
        %v5893 = vpop.f32.mrb[0].mxu0
        %v5894 = vadd.f32 0.0, %v5893
        %v5895 = vpop.f32.mrb[0].mxu0
        %v5896 = vpop.f32.mrb[0].mxu0
        %v5897 = vadd.f32 0.0, %v5896
        %v5898 = vpop.f32.mrb[0].mxu0
        %5899 = vmatprep.mubr.bf16.mxu0 0
        %5900 = vmatmul.mubr.bf16.gmra.mrb[0].mxu0 %v5662
        %v5901 = vpop.f32.mrb[0].mxu0
        %v5902 = vadd.f32 0.0, %v5901
        %v5903 = vpop.f32.mrb[0].mxu0
        %v5904 = vpop.f32.mrb[0].mxu0
        %v5905 = vadd.f32 0.0, %v5904
        %v5906 = vpop.f32.mrb[0].mxu0
        %5907 = vmatprep.mubr.bf16.mxu0 0
        %5908 = vmatmul.mubr.bf16.gmra.mrb[0].mxu0 %v5665
        %v5909 = vpop.f32.mrb[0].mxu0
        %v5910 = vadd.f32 0.0, %v5909
        %v5911 = vpop.f32.mrb[0].mxu0
        %v5912 = vpop.f32.mrb[0].mxu0
        %v5913 = vadd.f32 0.0, %v5912
        %v5914 = vpop.f32.mrb[0].mxu0
        %5915 = vmatprep.mubr.bf16.mxu0 0
        %5916 = vmatmul.mubr.bf16.gmra.mrb[0].mxu0 %v5668
        %v5917 = vpop.f32.mrb[0].mxu0
        %v5918 = vadd.f32 0.0, %v5917
        %v5919 = vpop.f32.mrb[0].mxu0
        %v5920 = vpop.f32.mrb[0].mxu0
        %v5921 = vpop.f32.mrb[0].mxu0
        %5922 = vmatprep.mubr.bf16.mxu0 0
        %5923 = vmatmul.mubr.bf16.gmra.mrb[0].mxu0 %v5671
        %v5924 = vpop.f32.mrb[0].mxu0
        %v5925 = vpop.f32.mrb[0].mxu0
        %v5926 = vpop.f32.mrb[0].mxu0
        %v5927 = vpop.f32.mrb[0].mxu0
        %5928 = vmatprep.mubr.bf16.mxu0 0
        %5929 = vmatmul.mubr.bf16.gmra.mrb[0].mxu0 %v5674
        %v5930 = vpop.f32.mrb[0].mxu0
        %v5931 = vadd.f32 0.0, %v5930
        %v5932 = vpop.f32.mrb[0].mxu0
        %v5933 = vpop.f32.mrb[0].mxu0
        %v5934 = vadd.f32 0.0, %v5933
        %v5935 = vpop.f32.mrb[0].mxu0
        %5936 = vmatprep.mubr.bf16.mxu0 0
        %5937 = vmatmul.mubr.bf16.gmra.mrb[0].mxu0 %v5677
        %v5938 = vpop.f32.mrb[0].mxu0
        %v5939 = vadd.f32 0.0, %v5938
        %v5940 = vpop.f32.mrb[0].mxu0
        %v5941 = vpop.f32.mrb[0].mxu0
        %v5942 = vadd.f32 0.0, %v5941
        %v5943 = vpop.f32.mrb[0].mxu0
        %5944 = vmatprep.mubr.bf16.mxu0 0
        %5945 = vmatmul.mubr.bf16.gmra.mrb[0].mxu0 %v5680
        %v5946 = vpop.f32.mrb[0].mxu0
        %v5947 = vadd.f32 0.0, %v5946
        %v5948 = vpop.f32.mrb[0].mxu0
        %v5949 = vpop.f32.mrb[0].mxu0
        %v5950 = vadd.f32 0.0, %v5949
        %v5951 = vpop.f32.mrb[0].mxu0
        %5952 = vmatprep.mubr.bf16.mxu0 0
        %5953 = vmatmul.mubr.bf16.gmra.mrb[0].mxu0 %v5683
        %v5954 = vpop.f32.mrb[0].mxu0
        %v5955 = vadd.f32 0.0, %v5954
        %v5956 = vpop.f32.mrb[0].mxu0
        %v5957 = vpop.f32.mrb[0].mxu0
        %v5958 = vadd.f32 0.0, %v5957
        %v5959 = vpop.f32.mrb[0].mxu0
        %5960 = vmatprep.mubr.bf16.mxu0 0
        %5961 = vmatmul.mubr.bf16.gmra.mrb[0].mxu0 %v5686
        %v5962 = vpop.f32.mrb[0].mxu0
        %v5963 = vadd.f32 0.0, %v5962
        %v5964 = vpop.f32.mrb[0].mxu0
        %v5965 = vpop.f32.mrb[0].mxu0
        %v5966 = vadd.f32 0.0, %v5965
        %v5967 = vpop.f32.mrb[0].mxu0
        %5968 = vmatprep.mubr.bf16.mxu0 0
        %5969 = vmatmul.mubr.bf16.gmra.mrb[0].mxu0 %v5689
        %v5970 = vpop.f32.mrb[0].mxu0
        %v5971 = vadd.f32 0.0, %v5970
        %v5972 = vpop.f32.mrb[0].mxu0
        %v5973 = vpop.f32.mrb[0].mxu0
        %v5974 = vadd.f32 0.0, %v5973
        %v5975 = vpop.f32.mrb[0].mxu0
        %5976 = vmatprep.mubr.bf16.mxu0 0
        %5977 = vmatmul.mubr.bf16.gmra.mrb[0].mxu0 %v5692
        %v5978 = vpop.f32.mrb[0].mxu0
        %v5979 = vadd.f32 0.0, %v5978
        %v5980 = vpop.f32.mrb[0].mxu0
        %v5981 = vpop.f32.mrb[0].mxu0
        %v5982 = vadd.f32 0.0, %v5981
        %v5983 = vpop.f32.mrb[0].mxu0
        %5984 = vmatprep.mubr.bf16.mxu0 0
        %5985 = vmatmul.mubr.bf16.gmra.mrb[0].mxu0 %v5695
        %v5986 = vpop.f32.mrb[0].mxu0
        %v5987 = vadd.f32 0.0, %v5986
        %v5988 = vpop.f32.mrb[0].mxu0
        %v5989 = vpop.f32.mrb[0].mxu0
        %v5990 = vadd.f32 0.0, %v5989
        %v5991 = vpop.f32.mrb[0].mxu0
        %5992 = vmatprep.mubr.bf16.mxu0 0
        %5993 = vmatmul.mubr.bf16.gmra.mrb[0].mxu0 %v5698
        %v5994 = vpop.f32.mrb[0].mxu0
        %v5995 = vadd.f32 0.0, %v5994
        %v5996 = vpop.f32.mrb[0].mxu0
        %v5997 = vpop.f32.mrb[0].mxu0
        %v5998 = vadd.f32 0.0, %v5997
        %v5999 = vpop.f32.mrb[0].mxu0
        %6000 = vmatprep.mubr.bf16.mxu0 0
        %6001 = vmatmul.mubr.bf16.gmra.mrb[0].mxu0 %v5701
        %v6002 = vpop.f32.mrb[0].mxu0
        %v6003 = vadd.f32 0.0, %v6002
        %v6004 = vpop.f32.mrb[0].mxu0
        %v6005 = vpop.f32.mrb[0].mxu0
        %v6006 = vadd.f32 0.0, %v6005
        %v6007 = vpop.f32.mrb[0].mxu0
        %6008 = vmatprep.mubr.bf16.mxu0 0
        %6009 = vmatmul.mubr.bf16.gmra.mrb[0].mxu0 %v5704
        %v6010 = vpop.f32.mrb[0].mxu0
        %v6011 = vadd.f32 0.0, %v6010
        %v6012 = vpop.f32.mrb[0].mxu0
        %v6013 = vpop.f32.mrb[0].mxu0
        %v6014 = vadd.f32 0.0, %v6013
        %v6015 = vpop.f32.mrb[0].mxu0
        %6016 = vmatprep.mubr.bf16.mxu0 0
        %6017 = vmatmul.mubr.bf16.gmra.mrb[0].mxu0 %v5707
        %v6018 = vpop.f32.mrb[0].mxu0
        %v6019 = vadd.f32 0.0, %v6018
        %v6020 = vpop.f32.mrb[0].mxu0
        %v6021 = vpop.f32.mrb[0].mxu0
        %v6022 = vadd.f32 0.0, %v6021
        %v6023 = vpop.f32.mrb[0].mxu0
        %6024 = vmatprep.mubr.bf16.mxu0 0
        %6025 = vmatmul.mubr.bf16.gmra.mrb[0].mxu0 %v5710
        %v6026 = vpop.f32.mrb[0].mxu0
        %v6027 = vadd.f32 0.0, %v6026
        %v6028 = vpop.f32.mrb[0].mxu0
        %v6029 = vpop.f32.mrb[0].mxu0
        %v6030 = vadd.f32 0.0, %v6029
        %v6031 = vpop.f32.mrb[0].mxu0
        %6032 = vmatprep.mubr.bf16.mxu0 0
        %6033 = vmatmul.mubr.bf16.gmra.mrb[0].mxu0 %v5713
        %v6034 = vpop.f32.mrb[0].mxu0
        %v6035 = vadd.f32 0.0, %v6034
        %v6036 = vpop.f32.mrb[0].mxu0
        %v6037 = vpop.f32.mrb[0].mxu0
        %v6038 = vadd.f32 0.0, %v6037
        %v6039 = vpop.f32.mrb[0].mxu0
        %6040 = vmatprep.mubr.bf16.mxu0 0
        %6041 = vmatmul.mubr.bf16.gmra.mrb[0].mxu0 %v5716
        %v6042 = vpop.f32.mrb[0].mxu0
        %v6043 = vadd.f32 0.0, %v6042
        %v6044 = vpop.f32.mrb[0].mxu0
        %v6045 = vpop.f32.mrb[0].mxu0
        %v6046 = vadd.f32 0.0, %v6045
        %v6047 = vpop.f32.mrb[0].mxu0
        %6048 = vmatprep.mubr.bf16.mxu0 0
        %6049 = vmatmul.mubr.bf16.gmra.mrb[0].mxu0 %v5719
        %v6050 = vpop.f32.mrb[0].mxu0
        %v6051 = vadd.f32 0.0, %v6050
        %v6052 = vpop.f32.mrb[0].mxu0
        %v6053 = vpop.f32.mrb[0].mxu0
        %v6054 = vadd.f32 0.0, %v6053
        %v6055 = vpop.f32.mrb[0].mxu0
        %6056 = vmatprep.mubr.bf16.mxu0 0
        %6057 = vmatmul.mubr.bf16.gmra.mrb[0].mxu0 %v5722
        %v6058 = vpop.f32.mrb[0].mxu0
        %v6059 = vadd.f32 0.0, %v6058
        %v6060 = vpop.f32.mrb[0].mxu0
        %v6061 = vpop.f32.mrb[0].mxu0
        %v6062 = vadd.f32 0.0, %v6061
        %v6063 = vpop.f32.mrb[0].mxu0
        %6064 = vmatprep.mubr.bf16.mxu0 0
        %6065 = vmatmul.mubr.bf16.gmra.mrb[0].mxu0 %v5725
        %v6066 = vpop.f32.mrb[0].mxu0
        %v6067 = vadd.f32 0.0, %v6066
        %v6068 = vpop.f32.mrb[0].mxu0
        %v6069 = vpop.f32.mrb[0].mxu0
        %v6070 = vadd.f32 0.0, %v6069
        %v6071 = vpop.f32.mrb[0].mxu0
        %6072 = vmatprep.mubr.bf16.mxu0 0
        %6073 = vmatmul.mubr.bf16.gmra.mrb[0].mxu0 %v5728
        %v6074 = vpop.f32.mrb[0].mxu0
        %v6075 = vadd.f32 0.0, %v6074
        %v6076 = vpop.f32.mrb[0].mxu0
        %v6077 = vpop.f32.mrb[0].mxu0
        %v6078 = vpop.f32.mrb[0].mxu0
        %6079 = vmatprep.mubr.bf16.mxu0 0
        %6080 = vmatmul.mubr.bf16.gmra.mrb[0].mxu0 %v5731
        %v6081 = vpop.f32.mrb[0].mxu0
        %v6082 = vpop.f32.mrb[0].mxu0
        %v6083 = vpop.f32.mrb[0].mxu0
        %v6084 = vpop.f32.mrb[0].mxu0
        %6085 = vdwg.mxu0
        %v6086 = vadd.f32 %v5438, %v5774
        %v6087 = vadd.f32 %v5439, %v5777
        %v6088 = vadd.f32 %v5440, %v5782
        %v6089 = vadd.f32 %v5441, %v5785
        %v6090 = vadd.f32 %v5442, %v5790
        %v6091 = vadd.f32 %v5443, %v5793
        %v6092 = vadd.f32 %v5444, %v5798
        %v6093 = vadd.f32 %v5445, %v5801
        %v6094 = vadd.f32 %v5446, %v5806
        %v6095 = vadd.f32 %v5447, %v5809
        %v6096 = vadd.f32 %v5448, %v5814
        %v6097 = vadd.f32 %v5449, %v5817
        %v6098 = vadd.f32 %v5450, %v5822
        %v6099 = vadd.f32 %v5451, %v5825
        %v6100 = vadd.f32 %v5452, %v5830
        %v6101 = vadd.f32 %v5453, %v5833
        %v6102 = vadd.f32 %v5454, %v5838
        %v6103 = vadd.f32 %v5455, %v5841
        %v6104 = vadd.f32 %v5456, %v5846
        %v6105 = vadd.f32 %v5457, %v5849
        %v6106 = vadd.f32 %v5458, %v5854
        %v6107 = vadd.f32 %v5459, %v5857
        %v6108 = vadd.f32 %v5460, %v5862
        %v6109 = vadd.f32 %v5461, %v5865
        %v6110 = vadd.f32 %v5462, %v5870
        %v6111 = vadd.f32 %v5463, %v5873
        %v6112 = vadd.f32 %v5464, %v5878
        %v6113 = vadd.f32 %v5465, %v5881
        %v6114 = vadd.f32 %v5466, %v5886
        %v6115 = vadd.f32 %v5467, %v5889
        %v6116 = vadd.f32 %v5468, %v5894
        %v6117 = vadd.f32 %v5469, %v5897
        %v6118 = vadd.f32 %v5470, %v5902
        %v6119 = vadd.f32 %v5471, %v5905
        %v6120 = vadd.f32 %v5472, %v5910
        %v6121 = vadd.f32 %v5473, %v5913
        %v6122 = vadd.f32 %v5474, %v5918
        %v6123 = vadd.f32 %v5475, %v5931
        %v6124 = vadd.f32 %v5476, %v5934
        %v6125 = vadd.f32 %v5477, %v5939
        %v6126 = vadd.f32 %v5478, %v5942
        %v6127 = vadd.f32 %v5479, %v5947
        %v6128 = vadd.f32 %v5480, %v5950
        %v6129 = vadd.f32 %v5481, %v5955
        %v6130 = vadd.f32 %v5482, %v5958
        %v6131 = vadd.f32 %v5483, %v5963
        %v6132 = vadd.f32 %v5484, %v5966
        %v6133 = vadd.f32 %v5485, %v5971
        %v6134 = vadd.f32 %v5486, %v5974
        %v6135 = vadd.f32 %v5487, %v5979
        %v6136 = vadd.f32 %v5488, %v5982
        %v6137 = vadd.f32 %v5489, %v5987
        %v6138 = vadd.f32 %v5490, %v5990
        %v6139 = vadd.f32 %v5491, %v5995
        %v6140 = vadd.f32 %v5492, %v5998
        %v6141 = vadd.f32 %v5493, %v6003
        %v6142 = vadd.f32 %v5494, %v6006
        %v6143 = vadd.f32 %v5495, %v6011
        %v6144 = vadd.f32 %v5496, %v6014
        %v6145 = vadd.f32 %v5497, %v6019
        %v6146 = vadd.f32 %v5498, %v6022
        %v6147 = vadd.f32 %v5499, %v6027
        %v6148 = vadd.f32 %v5500, %v6030
        %v6149 = vadd.f32 %v5501, %v6035
        %v6150 = vadd.f32 %v5502, %v6038
        %v6151 = vadd.f32 %v5503, %v6043
        %v6152 = vadd.f32 %v5504, %v6046
        %v6153 = vadd.f32 %v5505, %v6051
        %v6154 = vadd.f32 %v5506, %v6054
        %v6155 = vadd.f32 %v5507, %v6059
        %v6156 = vadd.f32 %v5508, %v6062
        %v6157 = vadd.f32 %v5509, %v6067
        %v6158 = vadd.f32 %v5510, %v6070
        %v6159 = vadd.f32 %v5511, %v6075
        %v6160 = vld [vmem:[#allocation2 + $0x10] sm:$0xc]
        %v6161 = vld [vmem:[#allocation2 + $0x14] sm:$0xf]
        %v6162 = vld [vmem:[#allocation2 + $0x18] sm:$0xf]
        %v6163 = vld [vmem:[#allocation2 + $0x1c] sm:$0xf]
        %v6164 = vld [vmem:[#allocation2 + $0x20] sm:$0xf]
        %v6165 = vld [vmem:[#allocation2 + $0x24] sm:$0xf]
        %v6166 = vld [vmem:[#allocation2 + $0x28] sm:$0xf]
        %v6167 = vld [vmem:[#allocation2 + $0x2c] sm:$0xf]
        %v6168 = vld [vmem:[#allocation2 + $0x30] sm:$0xf]
        %v6169 = vld [vmem:[#allocation2 + $0x34] sm:$0xf]
        %v6170 = vld [vmem:[#allocation2 + $0x38] sm:$0xf]
        %v6171 = vld [vmem:[#allocation2 + $0x3c] sm:$0xf]
        %v6172 = vld [vmem:[#allocation2 + $0x40] sm:$0xf]
        %v6173 = vld [vmem:[#allocation2 + $0x44] sm:$0xf]
        %v6174 = vld [vmem:[#allocation2 + $0x48] sm:$0xf]
        %v6175 = vld [vmem:[#allocation2 + $0x4c] sm:$0xf]
        %v6176 = vld [vmem:[#allocation2 + $0x50] sm:$0xf]
        %v6177 = vld [vmem:[#allocation2 + $0x54] sm:$0xf]
        %v6178 = vld [vmem:[#allocation2 + $0x58] sm:$0xf]
        %v6179 = vld [vmem:[#allocation2 + $0x5c] sm:$0xf]
        %v6180 = vld [vmem:[#allocation2 + $0x60] sm:$0xf]
        %v6181 = vld [vmem:[#allocation2 + $0x64] sm:$0xf]
        %v6182 = vld [vmem:[#allocation2 + $0x68] sm:$0xf]
        %v6183 = vld [vmem:[#allocation2 + $0x6c] sm:$0xf]
        %v6184 = vld [vmem:[#allocation2 + $0x70] sm:$0xf]
        %v6185 = vld [vmem:[#allocation2 + $0x74] sm:$0xf]
        %v6186 = vld [vmem:[#allocation2 + $0x78] sm:$0xf]
        %v6187 = vld [vmem:[#allocation2 + $0x7c] sm:$0xf]
        %v6188 = vld [vmem:[#allocation2 + $0x80] sm:$0xf]
        %v6189 = vld [vmem:[#allocation2 + $0x84] sm:$0xf]
        %v6190 = vld [vmem:[#allocation2 + $0x88] sm:$0xf]
        %v6191 = vld [vmem:[#allocation2 + $0x8c] sm:$0xf]
        %v6192 = vld [vmem:[#allocation2 + $0x90] sm:$0xf]
        %v6193 = vld [vmem:[#allocation2 + $0x94] sm:$0xf]
        %v6194 = vld [vmem:[#allocation2 + $0x98] sm:$0xf]
        %v6195 = vld [vmem:[#allocation2 + $0x9c] sm:$0xf]
        %v6196 = vld [vmem:[#allocation2 + $0xa0] sm:$0xf]
        %v6197 = vld [vmem:[#allocation2 + $0xa4] sm:$0xf]
        %v6198 = vld [vmem:[#allocation2 + $0xa8] sm:$0xf]
        %v6199 = vld [vmem:[#allocation2 + $0xac] sm:$0xf]
        %v6200 = vld [vmem:[#allocation2 + $0xb0] sm:$0xf]
        %v6201 = vld [vmem:[#allocation2 + $0xb4] sm:$0xf]
        %v6202 = vld [vmem:[#allocation2 + $0xb8] sm:$0xf]
        %v6203 = vld [vmem:[#allocation2 + $0xbc] sm:$0xf]
        %v6204 = vld [vmem:[#allocation2 + $0xc0] sm:$0xf]
        %v6205 = vld [vmem:[#allocation2 + $0xc4] sm:$0xf]
        %v6206 = vld [vmem:[#allocation2 + $0xc8] sm:$0xf]
        %v6207 = vld [vmem:[#allocation2 + $0xcc] sm:$0xf]
        %v6208 = vld [vmem:[#allocation2 + $0xd0] sm:$0xf]
        %v6209 = vld [vmem:[#allocation2 + $0xd4] sm:$0xf]
        %v6210 = vld [vmem:[#allocation2 + $0xd8] sm:$0xf]
        %v6211 = vld [vmem:[#allocation2 + $0xdc] sm:$0xf]
        %v6212 = vld [vmem:[#allocation2 + $0xe0] sm:$0xf]
        %v6213 = vld [vmem:[#allocation2 + $0xe4] sm:$0xf]
        %v6214 = vld [vmem:[#allocation2 + $0xe8] sm:$0xf]
        %v6215 = vld [vmem:[#allocation2 + $0xec] sm:$0xf]
        %v6216 = vld [vmem:[#allocation2 + $0xf0] sm:$0xf]
        %v6217 = vld [vmem:[#allocation2 + $0xf4] sm:$0xf]
        %v6218 = vld [vmem:[#allocation2 + $0xf8] sm:$0xf]
        %v6219 = vld [vmem:[#allocation2 + $0xfc] sm:$0xf]
        %v6220 = vld [vmem:[#allocation2 + $0x100] sm:$0xf]
        %v6221 = vld [vmem:[#allocation2 + $0x104] sm:$0xf]
        %v6222 = vld [vmem:[#allocation2 + $0x108] sm:$0xf]
        %v6223 = vld [vmem:[#allocation2 + $0x10c] sm:$0xf]
        %v6224 = vld [vmem:[#allocation2 + $0x110] sm:$0xf]
        %v6225 = vld [vmem:[#allocation2 + $0x114] sm:$0xf]
        %v6226 = vld [vmem:[#allocation2 + $0x118] sm:$0xf]
        %v6227 = vld [vmem:[#allocation2 + $0x11c] sm:$0xf]
        %v6228 = vld [vmem:[#allocation2 + $0x120] sm:$0xf]
        %v6229 = vld [vmem:[#allocation2 + $0x124] sm:$0xf]
        %v6230 = vld [vmem:[#allocation2 + $0x128] sm:$0xf]
        %v6231 = vld [vmem:[#allocation2 + $0x12c] sm:$0xf]
        %v6232 = vld [vmem:[#allocation2 + $0x130] sm:$0xf]
        %v6233 = vld [vmem:[#allocation2 + $0x134] sm:$0xf]
        %v6234 = vld [vmem:[#allocation2 + $0x138] sm:$0xf]
        %v6235 = vld [vmem:[#allocation2 + $0x13c] sm:$0xf]
        %v6236 = vld [vmem:[#allocation2 + $0x140] sm:$0xf]
        %v6237 = vld [vmem:[#allocation2 + $0x144] sm:$0xf]
        %v6238 = vld [vmem:[#allocation2 + $0x148] sm:$0xf]
        %v6239 = vld [vmem:[#allocation2 + $0x14c] sm:$0xf]
        %v6240 = vld [vmem:[#allocation2 + $0x150] sm:$0xf]
        %v6241 = vld [vmem:[#allocation2 + $0x154] sm:$0x3]
        %v6324 = vunpack.c.l.b16 %v6160
        %v6325 = vunpack.c.l.b16 %v6161
        %v6326 = vunpack.c.l.b16 %v6162
        %v6327 = vunpack.c.l.b16 %v6163
        %v6328 = vunpack.c.l.b16 %v6164
        %v6329 = vunpack.c.l.b16 %v6165
        %v6330 = vunpack.c.l.b16 %v6166
        %v6331 = vunpack.c.l.b16 %v6167
        %v6332 = vunpack.c.l.b16 %v6168
        %v6333 = vunpack.c.l.b16 %v6169
        %v6334 = vunpack.c.l.b16 %v6170
        %v6335 = vunpack.c.l.b16 %v6171
        %v6336 = vunpack.c.l.b16 %v6172
        %v6337 = vunpack.c.l.b16 %v6173
        %v6338 = vunpack.c.l.b16 %v6174
        %v6339 = vunpack.c.l.b16 %v6175
        %v6340 = vunpack.c.l.b16 %v6176
        %v6341 = vunpack.c.l.b16 %v6177
        %v6342 = vunpack.c.l.b16 %v6178
        %v6343 = vunpack.c.l.b16 %v6179
        %v6344 = vunpack.c.l.b16 %v6180
        %v6345 = vunpack.c.l.b16 %v6181
        %v6346 = vunpack.c.l.b16 %v6182
        %v6347 = vunpack.c.l.b16 %v6183
        %v6348 = vunpack.c.l.b16 %v6184
        %v6349 = vunpack.c.l.b16 %v6185
        %v6350 = vunpack.c.l.b16 %v6186
        %v6351 = vunpack.c.l.b16 %v6187
        %v6352 = vunpack.c.l.b16 %v6188
        %v6353 = vunpack.c.l.b16 %v6189
        %v6354 = vunpack.c.l.b16 %v6190
        %v6355 = vunpack.c.l.b16 %v6191
        %v6356 = vunpack.c.l.b16 %v6192
        %v6357 = vunpack.c.l.b16 %v6193
        %v6358 = vunpack.c.l.b16 %v6194
        %v6359 = vunpack.c.l.b16 %v6195
        %v6360 = vunpack.c.l.b16 %v6196
        %v6361 = vunpack.c.l.b16 %v6197
        %v6362 = vunpack.c.l.b16 %v6198
        %v6363 = vunpack.c.l.b16 %v6199
        %v6364 = vunpack.c.l.b16 %v6200
        %v6365 = vunpack.c.l.b16 %v6201
        %v6366 = vunpack.c.l.b16 %v6202
        %v6367 = vunpack.c.l.b16 %v6203
        %v6368 = vunpack.c.l.b16 %v6204
        %v6369 = vunpack.c.l.b16 %v6205
        %v6370 = vunpack.c.l.b16 %v6206
        %v6371 = vunpack.c.l.b16 %v6207
        %v6372 = vunpack.c.l.b16 %v6208
        %v6373 = vunpack.c.l.b16 %v6209
        %v6374 = vunpack.c.l.b16 %v6210
        %v6375 = vunpack.c.l.b16 %v6211
        %v6376 = vunpack.c.l.b16 %v6212
        %v6377 = vunpack.c.l.b16 %v6213
        %v6378 = vunpack.c.l.b16 %v6214
        %v6379 = vunpack.c.l.b16 %v6215
        %v6380 = vunpack.c.l.b16 %v6216
        %v6381 = vunpack.c.l.b16 %v6217
        %v6382 = vunpack.c.l.b16 %v6218
        %v6383 = vunpack.c.l.b16 %v6219
        %v6384 = vunpack.c.l.b16 %v6220
        %v6385 = vunpack.c.l.b16 %v6221
        %v6386 = vunpack.c.l.b16 %v6222
        %v6387 = vunpack.c.l.b16 %v6223
        %v6388 = vunpack.c.l.b16 %v6224
        %v6389 = vunpack.c.l.b16 %v6225
        %v6390 = vunpack.c.l.b16 %v6226
        %v6391 = vunpack.c.l.b16 %v6227
        %v6392 = vunpack.c.l.b16 %v6228
        %v6393 = vunpack.c.l.b16 %v6229
        %v6394 = vunpack.c.l.b16 %v6230
        %v6395 = vunpack.c.l.b16 %v6231
        %v6396 = vunpack.c.l.b16 %v6232
        %v6397 = vunpack.c.l.b16 %v6233
        %v6398 = vunpack.c.l.b16 %v6234
        %v6399 = vunpack.c.l.b16 %v6235
        %v6400 = vunpack.c.l.b16 %v6236
        %v6401 = vunpack.c.l.b16 %v6237
        %v6402 = vunpack.c.l.b16 %v6238
        %v6403 = vunpack.c.l.b16 %v6239
        %v6404 = vunpack.c.l.b16 %v6240
        %v6405 = vunpack.c.l.b16 %v6241
        %v6406 = vpack.c.b16 %v6325, %v6324
        %v6407 = vpack.c.b16 %v6327, %v6326
        %v6408 = vpack.c.b16 %v6329, %v6328
        %v6409 = vpack.c.b16 %v6331, %v6330
        %v6410 = vpack.c.b16 %v6333, %v6332
        %v6411 = vpack.c.b16 %v6335, %v6334
        %v6412 = vpack.c.b16 %v6337, %v6336
        %v6413 = vpack.c.b16 %v6339, %v6338
        %v6414 = vpack.c.b16 %v6341, %v6340
        %v6415 = vpack.c.b16 %v6343, %v6342
        %v6416 = vpack.c.b16 %v6345, %v6344
        %v6417 = vpack.c.b16 %v6347, %v6346
        %v6418 = vpack.c.b16 %v6349, %v6348
        %v6419 = vpack.c.b16 %v6351, %v6350
        %v6420 = vpack.c.b16 %v6353, %v6352
        %v6421 = vpack.c.b16 %v6355, %v6354
        %v6422 = vpack.c.b16 %v6357, %v6356
        %v6423 = vpack.c.b16 %v6359, %v6358
        %v6424 = vpack.c.b16 %v6361, %v6360
        %v6425 = vpack.c.b16 %v6363, %v6362
        %v6426 = vpack.c.b16 %v6365, %v6364
        %v6427 = vpack.c.b16 %v6367, %v6366
        %v6428 = vpack.c.b16 %v6369, %v6368
        %v6429 = vpack.c.b16 %v6371, %v6370
        %v6430 = vpack.c.b16 %v6373, %v6372
        %v6431 = vpack.c.b16 %v6375, %v6374
        %v6432 = vpack.c.b16 %v6377, %v6376
        %v6433 = vpack.c.b16 %v6379, %v6378
        %v6434 = vpack.c.b16 %v6381, %v6380
        %v6435 = vpack.c.b16 %v6383, %v6382
        %v6436 = vpack.c.b16 %v6385, %v6384
        %v6437 = vpack.c.b16 %v6387, %v6386
        %v6438 = vpack.c.b16 %v6389, %v6388
        %v6439 = vpack.c.b16 %v6391, %v6390
        %v6440 = vpack.c.b16 %v6393, %v6392
        %v6441 = vpack.c.b16 %v6395, %v6394
        %v6442 = vpack.c.b16 %v6397, %v6396
        %v6443 = vpack.c.b16 %v6399, %v6398
        %v6444 = vpack.c.b16 %v6401, %v6400
        %v6445 = vpack.c.b16 %v6403, %v6402
        %v6446 = vpack.c.b16 %v6405, %v6404
        %v6447 = vrot.slane %v6406, 2
        %v6448 = vrot.slane %v6407, 2
        %v6449 = vsel %vm5516, %v6447, %v6448
        %v6450 = vrot.slane %v6408, 2
        %v6451 = vsel %vm5516, %v6448, %v6450
        %v6452 = vrot.slane %v6409, 2
        %v6453 = vsel %vm5516, %v6450, %v6452
        %v6454 = vrot.slane %v6410, 2
        %v6455 = vsel %vm5516, %v6452, %v6454
        %v6456 = vrot.slane %v6411, 2
        %v6457 = vsel %vm5516, %v6454, %v6456
        %v6458 = vrot.slane %v6412, 2
        %v6459 = vsel %vm5516, %v6456, %v6458
        %v6460 = vrot.slane %v6413, 2
        %v6461 = vsel %vm5516, %v6458, %v6460
        %v6462 = vrot.slane %v6414, 2
        %v6463 = vsel %vm5516, %v6460, %v6462
        %v6464 = vrot.slane %v6415, 2
        %v6465 = vsel %vm5516, %v6462, %v6464
        %v6466 = vrot.slane %v6416, 2
        %v6467 = vsel %vm5516, %v6464, %v6466
        %v6468 = vrot.slane %v6417, 2
        %v6469 = vsel %vm5516, %v6466, %v6468
        %v6470 = vrot.slane %v6418, 2
        %v6471 = vsel %vm5516, %v6468, %v6470
        %v6472 = vrot.slane %v6419, 2
        %v6473 = vsel %vm5516, %v6470, %v6472
        %v6474 = vrot.slane %v6420, 2
        %v6475 = vsel %vm5516, %v6472, %v6474
        %v6476 = vrot.slane %v6421, 2
        %v6477 = vsel %vm5516, %v6474, %v6476
        %v6478 = vrot.slane %v6422, 2
        %v6479 = vsel %vm5516, %v6476, %v6478
        %v6480 = vrot.slane %v6423, 2
        %v6481 = vsel %vm5516, %v6478, %v6480
        %v6482 = vrot.slane %v6424, 2
        %v6483 = vsel %vm5516, %v6480, %v6482
        %v6484 = vrot.slane %v6425, 2
        %v6485 = vsel %vm5516, %v6482, %v6484
        %v6486 = vrot.slane %v6426, 2
        %v6487 = vsel %vm5516, %v6484, %v6486
        %v6488 = vrot.slane %v6427, 2
        %v6489 = vsel %vm5516, %v6486, %v6488
        %v6490 = vrot.slane %v6428, 2
        %v6491 = vsel %vm5516, %v6488, %v6490
        %v6492 = vrot.slane %v6429, 2
        %v6493 = vsel %vm5516, %v6490, %v6492
        %v6494 = vrot.slane %v6430, 2
        %v6495 = vsel %vm5516, %v6492, %v6494
        %v6496 = vrot.slane %v6431, 2
        %v6497 = vsel %vm5516, %v6494, %v6496
        %v6498 = vrot.slane %v6432, 2
        %v6499 = vsel %vm5516, %v6496, %v6498
        %v6500 = vrot.slane %v6433, 2
        %v6501 = vsel %vm5516, %v6498, %v6500
        %v6502 = vrot.slane %v6434, 2
        %v6503 = vsel %vm5516, %v6500, %v6502
        %v6504 = vrot.slane %v6435, 2
        %v6505 = vsel %vm5516, %v6502, %v6504
        %v6506 = vrot.slane %v6436, 2
        %v6507 = vsel %vm5516, %v6504, %v6506
        %v6508 = vrot.slane %v6437, 2
        %v6509 = vsel %vm5516, %v6506, %v6508
        %v6510 = vrot.slane %v6438, 2
        %v6511 = vsel %vm5516, %v6508, %v6510
        %v6512 = vrot.slane %v6439, 2
        %v6513 = vsel %vm5516, %v6510, %v6512
        %v6514 = vrot.slane %v6440, 2
        %v6515 = vsel %vm5516, %v6512, %v6514
        %v6516 = vrot.slane %v6441, 2
        %v6517 = vsel %vm5516, %v6514, %v6516
        %v6518 = vrot.slane %v6442, 2
        %v6519 = vsel %vm5516, %v6516, %v6518
        %v6520 = vrot.slane %v6443, 2
        %v6521 = vsel %vm5516, %v6518, %v6520
        %v6522 = vrot.slane %v6444, 2
        %v6523 = vsel %vm5516, %v6520, %v6522
        %v6524 = vrot.slane %v6445, 2
        %v6525 = vsel %vm5516, %v6522, %v6524
        %v6526 = vrot.slane %v6446, 2
        %v6527 = vsel %vm5516, %v6524, %v6526
        %v6532 = vunpack.c.l.b16 %v1434
        %v6533 = vunpack.c.l.b16 %v1435
        %v6534 = vunpack.c.l.b16 %v1436
        %v6535 = vunpack.c.l.b16 %v1437
        %v6536 = vpack.c.b16 %v6533, %v6532
        %v6537 = vpack.c.b16 %v6535, %v6534
        %v6541 = vsel %vm2073, %v6449, 0
        %v6544 = vsel %vm2073, %v6451, 0
        %v6547 = vsel %vm2073, %v6453, 0
        %v6550 = vsel %vm2073, %v6455, 0
        %v6553 = vsel %vm2073, %v6457, 0
        %v6556 = vsel %vm2073, %v6459, 0
        %v6559 = vsel %vm2073, %v6461, 0
        %v6562 = vsel %vm2073, %v6463, 0
        %v6565 = vsel %vm2073, %v6465, 0
        %v6568 = vsel %vm2073, %v6467, 0
        %v6571 = vsel %vm2073, %v6469, 0
        %v6574 = vsel %vm2073, %v6471, 0
        %v6577 = vsel %vm2073, %v6473, 0
        %v6580 = vsel %vm2073, %v6475, 0
        %v6583 = vsel %vm2073, %v6477, 0
        %v6586 = vsel %vm2073, %v6479, 0
        %v6589 = vsel %vm2073, %v6481, 0
        %v6592 = vsel %vm2073, %v6483, 0
        %v6595 = vsel %vm2073, %v6485, 0
        %v6598 = vsel %vm2073, %v6487, 0
        %v6601 = vsel %vm2073, %v6489, 0
        %v6604 = vsel %vm2073, %v6491, 0
        %v6607 = vsel %vm2073, %v6493, 0
        %v6610 = vsel %vm2073, %v6495, 0
        %v6613 = vsel %vm2073, %v6497, 0
        %v6616 = vsel %vm2073, %v6499, 0
        %v6619 = vsel %vm2073, %v6501, 0
        %v6622 = vsel %vm2073, %v6503, 0
        %v6625 = vsel %vm2073, %v6505, 0
        %v6628 = vsel %vm2073, %v6507, 0
        %v6631 = vsel %vm2073, %v6509, 0
        %v6634 = vsel %vm2073, %v6511, 0
        %v6637 = vsel %vm2073, %v6513, 0
        %v6640 = vsel %vm2073, %v6515, 0
        %v6643 = vsel %vm2073, %v6517, 0
        %v6646 = vsel %vm2073, %v6519, 0
        %v6649 = vsel %vm2073, %v6521, 0
        %v6652 = vsel %vm2073, %v6523, 0
        %v6655 = vsel %vm2073, %v6525, 0
        %v6658 = vsel %vm2073, %v6527, 0
        %v6661 = vsel %vm2073, %v6526, 0
        %6663 = vmatprep.subr.bf16.mxu0 0
        %6664 = vmatpush1.bf16.msra.mxu0 %v6536
        %6665 = vmatprep.subr.bf16.mxu0 0
        %6666 = vmatpush1.bf16.msra.mxu0 %v6537
        %6667 = vmatprep.subr.bf16.mxu0 0
        %6668 = vmatpush1.bf16.msra.mxu0 0
        %6669 = vmatprep.subr.bf16.mxu0 0
        %6670 = vmatpush1.bf16.msra.mxu0 0
        %6671 = vmatprep.subr.bf16.mxu0 0
        %6672 = vmatpush1.bf16.msra.mxu0 0
        %6673 = vmatprep.subr.bf16.mxu0 0
        %6674 = vmatpush1.bf16.msra.mxu0 0
        %6675 = vmatprep.subr.bf16.mxu0 0
        %6676 = vmatpush1.bf16.msra.mxu0 0
        %6677 = vmatprep.subr.bf16.mxu0 0
        %6678 = vmatpush1.bf16.msra.mxu0 0
        %6679 = vmatprep.subr.bf16.mxu0 0
        %6680 = vmatpush1.bf16.msra.mxu0 0
        %6681 = vmatprep.subr.bf16.mxu0 0
        %6682 = vmatpush1.bf16.msra.mxu0 0
        %6683 = vmatprep.subr.bf16.mxu0 0
        %6684 = vmatpush1.bf16.msra.mxu0 0
        %6685 = vmatprep.subr.bf16.mxu0 0
        %6686 = vmatpush1.bf16.msra.mxu0 0
        %6687 = vmatprep.subr.bf16.mxu0 0
        %6688 = vmatpush1.bf16.msra.mxu0 0
        %6689 = vmatprep.subr.bf16.mxu0 0
        %6690 = vmatpush1.bf16.msra.mxu0 0
        %6691 = vmatprep.subr.bf16.mxu0 0
        %6692 = vmatpush1.bf16.msra.mxu0 0
        %6693 = vmatprep.subr.bf16.mxu0 0
        %6694 = vmatpush1.bf16.msra.mxu0 0
        %6695 = vmatprep.mubr.bf16.mxu0 0
        %6696 = vmatmul.mubr.bf16.gmra.mrb[0].mxu0 %v6541
        %v6697 = vpop.f32.mrb[0].mxu0
        %v6698 = vpop.f32.mrb[0].mxu0
        %v6699 = vpop.f32.mrb[0].mxu0
        %v6700 = vpop.f32.mrb[0].mxu0
        %6701 = vmatprep.mubr.bf16.mxu0 0
        %6702 = vmatmul.mubr.bf16.gmra.mrb[0].mxu0 %v6544
        %v6703 = vpop.f32.mrb[0].mxu0
        %v6704 = vadd.f32 0.0, %v6703
        %v6705 = vpop.f32.mrb[0].mxu0
        %v6706 = vpop.f32.mrb[0].mxu0
        %v6707 = vadd.f32 0.0, %v6706
        %v6708 = vpop.f32.mrb[0].mxu0
        %6709 = vmatprep.mubr.bf16.mxu0 0
        %6710 = vmatmul.mubr.bf16.gmra.mrb[0].mxu0 %v6547
        %v6711 = vpop.f32.mrb[0].mxu0
        %v6712 = vadd.f32 0.0, %v6711
        %v6713 = vpop.f32.mrb[0].mxu0
        %v6714 = vpop.f32.mrb[0].mxu0
        %v6715 = vadd.f32 0.0, %v6714
        %v6716 = vpop.f32.mrb[0].mxu0
        %6717 = vmatprep.mubr.bf16.mxu0 0
        %6718 = vmatmul.mubr.bf16.gmra.mrb[0].mxu0 %v6550
        %v6719 = vpop.f32.mrb[0].mxu0
        %v6720 = vadd.f32 0.0, %v6719
        %v6721 = vpop.f32.mrb[0].mxu0
        %v6722 = vpop.f32.mrb[0].mxu0
        %v6723 = vadd.f32 0.0, %v6722
        %v6724 = vpop.f32.mrb[0].mxu0
        %6725 = vmatprep.mubr.bf16.mxu0 0
        %6726 = vmatmul.mubr.bf16.gmra.mrb[0].mxu0 %v6553
        %v6727 = vpop.f32.mrb[0].mxu0
        %v6728 = vadd.f32 0.0, %v6727
        %v6729 = vpop.f32.mrb[0].mxu0
        %v6730 = vpop.f32.mrb[0].mxu0
        %v6731 = vadd.f32 0.0, %v6730
        %v6732 = vpop.f32.mrb[0].mxu0
        %6733 = vmatprep.mubr.bf16.mxu0 0
        %6734 = vmatmul.mubr.bf16.gmra.mrb[0].mxu0 %v6556
        %v6735 = vpop.f32.mrb[0].mxu0
        %v6736 = vadd.f32 0.0, %v6735
        %v6737 = vpop.f32.mrb[0].mxu0
        %v6738 = vpop.f32.mrb[0].mxu0
        %v6739 = vadd.f32 0.0, %v6738
        %v6740 = vpop.f32.mrb[0].mxu0
        %6741 = vmatprep.mubr.bf16.mxu0 0
        %6742 = vmatmul.mubr.bf16.gmra.mrb[0].mxu0 %v6559
        %v6743 = vpop.f32.mrb[0].mxu0
        %v6744 = vadd.f32 0.0, %v6743
        %v6745 = vpop.f32.mrb[0].mxu0
        %v6746 = vpop.f32.mrb[0].mxu0
        %v6747 = vadd.f32 0.0, %v6746
        %v6748 = vpop.f32.mrb[0].mxu0
        %6749 = vmatprep.mubr.bf16.mxu0 0
        %6750 = vmatmul.mubr.bf16.gmra.mrb[0].mxu0 %v6562
        %v6751 = vpop.f32.mrb[0].mxu0
        %v6752 = vadd.f32 0.0, %v6751
        %v6753 = vpop.f32.mrb[0].mxu0
        %v6754 = vpop.f32.mrb[0].mxu0
        %v6755 = vadd.f32 0.0, %v6754
        %v6756 = vpop.f32.mrb[0].mxu0
        %6757 = vmatprep.mubr.bf16.mxu0 0
        %6758 = vmatmul.mubr.bf16.gmra.mrb[0].mxu0 %v6565
        %v6759 = vpop.f32.mrb[0].mxu0
        %v6760 = vadd.f32 0.0, %v6759
        %v6761 = vpop.f32.mrb[0].mxu0
        %v6762 = vpop.f32.mrb[0].mxu0
        %v6763 = vadd.f32 0.0, %v6762
        %v6764 = vpop.f32.mrb[0].mxu0
        %6765 = vmatprep.mubr.bf16.mxu0 0
        %6766 = vmatmul.mubr.bf16.gmra.mrb[0].mxu0 %v6568
        %v6767 = vpop.f32.mrb[0].mxu0
        %v6768 = vadd.f32 0.0, %v6767
        %v6769 = vpop.f32.mrb[0].mxu0
        %v6770 = vpop.f32.mrb[0].mxu0
        %v6771 = vadd.f32 0.0, %v6770
        %v6772 = vpop.f32.mrb[0].mxu0
        %6773 = vmatprep.mubr.bf16.mxu0 0
        %6774 = vmatmul.mubr.bf16.gmra.mrb[0].mxu0 %v6571
        %v6775 = vpop.f32.mrb[0].mxu0
        %v6776 = vadd.f32 0.0, %v6775
        %v6777 = vpop.f32.mrb[0].mxu0
        %v6778 = vpop.f32.mrb[0].mxu0
        %v6779 = vadd.f32 0.0, %v6778
        %v6780 = vpop.f32.mrb[0].mxu0
        %6781 = vmatprep.mubr.bf16.mxu0 0
        %6782 = vmatmul.mubr.bf16.gmra.mrb[0].mxu0 %v6574
        %v6783 = vpop.f32.mrb[0].mxu0
        %v6784 = vadd.f32 0.0, %v6783
        %v6785 = vpop.f32.mrb[0].mxu0
        %v6786 = vpop.f32.mrb[0].mxu0
        %v6787 = vadd.f32 0.0, %v6786
        %v6788 = vpop.f32.mrb[0].mxu0
        %6789 = vmatprep.mubr.bf16.mxu0 0
        %6790 = vmatmul.mubr.bf16.gmra.mrb[0].mxu0 %v6577
        %v6791 = vpop.f32.mrb[0].mxu0
        %v6792 = vadd.f32 0.0, %v6791
        %v6793 = vpop.f32.mrb[0].mxu0
        %v6794 = vpop.f32.mrb[0].mxu0
        %v6795 = vadd.f32 0.0, %v6794
        %v6796 = vpop.f32.mrb[0].mxu0
        %6797 = vmatprep.mubr.bf16.mxu0 0
        %6798 = vmatmul.mubr.bf16.gmra.mrb[0].mxu0 %v6580
        %v6799 = vpop.f32.mrb[0].mxu0
        %v6800 = vadd.f32 0.0, %v6799
        %v6801 = vpop.f32.mrb[0].mxu0
        %v6802 = vpop.f32.mrb[0].mxu0
        %v6803 = vadd.f32 0.0, %v6802
        %v6804 = vpop.f32.mrb[0].mxu0
        %6805 = vmatprep.mubr.bf16.mxu0 0
        %6806 = vmatmul.mubr.bf16.gmra.mrb[0].mxu0 %v6583
        %v6807 = vpop.f32.mrb[0].mxu0
        %v6808 = vadd.f32 0.0, %v6807
        %v6809 = vpop.f32.mrb[0].mxu0
        %v6810 = vpop.f32.mrb[0].mxu0
        %v6811 = vadd.f32 0.0, %v6810
        %v6812 = vpop.f32.mrb[0].mxu0
        %6813 = vmatprep.mubr.bf16.mxu0 0
        %6814 = vmatmul.mubr.bf16.gmra.mrb[0].mxu0 %v6586
        %v6815 = vpop.f32.mrb[0].mxu0
        %v6816 = vadd.f32 0.0, %v6815
        %v6817 = vpop.f32.mrb[0].mxu0
        %v6818 = vpop.f32.mrb[0].mxu0
        %v6819 = vadd.f32 0.0, %v6818
        %v6820 = vpop.f32.mrb[0].mxu0
        %6821 = vmatprep.mubr.bf16.mxu0 0
        %6822 = vmatmul.mubr.bf16.gmra.mrb[0].mxu0 %v6589
        %v6823 = vpop.f32.mrb[0].mxu0
        %v6824 = vadd.f32 0.0, %v6823
        %v6825 = vpop.f32.mrb[0].mxu0
        %v6826 = vpop.f32.mrb[0].mxu0
        %v6827 = vadd.f32 0.0, %v6826
        %v6828 = vpop.f32.mrb[0].mxu0
        %6829 = vmatprep.mubr.bf16.mxu0 0
        %6830 = vmatmul.mubr.bf16.gmra.mrb[0].mxu0 %v6592
        %v6831 = vpop.f32.mrb[0].mxu0
        %v6832 = vadd.f32 0.0, %v6831
        %v6833 = vpop.f32.mrb[0].mxu0
        %v6834 = vpop.f32.mrb[0].mxu0
        %v6835 = vadd.f32 0.0, %v6834
        %v6836 = vpop.f32.mrb[0].mxu0
        %6837 = vmatprep.mubr.bf16.mxu0 0
        %6838 = vmatmul.mubr.bf16.gmra.mrb[0].mxu0 %v6595
        %v6839 = vpop.f32.mrb[0].mxu0
        %v6840 = vadd.f32 0.0, %v6839
        %v6841 = vpop.f32.mrb[0].mxu0
        %v6842 = vpop.f32.mrb[0].mxu0
        %v6843 = vadd.f32 0.0, %v6842
        %v6844 = vpop.f32.mrb[0].mxu0
        %6845 = vmatprep.mubr.bf16.mxu0 0
        %6846 = vmatmul.mubr.bf16.gmra.mrb[0].mxu0 %v6598
        %v6847 = vpop.f32.mrb[0].mxu0
        %v6848 = vadd.f32 0.0, %v6847
        %v6849 = vpop.f32.mrb[0].mxu0
        %v6850 = vpop.f32.mrb[0].mxu0
        %v6851 = vpop.f32.mrb[0].mxu0
        %6852 = vmatprep.mubr.bf16.mxu0 0
        %6853 = vmatmul.mubr.bf16.gmra.mrb[0].mxu0 %v6601
        %v6854 = vpop.f32.mrb[0].mxu0
        %v6855 = vpop.f32.mrb[0].mxu0
        %v6856 = vpop.f32.mrb[0].mxu0
        %v6857 = vpop.f32.mrb[0].mxu0
        %6858 = vmatprep.mubr.bf16.mxu0 0
        %6859 = vmatmul.mubr.bf16.gmra.mrb[0].mxu0 %v6604
        %v6860 = vpop.f32.mrb[0].mxu0
        %v6861 = vadd.f32 0.0, %v6860
        %v6862 = vpop.f32.mrb[0].mxu0
        %v6863 = vpop.f32.mrb[0].mxu0
        %v6864 = vadd.f32 0.0, %v6863
        %v6865 = vpop.f32.mrb[0].mxu0
        %6866 = vmatprep.mubr.bf16.mxu0 0
        %6867 = vmatmul.mubr.bf16.gmra.mrb[0].mxu0 %v6607
        %v6868 = vpop.f32.mrb[0].mxu0
        %v6869 = vadd.f32 0.0, %v6868
        %v6870 = vpop.f32.mrb[0].mxu0
        %v6871 = vpop.f32.mrb[0].mxu0
        %v6872 = vadd.f32 0.0, %v6871
        %v6873 = vpop.f32.mrb[0].mxu0
        %6874 = vmatprep.mubr.bf16.mxu0 0
        %6875 = vmatmul.mubr.bf16.gmra.mrb[0].mxu0 %v6610
        %v6876 = vpop.f32.mrb[0].mxu0
        %v6877 = vadd.f32 0.0, %v6876
        %v6878 = vpop.f32.mrb[0].mxu0
        %v6879 = vpop.f32.mrb[0].mxu0
        %v6880 = vadd.f32 0.0, %v6879
        %v6881 = vpop.f32.mrb[0].mxu0
        %6882 = vmatprep.mubr.bf16.mxu0 0
        %6883 = vmatmul.mubr.bf16.gmra.mrb[0].mxu0 %v6613
        %v6884 = vpop.f32.mrb[0].mxu0
        %v6885 = vadd.f32 0.0, %v6884
        %v6886 = vpop.f32.mrb[0].mxu0
        %v6887 = vpop.f32.mrb[0].mxu0
        %v6888 = vadd.f32 0.0, %v6887
        %v6889 = vpop.f32.mrb[0].mxu0
        %6890 = vmatprep.mubr.bf16.mxu0 0
        %6891 = vmatmul.mubr.bf16.gmra.mrb[0].mxu0 %v6616
        %v6892 = vpop.f32.mrb[0].mxu0
        %v6893 = vadd.f32 0.0, %v6892
        %v6894 = vpop.f32.mrb[0].mxu0
        %v6895 = vpop.f32.mrb[0].mxu0
        %v6896 = vadd.f32 0.0, %v6895
        %v6897 = vpop.f32.mrb[0].mxu0
        %6898 = vmatprep.mubr.bf16.mxu0 0
        %6899 = vmatmul.mubr.bf16.gmra.mrb[0].mxu0 %v6619
        %v6900 = vpop.f32.mrb[0].mxu0
        %v6901 = vadd.f32 0.0, %v6900
        %v6902 = vpop.f32.mrb[0].mxu0
        %v6903 = vpop.f32.mrb[0].mxu0
        %v6904 = vadd.f32 0.0, %v6903
        %v6905 = vpop.f32.mrb[0].mxu0
        %6906 = vmatprep.mubr.bf16.mxu0 0
        %6907 = vmatmul.mubr.bf16.gmra.mrb[0].mxu0 %v6622
        %v6908 = vpop.f32.mrb[0].mxu0
        %v6909 = vadd.f32 0.0, %v6908
        %v6910 = vpop.f32.mrb[0].mxu0
        %v6911 = vpop.f32.mrb[0].mxu0
        %v6912 = vadd.f32 0.0, %v6911
        %v6913 = vpop.f32.mrb[0].mxu0
        %6914 = vmatprep.mubr.bf16.mxu0 0
        %6915 = vmatmul.mubr.bf16.gmra.mrb[0].mxu0 %v6625
        %v6916 = vpop.f32.mrb[0].mxu0
        %v6917 = vadd.f32 0.0, %v6916
        %v6918 = vpop.f32.mrb[0].mxu0
        %v6919 = vpop.f32.mrb[0].mxu0
        %v6920 = vadd.f32 0.0, %v6919
        %v6921 = vpop.f32.mrb[0].mxu0
        %6922 = vmatprep.mubr.bf16.mxu0 0
        %6923 = vmatmul.mubr.bf16.gmra.mrb[0].mxu0 %v6628
        %v6924 = vpop.f32.mrb[0].mxu0
        %v6925 = vadd.f32 0.0, %v6924
        %v6926 = vpop.f32.mrb[0].mxu0
        %v6927 = vpop.f32.mrb[0].mxu0
        %v6928 = vadd.f32 0.0, %v6927
        %v6929 = vpop.f32.mrb[0].mxu0
        %6930 = vmatprep.mubr.bf16.mxu0 0
        %6931 = vmatmul.mubr.bf16.gmra.mrb[0].mxu0 %v6631
        %v6932 = vpop.f32.mrb[0].mxu0
        %v6933 = vadd.f32 0.0, %v6932
        %v6934 = vpop.f32.mrb[0].mxu0
        %v6935 = vpop.f32.mrb[0].mxu0
        %v6936 = vadd.f32 0.0, %v6935
        %v6937 = vpop.f32.mrb[0].mxu0
        %6938 = vmatprep.mubr.bf16.mxu0 0
        %6939 = vmatmul.mubr.bf16.gmra.mrb[0].mxu0 %v6634
        %v6940 = vpop.f32.mrb[0].mxu0
        %v6941 = vadd.f32 0.0, %v6940
        %v6942 = vpop.f32.mrb[0].mxu0
        %v6943 = vpop.f32.mrb[0].mxu0
        %v6944 = vadd.f32 0.0, %v6943
        %v6945 = vpop.f32.mrb[0].mxu0
        %6946 = vmatprep.mubr.bf16.mxu0 0
        %6947 = vmatmul.mubr.bf16.gmra.mrb[0].mxu0 %v6637
        %v6948 = vpop.f32.mrb[0].mxu0
        %v6949 = vadd.f32 0.0, %v6948
        %v6950 = vpop.f32.mrb[0].mxu0
        %v6951 = vpop.f32.mrb[0].mxu0
        %v6952 = vadd.f32 0.0, %v6951
        %v6953 = vpop.f32.mrb[0].mxu0
        %6954 = vmatprep.mubr.bf16.mxu0 0
        %6955 = vmatmul.mubr.bf16.gmra.mrb[0].mxu0 %v6640
        %v6956 = vpop.f32.mrb[0].mxu0
        %v6957 = vadd.f32 0.0, %v6956
        %v6958 = vpop.f32.mrb[0].mxu0
        %v6959 = vpop.f32.mrb[0].mxu0
        %v6960 = vadd.f32 0.0, %v6959
        %v6961 = vpop.f32.mrb[0].mxu0
        %6962 = vmatprep.mubr.bf16.mxu0 0
        %6963 = vmatmul.mubr.bf16.gmra.mrb[0].mxu0 %v6643
        %v6964 = vpop.f32.mrb[0].mxu0
        %v6965 = vadd.f32 0.0, %v6964
        %v6966 = vpop.f32.mrb[0].mxu0
        %v6967 = vpop.f32.mrb[0].mxu0
        %v6968 = vadd.f32 0.0, %v6967
        %v6969 = vpop.f32.mrb[0].mxu0
        %6970 = vmatprep.mubr.bf16.mxu0 0
        %6971 = vmatmul.mubr.bf16.gmra.mrb[0].mxu0 %v6646
        %v6972 = vpop.f32.mrb[0].mxu0
        %v6973 = vadd.f32 0.0, %v6972
        %v6974 = vpop.f32.mrb[0].mxu0
        %v6975 = vpop.f32.mrb[0].mxu0
        %v6976 = vadd.f32 0.0, %v6975
        %v6977 = vpop.f32.mrb[0].mxu0
        %6978 = vmatprep.mubr.bf16.mxu0 0
        %6979 = vmatmul.mubr.bf16.gmra.mrb[0].mxu0 %v6649
        %v6980 = vpop.f32.mrb[0].mxu0
        %v6981 = vadd.f32 0.0, %v6980
        %v6982 = vpop.f32.mrb[0].mxu0
        %v6983 = vpop.f32.mrb[0].mxu0
        %v6984 = vadd.f32 0.0, %v6983
        %v6985 = vpop.f32.mrb[0].mxu0
        %6986 = vmatprep.mubr.bf16.mxu0 0
        %6987 = vmatmul.mubr.bf16.gmra.mrb[0].mxu0 %v6652
        %v6988 = vpop.f32.mrb[0].mxu0
        %v6989 = vadd.f32 0.0, %v6988
        %v6990 = vpop.f32.mrb[0].mxu0
        %v6991 = vpop.f32.mrb[0].mxu0
        %v6992 = vadd.f32 0.0, %v6991
        %v6993 = vpop.f32.mrb[0].mxu0
        %6994 = vmatprep.mubr.bf16.mxu0 0
        %6995 = vmatmul.mubr.bf16.gmra.mrb[0].mxu0 %v6655
        %v6996 = vpop.f32.mrb[0].mxu0
        %v6997 = vadd.f32 0.0, %v6996
        %v6998 = vpop.f32.mrb[0].mxu0
        %v6999 = vpop.f32.mrb[0].mxu0
        %v7000 = vadd.f32 0.0, %v6999
        %v7001 = vpop.f32.mrb[0].mxu0
        %7002 = vmatprep.mubr.bf16.mxu0 0
        %7003 = vmatmul.mubr.bf16.gmra.mrb[0].mxu0 %v6658
        %v7004 = vpop.f32.mrb[0].mxu0
        %v7005 = vadd.f32 0.0, %v7004
        %v7006 = vpop.f32.mrb[0].mxu0
        %v7007 = vpop.f32.mrb[0].mxu0
        %v7008 = vpop.f32.mrb[0].mxu0
        %7009 = vmatprep.mubr.bf16.mxu0 0
        %7010 = vmatmul.mubr.bf16.gmra.mrb[0].mxu0 %v6661
        %v7011 = vpop.f32.mrb[0].mxu0
        %v7012 = vpop.f32.mrb[0].mxu0
        %v7013 = vpop.f32.mrb[0].mxu0
        %v7014 = vpop.f32.mrb[0].mxu0
        %7015 = vdwg.mxu0
        %v7016 = vadd.f32 %v6086, %v6704
        %v7017 = vadd.f32 %v6087, %v6707
        %v7018 = vadd.f32 %v6088, %v6712
        %v7019 = vadd.f32 %v6089, %v6715
        %v7020 = vadd.f32 %v6090, %v6720
        %v7021 = vadd.f32 %v6091, %v6723
        %v7022 = vadd.f32 %v6092, %v6728
        %v7023 = vadd.f32 %v6093, %v6731
        %v7024 = vadd.f32 %v6094, %v6736
        %v7025 = vadd.f32 %v6095, %v6739
        %v7026 = vadd.f32 %v6096, %v6744
        %v7027 = vadd.f32 %v6097, %v6747
        %v7028 = vadd.f32 %v6098, %v6752
        %v7029 = vadd.f32 %v6099, %v6755
        %v7030 = vadd.f32 %v6100, %v6760
        %v7031 = vadd.f32 %v6101, %v6763
        %v7032 = vadd.f32 %v6102, %v6768
        %v7033 = vadd.f32 %v6103, %v6771
        %v7034 = vadd.f32 %v6104, %v6776
        %v7035 = vadd.f32 %v6105, %v6779
        %v7036 = vadd.f32 %v6106, %v6784
        %v7037 = vadd.f32 %v6107, %v6787
        %v7038 = vadd.f32 %v6108, %v6792
        %v7039 = vadd.f32 %v6109, %v6795
        %v7040 = vadd.f32 %v6110, %v6800
        %v7041 = vadd.f32 %v6111, %v6803
        %v7042 = vadd.f32 %v6112, %v6808
        %v7043 = vadd.f32 %v6113, %v6811
        %v7044 = vadd.f32 %v6114, %v6816
        %v7045 = vadd.f32 %v6115, %v6819
        %v7046 = vadd.f32 %v6116, %v6824
        %v7047 = vadd.f32 %v6117, %v6827
        %v7048 = vadd.f32 %v6118, %v6832
        %v7049 = vadd.f32 %v6119, %v6835
        %v7050 = vadd.f32 %v6120, %v6840
        %v7051 = vadd.f32 %v6121, %v6843
        %v7052 = vadd.f32 %v6122, %v6848
        %v7053 = vadd.f32 %v6123, %v6861
        %v7054 = vadd.f32 %v6124, %v6864
        %v7055 = vadd.f32 %v6125, %v6869
        %v7056 = vadd.f32 %v6126, %v6872
        %v7057 = vadd.f32 %v6127, %v6877
        %v7058 = vadd.f32 %v6128, %v6880
        %v7059 = vadd.f32 %v6129, %v6885
        %v7060 = vadd.f32 %v6130, %v6888
        %v7061 = vadd.f32 %v6131, %v6893
        %v7062 = vadd.f32 %v6132, %v6896
        %v7063 = vadd.f32 %v6133, %v6901
        %v7064 = vadd.f32 %v6134, %v6904
        %v7065 = vadd.f32 %v6135, %v6909
        %v7066 = vadd.f32 %v6136, %v6912
        %v7067 = vadd.f32 %v6137, %v6917
        %v7068 = vadd.f32 %v6138, %v6920
        %v7069 = vadd.f32 %v6139, %v6925
        %v7070 = vadd.f32 %v6140, %v6928
        %v7071 = vadd.f32 %v6141, %v6933
        %v7072 = vadd.f32 %v6142, %v6936
        %v7073 = vadd.f32 %v6143, %v6941
        %v7074 = vadd.f32 %v6144, %v6944
        %v7075 = vadd.f32 %v6145, %v6949
        %v7076 = vadd.f32 %v6146, %v6952
        %v7077 = vadd.f32 %v6147, %v6957
        %v7078 = vadd.f32 %v6148, %v6960
        %v7079 = vadd.f32 %v6149, %v6965
        %v7080 = vadd.f32 %v6150, %v6968
        %v7081 = vadd.f32 %v6151, %v6973
        %v7082 = vadd.f32 %v6152, %v6976
        %v7083 = vadd.f32 %v6153, %v6981
        %v7084 = vadd.f32 %v6154, %v6984
        %v7085 = vadd.f32 %v6155, %v6989
        %v7086 = vadd.f32 %v6156, %v6992
        %v7087 = vadd.f32 %v6157, %v6997
        %v7088 = vadd.f32 %v6158, %v7000
        %v7089 = vadd.f32 %v6159, %v7005
        %v7090 = vld [vmem:[#allocation2 + $0x154] sm:$0x7]
        %v7092 = vunpack.c.l.b16 %v7090
        %v7093 = vpack.c.b16 %v7092, %v6404
        %vm7094 = vsmask.f32 5376
        %v7096 = vshrl.u32 %v6406, 16
        %v7098 = vrot.slane %v7096, 2
        %v7099 = vshll.u32 %v6406, 16
        %v7101 = vrot.slane %v7099, 3
        %v7102 = vor.u32 %v7098, %v7101
        %v7104 = vshrl.u32 %v6407, 16
        %v7106 = vrot.slane %v7104, 2
        %v7107 = vshll.u32 %v6407, 16
        %v7109 = vrot.slane %v7107, 3
        %v7110 = vor.u32 %v7106, %v7109
        %v7111 = vsel %vm7094, %v7102, %v7110
        %v7113 = vshrl.u32 %v6408, 16
        %v7115 = vrot.slane %v7113, 2
        %v7116 = vshll.u32 %v6408, 16
        %v7118 = vrot.slane %v7116, 3
        %v7119 = vor.u32 %v7115, %v7118
        %v7120 = vsel %vm7094, %v7110, %v7119
        %v7122 = vshrl.u32 %v6409, 16
        %v7124 = vrot.slane %v7122, 2
        %v7125 = vshll.u32 %v6409, 16
        %v7127 = vrot.slane %v7125, 3
        %v7128 = vor.u32 %v7124, %v7127
        %v7129 = vsel %vm7094, %v7119, %v7128
        %v7131 = vshrl.u32 %v6410, 16
        %v7133 = vrot.slane %v7131, 2
        %v7134 = vshll.u32 %v6410, 16
        %v7136 = vrot.slane %v7134, 3
        %v7137 = vor.u32 %v7133, %v7136
        %v7138 = vsel %vm7094, %v7128, %v7137
        %v7140 = vshrl.u32 %v6411, 16
        %v7142 = vrot.slane %v7140, 2
        %v7143 = vshll.u32 %v6411, 16
        %v7145 = vrot.slane %v7143, 3
        %v7146 = vor.u32 %v7142, %v7145
        %v7147 = vsel %vm7094, %v7137, %v7146
        %v7149 = vshrl.u32 %v6412, 16
        %v7151 = vrot.slane %v7149, 2
        %v7152 = vshll.u32 %v6412, 16
        %v7154 = vrot.slane %v7152, 3
        %v7155 = vor.u32 %v7151, %v7154
        %v7156 = vsel %vm7094, %v7146, %v7155
        %v7158 = vshrl.u32 %v6413, 16
        %v7160 = vrot.slane %v7158, 2
        %v7161 = vshll.u32 %v6413, 16
        %v7163 = vrot.slane %v7161, 3
        %v7164 = vor.u32 %v7160, %v7163
        %v7165 = vsel %vm7094, %v7155, %v7164
        %v7167 = vshrl.u32 %v6414, 16
        %v7169 = vrot.slane %v7167, 2
        %v7170 = vshll.u32 %v6414, 16
        %v7172 = vrot.slane %v7170, 3
        %v7173 = vor.u32 %v7169, %v7172
        %v7174 = vsel %vm7094, %v7164, %v7173
        %v7176 = vshrl.u32 %v6415, 16
        %v7178 = vrot.slane %v7176, 2
        %v7179 = vshll.u32 %v6415, 16
        %v7181 = vrot.slane %v7179, 3
        %v7182 = vor.u32 %v7178, %v7181
        %v7183 = vsel %vm7094, %v7173, %v7182
        %v7185 = vshrl.u32 %v6416, 16
        %v7187 = vrot.slane %v7185, 2
        %v7188 = vshll.u32 %v6416, 16
        %v7190 = vrot.slane %v7188, 3
        %v7191 = vor.u32 %v7187, %v7190
        %v7192 = vsel %vm7094, %v7182, %v7191
        %v7194 = vshrl.u32 %v6417, 16
        %v7196 = vrot.slane %v7194, 2
        %v7197 = vshll.u32 %v6417, 16
        %v7199 = vrot.slane %v7197, 3
        %v7200 = vor.u32 %v7196, %v7199
        %v7201 = vsel %vm7094, %v7191, %v7200
        %v7203 = vshrl.u32 %v6418, 16
        %v7205 = vrot.slane %v7203, 2
        %v7206 = vshll.u32 %v6418, 16
        %v7208 = vrot.slane %v7206, 3
        %v7209 = vor.u32 %v7205, %v7208
        %v7210 = vsel %vm7094, %v7200, %v7209
        %v7212 = vshrl.u32 %v6419, 16
        %v7214 = vrot.slane %v7212, 2
        %v7215 = vshll.u32 %v6419, 16
        %v7217 = vrot.slane %v7215, 3
        %v7218 = vor.u32 %v7214, %v7217
        %v7219 = vsel %vm7094, %v7209, %v7218
        %v7221 = vshrl.u32 %v6420, 16
        %v7223 = vrot.slane %v7221, 2
        %v7224 = vshll.u32 %v6420, 16
        %v7226 = vrot.slane %v7224, 3
        %v7227 = vor.u32 %v7223, %v7226
        %v7228 = vsel %vm7094, %v7218, %v7227
        %v7230 = vshrl.u32 %v6421, 16
        %v7232 = vrot.slane %v7230, 2
        %v7233 = vshll.u32 %v6421, 16
        %v7235 = vrot.slane %v7233, 3
        %v7236 = vor.u32 %v7232, %v7235
        %v7237 = vsel %vm7094, %v7227, %v7236
        %v7239 = vshrl.u32 %v6422, 16
        %v7241 = vrot.slane %v7239, 2
        %v7242 = vshll.u32 %v6422, 16
        %v7244 = vrot.slane %v7242, 3
        %v7245 = vor.u32 %v7241, %v7244
        %v7246 = vsel %vm7094, %v7236, %v7245
        %v7248 = vshrl.u32 %v6423, 16
        %v7250 = vrot.slane %v7248, 2
        %v7251 = vshll.u32 %v6423, 16
        %v7253 = vrot.slane %v7251, 3
        %v7254 = vor.u32 %v7250, %v7253
        %v7255 = vsel %vm7094, %v7245, %v7254
        %v7257 = vshrl.u32 %v6424, 16
        %v7259 = vrot.slane %v7257, 2
        %v7260 = vshll.u32 %v6424, 16
        %v7262 = vrot.slane %v7260, 3
        %v7263 = vor.u32 %v7259, %v7262
        %v7264 = vsel %vm7094, %v7254, %v7263
        %v7266 = vshrl.u32 %v6425, 16
        %v7268 = vrot.slane %v7266, 2
        %v7269 = vshll.u32 %v6425, 16
        %v7271 = vrot.slane %v7269, 3
        %v7272 = vor.u32 %v7268, %v7271
        %v7273 = vsel %vm7094, %v7263, %v7272
        %v7275 = vshrl.u32 %v6426, 16
        %v7277 = vrot.slane %v7275, 2
        %v7278 = vshll.u32 %v6426, 16
        %v7280 = vrot.slane %v7278, 3
        %v7281 = vor.u32 %v7277, %v7280
        %v7282 = vsel %vm7094, %v7272, %v7281
        %v7284 = vshrl.u32 %v6427, 16
        %v7286 = vrot.slane %v7284, 2
        %v7287 = vshll.u32 %v6427, 16
        %v7289 = vrot.slane %v7287, 3
        %v7290 = vor.u32 %v7286, %v7289
        %v7291 = vsel %vm7094, %v7281, %v7290
        %v7293 = vshrl.u32 %v6428, 16
        %v7295 = vrot.slane %v7293, 2
        %v7296 = vshll.u32 %v6428, 16
        %v7298 = vrot.slane %v7296, 3
        %v7299 = vor.u32 %v7295, %v7298
        %v7300 = vsel %vm7094, %v7290, %v7299
        %v7302 = vshrl.u32 %v6429, 16
        %v7304 = vrot.slane %v7302, 2
        %v7305 = vshll.u32 %v6429, 16
        %v7307 = vrot.slane %v7305, 3
        %v7308 = vor.u32 %v7304, %v7307
        %v7309 = vsel %vm7094, %v7299, %v7308
        %v7311 = vshrl.u32 %v6430, 16
        %v7313 = vrot.slane %v7311, 2
        %v7314 = vshll.u32 %v6430, 16
        %v7316 = vrot.slane %v7314, 3
        %v7317 = vor.u32 %v7313, %v7316
        %v7318 = vsel %vm7094, %v7308, %v7317
        %v7320 = vshrl.u32 %v6431, 16
        %v7322 = vrot.slane %v7320, 2
        %v7323 = vshll.u32 %v6431, 16
        %v7325 = vrot.slane %v7323, 3
        %v7326 = vor.u32 %v7322, %v7325
        %v7327 = vsel %vm7094, %v7317, %v7326
        %v7329 = vshrl.u32 %v6432, 16
        %v7331 = vrot.slane %v7329, 2
        %v7332 = vshll.u32 %v6432, 16
        %v7334 = vrot.slane %v7332, 3
        %v7335 = vor.u32 %v7331, %v7334
        %v7336 = vsel %vm7094, %v7326, %v7335
        %v7338 = vshrl.u32 %v6433, 16
        %v7340 = vrot.slane %v7338, 2
        %v7341 = vshll.u32 %v6433, 16
        %v7343 = vrot.slane %v7341, 3
        %v7344 = vor.u32 %v7340, %v7343
        %v7345 = vsel %vm7094, %v7335, %v7344
        %v7347 = vshrl.u32 %v6434, 16
        %v7349 = vrot.slane %v7347, 2
        %v7350 = vshll.u32 %v6434, 16
        %v7352 = vrot.slane %v7350, 3
        %v7353 = vor.u32 %v7349, %v7352
        %v7354 = vsel %vm7094, %v7344, %v7353
        %v7356 = vshrl.u32 %v6435, 16
        %v7358 = vrot.slane %v7356, 2
        %v7359 = vshll.u32 %v6435, 16
        %v7361 = vrot.slane %v7359, 3
        %v7362 = vor.u32 %v7358, %v7361
        %v7363 = vsel %vm7094, %v7353, %v7362
        %v7365 = vshrl.u32 %v6436, 16
        %v7367 = vrot.slane %v7365, 2
        %v7368 = vshll.u32 %v6436, 16
        %v7370 = vrot.slane %v7368, 3
        %v7371 = vor.u32 %v7367, %v7370
        %v7372 = vsel %vm7094, %v7362, %v7371
        %v7374 = vshrl.u32 %v6437, 16
        %v7376 = vrot.slane %v7374, 2
        %v7377 = vshll.u32 %v6437, 16
        %v7379 = vrot.slane %v7377, 3
        %v7380 = vor.u32 %v7376, %v7379
        %v7381 = vsel %vm7094, %v7371, %v7380
        %v7383 = vshrl.u32 %v6438, 16
        %v7385 = vrot.slane %v7383, 2
        %v7386 = vshll.u32 %v6438, 16
        %v7388 = vrot.slane %v7386, 3
        %v7389 = vor.u32 %v7385, %v7388
        %v7390 = vsel %vm7094, %v7380, %v7389
        %v7392 = vshrl.u32 %v6439, 16
        %v7394 = vrot.slane %v7392, 2
        %v7395 = vshll.u32 %v6439, 16
        %v7397 = vrot.slane %v7395, 3
        %v7398 = vor.u32 %v7394, %v7397
        %v7399 = vsel %vm7094, %v7389, %v7398
        %v7401 = vshrl.u32 %v6440, 16
        %v7403 = vrot.slane %v7401, 2
        %v7404 = vshll.u32 %v6440, 16
        %v7406 = vrot.slane %v7404, 3
        %v7407 = vor.u32 %v7403, %v7406
        %v7408 = vsel %vm7094, %v7398, %v7407
        %v7410 = vshrl.u32 %v6441, 16
        %v7412 = vrot.slane %v7410, 2
        %v7413 = vshll.u32 %v6441, 16
        %v7415 = vrot.slane %v7413, 3
        %v7416 = vor.u32 %v7412, %v7415
        %v7417 = vsel %vm7094, %v7407, %v7416
        %v7419 = vshrl.u32 %v6442, 16
        %v7421 = vrot.slane %v7419, 2
        %v7422 = vshll.u32 %v6442, 16
        %v7424 = vrot.slane %v7422, 3
        %v7425 = vor.u32 %v7421, %v7424
        %v7426 = vsel %vm7094, %v7416, %v7425
        %v7428 = vshrl.u32 %v6443, 16
        %v7430 = vrot.slane %v7428, 2
        %v7431 = vshll.u32 %v6443, 16
        %v7433 = vrot.slane %v7431, 3
        %v7434 = vor.u32 %v7430, %v7433
        %v7435 = vsel %vm7094, %v7425, %v7434
        %v7437 = vshrl.u32 %v6444, 16
        %v7439 = vrot.slane %v7437, 2
        %v7440 = vshll.u32 %v6444, 16
        %v7442 = vrot.slane %v7440, 3
        %v7443 = vor.u32 %v7439, %v7442
        %v7444 = vsel %vm7094, %v7434, %v7443
        %v7446 = vshrl.u32 %v6445, 16
        %v7448 = vrot.slane %v7446, 2
        %v7449 = vshll.u32 %v6445, 16
        %v7451 = vrot.slane %v7449, 3
        %v7452 = vor.u32 %v7448, %v7451
        %v7453 = vsel %vm7094, %v7443, %v7452
        %v7455 = vshrl.u32 %v7093, 16
        %v7457 = vrot.slane %v7455, 2
        %v7458 = vshll.u32 %v7093, 16
        %v7460 = vrot.slane %v7458, 3
        %v7461 = vor.u32 %v7457, %v7460
        %v7462 = vsel %vm7094, %v7452, %v7461
        %v7467 = vunpack.c.l.b16 %v1438
        %v7468 = vunpack.c.l.b16 %v1439
        %v7469 = vunpack.c.l.b16 %v1440
        %v7470 = vunpack.c.l.b16 %v1441
        %v7471 = vpack.c.b16 %v7468, %v7467
        %v7472 = vpack.c.b16 %v7470, %v7469
        %v7476 = vsel %vm2073, %v7111, 0
        %v7479 = vsel %vm2073, %v7120, 0
        %v7482 = vsel %vm2073, %v7129, 0
        %v7485 = vsel %vm2073, %v7138, 0
        %v7488 = vsel %vm2073, %v7147, 0
        %v7491 = vsel %vm2073, %v7156, 0
        %v7494 = vsel %vm2073, %v7165, 0
        %v7497 = vsel %vm2073, %v7174, 0
        %v7500 = vsel %vm2073, %v7183, 0
        %v7503 = vsel %vm2073, %v7192, 0
        %v7506 = vsel %vm2073, %v7201, 0
        %v7509 = vsel %vm2073, %v7210, 0
        %v7512 = vsel %vm2073, %v7219, 0
        %v7515 = vsel %vm2073, %v7228, 0
        %v7518 = vsel %vm2073, %v7237, 0
        %v7521 = vsel %vm2073, %v7246, 0
        %v7524 = vsel %vm2073, %v7255, 0
        %v7527 = vsel %vm2073, %v7264, 0
        %v7530 = vsel %vm2073, %v7273, 0
        %v7533 = vsel %vm2073, %v7282, 0
        %v7536 = vsel %vm2073, %v7291, 0
        %v7539 = vsel %vm2073, %v7300, 0
        %v7542 = vsel %vm2073, %v7309, 0
        %v7545 = vsel %vm2073, %v7318, 0
        %v7548 = vsel %vm2073, %v7327, 0
        %v7551 = vsel %vm2073, %v7336, 0
        %v7554 = vsel %vm2073, %v7345, 0
        %v7557 = vsel %vm2073, %v7354, 0
        %v7560 = vsel %vm2073, %v7363, 0
        %v7563 = vsel %vm2073, %v7372, 0
        %v7566 = vsel %vm2073, %v7381, 0
        %v7569 = vsel %vm2073, %v7390, 0
        %v7572 = vsel %vm2073, %v7399, 0
        %v7575 = vsel %vm2073, %v7408, 0
        %v7578 = vsel %vm2073, %v7417, 0
        %v7581 = vsel %vm2073, %v7426, 0
        %v7584 = vsel %vm2073, %v7435, 0
        %v7587 = vsel %vm2073, %v7444, 0
        %v7590 = vsel %vm2073, %v7453, 0
        %v7593 = vsel %vm2073, %v7462, 0
        %v7596 = vsel %vm2073, %v7461, 0
        %7598 = vmatprep.subr.bf16.mxu0 0
        %7599 = vmatpush1.bf16.msra.mxu0 %v7471
        %7600 = vmatprep.subr.bf16.mxu0 0
        %7601 = vmatpush1.bf16.msra.mxu0 %v7472
        %7602 = vmatprep.subr.bf16.mxu0 0
        %7603 = vmatpush1.bf16.msra.mxu0 0
        %7604 = vmatprep.subr.bf16.mxu0 0
        %7605 = vmatpush1.bf16.msra.mxu0 0
        %7606 = vmatprep.subr.bf16.mxu0 0
        %7607 = vmatpush1.bf16.msra.mxu0 0
        %7608 = vmatprep.subr.bf16.mxu0 0
        %7609 = vmatpush1.bf16.msra.mxu0 0
        %7610 = vmatprep.subr.bf16.mxu0 0
        %7611 = vmatpush1.bf16.msra.mxu0 0
        %7612 = vmatprep.subr.bf16.mxu0 0
        %7613 = vmatpush1.bf16.msra.mxu0 0
        %7614 = vmatprep.subr.bf16.mxu0 0
        %7615 = vmatpush1.bf16.msra.mxu0 0
        %7616 = vmatprep.subr.bf16.mxu0 0
        %7617 = vmatpush1.bf16.msra.mxu0 0
        %7618 = vmatprep.subr.bf16.mxu0 0
        %7619 = vmatpush1.bf16.msra.mxu0 0
        %7620 = vmatprep.subr.bf16.mxu0 0
        %7621 = vmatpush1.bf16.msra.mxu0 0
        %7622 = vmatprep.subr.bf16.mxu0 0
        %7623 = vmatpush1.bf16.msra.mxu0 0
        %7624 = vmatprep.subr.bf16.mxu0 0
        %7625 = vmatpush1.bf16.msra.mxu0 0
        %7626 = vmatprep.subr.bf16.mxu0 0
        %7627 = vmatpush1.bf16.msra.mxu0 0
        %7628 = vmatprep.subr.bf16.mxu0 0
        %7629 = vmatpush1.bf16.msra.mxu0 0
        %7630 = vmatprep.mubr.bf16.mxu0 0
        %7631 = vmatmul.mubr.bf16.gmra.mrb[0].mxu0 %v7476
        %v7632 = vpop.f32.mrb[0].mxu0
        %v7633 = vpop.f32.mrb[0].mxu0
        %v7634 = vpop.f32.mrb[0].mxu0
        %v7635 = vpop.f32.mrb[0].mxu0
        %7636 = vmatprep.mubr.bf16.mxu0 0
        %7637 = vmatmul.mubr.bf16.gmra.mrb[0].mxu0 %v7479
        %v7638 = vpop.f32.mrb[0].mxu0
        %v7639 = vadd.f32 0.0, %v7638
        %v7640 = vpop.f32.mrb[0].mxu0
        %v7641 = vpop.f32.mrb[0].mxu0
        %v7642 = vadd.f32 0.0, %v7641
        %v7643 = vpop.f32.mrb[0].mxu0
        %7644 = vmatprep.mubr.bf16.mxu0 0
        %7645 = vmatmul.mubr.bf16.gmra.mrb[0].mxu0 %v7482
        %v7646 = vpop.f32.mrb[0].mxu0
        %v7647 = vadd.f32 0.0, %v7646
        %v7648 = vpop.f32.mrb[0].mxu0
        %v7649 = vpop.f32.mrb[0].mxu0
        %v7650 = vadd.f32 0.0, %v7649
        %v7651 = vpop.f32.mrb[0].mxu0
        %7652 = vmatprep.mubr.bf16.mxu0 0
        %7653 = vmatmul.mubr.bf16.gmra.mrb[0].mxu0 %v7485
        %v7654 = vpop.f32.mrb[0].mxu0
        %v7655 = vadd.f32 0.0, %v7654
        %v7656 = vpop.f32.mrb[0].mxu0
        %v7657 = vpop.f32.mrb[0].mxu0
        %v7658 = vadd.f32 0.0, %v7657
        %v7659 = vpop.f32.mrb[0].mxu0
        %7660 = vmatprep.mubr.bf16.mxu0 0
        %7661 = vmatmul.mubr.bf16.gmra.mrb[0].mxu0 %v7488
        %v7662 = vpop.f32.mrb[0].mxu0
        %v7663 = vadd.f32 0.0, %v7662
        %v7664 = vpop.f32.mrb[0].mxu0
        %v7665 = vpop.f32.mrb[0].mxu0
        %v7666 = vadd.f32 0.0, %v7665
        %v7667 = vpop.f32.mrb[0].mxu0
        %7668 = vmatprep.mubr.bf16.mxu0 0
        %7669 = vmatmul.mubr.bf16.gmra.mrb[0].mxu0 %v7491
        %v7670 = vpop.f32.mrb[0].mxu0
        %v7671 = vadd.f32 0.0, %v7670
        %v7672 = vpop.f32.mrb[0].mxu0
        %v7673 = vpop.f32.mrb[0].mxu0
        %v7674 = vadd.f32 0.0, %v7673
        %v7675 = vpop.f32.mrb[0].mxu0
        %7676 = vmatprep.mubr.bf16.mxu0 0
        %7677 = vmatmul.mubr.bf16.gmra.mrb[0].mxu0 %v7494
        %v7678 = vpop.f32.mrb[0].mxu0
        %v7679 = vadd.f32 0.0, %v7678
        %v7680 = vpop.f32.mrb[0].mxu0
        %v7681 = vpop.f32.mrb[0].mxu0
        %v7682 = vadd.f32 0.0, %v7681
        %v7683 = vpop.f32.mrb[0].mxu0
        %7684 = vmatprep.mubr.bf16.mxu0 0
        %7685 = vmatmul.mubr.bf16.gmra.mrb[0].mxu0 %v7497
        %v7686 = vpop.f32.mrb[0].mxu0
        %v7687 = vadd.f32 0.0, %v7686
        %v7688 = vpop.f32.mrb[0].mxu0
        %v7689 = vpop.f32.mrb[0].mxu0
        %v7690 = vadd.f32 0.0, %v7689
        %v7691 = vpop.f32.mrb[0].mxu0
        %7692 = vmatprep.mubr.bf16.mxu0 0
        %7693 = vmatmul.mubr.bf16.gmra.mrb[0].mxu0 %v7500
        %v7694 = vpop.f32.mrb[0].mxu0
        %v7695 = vadd.f32 0.0, %v7694
        %v7696 = vpop.f32.mrb[0].mxu0
        %v7697 = vpop.f32.mrb[0].mxu0
        %v7698 = vadd.f32 0.0, %v7697
        %v7699 = vpop.f32.mrb[0].mxu0
        %7700 = vmatprep.mubr.bf16.mxu0 0
        %7701 = vmatmul.mubr.bf16.gmra.mrb[0].mxu0 %v7503
        %v7702 = vpop.f32.mrb[0].mxu0
        %v7703 = vadd.f32 0.0, %v7702
        %v7704 = vpop.f32.mrb[0].mxu0
        %v7705 = vpop.f32.mrb[0].mxu0
        %v7706 = vadd.f32 0.0, %v7705
        %v7707 = vpop.f32.mrb[0].mxu0
        %7708 = vmatprep.mubr.bf16.mxu0 0
        %7709 = vmatmul.mubr.bf16.gmra.mrb[0].mxu0 %v7506
        %v7710 = vpop.f32.mrb[0].mxu0
        %v7711 = vadd.f32 0.0, %v7710
        %v7712 = vpop.f32.mrb[0].mxu0
        %v7713 = vpop.f32.mrb[0].mxu0
        %v7714 = vadd.f32 0.0, %v7713
        %v7715 = vpop.f32.mrb[0].mxu0
        %7716 = vmatprep.mubr.bf16.mxu0 0
        %7717 = vmatmul.mubr.bf16.gmra.mrb[0].mxu0 %v7509
        %v7718 = vpop.f32.mrb[0].mxu0
        %v7719 = vadd.f32 0.0, %v7718
        %v7720 = vpop.f32.mrb[0].mxu0
        %v7721 = vpop.f32.mrb[0].mxu0
        %v7722 = vadd.f32 0.0, %v7721
        %v7723 = vpop.f32.mrb[0].mxu0
        %7724 = vmatprep.mubr.bf16.mxu0 0
        %7725 = vmatmul.mubr.bf16.gmra.mrb[0].mxu0 %v7512
        %v7726 = vpop.f32.mrb[0].mxu0
        %v7727 = vadd.f32 0.0, %v7726
        %v7728 = vpop.f32.mrb[0].mxu0
        %v7729 = vpop.f32.mrb[0].mxu0
        %v7730 = vadd.f32 0.0, %v7729
        %v7731 = vpop.f32.mrb[0].mxu0
        %7732 = vmatprep.mubr.bf16.mxu0 0
        %7733 = vmatmul.mubr.bf16.gmra.mrb[0].mxu0 %v7515
        %v7734 = vpop.f32.mrb[0].mxu0
        %v7735 = vadd.f32 0.0, %v7734
        %v7736 = vpop.f32.mrb[0].mxu0
        %v7737 = vpop.f32.mrb[0].mxu0
        %v7738 = vadd.f32 0.0, %v7737
        %v7739 = vpop.f32.mrb[0].mxu0
        %7740 = vmatprep.mubr.bf16.mxu0 0
        %7741 = vmatmul.mubr.bf16.gmra.mrb[0].mxu0 %v7518
        %v7742 = vpop.f32.mrb[0].mxu0
        %v7743 = vadd.f32 0.0, %v7742
        %v7744 = vpop.f32.mrb[0].mxu0
        %v7745 = vpop.f32.mrb[0].mxu0
        %v7746 = vadd.f32 0.0, %v7745
        %v7747 = vpop.f32.mrb[0].mxu0
        %7748 = vmatprep.mubr.bf16.mxu0 0
        %7749 = vmatmul.mubr.bf16.gmra.mrb[0].mxu0 %v7521
        %v7750 = vpop.f32.mrb[0].mxu0
        %v7751 = vadd.f32 0.0, %v7750
        %v7752 = vpop.f32.mrb[0].mxu0
        %v7753 = vpop.f32.mrb[0].mxu0
        %v7754 = vadd.f32 0.0, %v7753
        %v7755 = vpop.f32.mrb[0].mxu0
        %7756 = vmatprep.mubr.bf16.mxu0 0
        %7757 = vmatmul.mubr.bf16.gmra.mrb[0].mxu0 %v7524
        %v7758 = vpop.f32.mrb[0].mxu0
        %v7759 = vadd.f32 0.0, %v7758
        %v7760 = vpop.f32.mrb[0].mxu0
        %v7761 = vpop.f32.mrb[0].mxu0
        %v7762 = vadd.f32 0.0, %v7761
        %v7763 = vpop.f32.mrb[0].mxu0
        %7764 = vmatprep.mubr.bf16.mxu0 0
        %7765 = vmatmul.mubr.bf16.gmra.mrb[0].mxu0 %v7527
        %v7766 = vpop.f32.mrb[0].mxu0
        %v7767 = vadd.f32 0.0, %v7766
        %v7768 = vpop.f32.mrb[0].mxu0
        %v7769 = vpop.f32.mrb[0].mxu0
        %v7770 = vadd.f32 0.0, %v7769
        %v7771 = vpop.f32.mrb[0].mxu0
        %7772 = vmatprep.mubr.bf16.mxu0 0
        %7773 = vmatmul.mubr.bf16.gmra.mrb[0].mxu0 %v7530
        %v7774 = vpop.f32.mrb[0].mxu0
        %v7775 = vadd.f32 0.0, %v7774
        %v7776 = vpop.f32.mrb[0].mxu0
        %v7777 = vpop.f32.mrb[0].mxu0
        %v7778 = vadd.f32 0.0, %v7777
        %v7779 = vpop.f32.mrb[0].mxu0
        %7780 = vmatprep.mubr.bf16.mxu0 0
        %7781 = vmatmul.mubr.bf16.gmra.mrb[0].mxu0 %v7533
        %v7782 = vpop.f32.mrb[0].mxu0
        %v7783 = vadd.f32 0.0, %v7782
        %v7784 = vpop.f32.mrb[0].mxu0
        %v7785 = vpop.f32.mrb[0].mxu0
        %v7786 = vpop.f32.mrb[0].mxu0
        %7787 = vmatprep.mubr.bf16.mxu0 0
        %7788 = vmatmul.mubr.bf16.gmra.mrb[0].mxu0 %v7536
        %v7789 = vpop.f32.mrb[0].mxu0
        %v7790 = vpop.f32.mrb[0].mxu0
        %v7791 = vpop.f32.mrb[0].mxu0
        %v7792 = vpop.f32.mrb[0].mxu0
        %7793 = vmatprep.mubr.bf16.mxu0 0
        %7794 = vmatmul.mubr.bf16.gmra.mrb[0].mxu0 %v7539
        %v7795 = vpop.f32.mrb[0].mxu0
        %v7796 = vadd.f32 0.0, %v7795
        %v7797 = vpop.f32.mrb[0].mxu0
        %v7798 = vpop.f32.mrb[0].mxu0
        %v7799 = vadd.f32 0.0, %v7798
        %v7800 = vpop.f32.mrb[0].mxu0
        %7801 = vmatprep.mubr.bf16.mxu0 0
        %7802 = vmatmul.mubr.bf16.gmra.mrb[0].mxu0 %v7542
        %v7803 = vpop.f32.mrb[0].mxu0
        %v7804 = vadd.f32 0.0, %v7803
        %v7805 = vpop.f32.mrb[0].mxu0
        %v7806 = vpop.f32.mrb[0].mxu0
        %v7807 = vadd.f32 0.0, %v7806
        %v7808 = vpop.f32.mrb[0].mxu0
        %7809 = vmatprep.mubr.bf16.mxu0 0
        %7810 = vmatmul.mubr.bf16.gmra.mrb[0].mxu0 %v7545
        %v7811 = vpop.f32.mrb[0].mxu0
        %v7812 = vadd.f32 0.0, %v7811
        %v7813 = vpop.f32.mrb[0].mxu0
        %v7814 = vpop.f32.mrb[0].mxu0
        %v7815 = vadd.f32 0.0, %v7814
        %v7816 = vpop.f32.mrb[0].mxu0
        %7817 = vmatprep.mubr.bf16.mxu0 0
        %7818 = vmatmul.mubr.bf16.gmra.mrb[0].mxu0 %v7548
        %v7819 = vpop.f32.mrb[0].mxu0
        %v7820 = vadd.f32 0.0, %v7819
        %v7821 = vpop.f32.mrb[0].mxu0
        %v7822 = vpop.f32.mrb[0].mxu0
        %v7823 = vadd.f32 0.0, %v7822
        %v7824 = vpop.f32.mrb[0].mxu0
        %7825 = vmatprep.mubr.bf16.mxu0 0
        %7826 = vmatmul.mubr.bf16.gmra.mrb[0].mxu0 %v7551
        %v7827 = vpop.f32.mrb[0].mxu0
        %v7828 = vadd.f32 0.0, %v7827
        %v7829 = vpop.f32.mrb[0].mxu0
        %v7830 = vpop.f32.mrb[0].mxu0
        %v7831 = vadd.f32 0.0, %v7830
        %v7832 = vpop.f32.mrb[0].mxu0
        %7833 = vmatprep.mubr.bf16.mxu0 0
        %7834 = vmatmul.mubr.bf16.gmra.mrb[0].mxu0 %v7554
        %v7835 = vpop.f32.mrb[0].mxu0
        %v7836 = vadd.f32 0.0, %v7835
        %v7837 = vpop.f32.mrb[0].mxu0
        %v7838 = vpop.f32.mrb[0].mxu0
        %v7839 = vadd.f32 0.0, %v7838
        %v7840 = vpop.f32.mrb[0].mxu0
        %7841 = vmatprep.mubr.bf16.mxu0 0
        %7842 = vmatmul.mubr.bf16.gmra.mrb[0].mxu0 %v7557
        %v7843 = vpop.f32.mrb[0].mxu0
        %v7844 = vadd.f32 0.0, %v7843
        %v7845 = vpop.f32.mrb[0].mxu0
        %v7846 = vpop.f32.mrb[0].mxu0
        %v7847 = vadd.f32 0.0, %v7846
        %v7848 = vpop.f32.mrb[0].mxu0
        %7849 = vmatprep.mubr.bf16.mxu0 0
        %7850 = vmatmul.mubr.bf16.gmra.mrb[0].mxu0 %v7560
        %v7851 = vpop.f32.mrb[0].mxu0
        %v7852 = vadd.f32 0.0, %v7851
        %v7853 = vpop.f32.mrb[0].mxu0
        %v7854 = vpop.f32.mrb[0].mxu0
        %v7855 = vadd.f32 0.0, %v7854
        %v7856 = vpop.f32.mrb[0].mxu0
        %7857 = vmatprep.mubr.bf16.mxu0 0
        %7858 = vmatmul.mubr.bf16.gmra.mrb[0].mxu0 %v7563
        %v7859 = vpop.f32.mrb[0].mxu0
        %v7860 = vadd.f32 0.0, %v7859
        %v7861 = vpop.f32.mrb[0].mxu0
        %v7862 = vpop.f32.mrb[0].mxu0
        %v7863 = vadd.f32 0.0, %v7862
        %v7864 = vpop.f32.mrb[0].mxu0
        %7865 = vmatprep.mubr.bf16.mxu0 0
        %7866 = vmatmul.mubr.bf16.gmra.mrb[0].mxu0 %v7566
        %v7867 = vpop.f32.mrb[0].mxu0
        %v7868 = vadd.f32 0.0, %v7867
        %v7869 = vpop.f32.mrb[0].mxu0
        %v7870 = vpop.f32.mrb[0].mxu0
        %v7871 = vadd.f32 0.0, %v7870
        %v7872 = vpop.f32.mrb[0].mxu0
        %7873 = vmatprep.mubr.bf16.mxu0 0
        %7874 = vmatmul.mubr.bf16.gmra.mrb[0].mxu0 %v7569
        %v7875 = vpop.f32.mrb[0].mxu0
        %v7876 = vadd.f32 0.0, %v7875
        %v7877 = vpop.f32.mrb[0].mxu0
        %v7878 = vpop.f32.mrb[0].mxu0
        %v7879 = vadd.f32 0.0, %v7878
        %v7880 = vpop.f32.mrb[0].mxu0
        %7881 = vmatprep.mubr.bf16.mxu0 0
        %7882 = vmatmul.mubr.bf16.gmra.mrb[0].mxu0 %v7572
        %v7883 = vpop.f32.mrb[0].mxu0
        %v7884 = vadd.f32 0.0, %v7883
        %v7885 = vpop.f32.mrb[0].mxu0
        %v7886 = vpop.f32.mrb[0].mxu0
        %v7887 = vadd.f32 0.0, %v7886
        %v7888 = vpop.f32.mrb[0].mxu0
        %7889 = vmatprep.mubr.bf16.mxu0 0
        %7890 = vmatmul.mubr.bf16.gmra.mrb[0].mxu0 %v7575
        %v7891 = vpop.f32.mrb[0].mxu0
        %v7892 = vadd.f32 0.0, %v7891
        %v7893 = vpop.f32.mrb[0].mxu0
        %v7894 = vpop.f32.mrb[0].mxu0
        %v7895 = vadd.f32 0.0, %v7894
        %v7896 = vpop.f32.mrb[0].mxu0
        %7897 = vmatprep.mubr.bf16.mxu0 0
        %7898 = vmatmul.mubr.bf16.gmra.mrb[0].mxu0 %v7578
        %v7899 = vpop.f32.mrb[0].mxu0
        %v7900 = vadd.f32 0.0, %v7899
        %v7901 = vpop.f32.mrb[0].mxu0
        %v7902 = vpop.f32.mrb[0].mxu0
        %v7903 = vadd.f32 0.0, %v7902
        %v7904 = vpop.f32.mrb[0].mxu0
        %7905 = vmatprep.mubr.bf16.mxu0 0
        %7906 = vmatmul.mubr.bf16.gmra.mrb[0].mxu0 %v7581
        %v7907 = vpop.f32.mrb[0].mxu0
        %v7908 = vadd.f32 0.0, %v7907
        %v7909 = vpop.f32.mrb[0].mxu0
        %v7910 = vpop.f32.mrb[0].mxu0
        %v7911 = vadd.f32 0.0, %v7910
        %v7912 = vpop.f32.mrb[0].mxu0
        %7913 = vmatprep.mubr.bf16.mxu0 0
        %7914 = vmatmul.mubr.bf16.gmra.mrb[0].mxu0 %v7584
        %v7915 = vpop.f32.mrb[0].mxu0
        %v7916 = vadd.f32 0.0, %v7915
        %v7917 = vpop.f32.mrb[0].mxu0
        %v7918 = vpop.f32.mrb[0].mxu0
        %v7919 = vadd.f32 0.0, %v7918
        %v7920 = vpop.f32.mrb[0].mxu0
        %7921 = vmatprep.mubr.bf16.mxu0 0
        %7922 = vmatmul.mubr.bf16.gmra.mrb[0].mxu0 %v7587
        %v7923 = vpop.f32.mrb[0].mxu0
        %v7924 = vadd.f32 0.0, %v7923
        %v7925 = vpop.f32.mrb[0].mxu0
        %v7926 = vpop.f32.mrb[0].mxu0
        %v7927 = vadd.f32 0.0, %v7926
        %v7928 = vpop.f32.mrb[0].mxu0
        %7929 = vmatprep.mubr.bf16.mxu0 0
        %7930 = vmatmul.mubr.bf16.gmra.mrb[0].mxu0 %v7590
        %v7931 = vpop.f32.mrb[0].mxu0
        %v7932 = vadd.f32 0.0, %v7931
        %v7933 = vpop.f32.mrb[0].mxu0
        %v7934 = vpop.f32.mrb[0].mxu0
        %v7935 = vadd.f32 0.0, %v7934
        %v7936 = vpop.f32.mrb[0].mxu0
        %7937 = vmatprep.mubr.bf16.mxu0 0
        %7938 = vmatmul.mubr.bf16.gmra.mrb[0].mxu0 %v7593
        %v7939 = vpop.f32.mrb[0].mxu0
        %v7940 = vadd.f32 0.0, %v7939
        %v7941 = vpop.f32.mrb[0].mxu0
        %v7942 = vpop.f32.mrb[0].mxu0
        %v7943 = vpop.f32.mrb[0].mxu0
        %7944 = vmatprep.mubr.bf16.mxu0 0
        %7945 = vmatmul.mubr.bf16.gmra.mrb[0].mxu0 %v7596
        %v7946 = vpop.f32.mrb[0].mxu0
        %v7947 = vpop.f32.mrb[0].mxu0
        %v7948 = vpop.f32.mrb[0].mxu0
        %v7949 = vpop.f32.mrb[0].mxu0
        %7950 = vdwg.mxu0
        %v7951 = vadd.f32 %v7016, %v7639
        %v7952 = vadd.f32 %v7017, %v7642
        %v7953 = vadd.f32 %v7018, %v7647
        %v7954 = vadd.f32 %v7019, %v7650
        %v7955 = vadd.f32 %v7020, %v7655
        %v7956 = vadd.f32 %v7021, %v7658
        %v7957 = vadd.f32 %v7022, %v7663
        %v7958 = vadd.f32 %v7023, %v7666
        %v7959 = vadd.f32 %v7024, %v7671
        %v7960 = vadd.f32 %v7025, %v7674
        %v7961 = vadd.f32 %v7026, %v7679
        %v7962 = vadd.f32 %v7027, %v7682
        %v7963 = vadd.f32 %v7028, %v7687
        %v7964 = vadd.f32 %v7029, %v7690
        %v7965 = vadd.f32 %v7030, %v7695
        %v7966 = vadd.f32 %v7031, %v7698
        %v7967 = vadd.f32 %v7032, %v7703
        %v7968 = vadd.f32 %v7033, %v7706
        %v7969 = vadd.f32 %v7034, %v7711
        %v7970 = vadd.f32 %v7035, %v7714
        %v7971 = vadd.f32 %v7036, %v7719
        %v7972 = vadd.f32 %v7037, %v7722
        %v7973 = vadd.f32 %v7038, %v7727
        %v7974 = vadd.f32 %v7039, %v7730
        %v7975 = vadd.f32 %v7040, %v7735
        %v7976 = vadd.f32 %v7041, %v7738
        %v7977 = vadd.f32 %v7042, %v7743
        %v7978 = vadd.f32 %v7043, %v7746
        %v7979 = vadd.f32 %v7044, %v7751
        %v7980 = vadd.f32 %v7045, %v7754
        %v7981 = vadd.f32 %v7046, %v7759
        %v7982 = vadd.f32 %v7047, %v7762
        %v7983 = vadd.f32 %v7048, %v7767
        %v7984 = vadd.f32 %v7049, %v7770
        %v7985 = vadd.f32 %v7050, %v7775
        %v7986 = vadd.f32 %v7051, %v7778
        %v7987 = vadd.f32 %v7052, %v7783
        %v7988 = vadd.f32 %v7053, %v7796
        %v7989 = vadd.f32 %v7054, %v7799
        %v7990 = vadd.f32 %v7055, %v7804
        %v7991 = vadd.f32 %v7056, %v7807
        %v7992 = vadd.f32 %v7057, %v7812
        %v7993 = vadd.f32 %v7058, %v7815
        %v7994 = vadd.f32 %v7059, %v7820
        %v7995 = vadd.f32 %v7060, %v7823
        %v7996 = vadd.f32 %v7061, %v7828
        %v7997 = vadd.f32 %v7062, %v7831
        %v7998 = vadd.f32 %v7063, %v7836
        %v7999 = vadd.f32 %v7064, %v7839
        %v8000 = vadd.f32 %v7065, %v7844
        %v8001 = vadd.f32 %v7066, %v7847
        %v8002 = vadd.f32 %v7067, %v7852
        %v8003 = vadd.f32 %v7068, %v7855
        %v8004 = vadd.f32 %v7069, %v7860
        %v8005 = vadd.f32 %v7070, %v7863
        %v8006 = vadd.f32 %v7071, %v7868
        %v8007 = vadd.f32 %v7072, %v7871
        %v8008 = vadd.f32 %v7073, %v7876
        %v8009 = vadd.f32 %v7074, %v7879
        %v8010 = vadd.f32 %v7075, %v7884
        %v8011 = vadd.f32 %v7076, %v7887
        %v8012 = vadd.f32 %v7077, %v7892
        %v8013 = vadd.f32 %v7078, %v7895
        %v8014 = vadd.f32 %v7079, %v7900
        %v8015 = vadd.f32 %v7080, %v7903
        %v8016 = vadd.f32 %v7081, %v7908
        %v8017 = vadd.f32 %v7082, %v7911
        %v8018 = vadd.f32 %v7083, %v7916
        %v8019 = vadd.f32 %v7084, %v7919
        %v8020 = vadd.f32 %v7085, %v7924
        %v8021 = vadd.f32 %v7086, %v7927
        %v8022 = vadd.f32 %v7087, %v7932
        %v8023 = vadd.f32 %v7088, %v7935
        %v8024 = vadd.f32 %v7089, %v7940
        %v8025 = vld [vmem:[#allocation2 + $0x10] sm:$0x8]
        %v8027 = vunpack.c.l.b16 %v8025
        %v8028 = vpack.c.b16 %v6325, %v8027
        %vm8029 = vcmask 1044480
        %v8030 = vrot.slane %v8028, 3
        %v8031 = vrot.slane %v6407, 3
        %v8032 = vsel %vm8029, %v8030, %v8031
        %v8033 = vrot.slane %v6408, 3
        %v8034 = vsel %vm8029, %v8031, %v8033
        %v8035 = vrot.slane %v6409, 3
        %v8036 = vsel %vm8029, %v8033, %v8035
        %v8037 = vrot.slane %v6410, 3
        %v8038 = vsel %vm8029, %v8035, %v8037
        %v8039 = vrot.slane %v6411, 3
        %v8040 = vsel %vm8029, %v8037, %v8039
        %v8041 = vrot.slane %v6412, 3
        %v8042 = vsel %vm8029, %v8039, %v8041
        %v8043 = vrot.slane %v6413, 3
        %v8044 = vsel %vm8029, %v8041, %v8043
        %v8045 = vrot.slane %v6414, 3
        %v8046 = vsel %vm8029, %v8043, %v8045
        %v8047 = vrot.slane %v6415, 3
        %v8048 = vsel %vm8029, %v8045, %v8047
        %v8049 = vrot.slane %v6416, 3
        %v8050 = vsel %vm8029, %v8047, %v8049
        %v8051 = vrot.slane %v6417, 3
        %v8052 = vsel %vm8029, %v8049, %v8051
        %v8053 = vrot.slane %v6418, 3
        %v8054 = vsel %vm8029, %v8051, %v8053
        %v8055 = vrot.slane %v6419, 3
        %v8056 = vsel %vm8029, %v8053, %v8055
        %v8057 = vrot.slane %v6420, 3
        %v8058 = vsel %vm8029, %v8055, %v8057
        %v8059 = vrot.slane %v6421, 3
        %v8060 = vsel %vm8029, %v8057, %v8059
        %v8061 = vrot.slane %v6422, 3
        %v8062 = vsel %vm8029, %v8059, %v8061
        %v8063 = vrot.slane %v6423, 3
        %v8064 = vsel %vm8029, %v8061, %v8063
        %v8065 = vrot.slane %v6424, 3
        %v8066 = vsel %vm8029, %v8063, %v8065
        %v8067 = vrot.slane %v6425, 3
        %v8068 = vsel %vm8029, %v8065, %v8067
        %v8069 = vrot.slane %v6426, 3
        %v8070 = vsel %vm8029, %v8067, %v8069
        %v8071 = vrot.slane %v6427, 3
        %v8072 = vsel %vm8029, %v8069, %v8071
        %v8073 = vrot.slane %v6428, 3
        %v8074 = vsel %vm8029, %v8071, %v8073
        %v8075 = vrot.slane %v6429, 3
        %v8076 = vsel %vm8029, %v8073, %v8075
        %v8077 = vrot.slane %v6430, 3
        %v8078 = vsel %vm8029, %v8075, %v8077
        %v8079 = vrot.slane %v6431, 3
        %v8080 = vsel %vm8029, %v8077, %v8079
        %v8081 = vrot.slane %v6432, 3
        %v8082 = vsel %vm8029, %v8079, %v8081
        %v8083 = vrot.slane %v6433, 3
        %v8084 = vsel %vm8029, %v8081, %v8083
        %v8085 = vrot.slane %v6434, 3
        %v8086 = vsel %vm8029, %v8083, %v8085
        %v8087 = vrot.slane %v6435, 3
        %v8088 = vsel %vm8029, %v8085, %v8087
        %v8089 = vrot.slane %v6436, 3
        %v8090 = vsel %vm8029, %v8087, %v8089
        %v8091 = vrot.slane %v6437, 3
        %v8092 = vsel %vm8029, %v8089, %v8091
        %v8093 = vrot.slane %v6438, 3
        %v8094 = vsel %vm8029, %v8091, %v8093
        %v8095 = vrot.slane %v6439, 3
        %v8096 = vsel %vm8029, %v8093, %v8095
        %v8097 = vrot.slane %v6440, 3
        %v8098 = vsel %vm8029, %v8095, %v8097
        %v8099 = vrot.slane %v6441, 3
        %v8100 = vsel %vm8029, %v8097, %v8099
        %v8101 = vrot.slane %v6442, 3
        %v8102 = vsel %vm8029, %v8099, %v8101
        %v8103 = vrot.slane %v6443, 3
        %v8104 = vsel %vm8029, %v8101, %v8103
        %v8105 = vrot.slane %v6444, 3
        %v8106 = vsel %vm8029, %v8103, %v8105
        %v8107 = vrot.slane %v6445, 3
        %v8108 = vsel %vm8029, %v8105, %v8107
        %v8109 = vrot.slane %v7093, 3
        %v8110 = vsel %vm8029, %v8107, %v8109
        %v8115 = vunpack.c.l.b16 %v1442
        %v8116 = vunpack.c.l.b16 %v1443
        %v8117 = vunpack.c.l.b16 %v1444
        %v8118 = vunpack.c.l.b16 %v1445
        %v8119 = vpack.c.b16 %v8116, %v8115
        %v8120 = vpack.c.b16 %v8118, %v8117
        %v8124 = vsel %vm2073, %v8032, 0
        %v8127 = vsel %vm2073, %v8034, 0
        %v8130 = vsel %vm2073, %v8036, 0
        %v8133 = vsel %vm2073, %v8038, 0
        %v8136 = vsel %vm2073, %v8040, 0
        %v8139 = vsel %vm2073, %v8042, 0
        %v8142 = vsel %vm2073, %v8044, 0
        %v8145 = vsel %vm2073, %v8046, 0
        %v8148 = vsel %vm2073, %v8048, 0
        %v8151 = vsel %vm2073, %v8050, 0
        %v8154 = vsel %vm2073, %v8052, 0
        %v8157 = vsel %vm2073, %v8054, 0
        %v8160 = vsel %vm2073, %v8056, 0
        %v8163 = vsel %vm2073, %v8058, 0
        %v8166 = vsel %vm2073, %v8060, 0
        %v8169 = vsel %vm2073, %v8062, 0
        %v8172 = vsel %vm2073, %v8064, 0
        %v8175 = vsel %vm2073, %v8066, 0
        %v8178 = vsel %vm2073, %v8068, 0
        %v8181 = vsel %vm2073, %v8070, 0
        %v8184 = vsel %vm2073, %v8072, 0
        %v8187 = vsel %vm2073, %v8074, 0
        %v8190 = vsel %vm2073, %v8076, 0
        %v8193 = vsel %vm2073, %v8078, 0
        %v8196 = vsel %vm2073, %v8080, 0
        %v8199 = vsel %vm2073, %v8082, 0
        %v8202 = vsel %vm2073, %v8084, 0
        %v8205 = vsel %vm2073, %v8086, 0
        %v8208 = vsel %vm2073, %v8088, 0
        %v8211 = vsel %vm2073, %v8090, 0
        %v8214 = vsel %vm2073, %v8092, 0
        %v8217 = vsel %vm2073, %v8094, 0
        %v8220 = vsel %vm2073, %v8096, 0
        %v8223 = vsel %vm2073, %v8098, 0
        %v8226 = vsel %vm2073, %v8100, 0
        %v8229 = vsel %vm2073, %v8102, 0
        %v8232 = vsel %vm2073, %v8104, 0
        %v8235 = vsel %vm2073, %v8106, 0
        %v8238 = vsel %vm2073, %v8108, 0
        %v8241 = vsel %vm2073, %v8110, 0
        %v8244 = vsel %vm2073, %v8109, 0
        %8246 = vmatprep.subr.bf16.mxu0 0
        %8247 = vmatpush1.bf16.msra.mxu0 %v8119
        %8248 = vmatprep.subr.bf16.mxu0 0
        %8249 = vmatpush1.bf16.msra.mxu0 %v8120
        %8250 = vmatprep.subr.bf16.mxu0 0
        %8251 = vmatpush1.bf16.msra.mxu0 0
        %8252 = vmatprep.subr.bf16.mxu0 0
        %8253 = vmatpush1.bf16.msra.mxu0 0
        %8254 = vmatprep.subr.bf16.mxu0 0
        %8255 = vmatpush1.bf16.msra.mxu0 0
        %8256 = vmatprep.subr.bf16.mxu0 0
        %8257 = vmatpush1.bf16.msra.mxu0 0
        %8258 = vmatprep.subr.bf16.mxu0 0
        %8259 = vmatpush1.bf16.msra.mxu0 0
        %8260 = vmatprep.subr.bf16.mxu0 0
        %8261 = vmatpush1.bf16.msra.mxu0 0
        %8262 = vmatprep.subr.bf16.mxu0 0
        %8263 = vmatpush1.bf16.msra.mxu0 0
        %8264 = vmatprep.subr.bf16.mxu0 0
        %8265 = vmatpush1.bf16.msra.mxu0 0
        %8266 = vmatprep.subr.bf16.mxu0 0
        %8267 = vmatpush1.bf16.msra.mxu0 0
        %8268 = vmatprep.subr.bf16.mxu0 0
        %8269 = vmatpush1.bf16.msra.mxu0 0
        %8270 = vmatprep.subr.bf16.mxu0 0
        %8271 = vmatpush1.bf16.msra.mxu0 0
        %8272 = vmatprep.subr.bf16.mxu0 0
        %8273 = vmatpush1.bf16.msra.mxu0 0
        %8274 = vmatprep.subr.bf16.mxu0 0
        %8275 = vmatpush1.bf16.msra.mxu0 0
        %8276 = vmatprep.subr.bf16.mxu0 0
        %8277 = vmatpush1.bf16.msra.mxu0 0
        %8278 = vmatprep.mubr.bf16.mxu0 0
        %8279 = vmatmul.mubr.bf16.gmra.mrb[0].mxu0 %v8124
        %v8280 = vpop.f32.mrb[0].mxu0
        %v8281 = vpop.f32.mrb[0].mxu0
        %v8282 = vpop.f32.mrb[0].mxu0
        %v8283 = vpop.f32.mrb[0].mxu0
        %8284 = vmatprep.mubr.bf16.mxu0 0
        %8285 = vmatmul.mubr.bf16.gmra.mrb[0].mxu0 %v8127
        %v8286 = vpop.f32.mrb[0].mxu0
        %v8287 = vadd.f32 0.0, %v8286
        %v8288 = vpop.f32.mrb[0].mxu0
        %v8289 = vpop.f32.mrb[0].mxu0
        %v8290 = vadd.f32 0.0, %v8289
        %v8291 = vpop.f32.mrb[0].mxu0
        %8292 = vmatprep.mubr.bf16.mxu0 0
        %8293 = vmatmul.mubr.bf16.gmra.mrb[0].mxu0 %v8130
        %v8294 = vpop.f32.mrb[0].mxu0
        %v8295 = vadd.f32 0.0, %v8294
        %v8296 = vpop.f32.mrb[0].mxu0
        %v8297 = vpop.f32.mrb[0].mxu0
        %v8298 = vadd.f32 0.0, %v8297
        %v8299 = vpop.f32.mrb[0].mxu0
        %8300 = vmatprep.mubr.bf16.mxu0 0
        %8301 = vmatmul.mubr.bf16.gmra.mrb[0].mxu0 %v8133
        %v8302 = vpop.f32.mrb[0].mxu0
        %v8303 = vadd.f32 0.0, %v8302
        %v8304 = vpop.f32.mrb[0].mxu0
        %v8305 = vpop.f32.mrb[0].mxu0
        %v8306 = vadd.f32 0.0, %v8305
        %v8307 = vpop.f32.mrb[0].mxu0
        %8308 = vmatprep.mubr.bf16.mxu0 0
        %8309 = vmatmul.mubr.bf16.gmra.mrb[0].mxu0 %v8136
        %v8310 = vpop.f32.mrb[0].mxu0
        %v8311 = vadd.f32 0.0, %v8310
        %v8312 = vpop.f32.mrb[0].mxu0
        %v8313 = vpop.f32.mrb[0].mxu0
        %v8314 = vadd.f32 0.0, %v8313
        %v8315 = vpop.f32.mrb[0].mxu0
        %8316 = vmatprep.mubr.bf16.mxu0 0
        %8317 = vmatmul.mubr.bf16.gmra.mrb[0].mxu0 %v8139
        %v8318 = vpop.f32.mrb[0].mxu0
        %v8319 = vadd.f32 0.0, %v8318
        %v8320 = vpop.f32.mrb[0].mxu0
        %v8321 = vpop.f32.mrb[0].mxu0
        %v8322 = vadd.f32 0.0, %v8321
        %v8323 = vpop.f32.mrb[0].mxu0
        %8324 = vmatprep.mubr.bf16.mxu0 0
        %8325 = vmatmul.mubr.bf16.gmra.mrb[0].mxu0 %v8142
        %v8326 = vpop.f32.mrb[0].mxu0
        %v8327 = vadd.f32 0.0, %v8326
        %v8328 = vpop.f32.mrb[0].mxu0
        %v8329 = vpop.f32.mrb[0].mxu0
        %v8330 = vadd.f32 0.0, %v8329
        %v8331 = vpop.f32.mrb[0].mxu0
        %8332 = vmatprep.mubr.bf16.mxu0 0
        %8333 = vmatmul.mubr.bf16.gmra.mrb[0].mxu0 %v8145
        %v8334 = vpop.f32.mrb[0].mxu0
        %v8335 = vadd.f32 0.0, %v8334
        %v8336 = vpop.f32.mrb[0].mxu0
        %v8337 = vpop.f32.mrb[0].mxu0
        %v8338 = vadd.f32 0.0, %v8337
        %v8339 = vpop.f32.mrb[0].mxu0
        %8340 = vmatprep.mubr.bf16.mxu0 0
        %8341 = vmatmul.mubr.bf16.gmra.mrb[0].mxu0 %v8148
        %v8342 = vpop.f32.mrb[0].mxu0
        %v8343 = vadd.f32 0.0, %v8342
        %v8344 = vpop.f32.mrb[0].mxu0
        %v8345 = vpop.f32.mrb[0].mxu0
        %v8346 = vadd.f32 0.0, %v8345
        %v8347 = vpop.f32.mrb[0].mxu0
        %8348 = vmatprep.mubr.bf16.mxu0 0
        %8349 = vmatmul.mubr.bf16.gmra.mrb[0].mxu0 %v8151
        %v8350 = vpop.f32.mrb[0].mxu0
        %v8351 = vadd.f32 0.0, %v8350
        %v8352 = vpop.f32.mrb[0].mxu0
        %v8353 = vpop.f32.mrb[0].mxu0
        %v8354 = vadd.f32 0.0, %v8353
        %v8355 = vpop.f32.mrb[0].mxu0
        %8356 = vmatprep.mubr.bf16.mxu0 0
        %8357 = vmatmul.mubr.bf16.gmra.mrb[0].mxu0 %v8154
        %v8358 = vpop.f32.mrb[0].mxu0
        %v8359 = vadd.f32 0.0, %v8358
        %v8360 = vpop.f32.mrb[0].mxu0
        %v8361 = vpop.f32.mrb[0].mxu0
        %v8362 = vadd.f32 0.0, %v8361
        %v8363 = vpop.f32.mrb[0].mxu0
        %8364 = vmatprep.mubr.bf16.mxu0 0
        %8365 = vmatmul.mubr.bf16.gmra.mrb[0].mxu0 %v8157
        %v8366 = vpop.f32.mrb[0].mxu0
        %v8367 = vadd.f32 0.0, %v8366
        %v8368 = vpop.f32.mrb[0].mxu0
        %v8369 = vpop.f32.mrb[0].mxu0
        %v8370 = vadd.f32 0.0, %v8369
        %v8371 = vpop.f32.mrb[0].mxu0
        %8372 = vmatprep.mubr.bf16.mxu0 0
        %8373 = vmatmul.mubr.bf16.gmra.mrb[0].mxu0 %v8160
        %v8374 = vpop.f32.mrb[0].mxu0
        %v8375 = vadd.f32 0.0, %v8374
        %v8376 = vpop.f32.mrb[0].mxu0
        %v8377 = vpop.f32.mrb[0].mxu0
        %v8378 = vadd.f32 0.0, %v8377
        %v8379 = vpop.f32.mrb[0].mxu0
        %8380 = vmatprep.mubr.bf16.mxu0 0
        %8381 = vmatmul.mubr.bf16.gmra.mrb[0].mxu0 %v8163
        %v8382 = vpop.f32.mrb[0].mxu0
        %v8383 = vadd.f32 0.0, %v8382
        %v8384 = vpop.f32.mrb[0].mxu0
        %v8385 = vpop.f32.mrb[0].mxu0
        %v8386 = vadd.f32 0.0, %v8385
        %v8387 = vpop.f32.mrb[0].mxu0
        %8388 = vmatprep.mubr.bf16.mxu0 0
        %8389 = vmatmul.mubr.bf16.gmra.mrb[0].mxu0 %v8166
        %v8390 = vpop.f32.mrb[0].mxu0
        %v8391 = vadd.f32 0.0, %v8390
        %v8392 = vpop.f32.mrb[0].mxu0
        %v8393 = vpop.f32.mrb[0].mxu0
        %v8394 = vadd.f32 0.0, %v8393
        %v8395 = vpop.f32.mrb[0].mxu0
        %8396 = vmatprep.mubr.bf16.mxu0 0
        %8397 = vmatmul.mubr.bf16.gmra.mrb[0].mxu0 %v8169
        %v8398 = vpop.f32.mrb[0].mxu0
        %v8399 = vadd.f32 0.0, %v8398
        %v8400 = vpop.f32.mrb[0].mxu0
        %v8401 = vpop.f32.mrb[0].mxu0
        %v8402 = vadd.f32 0.0, %v8401
        %v8403 = vpop.f32.mrb[0].mxu0
        %8404 = vmatprep.mubr.bf16.mxu0 0
        %8405 = vmatmul.mubr.bf16.gmra.mrb[0].mxu0 %v8172
        %v8406 = vpop.f32.mrb[0].mxu0
        %v8407 = vadd.f32 0.0, %v8406
        %v8408 = vpop.f32.mrb[0].mxu0
        %v8409 = vpop.f32.mrb[0].mxu0
        %v8410 = vadd.f32 0.0, %v8409
        %v8411 = vpop.f32.mrb[0].mxu0
        %8412 = vmatprep.mubr.bf16.mxu0 0
        %8413 = vmatmul.mubr.bf16.gmra.mrb[0].mxu0 %v8175
        %v8414 = vpop.f32.mrb[0].mxu0
        %v8415 = vadd.f32 0.0, %v8414
        %v8416 = vpop.f32.mrb[0].mxu0
        %v8417 = vpop.f32.mrb[0].mxu0
        %v8418 = vadd.f32 0.0, %v8417
        %v8419 = vpop.f32.mrb[0].mxu0
        %8420 = vmatprep.mubr.bf16.mxu0 0
        %8421 = vmatmul.mubr.bf16.gmra.mrb[0].mxu0 %v8178
        %v8422 = vpop.f32.mrb[0].mxu0
        %v8423 = vadd.f32 0.0, %v8422
        %v8424 = vpop.f32.mrb[0].mxu0
        %v8425 = vpop.f32.mrb[0].mxu0
        %v8426 = vadd.f32 0.0, %v8425
        %v8427 = vpop.f32.mrb[0].mxu0
        %8428 = vmatprep.mubr.bf16.mxu0 0
        %8429 = vmatmul.mubr.bf16.gmra.mrb[0].mxu0 %v8181
        %v8430 = vpop.f32.mrb[0].mxu0
        %v8431 = vadd.f32 0.0, %v8430
        %v8432 = vpop.f32.mrb[0].mxu0
        %v8433 = vpop.f32.mrb[0].mxu0
        %v8434 = vpop.f32.mrb[0].mxu0
        %8435 = vmatprep.mubr.bf16.mxu0 0
        %8436 = vmatmul.mubr.bf16.gmra.mrb[0].mxu0 %v8184
        %v8437 = vpop.f32.mrb[0].mxu0
        %v8438 = vpop.f32.mrb[0].mxu0
        %v8439 = vpop.f32.mrb[0].mxu0
        %v8440 = vpop.f32.mrb[0].mxu0
        %8441 = vmatprep.mubr.bf16.mxu0 0
        %8442 = vmatmul.mubr.bf16.gmra.mrb[0].mxu0 %v8187
        %v8443 = vpop.f32.mrb[0].mxu0
        %v8444 = vadd.f32 0.0, %v8443
        %v8445 = vpop.f32.mrb[0].mxu0
        %v8446 = vpop.f32.mrb[0].mxu0
        %v8447 = vadd.f32 0.0, %v8446
        %v8448 = vpop.f32.mrb[0].mxu0
        %8449 = vmatprep.mubr.bf16.mxu0 0
        %8450 = vmatmul.mubr.bf16.gmra.mrb[0].mxu0 %v8190
        %v8451 = vpop.f32.mrb[0].mxu0
        %v8452 = vadd.f32 0.0, %v8451
        %v8453 = vpop.f32.mrb[0].mxu0
        %v8454 = vpop.f32.mrb[0].mxu0
        %v8455 = vadd.f32 0.0, %v8454
        %v8456 = vpop.f32.mrb[0].mxu0
        %8457 = vmatprep.mubr.bf16.mxu0 0
        %8458 = vmatmul.mubr.bf16.gmra.mrb[0].mxu0 %v8193
        %v8459 = vpop.f32.mrb[0].mxu0
        %v8460 = vadd.f32 0.0, %v8459
        %v8461 = vpop.f32.mrb[0].mxu0
        %v8462 = vpop.f32.mrb[0].mxu0
        %v8463 = vadd.f32 0.0, %v8462
        %v8464 = vpop.f32.mrb[0].mxu0
        %8465 = vmatprep.mubr.bf16.mxu0 0
        %8466 = vmatmul.mubr.bf16.gmra.mrb[0].mxu0 %v8196
        %v8467 = vpop.f32.mrb[0].mxu0
        %v8468 = vadd.f32 0.0, %v8467
        %v8469 = vpop.f32.mrb[0].mxu0
        %v8470 = vpop.f32.mrb[0].mxu0
        %v8471 = vadd.f32 0.0, %v8470
        %v8472 = vpop.f32.mrb[0].mxu0
        %8473 = vmatprep.mubr.bf16.mxu0 0
        %8474 = vmatmul.mubr.bf16.gmra.mrb[0].mxu0 %v8199
        %v8475 = vpop.f32.mrb[0].mxu0
        %v8476 = vadd.f32 0.0, %v8475
        %v8477 = vpop.f32.mrb[0].mxu0
        %v8478 = vpop.f32.mrb[0].mxu0
        %v8479 = vadd.f32 0.0, %v8478
        %v8480 = vpop.f32.mrb[0].mxu0
        %8481 = vmatprep.mubr.bf16.mxu0 0
        %8482 = vmatmul.mubr.bf16.gmra.mrb[0].mxu0 %v8202
        %v8483 = vpop.f32.mrb[0].mxu0
        %v8484 = vadd.f32 0.0, %v8483
        %v8485 = vpop.f32.mrb[0].mxu0
        %v8486 = vpop.f32.mrb[0].mxu0
        %v8487 = vadd.f32 0.0, %v8486
        %v8488 = vpop.f32.mrb[0].mxu0
        %8489 = vmatprep.mubr.bf16.mxu0 0
        %8490 = vmatmul.mubr.bf16.gmra.mrb[0].mxu0 %v8205
        %v8491 = vpop.f32.mrb[0].mxu0
        %v8492 = vadd.f32 0.0, %v8491
        %v8493 = vpop.f32.mrb[0].mxu0
        %v8494 = vpop.f32.mrb[0].mxu0
        %v8495 = vadd.f32 0.0, %v8494
        %v8496 = vpop.f32.mrb[0].mxu0
        %8497 = vmatprep.mubr.bf16.mxu0 0
        %8498 = vmatmul.mubr.bf16.gmra.mrb[0].mxu0 %v8208
        %v8499 = vpop.f32.mrb[0].mxu0
        %v8500 = vadd.f32 0.0, %v8499
        %v8501 = vpop.f32.mrb[0].mxu0
        %v8502 = vpop.f32.mrb[0].mxu0
        %v8503 = vadd.f32 0.0, %v8502
        %v8504 = vpop.f32.mrb[0].mxu0
        %8505 = vmatprep.mubr.bf16.mxu0 0
        %8506 = vmatmul.mubr.bf16.gmra.mrb[0].mxu0 %v8211
        %v8507 = vpop.f32.mrb[0].mxu0
        %v8508 = vadd.f32 0.0, %v8507
        %v8509 = vpop.f32.mrb[0].mxu0
        %v8510 = vpop.f32.mrb[0].mxu0
        %v8511 = vadd.f32 0.0, %v8510
        %v8512 = vpop.f32.mrb[0].mxu0
        %8513 = vmatprep.mubr.bf16.mxu0 0
        %8514 = vmatmul.mubr.bf16.gmra.mrb[0].mxu0 %v8214
        %v8515 = vpop.f32.mrb[0].mxu0
        %v8516 = vadd.f32 0.0, %v8515
        %v8517 = vpop.f32.mrb[0].mxu0
        %v8518 = vpop.f32.mrb[0].mxu0
        %v8519 = vadd.f32 0.0, %v8518
        %v8520 = vpop.f32.mrb[0].mxu0
        %8521 = vmatprep.mubr.bf16.mxu0 0
        %8522 = vmatmul.mubr.bf16.gmra.mrb[0].mxu0 %v8217
        %v8523 = vpop.f32.mrb[0].mxu0
        %v8524 = vadd.f32 0.0, %v8523
        %v8525 = vpop.f32.mrb[0].mxu0
        %v8526 = vpop.f32.mrb[0].mxu0
        %v8527 = vadd.f32 0.0, %v8526
        %v8528 = vpop.f32.mrb[0].mxu0
        %8529 = vmatprep.mubr.bf16.mxu0 0
        %8530 = vmatmul.mubr.bf16.gmra.mrb[0].mxu0 %v8220
        %v8531 = vpop.f32.mrb[0].mxu0
        %v8532 = vadd.f32 0.0, %v8531
        %v8533 = vpop.f32.mrb[0].mxu0
        %v8534 = vpop.f32.mrb[0].mxu0
        %v8535 = vadd.f32 0.0, %v8534
        %v8536 = vpop.f32.mrb[0].mxu0
        %8537 = vmatprep.mubr.bf16.mxu0 0
        %8538 = vmatmul.mubr.bf16.gmra.mrb[0].mxu0 %v8223
        %v8539 = vpop.f32.mrb[0].mxu0
        %v8540 = vadd.f32 0.0, %v8539
        %v8541 = vpop.f32.mrb[0].mxu0
        %v8542 = vpop.f32.mrb[0].mxu0
        %v8543 = vadd.f32 0.0, %v8542
        %v8544 = vpop.f32.mrb[0].mxu0
        %8545 = vmatprep.mubr.bf16.mxu0 0
        %8546 = vmatmul.mubr.bf16.gmra.mrb[0].mxu0 %v8226
        %v8547 = vpop.f32.mrb[0].mxu0
        %v8548 = vadd.f32 0.0, %v8547
        %v8549 = vpop.f32.mrb[0].mxu0
        %v8550 = vpop.f32.mrb[0].mxu0
        %v8551 = vadd.f32 0.0, %v8550
        %v8552 = vpop.f32.mrb[0].mxu0
        %8553 = vmatprep.mubr.bf16.mxu0 0
        %8554 = vmatmul.mubr.bf16.gmra.mrb[0].mxu0 %v8229
        %v8555 = vpop.f32.mrb[0].mxu0
        %v8556 = vadd.f32 0.0, %v8555
        %v8557 = vpop.f32.mrb[0].mxu0
        %v8558 = vpop.f32.mrb[0].mxu0
        %v8559 = vadd.f32 0.0, %v8558
        %v8560 = vpop.f32.mrb[0].mxu0
        %8561 = vmatprep.mubr.bf16.mxu0 0
        %8562 = vmatmul.mubr.bf16.gmra.mrb[0].mxu0 %v8232
        %v8563 = vpop.f32.mrb[0].mxu0
        %v8564 = vadd.f32 0.0, %v8563
        %v8565 = vpop.f32.mrb[0].mxu0
        %v8566 = vpop.f32.mrb[0].mxu0
        %v8567 = vadd.f32 0.0, %v8566
        %v8568 = vpop.f32.mrb[0].mxu0
        %8569 = vmatprep.mubr.bf16.mxu0 0
        %8570 = vmatmul.mubr.bf16.gmra.mrb[0].mxu0 %v8235
        %v8571 = vpop.f32.mrb[0].mxu0
        %v8572 = vadd.f32 0.0, %v8571
        %v8573 = vpop.f32.mrb[0].mxu0
        %v8574 = vpop.f32.mrb[0].mxu0
        %v8575 = vadd.f32 0.0, %v8574
        %v8576 = vpop.f32.mrb[0].mxu0
        %8577 = vmatprep.mubr.bf16.mxu0 0
        %8578 = vmatmul.mubr.bf16.gmra.mrb[0].mxu0 %v8238
        %v8579 = vpop.f32.mrb[0].mxu0
        %v8580 = vadd.f32 0.0, %v8579
        %v8581 = vpop.f32.mrb[0].mxu0
        %v8582 = vpop.f32.mrb[0].mxu0
        %v8583 = vadd.f32 0.0, %v8582
        %v8584 = vpop.f32.mrb[0].mxu0
        %8585 = vmatprep.mubr.bf16.mxu0 0
        %8586 = vmatmul.mubr.bf16.gmra.mrb[0].mxu0 %v8241
        %v8587 = vpop.f32.mrb[0].mxu0
        %v8588 = vadd.f32 0.0, %v8587
        %v8589 = vpop.f32.mrb[0].mxu0
        %v8590 = vpop.f32.mrb[0].mxu0
        %v8591 = vpop.f32.mrb[0].mxu0
        %8592 = vmatprep.mubr.bf16.mxu0 0
        %8593 = vmatmul.mubr.bf16.gmra.mrb[0].mxu0 %v8244
        %v8594 = vpop.f32.mrb[0].mxu0
        %v8595 = vpop.f32.mrb[0].mxu0
        %v8596 = vpop.f32.mrb[0].mxu0
        %v8597 = vpop.f32.mrb[0].mxu0
        %8598 = vdwg.mxu0
        %v8599 = vadd.f32 %v7951, %v8287
        %v8600 = vadd.f32 %v7952, %v8290
        %v8601 = vadd.f32 %v7953, %v8295
        %v8602 = vadd.f32 %v7954, %v8298
        %v8603 = vadd.f32 %v7955, %v8303
        %v8604 = vadd.f32 %v7956, %v8306
        %v8605 = vadd.f32 %v7957, %v8311
        %v8606 = vadd.f32 %v7958, %v8314
        %v8607 = vadd.f32 %v7959, %v8319
        %v8608 = vadd.f32 %v7960, %v8322
        %v8609 = vadd.f32 %v7961, %v8327
        %v8610 = vadd.f32 %v7962, %v8330
        %v8611 = vadd.f32 %v7963, %v8335
        %v8612 = vadd.f32 %v7964, %v8338
        %v8613 = vadd.f32 %v7965, %v8343
        %v8614 = vadd.f32 %v7966, %v8346
        %v8615 = vadd.f32 %v7967, %v8351
        %v8616 = vadd.f32 %v7968, %v8354
        %v8617 = vadd.f32 %v7969, %v8359
        %v8618 = vadd.f32 %v7970, %v8362
        %v8619 = vadd.f32 %v7971, %v8367
        %v8620 = vadd.f32 %v7972, %v8370
        %v8621 = vadd.f32 %v7973, %v8375
        %v8622 = vadd.f32 %v7974, %v8378
        %v8623 = vadd.f32 %v7975, %v8383
        %v8624 = vadd.f32 %v7976, %v8386
        %v8625 = vadd.f32 %v7977, %v8391
        %v8626 = vadd.f32 %v7978, %v8394
        %v8627 = vadd.f32 %v7979, %v8399
        %v8628 = vadd.f32 %v7980, %v8402
        %v8629 = vadd.f32 %v7981, %v8407
        %v8630 = vadd.f32 %v7982, %v8410
        %v8631 = vadd.f32 %v7983, %v8415
        %v8632 = vadd.f32 %v7984, %v8418
        %v8633 = vadd.f32 %v7985, %v8423
        %v8634 = vadd.f32 %v7986, %v8426
        %v8635 = vadd.f32 %v7987, %v8431
        %v8636 = vadd.f32 %v7988, %v8444
        %v8637 = vadd.f32 %v7989, %v8447
        %v8638 = vadd.f32 %v7990, %v8452
        %v8639 = vadd.f32 %v7991, %v8455
        %v8640 = vadd.f32 %v7992, %v8460
        %v8641 = vadd.f32 %v7993, %v8463
        %v8642 = vadd.f32 %v7994, %v8468
        %v8643 = vadd.f32 %v7995, %v8471
        %v8644 = vadd.f32 %v7996, %v8476
        %v8645 = vadd.f32 %v7997, %v8479
        %v8646 = vadd.f32 %v7998, %v8484
        %v8647 = vadd.f32 %v7999, %v8487
        %v8648 = vadd.f32 %v8000, %v8492
        %v8649 = vadd.f32 %v8001, %v8495
        %v8650 = vadd.f32 %v8002, %v8500
        %v8651 = vadd.f32 %v8003, %v8503
        %v8652 = vadd.f32 %v8004, %v8508
        %v8653 = vadd.f32 %v8005, %v8511
        %v8654 = vadd.f32 %v8006, %v8516
        %v8655 = vadd.f32 %v8007, %v8519
        %v8656 = vadd.f32 %v8008, %v8524
        %v8657 = vadd.f32 %v8009, %v8527
        %v8658 = vadd.f32 %v8010, %v8532
        %v8659 = vadd.f32 %v8011, %v8535
        %v8660 = vadd.f32 %v8012, %v8540
        %v8661 = vadd.f32 %v8013, %v8543
        %v8662 = vadd.f32 %v8014, %v8548
        %v8663 = vadd.f32 %v8015, %v8551
        %v8664 = vadd.f32 %v8016, %v8556
        %v8665 = vadd.f32 %v8017, %v8559
        %v8666 = vadd.f32 %v8018, %v8564
        %v8667 = vadd.f32 %v8019, %v8567
        %v8668 = vadd.f32 %v8020, %v8572
        %v8669 = vadd.f32 %v8021, %v8575
        %v8670 = vadd.f32 %v8022, %v8580
        %v8671 = vadd.f32 %v8023, %v8583
        %v8672 = vadd.f32 %v8024, %v8588
        %vm8676 = vcmask 1044480
        %v8677 = vrot.slane %v8599, 3
        %v8678 = vrot.slane %v8600, 3
        %v8679 = vsel %vm8676, %v8677, %v8678
        %v8680 = vrot.slane %v8601, 3
        %v8681 = vsel %vm8676, %v8678, %v8680
        %vm8686 = vcmask 1042432
        %v8687 = vrot.slane %v8601, 5
        %v8688 = vrot.slane %v8602, 5
        %v8689 = vsel %vm8686, %v8687, %v8688
        %v8690 = vrot.slane %v8603, 5
        %v8691 = vsel %vm8686, %v8688, %v8690
        %vm8696 = vcmask 1040384
        %v8697 = vrot.slane %v8603, 7
        %v8698 = vrot.slane %v8604, 7
        %v8699 = vsel %vm8696, %v8697, %v8698
        %v8700 = vrot.slane %v8605, 7
        %v8701 = vsel %vm8696, %v8698, %v8700
        %vm8707 = vcmask 1046528
        %v8708 = vrot.slane %v8606, 1
        %v8709 = vrot.slane %v8607, 1
        %v8710 = vsel %vm8707, %v8708, %v8709
        %v8711 = vrot.slane %v8608, 1
        %v8712 = vsel %vm8707, %v8709, %v8711
        %v8717 = vrot.slane %v8608, 3
        %v8718 = vrot.slane %v8609, 3
        %v8719 = vsel %vm8676, %v8717, %v8718
        %v8720 = vrot.slane %v8610, 3
        %v8721 = vsel %vm8676, %v8718, %v8720
        %v8726 = vrot.slane %v8610, 5
        %v8727 = vrot.slane %v8611, 5
        %v8728 = vsel %vm8686, %v8726, %v8727
        %v8729 = vrot.slane %v8612, 5
        %v8730 = vsel %vm8686, %v8727, %v8729
        %v8735 = vrot.slane %v8612, 7
        %v8736 = vrot.slane %v8613, 7
        %v8737 = vsel %vm8696, %v8735, %v8736
        %v8738 = vrot.slane %v8614, 7
        %v8739 = vsel %vm8696, %v8736, %v8738
        %v8745 = vrot.slane %v8615, 1
        %v8746 = vrot.slane %v8616, 1
        %v8747 = vsel %vm8707, %v8745, %v8746
        %v8748 = vrot.slane %v8617, 1
        %v8749 = vsel %vm8707, %v8746, %v8748
        %v8754 = vrot.slane %v8617, 3
        %v8755 = vrot.slane %v8618, 3
        %v8756 = vsel %vm8676, %v8754, %v8755
        %v8757 = vrot.slane %v8619, 3
        %v8758 = vsel %vm8676, %v8755, %v8757
        %v8763 = vrot.slane %v8619, 5
        %v8764 = vrot.slane %v8620, 5
        %v8765 = vsel %vm8686, %v8763, %v8764
        %v8766 = vrot.slane %v8621, 5
        %v8767 = vsel %vm8686, %v8764, %v8766
        %v8772 = vrot.slane %v8621, 7
        %v8773 = vrot.slane %v8622, 7
        %v8774 = vsel %vm8696, %v8772, %v8773
        %v8775 = vrot.slane %v8623, 7
        %v8776 = vsel %vm8696, %v8773, %v8775
        %v8782 = vrot.slane %v8624, 1
        %v8783 = vrot.slane %v8625, 1
        %v8784 = vsel %vm8707, %v8782, %v8783
        %v8785 = vrot.slane %v8626, 1
        %v8786 = vsel %vm8707, %v8783, %v8785
        %v8791 = vrot.slane %v8626, 3
        %v8792 = vrot.slane %v8627, 3
        %v8793 = vsel %vm8676, %v8791, %v8792
        %v8794 = vrot.slane %v8628, 3
        %v8795 = vsel %vm8676, %v8792, %v8794
        %v8800 = vrot.slane %v8628, 5
        %v8801 = vrot.slane %v8629, 5
        %v8802 = vsel %vm8686, %v8800, %v8801
        %v8803 = vrot.slane %v8630, 5
        %v8804 = vsel %vm8686, %v8801, %v8803
        %v8809 = vrot.slane %v8630, 7
        %v8810 = vrot.slane %v8631, 7
        %v8811 = vsel %vm8696, %v8809, %v8810
        %v8812 = vrot.slane %v8632, 7
        %v8813 = vsel %vm8696, %v8810, %v8812
        %v8819 = vrot.slane %v8633, 1
        %v8820 = vrot.slane %v8634, 1
        %v8821 = vsel %vm8707, %v8819, %v8820
        %v8822 = vrot.slane %v8635, 1
        %v8823 = vsel %vm8707, %v8820, %v8822
        %v8829 = vrot.slane %v8636, 7
        %v8830 = vrot.slane %v8637, 7
        %v8831 = vsel %vm8696, %v8829, %v8830
        %v8832 = vrot.slane %v8638, 7
        %v8833 = vsel %vm8696, %v8830, %v8832
        %v8839 = vrot.slane %v8639, 1
        %v8840 = vrot.slane %v8640, 1
        %v8841 = vsel %vm8707, %v8839, %v8840
        %v8842 = vrot.slane %v8641, 1
        %v8843 = vsel %vm8707, %v8840, %v8842
        %v8848 = vrot.slane %v8641, 3
        %v8849 = vrot.slane %v8642, 3
        %v8850 = vsel %vm8676, %v8848, %v8849
        %v8851 = vrot.slane %v8643, 3
        %v8852 = vsel %vm8676, %v8849, %v8851
        %v8857 = vrot.slane %v8643, 5
        %v8858 = vrot.slane %v8644, 5
        %v8859 = vsel %vm8686, %v8857, %v8858
        %v8860 = vrot.slane %v8645, 5
        %v8861 = vsel %vm8686, %v8858, %v8860
        %v8866 = vrot.slane %v8645, 7
        %v8867 = vrot.slane %v8646, 7
        %v8868 = vsel %vm8696, %v8866, %v8867
        %v8869 = vrot.slane %v8647, 7
        %v8870 = vsel %vm8696, %v8867, %v8869
        %v8876 = vrot.slane %v8648, 1
        %v8877 = vrot.slane %v8649, 1
        %v8878 = vsel %vm8707, %v8876, %v8877
        %v8879 = vrot.slane %v8650, 1
        %v8880 = vsel %vm8707, %v8877, %v8879
        %v8885 = vrot.slane %v8650, 3
        %v8886 = vrot.slane %v8651, 3
        %v8887 = vsel %vm8676, %v8885, %v8886
        %v8888 = vrot.slane %v8652, 3
        %v8889 = vsel %vm8676, %v8886, %v8888
        %v8894 = vrot.slane %v8652, 5
        %v8895 = vrot.slane %v8653, 5
        %v8896 = vsel %vm8686, %v8894, %v8895
        %v8897 = vrot.slane %v8654, 5
        %v8898 = vsel %vm8686, %v8895, %v8897
        %v8903 = vrot.slane %v8654, 7
        %v8904 = vrot.slane %v8655, 7
        %v8905 = vsel %vm8696, %v8903, %v8904
        %v8906 = vrot.slane %v8656, 7
        %v8907 = vsel %vm8696, %v8904, %v8906
        %v8913 = vrot.slane %v8657, 1
        %v8914 = vrot.slane %v8658, 1
        %v8915 = vsel %vm8707, %v8913, %v8914
        %v8916 = vrot.slane %v8659, 1
        %v8917 = vsel %vm8707, %v8914, %v8916
        %v8922 = vrot.slane %v8659, 3
        %v8923 = vrot.slane %v8660, 3
        %v8924 = vsel %vm8676, %v8922, %v8923
        %v8925 = vrot.slane %v8661, 3
        %v8926 = vsel %vm8676, %v8923, %v8925
        %v8931 = vrot.slane %v8661, 5
        %v8932 = vrot.slane %v8662, 5
        %v8933 = vsel %vm8686, %v8931, %v8932
        %v8934 = vrot.slane %v8663, 5
        %v8935 = vsel %vm8686, %v8932, %v8934
        %v8940 = vrot.slane %v8663, 7
        %v8941 = vrot.slane %v8664, 7
        %v8942 = vsel %vm8696, %v8940, %v8941
        %v8943 = vrot.slane %v8665, 7
        %v8944 = vsel %vm8696, %v8941, %v8943
        %v8950 = vrot.slane %v8666, 1
        %v8951 = vrot.slane %v8667, 1
        %v8952 = vsel %vm8707, %v8950, %v8951
        %v8953 = vrot.slane %v8668, 1
        %v8954 = vsel %vm8707, %v8951, %v8953
        %v8959 = vrot.slane %v8668, 3
        %v8960 = vrot.slane %v8669, 3
        %v8961 = vsel %vm8676, %v8959, %v8960
        %v8962 = vrot.slane %v8670, 3
        %v8963 = vsel %vm8676, %v8960, %v8962
        %v8968 = vrot.slane %v8670, 5
        %v8969 = vrot.slane %v8671, 5
        %v8970 = vsel %vm8686, %v8968, %v8969
        %v8971 = vrot.slane %v8672, 5
        %v8972 = vsel %vm8686, %v8969, %v8971
        %v8975 = vld [vmem:[%s5] sm:$0x1]
        %v8977 = vlaneseq
        %v8978 = vshrl.u32 %v8977, 7
        %v8979 = vsub.s32 0, %v8978
        %v8980 = vrot.slane %v8975, %v8979
        %v8982 = vadd.f32 %v8679, %v8980
        %v8983 = vadd.f32 %v8681, %v8980
        %v8984 = vadd.f32 %v8689, %v8980
        %v8985 = vadd.f32 %v8691, %v8980
        %v8986 = vadd.f32 %v8699, %v8980
        %v8987 = vadd.f32 %v8701, %v8980
        %v8988 = vadd.f32 %v8710, %v8980
        %v8989 = vadd.f32 %v8712, %v8980
        %v8990 = vadd.f32 %v8719, %v8980
        %v8991 = vadd.f32 %v8721, %v8980
        %v8992 = vadd.f32 %v8728, %v8980
        %v8993 = vadd.f32 %v8730, %v8980
        %v8994 = vadd.f32 %v8737, %v8980
        %v8995 = vadd.f32 %v8739, %v8980
        %v8996 = vadd.f32 %v8747, %v8980
        %v8997 = vadd.f32 %v8749, %v8980
        %v8998 = vadd.f32 %v8756, %v8980
        %v8999 = vadd.f32 %v8758, %v8980
        %v9000 = vadd.f32 %v8765, %v8980
        %v9001 = vadd.f32 %v8767, %v8980
        %v9002 = vadd.f32 %v8774, %v8980
        %v9003 = vadd.f32 %v8776, %v8980
        %v9004 = vadd.f32 %v8784, %v8980
        %v9005 = vadd.f32 %v8786, %v8980
        %v9006 = vadd.f32 %v8793, %v8980
        %v9007 = vadd.f32 %v8795, %v8980
        %v9008 = vadd.f32 %v8802, %v8980
        %v9009 = vadd.f32 %v8804, %v8980
        %v9010 = vadd.f32 %v8811, %v8980
        %v9011 = vadd.f32 %v8813, %v8980
        %v9012 = vadd.f32 %v8821, %v8980
        %v9013 = vadd.f32 %v8823, %v8980
        %v9014 = vadd.f32 %v8831, %v8980
        %v9015 = vadd.f32 %v8833, %v8980
        %v9016 = vadd.f32 %v8841, %v8980
        %v9017 = vadd.f32 %v8843, %v8980
        %v9018 = vadd.f32 %v8850, %v8980
        %v9019 = vadd.f32 %v8852, %v8980
        %v9020 = vadd.f32 %v8859, %v8980
        %v9021 = vadd.f32 %v8861, %v8980
        %v9022 = vadd.f32 %v8868, %v8980
        %v9023 = vadd.f32 %v8870, %v8980
        %v9024 = vadd.f32 %v8878, %v8980
        %v9025 = vadd.f32 %v8880, %v8980
        %v9026 = vadd.f32 %v8887, %v8980
        %v9027 = vadd.f32 %v8889, %v8980
        %v9028 = vadd.f32 %v8896, %v8980
        %v9029 = vadd.f32 %v8898, %v8980
        %v9030 = vadd.f32 %v8905, %v8980
        %v9031 = vadd.f32 %v8907, %v8980
        %v9032 = vadd.f32 %v8915, %v8980
        %v9033 = vadd.f32 %v8917, %v8980
        %v9034 = vadd.f32 %v8924, %v8980
        %v9035 = vadd.f32 %v8926, %v8980
        %v9036 = vadd.f32 %v8933, %v8980
        %v9037 = vadd.f32 %v8935, %v8980
        %v9038 = vadd.f32 %v8942, %v8980
        %v9039 = vadd.f32 %v8944, %v8980
        %v9040 = vadd.f32 %v8952, %v8980
        %v9041 = vadd.f32 %v8954, %v8980
        %v9042 = vadd.f32 %v8961, %v8980
        %v9043 = vadd.f32 %v8963, %v8980
        %v9044 = vadd.f32 %v8970, %v8980
        %v9045 = vadd.f32 %v8972, %v8980
        %v9046 = vmax.f32 %v8982, 0.0
        %v9047 = vmax.f32 %v8983, 0.0
        %v9048 = vmax.f32 %v8984, 0.0
        %v9049 = vmax.f32 %v8985, 0.0
        %v9050 = vmax.f32 %v8986, 0.0
        %v9051 = vmax.f32 %v8987, 0.0
        %v9052 = vmax.f32 %v8988, 0.0
        %v9053 = vmax.f32 %v8989, 0.0
        %v9054 = vmax.f32 %v8990, 0.0
        %v9055 = vmax.f32 %v8991, 0.0
        %v9056 = vmax.f32 %v8992, 0.0
        %v9057 = vmax.f32 %v8993, 0.0
        %v9058 = vmax.f32 %v8994, 0.0
        %v9059 = vmax.f32 %v8995, 0.0
        %v9060 = vmax.f32 %v8996, 0.0
        %v9061 = vmax.f32 %v8997, 0.0
        %v9062 = vmax.f32 %v8998, 0.0
        %v9063 = vmax.f32 %v8999, 0.0
        %v9064 = vmax.f32 %v9000, 0.0
        %v9065 = vmax.f32 %v9001, 0.0
        %v9066 = vmax.f32 %v9002, 0.0
        %v9067 = vmax.f32 %v9003, 0.0
        %v9068 = vmax.f32 %v9004, 0.0
        %v9069 = vmax.f32 %v9005, 0.0
        %v9070 = vmax.f32 %v9006, 0.0
        %v9071 = vmax.f32 %v9007, 0.0
        %v9072 = vmax.f32 %v9008, 0.0
        %v9073 = vmax.f32 %v9009, 0.0
        %v9074 = vmax.f32 %v9010, 0.0
        %v9075 = vmax.f32 %v9011, 0.0
        %v9076 = vmax.f32 %v9012, 0.0
        %v9077 = vmax.f32 %v9013, 0.0
        %v9078 = vmax.f32 %v9014, 0.0
        %v9079 = vmax.f32 %v9015, 0.0
        %v9080 = vmax.f32 %v9016, 0.0
        %v9081 = vmax.f32 %v9017, 0.0
        %v9082 = vmax.f32 %v9018, 0.0
        %v9083 = vmax.f32 %v9019, 0.0
        %v9084 = vmax.f32 %v9020, 0.0
        %v9085 = vmax.f32 %v9021, 0.0
        %v9086 = vmax.f32 %v9022, 0.0
        %v9087 = vmax.f32 %v9023, 0.0
        %v9088 = vmax.f32 %v9024, 0.0
        %v9089 = vmax.f32 %v9025, 0.0
        %v9090 = vmax.f32 %v9026, 0.0
        %v9091 = vmax.f32 %v9027, 0.0
        %v9092 = vmax.f32 %v9028, 0.0
        %v9093 = vmax.f32 %v9029, 0.0
        %v9094 = vmax.f32 %v9030, 0.0
        %v9095 = vmax.f32 %v9031, 0.0
        %v9096 = vmax.f32 %v9032, 0.0
        %v9097 = vmax.f32 %v9033, 0.0
        %v9098 = vmax.f32 %v9034, 0.0
        %v9099 = vmax.f32 %v9035, 0.0
        %v9100 = vmax.f32 %v9036, 0.0
        %v9101 = vmax.f32 %v9037, 0.0
        %v9102 = vmax.f32 %v9038, 0.0
        %v9103 = vmax.f32 %v9039, 0.0
        %v9104 = vmax.f32 %v9040, 0.0
        %v9105 = vmax.f32 %v9041, 0.0
        %v9106 = vmax.f32 %v9042, 0.0
        %v9107 = vmax.f32 %v9043, 0.0
        %v9108 = vmax.f32 %v9044, 0.0
        %v9109 = vmax.f32 %v9045, 0.0
        %v9110 = vpack.c.bf16 %v9047, %v9046
        %v9111 = vpack.c.bf16 %v9049, %v9048
        %v9112 = vpack.c.bf16 %v9051, %v9050
        %v9113 = vpack.c.bf16 %v9053, %v9052
        %v9114 = vpack.c.bf16 %v9055, %v9054
        %v9115 = vpack.c.bf16 %v9057, %v9056
        %v9116 = vpack.c.bf16 %v9059, %v9058
        %v9117 = vpack.c.bf16 %v9061, %v9060
        %v9118 = vpack.c.bf16 %v9063, %v9062
        %v9119 = vpack.c.bf16 %v9065, %v9064
        %v9120 = vpack.c.bf16 %v9067, %v9066
        %v9121 = vpack.c.bf16 %v9069, %v9068
        %v9122 = vpack.c.bf16 %v9071, %v9070
        %v9123 = vpack.c.bf16 %v9073, %v9072
        %v9124 = vpack.c.bf16 %v9075, %v9074
        %v9125 = vpack.c.bf16 %v9077, %v9076
        %v9126 = vpack.c.bf16 %v9079, %v9078
        %v9127 = vpack.c.bf16 %v9081, %v9080
        %v9128 = vpack.c.bf16 %v9083, %v9082
        %v9129 = vpack.c.bf16 %v9085, %v9084
        %v9130 = vpack.c.bf16 %v9087, %v9086
        %v9131 = vpack.c.bf16 %v9089, %v9088
        %v9132 = vpack.c.bf16 %v9091, %v9090
        %v9133 = vpack.c.bf16 %v9093, %v9092
        %v9134 = vpack.c.bf16 %v9095, %v9094
        %v9135 = vpack.c.bf16 %v9097, %v9096
        %v9136 = vpack.c.bf16 %v9099, %v9098
        %v9137 = vpack.c.bf16 %v9101, %v9100
        %v9138 = vpack.c.bf16 %v9103, %v9102
        %v9139 = vpack.c.bf16 %v9105, %v9104
        %v9140 = vpack.c.bf16 %v9107, %v9106
        %v9141 = vpack.c.bf16 %v9109, %v9108
        %v9142 = vld [vmem:[%s3] sm:$0xf]
        %v9143 = vld [vmem:[%s3 + $0x4] sm:$0xf]
        %v9144 = vld [vmem:[%s3 + $0x8] sm:$0xf]
        %v9145 = vld [vmem:[%s3 + $0xc] sm:$0xf]
        %v9146 = vld [vmem:[%s6] sm:$0x1]
        %v9148 = vlaneseq
        %v9149 = vshrl.u32 %v9148, 7
        %v9150 = vsub.s32 0, %v9149
        %v9151 = vrot.slane %v9146, %v9150
        %v9157 = vunpack.c.l.b16 %v9142
        %v9158 = vunpack.c.l.b16 %v9143
        %v9159 = vunpack.c.l.b16 %v9144
        %v9160 = vunpack.c.l.b16 %v9145
        %v9161 = vpack.c.b16 %v9158, %v9157
        %v9162 = vpack.c.b16 %v9160, %v9159
        %v9166 = vsel %vm2073, %v9110, 0
        %v9169 = vsel %vm2073, %v9111, 0
        %v9172 = vsel %vm2073, %v9112, 0
        %v9175 = vsel %vm2073, %v9113, 0
        %v9178 = vsel %vm2073, %v9114, 0
        %v9181 = vsel %vm2073, %v9115, 0
        %v9184 = vsel %vm2073, %v9116, 0
        %v9187 = vsel %vm2073, %v9117, 0
        %v9190 = vsel %vm2073, %v9118, 0
        %v9193 = vsel %vm2073, %v9119, 0
        %v9196 = vsel %vm2073, %v9120, 0
        %v9199 = vsel %vm2073, %v9121, 0
        %v9202 = vsel %vm2073, %v9122, 0
        %v9205 = vsel %vm2073, %v9123, 0
        %v9208 = vsel %vm2073, %v9124, 0
        %v9211 = vsel %vm2073, %v9125, 0
        %v9214 = vsel %vm2073, %v9126, 0
        %v9217 = vsel %vm2073, %v9127, 0
        %v9220 = vsel %vm2073, %v9128, 0
        %v9223 = vsel %vm2073, %v9129, 0
        %v9226 = vsel %vm2073, %v9130, 0
        %v9229 = vsel %vm2073, %v9131, 0
        %v9232 = vsel %vm2073, %v9132, 0
        %v9235 = vsel %vm2073, %v9133, 0
        %v9238 = vsel %vm2073, %v9134, 0
        %v9241 = vsel %vm2073, %v9135, 0
        %v9244 = vsel %vm2073, %v9136, 0
        %v9247 = vsel %vm2073, %v9137, 0
        %v9250 = vsel %vm2073, %v9138, 0
        %v9253 = vsel %vm2073, %v9139, 0
        %v9256 = vsel %vm2073, %v9140, 0
        %v9259 = vsel %vm2073, %v9141, 0
        %9261 = vmatprep.subr.bf16.mxu0 0
        %9262 = vmatpush1.bf16.msra.mxu0 %v9161
        %9263 = vmatprep.subr.bf16.mxu0 0
        %9264 = vmatpush1.bf16.msra.mxu0 %v9162
        %9265 = vmatprep.subr.bf16.mxu0 0
        %9266 = vmatpush1.bf16.msra.mxu0 0
        %9267 = vmatprep.subr.bf16.mxu0 0
        %9268 = vmatpush1.bf16.msra.mxu0 0
        %9269 = vmatprep.subr.bf16.mxu0 0
        %9270 = vmatpush1.bf16.msra.mxu0 0
        %9271 = vmatprep.subr.bf16.mxu0 0
        %9272 = vmatpush1.bf16.msra.mxu0 0
        %9273 = vmatprep.subr.bf16.mxu0 0
        %9274 = vmatpush1.bf16.msra.mxu0 0
        %9275 = vmatprep.subr.bf16.mxu0 0
        %9276 = vmatpush1.bf16.msra.mxu0 0
        %9277 = vmatprep.subr.bf16.mxu0 0
        %9278 = vmatpush1.bf16.msra.mxu0 0
        %9279 = vmatprep.subr.bf16.mxu0 0
        %9280 = vmatpush1.bf16.msra.mxu0 0
        %9281 = vmatprep.subr.bf16.mxu0 0
        %9282 = vmatpush1.bf16.msra.mxu0 0
        %9283 = vmatprep.subr.bf16.mxu0 0
        %9284 = vmatpush1.bf16.msra.mxu0 0
        %9285 = vmatprep.subr.bf16.mxu0 0
        %9286 = vmatpush1.bf16.msra.mxu0 0
        %9287 = vmatprep.subr.bf16.mxu0 0
        %9288 = vmatpush1.bf16.msra.mxu0 0
        %9289 = vmatprep.subr.bf16.mxu0 0
        %9290 = vmatpush1.bf16.msra.mxu0 0
        %9291 = vmatprep.subr.bf16.mxu0 0
        %9292 = vmatpush1.bf16.msra.mxu0 0
        %9293 = vmatprep.mubr.bf16.mxu0 0
        %9294 = vmatmul.mubr.bf16.gmra.mrb[0].mxu0 %v9166
        %v9295 = vpop.f32.mrb[0].mxu0
        %v9296 = vadd.f32 %v9151, %v9295
        %v9297 = vpop.f32.mrb[0].mxu0
        %v9298 = vpop.f32.mrb[0].mxu0
        %v9299 = vadd.f32 %v9151, %v9298
        %v9300 = vpop.f32.mrb[0].mxu0
        %9301 = vmatprep.mubr.bf16.mxu0 0
        %9302 = vmatmul.mubr.bf16.gmra.mrb[0].mxu0 %v9169
        %v9303 = vpop.f32.mrb[0].mxu0
        %v9304 = vadd.f32 %v9151, %v9303
        %v9305 = vpop.f32.mrb[0].mxu0
        %v9306 = vpop.f32.mrb[0].mxu0
        %v9307 = vadd.f32 %v9151, %v9306
        %v9308 = vpop.f32.mrb[0].mxu0
        %9309 = vmatprep.mubr.bf16.mxu0 0
        %9310 = vmatmul.mubr.bf16.gmra.mrb[0].mxu0 %v9172
        %v9311 = vpop.f32.mrb[0].mxu0
        %v9312 = vadd.f32 %v9151, %v9311
        %v9313 = vpop.f32.mrb[0].mxu0
        %v9314 = vpop.f32.mrb[0].mxu0
        %v9315 = vadd.f32 %v9151, %v9314
        %v9316 = vpop.f32.mrb[0].mxu0
        %9317 = vmatprep.mubr.bf16.mxu0 0
        %9318 = vmatmul.mubr.bf16.gmra.mrb[0].mxu0 %v9175
        %v9319 = vpop.f32.mrb[0].mxu0
        %v9320 = vadd.f32 %v9151, %v9319
        %v9321 = vpop.f32.mrb[0].mxu0
        %v9322 = vpop.f32.mrb[0].mxu0
        %v9323 = vadd.f32 %v9151, %v9322
        %v9324 = vpop.f32.mrb[0].mxu0
        %9325 = vmatprep.mubr.bf16.mxu0 0
        %9326 = vmatmul.mubr.bf16.gmra.mrb[0].mxu0 %v9178
        %v9327 = vpop.f32.mrb[0].mxu0
        %v9328 = vadd.f32 %v9151, %v9327
        %v9329 = vpop.f32.mrb[0].mxu0
        %v9330 = vpop.f32.mrb[0].mxu0
        %v9331 = vadd.f32 %v9151, %v9330
        %v9332 = vpop.f32.mrb[0].mxu0
        %9333 = vmatprep.mubr.bf16.mxu0 0
        %9334 = vmatmul.mubr.bf16.gmra.mrb[0].mxu0 %v9181
        %v9335 = vpop.f32.mrb[0].mxu0
        %v9336 = vadd.f32 %v9151, %v9335
        %v9337 = vpop.f32.mrb[0].mxu0
        %v9338 = vpop.f32.mrb[0].mxu0
        %v9339 = vadd.f32 %v9151, %v9338
        %v9340 = vpop.f32.mrb[0].mxu0
        %9341 = vmatprep.mubr.bf16.mxu0 0
        %9342 = vmatmul.mubr.bf16.gmra.mrb[0].mxu0 %v9184
        %v9343 = vpop.f32.mrb[0].mxu0
        %v9344 = vadd.f32 %v9151, %v9343
        %v9345 = vpop.f32.mrb[0].mxu0
        %v9346 = vpop.f32.mrb[0].mxu0
        %v9347 = vadd.f32 %v9151, %v9346
        %v9348 = vpop.f32.mrb[0].mxu0
        %9349 = vmatprep.mubr.bf16.mxu0 0
        %9350 = vmatmul.mubr.bf16.gmra.mrb[0].mxu0 %v9187
        %v9351 = vpop.f32.mrb[0].mxu0
        %v9352 = vadd.f32 %v9151, %v9351
        %v9353 = vpop.f32.mrb[0].mxu0
        %v9354 = vpop.f32.mrb[0].mxu0
        %v9355 = vadd.f32 %v9151, %v9354
        %v9356 = vpop.f32.mrb[0].mxu0
        %9357 = vmatprep.mubr.bf16.mxu0 0
        %9358 = vmatmul.mubr.bf16.gmra.mrb[0].mxu0 %v9190
        %v9359 = vpop.f32.mrb[0].mxu0
        %v9360 = vadd.f32 %v9151, %v9359
        %v9361 = vpop.f32.mrb[0].mxu0
        %v9362 = vpop.f32.mrb[0].mxu0
        %v9363 = vadd.f32 %v9151, %v9362
        %v9364 = vpop.f32.mrb[0].mxu0
        %9365 = vmatprep.mubr.bf16.mxu0 0
        %9366 = vmatmul.mubr.bf16.gmra.mrb[0].mxu0 %v9193
        %v9367 = vpop.f32.mrb[0].mxu0
        %v9368 = vadd.f32 %v9151, %v9367
        %v9369 = vpop.f32.mrb[0].mxu0
        %v9370 = vpop.f32.mrb[0].mxu0
        %v9371 = vadd.f32 %v9151, %v9370
        %v9372 = vpop.f32.mrb[0].mxu0
        %9373 = vmatprep.mubr.bf16.mxu0 0
        %9374 = vmatmul.mubr.bf16.gmra.mrb[0].mxu0 %v9196
        %v9375 = vpop.f32.mrb[0].mxu0
        %v9376 = vadd.f32 %v9151, %v9375
        %v9377 = vpop.f32.mrb[0].mxu0
        %v9378 = vpop.f32.mrb[0].mxu0
        %v9379 = vadd.f32 %v9151, %v9378
        %v9380 = vpop.f32.mrb[0].mxu0
        %9381 = vmatprep.mubr.bf16.mxu0 0
        %9382 = vmatmul.mubr.bf16.gmra.mrb[0].mxu0 %v9199
        %v9383 = vpop.f32.mrb[0].mxu0
        %v9384 = vadd.f32 %v9151, %v9383
        %v9385 = vpop.f32.mrb[0].mxu0
        %v9386 = vpop.f32.mrb[0].mxu0
        %v9387 = vadd.f32 %v9151, %v9386
        %v9388 = vpop.f32.mrb[0].mxu0
        %9389 = vmatprep.mubr.bf16.mxu0 0
        %9390 = vmatmul.mubr.bf16.gmra.mrb[0].mxu0 %v9202
        %v9391 = vpop.f32.mrb[0].mxu0
        %v9392 = vadd.f32 %v9151, %v9391
        %v9393 = vpop.f32.mrb[0].mxu0
        %v9394 = vpop.f32.mrb[0].mxu0
        %v9395 = vadd.f32 %v9151, %v9394
        %v9396 = vpop.f32.mrb[0].mxu0
        %9397 = vmatprep.mubr.bf16.mxu0 0
        %9398 = vmatmul.mubr.bf16.gmra.mrb[0].mxu0 %v9205
        %v9399 = vpop.f32.mrb[0].mxu0
        %v9400 = vadd.f32 %v9151, %v9399
        %v9401 = vpop.f32.mrb[0].mxu0
        %v9402 = vpop.f32.mrb[0].mxu0
        %v9403 = vadd.f32 %v9151, %v9402
        %v9404 = vpop.f32.mrb[0].mxu0
        %9405 = vmatprep.mubr.bf16.mxu0 0
        %9406 = vmatmul.mubr.bf16.gmra.mrb[0].mxu0 %v9208
        %v9407 = vpop.f32.mrb[0].mxu0
        %v9408 = vadd.f32 %v9151, %v9407
        %v9409 = vpop.f32.mrb[0].mxu0
        %v9410 = vpop.f32.mrb[0].mxu0
        %v9411 = vadd.f32 %v9151, %v9410
        %v9412 = vpop.f32.mrb[0].mxu0
        %9413 = vmatprep.mubr.bf16.mxu0 0
        %9414 = vmatmul.mubr.bf16.gmra.mrb[0].mxu0 %v9211
        %v9415 = vpop.f32.mrb[0].mxu0
        %v9416 = vadd.f32 %v9151, %v9415
        %v9417 = vpop.f32.mrb[0].mxu0
        %v9418 = vpop.f32.mrb[0].mxu0
        %v9419 = vadd.f32 %v9151, %v9418
        %v9420 = vpop.f32.mrb[0].mxu0
        %9421 = vmatprep.mubr.bf16.mxu0 0
        %9422 = vmatmul.mubr.bf16.gmra.mrb[0].mxu0 %v9214
        %v9423 = vpop.f32.mrb[0].mxu0
        %v9424 = vadd.f32 %v9151, %v9423
        %v9425 = vpop.f32.mrb[0].mxu0
        %v9426 = vpop.f32.mrb[0].mxu0
        %v9427 = vadd.f32 %v9151, %v9426
        %v9428 = vpop.f32.mrb[0].mxu0
        %9429 = vmatprep.mubr.bf16.mxu0 0
        %9430 = vmatmul.mubr.bf16.gmra.mrb[0].mxu0 %v9217
        %v9431 = vpop.f32.mrb[0].mxu0
        %v9432 = vadd.f32 %v9151, %v9431
        %v9433 = vpop.f32.mrb[0].mxu0
        %v9434 = vpop.f32.mrb[0].mxu0
        %v9435 = vadd.f32 %v9151, %v9434
        %v9436 = vpop.f32.mrb[0].mxu0
        %9437 = vmatprep.mubr.bf16.mxu0 0
        %9438 = vmatmul.mubr.bf16.gmra.mrb[0].mxu0 %v9220
        %v9439 = vpop.f32.mrb[0].mxu0
        %v9440 = vadd.f32 %v9151, %v9439
        %v9441 = vpop.f32.mrb[0].mxu0
        %v9442 = vpop.f32.mrb[0].mxu0
        %v9443 = vadd.f32 %v9151, %v9442
        %v9444 = vpop.f32.mrb[0].mxu0
        %9445 = vmatprep.mubr.bf16.mxu0 0
        %9446 = vmatmul.mubr.bf16.gmra.mrb[0].mxu0 %v9223
        %v9447 = vpop.f32.mrb[0].mxu0
        %v9448 = vadd.f32 %v9151, %v9447
        %v9449 = vpop.f32.mrb[0].mxu0
        %v9450 = vpop.f32.mrb[0].mxu0
        %v9451 = vadd.f32 %v9151, %v9450
        %v9452 = vpop.f32.mrb[0].mxu0
        %9453 = vmatprep.mubr.bf16.mxu0 0
        %9454 = vmatmul.mubr.bf16.gmra.mrb[0].mxu0 %v9226
        %v9455 = vpop.f32.mrb[0].mxu0
        %v9456 = vadd.f32 %v9151, %v9455
        %v9457 = vpop.f32.mrb[0].mxu0
        %v9458 = vpop.f32.mrb[0].mxu0
        %v9459 = vadd.f32 %v9151, %v9458
        %v9460 = vpop.f32.mrb[0].mxu0
        %9461 = vmatprep.mubr.bf16.mxu0 0
        %9462 = vmatmul.mubr.bf16.gmra.mrb[0].mxu0 %v9229
        %v9463 = vpop.f32.mrb[0].mxu0
        %v9464 = vadd.f32 %v9151, %v9463
        %v9465 = vpop.f32.mrb[0].mxu0
        %v9466 = vpop.f32.mrb[0].mxu0
        %v9467 = vadd.f32 %v9151, %v9466
        %v9468 = vpop.f32.mrb[0].mxu0
        %9469 = vmatprep.mubr.bf16.mxu0 0
        %9470 = vmatmul.mubr.bf16.gmra.mrb[0].mxu0 %v9232
        %v9471 = vpop.f32.mrb[0].mxu0
        %v9472 = vadd.f32 %v9151, %v9471
        %v9473 = vpop.f32.mrb[0].mxu0
        %v9474 = vpop.f32.mrb[0].mxu0
        %v9475 = vadd.f32 %v9151, %v9474
        %v9476 = vpop.f32.mrb[0].mxu0
        %9477 = vmatprep.mubr.bf16.mxu0 0
        %9478 = vmatmul.mubr.bf16.gmra.mrb[0].mxu0 %v9235
        %v9479 = vpop.f32.mrb[0].mxu0
        %v9480 = vadd.f32 %v9151, %v9479
        %v9481 = vpop.f32.mrb[0].mxu0
        %v9482 = vpop.f32.mrb[0].mxu0
        %v9483 = vadd.f32 %v9151, %v9482
        %v9484 = vpop.f32.mrb[0].mxu0
        %9485 = vmatprep.mubr.bf16.mxu0 0
        %9486 = vmatmul.mubr.bf16.gmra.mrb[0].mxu0 %v9238
        %v9487 = vpop.f32.mrb[0].mxu0
        %v9488 = vadd.f32 %v9151, %v9487
        %v9489 = vpop.f32.mrb[0].mxu0
        %v9490 = vpop.f32.mrb[0].mxu0
        %v9491 = vadd.f32 %v9151, %v9490
        %v9492 = vpop.f32.mrb[0].mxu0
        %9493 = vmatprep.mubr.bf16.mxu0 0
        %9494 = vmatmul.mubr.bf16.gmra.mrb[0].mxu0 %v9241
        %v9495 = vpop.f32.mrb[0].mxu0
        %v9496 = vadd.f32 %v9151, %v9495
        %v9497 = vpop.f32.mrb[0].mxu0
        %v9498 = vpop.f32.mrb[0].mxu0
        %v9499 = vadd.f32 %v9151, %v9498
        %v9500 = vpop.f32.mrb[0].mxu0
        %9501 = vmatprep.mubr.bf16.mxu0 0
        %9502 = vmatmul.mubr.bf16.gmra.mrb[0].mxu0 %v9244
        %v9503 = vpop.f32.mrb[0].mxu0
        %v9504 = vadd.f32 %v9151, %v9503
        %v9505 = vpop.f32.mrb[0].mxu0
        %v9506 = vpop.f32.mrb[0].mxu0
        %v9507 = vadd.f32 %v9151, %v9506
        %v9508 = vpop.f32.mrb[0].mxu0
        %9509 = vmatprep.mubr.bf16.mxu0 0
        %9510 = vmatmul.mubr.bf16.gmra.mrb[0].mxu0 %v9247
        %v9511 = vpop.f32.mrb[0].mxu0
        %v9512 = vadd.f32 %v9151, %v9511
        %v9513 = vpop.f32.mrb[0].mxu0
        %v9514 = vpop.f32.mrb[0].mxu0
        %v9515 = vadd.f32 %v9151, %v9514
        %v9516 = vpop.f32.mrb[0].mxu0
        %9517 = vmatprep.mubr.bf16.mxu0 0
        %9518 = vmatmul.mubr.bf16.gmra.mrb[0].mxu0 %v9250
        %v9519 = vpop.f32.mrb[0].mxu0
        %v9520 = vadd.f32 %v9151, %v9519
        %v9521 = vpop.f32.mrb[0].mxu0
        %v9522 = vpop.f32.mrb[0].mxu0
        %v9523 = vadd.f32 %v9151, %v9522
        %v9524 = vpop.f32.mrb[0].mxu0
        %9525 = vmatprep.mubr.bf16.mxu0 0
        %9526 = vmatmul.mubr.bf16.gmra.mrb[0].mxu0 %v9253
        %v9527 = vpop.f32.mrb[0].mxu0
        %v9528 = vadd.f32 %v9151, %v9527
        %v9529 = vpop.f32.mrb[0].mxu0
        %v9530 = vpop.f32.mrb[0].mxu0
        %v9531 = vadd.f32 %v9151, %v9530
        %v9532 = vpop.f32.mrb[0].mxu0
        %9533 = vmatprep.mubr.bf16.mxu0 0
        %9534 = vmatmul.mubr.bf16.gmra.mrb[0].mxu0 %v9256
        %v9535 = vpop.f32.mrb[0].mxu0
        %v9536 = vadd.f32 %v9151, %v9535
        %v9537 = vpop.f32.mrb[0].mxu0
        %v9538 = vpop.f32.mrb[0].mxu0
        %v9539 = vadd.f32 %v9151, %v9538
        %v9540 = vpop.f32.mrb[0].mxu0
        %9541 = vmatprep.mubr.bf16.mxu0 0
        %9542 = vmatmul.mubr.bf16.gmra.mrb[0].mxu0 %v9259
        %v9543 = vpop.f32.mrb[0].mxu0
        %v9544 = vadd.f32 %v9151, %v9543
        %v9545 = vpop.f32.mrb[0].mxu0
        %v9546 = vpop.f32.mrb[0].mxu0
        %v9547 = vadd.f32 %v9151, %v9546
        %v9548 = vpop.f32.mrb[0].mxu0
        %9549 = vdwg.mxu0
        %v9550 = vld [vmem:[%s266] sm:$0xff]
        %v9551 = vld [vmem:[%s266 + $0x8] sm:$0xff]
        %v9552 = vld [vmem:[%s266 + $0x10] sm:$0xff]
        %v9553 = vld [vmem:[%s266 + $0x18] sm:$0xff]
        %v9554 = vld [vmem:[%s266 + $0x20] sm:$0xff]
        %v9555 = vld [vmem:[%s266 + $0x28] sm:$0xff]
        %v9556 = vld [vmem:[%s266 + $0x30] sm:$0xff]
        %v9557 = vld [vmem:[%s266 + $0x38] sm:$0xff]
        %v9558 = vld [vmem:[%s266 + $0x40] sm:$0xff]
        %v9559 = vld [vmem:[%s266 + $0x48] sm:$0xff]
        %v9560 = vld [vmem:[%s266 + $0x50] sm:$0xff]
        %v9561 = vld [vmem:[%s266 + $0x58] sm:$0xff]
        %v9562 = vld [vmem:[%s266 + $0x60] sm:$0xff]
        %v9563 = vld [vmem:[%s266 + $0x68] sm:$0xff]
        %v9564 = vld [vmem:[%s266 + $0x70] sm:$0xff]
        %v9565 = vld [vmem:[%s266 + $0x78] sm:$0xff]
        %v9566 = vld [vmem:[%s266 + $0x80] sm:$0xff]
        %v9567 = vld [vmem:[%s266 + $0x88] sm:$0xff]
        %v9568 = vld [vmem:[%s266 + $0x90] sm:$0xff]
        %v9569 = vld [vmem:[%s266 + $0x98] sm:$0xff]
        %v9570 = vld [vmem:[%s266 + $0xa0] sm:$0xff]
        %v9571 = vld [vmem:[%s266 + $0xa8] sm:$0xff]
        %v9572 = vld [vmem:[%s266 + $0xb0] sm:$0xff]
        %v9573 = vld [vmem:[%s266 + $0xb8] sm:$0xff]
        %v9574 = vld [vmem:[%s266 + $0xc0] sm:$0xff]
        %v9575 = vld [vmem:[%s266 + $0xc8] sm:$0xff]
        %v9576 = vld [vmem:[%s266 + $0xd0] sm:$0xff]
        %v9577 = vld [vmem:[%s266 + $0xd8] sm:$0xff]
        %v9578 = vld [vmem:[%s266 + $0xe0] sm:$0xff]
        %v9579 = vld [vmem:[%s266 + $0xe8] sm:$0xff]
        %v9580 = vld [vmem:[%s266 + $0xf0] sm:$0xff]
        %v9581 = vld [vmem:[%s266 + $0xf8] sm:$0xff]
        %v9582 = vld [vmem:[%s266 + $0x100] sm:$0xff]
        %v9583 = vld [vmem:[%s266 + $0x108] sm:$0xff]
        %v9584 = vld [vmem:[%s266 + $0x110] sm:$0xff]
        %v9585 = vld [vmem:[%s266 + $0x118] sm:$0xff]
        %v9586 = vld [vmem:[%s266 + $0x120] sm:$0xff]
        %v9587 = vld [vmem:[%s266 + $0x128] sm:$0xff]
        %v9588 = vld [vmem:[%s266 + $0x130] sm:$0xff]
        %v9589 = vld [vmem:[%s266 + $0x138] sm:$0xff]
        %v9590 = vld [vmem:[%s266 + $0x140] sm:$0xff]
        %v9591 = vld [vmem:[%s266 + $0x148] sm:$0xff]
        %v9592 = vld [vmem:[%s266 + $0x150] sm:$0xff]
        %v9593 = vld [vmem:[%s266 + $0x158] sm:$0xff]
        %v9594 = vld [vmem:[%s266 + $0x160] sm:$0xff]
        %v9595 = vld [vmem:[%s266 + $0x168] sm:$0xff]
        %v9596 = vld [vmem:[%s266 + $0x170] sm:$0xff]
        %v9597 = vld [vmem:[%s266 + $0x178] sm:$0xff]
        %v9598 = vld [vmem:[%s266 + $0x180] sm:$0xff]
        %v9599 = vld [vmem:[%s266 + $0x188] sm:$0xff]
        %v9600 = vld [vmem:[%s266 + $0x190] sm:$0xff]
        %v9601 = vld [vmem:[%s266 + $0x198] sm:$0xff]
        %v9602 = vld [vmem:[%s266 + $0x1a0] sm:$0xff]
        %v9603 = vld [vmem:[%s266 + $0x1a8] sm:$0xff]
        %v9604 = vld [vmem:[%s266 + $0x1b0] sm:$0xff]
        %v9605 = vld [vmem:[%s266 + $0x1b8] sm:$0xff]
        %v9606 = vld [vmem:[%s266 + $0x1c0] sm:$0xff]
        %v9607 = vld [vmem:[%s266 + $0x1c8] sm:$0xff]
        %v9608 = vld [vmem:[%s266 + $0x1d0] sm:$0xff]
        %v9609 = vld [vmem:[%s266 + $0x1d8] sm:$0xff]
        %v9610 = vld [vmem:[%s266 + $0x1e0] sm:$0xff]
        %v9611 = vld [vmem:[%s266 + $0x1e8] sm:$0xff]
        %v9612 = vld [vmem:[%s266 + $0x1f0] sm:$0xff]
        %v9613 = vld [vmem:[%s266 + $0x1f8] sm:$0xff]
        %v9614 = vadd.f32 %v9296, %v9550
        %v9615 = vadd.f32 %v9299, %v9551
        %v9616 = vadd.f32 %v9304, %v9552
        %v9617 = vadd.f32 %v9307, %v9553
        %v9618 = vadd.f32 %v9312, %v9554
        %v9619 = vadd.f32 %v9315, %v9555
        %v9620 = vadd.f32 %v9320, %v9556
        %v9621 = vadd.f32 %v9323, %v9557
        %v9622 = vadd.f32 %v9328, %v9558
        %v9623 = vadd.f32 %v9331, %v9559
        %v9624 = vadd.f32 %v9336, %v9560
        %v9625 = vadd.f32 %v9339, %v9561
        %v9626 = vadd.f32 %v9344, %v9562
        %v9627 = vadd.f32 %v9347, %v9563
        %v9628 = vadd.f32 %v9352, %v9564
        %v9629 = vadd.f32 %v9355, %v9565
        %v9630 = vadd.f32 %v9360, %v9566
        %v9631 = vadd.f32 %v9363, %v9567
        %v9632 = vadd.f32 %v9368, %v9568
        %v9633 = vadd.f32 %v9371, %v9569
        %v9634 = vadd.f32 %v9376, %v9570
        %v9635 = vadd.f32 %v9379, %v9571
        %v9636 = vadd.f32 %v9384, %v9572
        %v9637 = vadd.f32 %v9387, %v9573
        %v9638 = vadd.f32 %v9392, %v9574
        %v9639 = vadd.f32 %v9395, %v9575
        %v9640 = vadd.f32 %v9400, %v9576
        %v9641 = vadd.f32 %v9403, %v9577
        %v9642 = vadd.f32 %v9408, %v9578
        %v9643 = vadd.f32 %v9411, %v9579
        %v9644 = vadd.f32 %v9416, %v9580
        %v9645 = vadd.f32 %v9419, %v9581
        %v9646 = vadd.f32 %v9424, %v9582
        %v9647 = vadd.f32 %v9427, %v9583
        %v9648 = vadd.f32 %v9432, %v9584
        %v9649 = vadd.f32 %v9435, %v9585
        %v9650 = vadd.f32 %v9440, %v9586
        %v9651 = vadd.f32 %v9443, %v9587
        %v9652 = vadd.f32 %v9448, %v9588
        %v9653 = vadd.f32 %v9451, %v9589
        %v9654 = vadd.f32 %v9456, %v9590
        %v9655 = vadd.f32 %v9459, %v9591
        %v9656 = vadd.f32 %v9464, %v9592
        %v9657 = vadd.f32 %v9467, %v9593
        %v9658 = vadd.f32 %v9472, %v9594
        %v9659 = vadd.f32 %v9475, %v9595
        %v9660 = vadd.f32 %v9480, %v9596
        %v9661 = vadd.f32 %v9483, %v9597
        %v9662 = vadd.f32 %v9488, %v9598
        %v9663 = vadd.f32 %v9491, %v9599
        %v9664 = vadd.f32 %v9496, %v9600
        %v9665 = vadd.f32 %v9499, %v9601
        %v9666 = vadd.f32 %v9504, %v9602
        %v9667 = vadd.f32 %v9507, %v9603
        %v9668 = vadd.f32 %v9512, %v9604
        %v9669 = vadd.f32 %v9515, %v9605
        %v9670 = vadd.f32 %v9520, %v9606
        %v9671 = vadd.f32 %v9523, %v9607
        %v9672 = vadd.f32 %v9528, %v9608
        %v9673 = vadd.f32 %v9531, %v9609
        %v9674 = vadd.f32 %v9536, %v9610
        %v9675 = vadd.f32 %v9539, %v9611
        %v9676 = vadd.f32 %v9544, %v9612
        %v9677 = vadd.f32 %v9547, %v9613
        %v9678 = vmax.f32 %v9614, 0.0
        %v9679 = vmax.f32 %v9615, 0.0
        %v9680 = vmax.f32 %v9616, 0.0
        %v9681 = vmax.f32 %v9617, 0.0
        %v9682 = vmax.f32 %v9618, 0.0
        %v9683 = vmax.f32 %v9619, 0.0
        %v9684 = vmax.f32 %v9620, 0.0
        %v9685 = vmax.f32 %v9621, 0.0
        %v9686 = vmax.f32 %v9622, 0.0
        %v9687 = vmax.f32 %v9623, 0.0
        %v9688 = vmax.f32 %v9624, 0.0
        %v9689 = vmax.f32 %v9625, 0.0
        %v9690 = vmax.f32 %v9626, 0.0
        %v9691 = vmax.f32 %v9627, 0.0
        %v9692 = vmax.f32 %v9628, 0.0
        %v9693 = vmax.f32 %v9629, 0.0
        %v9694 = vmax.f32 %v9630, 0.0
        %v9695 = vmax.f32 %v9631, 0.0
        %v9696 = vmax.f32 %v9632, 0.0
        %v9697 = vmax.f32 %v9633, 0.0
        %v9698 = vmax.f32 %v9634, 0.0
        %v9699 = vmax.f32 %v9635, 0.0
        %v9700 = vmax.f32 %v9636, 0.0
        %v9701 = vmax.f32 %v9637, 0.0
        %v9702 = vmax.f32 %v9638, 0.0
        %v9703 = vmax.f32 %v9639, 0.0
        %v9704 = vmax.f32 %v9640, 0.0
        %v9705 = vmax.f32 %v9641, 0.0
        %v9706 = vmax.f32 %v9642, 0.0
        %v9707 = vmax.f32 %v9643, 0.0
        %v9708 = vmax.f32 %v9644, 0.0
        %v9709 = vmax.f32 %v9645, 0.0
        %v9710 = vmax.f32 %v9646, 0.0
        %v9711 = vmax.f32 %v9647, 0.0
        %v9712 = vmax.f32 %v9648, 0.0
        %v9713 = vmax.f32 %v9649, 0.0
        %v9714 = vmax.f32 %v9650, 0.0
        %v9715 = vmax.f32 %v9651, 0.0
        %v9716 = vmax.f32 %v9652, 0.0
        %v9717 = vmax.f32 %v9653, 0.0
        %v9718 = vmax.f32 %v9654, 0.0
        %v9719 = vmax.f32 %v9655, 0.0
        %v9720 = vmax.f32 %v9656, 0.0
        %v9721 = vmax.f32 %v9657, 0.0
        %v9722 = vmax.f32 %v9658, 0.0
        %v9723 = vmax.f32 %v9659, 0.0
        %v9724 = vmax.f32 %v9660, 0.0
        %v9725 = vmax.f32 %v9661, 0.0
        %v9726 = vmax.f32 %v9662, 0.0
        %v9727 = vmax.f32 %v9663, 0.0
        %v9728 = vmax.f32 %v9664, 0.0
        %v9729 = vmax.f32 %v9665, 0.0
        %v9730 = vmax.f32 %v9666, 0.0
        %v9731 = vmax.f32 %v9667, 0.0
        %v9732 = vmax.f32 %v9668, 0.0
        %v9733 = vmax.f32 %v9669, 0.0
        %v9734 = vmax.f32 %v9670, 0.0
        %v9735 = vmax.f32 %v9671, 0.0
        %v9736 = vmax.f32 %v9672, 0.0
        %v9737 = vmax.f32 %v9673, 0.0
        %v9738 = vmax.f32 %v9674, 0.0
        %v9739 = vmax.f32 %v9675, 0.0
        %v9740 = vmax.f32 %v9676, 0.0
        %v9741 = vmax.f32 %v9677, 0.0
        %9742 = vst [vmem:[%s296] sm:$0xff] %v9678
        %9743 = vst [vmem:[%s296 + $0x8] sm:$0xff] %v9679
        %9744 = vst [vmem:[%s296 + $0x10] sm:$0xff] %v9680
        %9745 = vst [vmem:[%s296 + $0x18] sm:$0xff] %v9681
        %9746 = vst [vmem:[%s296 + $0x20] sm:$0xff] %v9682
        %9747 = vst [vmem:[%s296 + $0x28] sm:$0xff] %v9683
        %9748 = vst [vmem:[%s296 + $0x30] sm:$0xff] %v9684
        %9749 = vst [vmem:[%s296 + $0x38] sm:$0xff] %v9685
        %9750 = vst [vmem:[%s296 + $0x40] sm:$0xff] %v9686
        %9751 = vst [vmem:[%s296 + $0x48] sm:$0xff] %v9687
        %9752 = vst [vmem:[%s296 + $0x50] sm:$0xff] %v9688
        %9753 = vst [vmem:[%s296 + $0x58] sm:$0xff] %v9689
        %9754 = vst [vmem:[%s296 + $0x60] sm:$0xff] %v9690
        %9755 = vst [vmem:[%s296 + $0x68] sm:$0xff] %v9691
        %9756 = vst [vmem:[%s296 + $0x70] sm:$0xff] %v9692
        %9757 = vst [vmem:[%s296 + $0x78] sm:$0xff] %v9693
        %9758 = vst [vmem:[%s296 + $0x80] sm:$0xff] %v9694
        %9759 = vst [vmem:[%s296 + $0x88] sm:$0xff] %v9695
        %9760 = vst [vmem:[%s296 + $0x90] sm:$0xff] %v9696
        %9761 = vst [vmem:[%s296 + $0x98] sm:$0xff] %v9697
        %9762 = vst [vmem:[%s296 + $0xa0] sm:$0xff] %v9698
        %9763 = vst [vmem:[%s296 + $0xa8] sm:$0xff] %v9699
        %9764 = vst [vmem:[%s296 + $0xb0] sm:$0xff] %v9700
        %9765 = vst [vmem:[%s296 + $0xb8] sm:$0xff] %v9701
        %9766 = vst [vmem:[%s296 + $0xc0] sm:$0xff] %v9702
        %9767 = vst [vmem:[%s296 + $0xc8] sm:$0xff] %v9703
        %9768 = vst [vmem:[%s296 + $0xd0] sm:$0xff] %v9704
        %9769 = vst [vmem:[%s296 + $0xd8] sm:$0xff] %v9705
        %9770 = vst [vmem:[%s296 + $0xe0] sm:$0xff] %v9706
        %9771 = vst [vmem:[%s296 + $0xe8] sm:$0xff] %v9707
        %9772 = vst [vmem:[%s296 + $0xf0] sm:$0xff] %v9708
        %9773 = vst [vmem:[%s296 + $0xf8] sm:$0xff] %v9709
        %9774 = vst [vmem:[%s296 + $0x100] sm:$0xff] %v9710
        %9775 = vst [vmem:[%s296 + $0x108] sm:$0xff] %v9711
        %9776 = vst [vmem:[%s296 + $0x110] sm:$0xff] %v9712
        %9777 = vst [vmem:[%s296 + $0x118] sm:$0xff] %v9713
        %9778 = vst [vmem:[%s296 + $0x120] sm:$0xff] %v9714
        %9779 = vst [vmem:[%s296 + $0x128] sm:$0xff] %v9715
        %9780 = vst [vmem:[%s296 + $0x130] sm:$0xff] %v9716
        %9781 = vst [vmem:[%s296 + $0x138] sm:$0xff] %v9717
        %9782 = vst [vmem:[%s296 + $0x140] sm:$0xff] %v9718
        %9783 = vst [vmem:[%s296 + $0x148] sm:$0xff] %v9719
        %9784 = vst [vmem:[%s296 + $0x150] sm:$0xff] %v9720
        %9785 = vst [vmem:[%s296 + $0x158] sm:$0xff] %v9721
        %9786 = vst [vmem:[%s296 + $0x160] sm:$0xff] %v9722
        %9787 = vst [vmem:[%s296 + $0x168] sm:$0xff] %v9723
        %9788 = vst [vmem:[%s296 + $0x170] sm:$0xff] %v9724
        %9789 = vst [vmem:[%s296 + $0x178] sm:$0xff] %v9725
        %9790 = vst [vmem:[%s296 + $0x180] sm:$0xff] %v9726
        %9791 = vst [vmem:[%s296 + $0x188] sm:$0xff] %v9727
        %9792 = vst [vmem:[%s296 + $0x190] sm:$0xff] %v9728
        %9793 = vst [vmem:[%s296 + $0x198] sm:$0xff] %v9729
        %9794 = vst [vmem:[%s296 + $0x1a0] sm:$0xff] %v9730
        %9795 = vst [vmem:[%s296 + $0x1a8] sm:$0xff] %v9731
        %9796 = vst [vmem:[%s296 + $0x1b0] sm:$0xff] %v9732
        %9797 = vst [vmem:[%s296 + $0x1b8] sm:$0xff] %v9733
        %9798 = vst [vmem:[%s296 + $0x1c0] sm:$0xff] %v9734
        %9799 = vst [vmem:[%s296 + $0x1c8] sm:$0xff] %v9735
        %9800 = vst [vmem:[%s296 + $0x1d0] sm:$0xff] %v9736
        %9801 = vst [vmem:[%s296 + $0x1d8] sm:$0xff] %v9737
        %9802 = vst [vmem:[%s296 + $0x1e0] sm:$0xff] %v9738
        %9803 = vst [vmem:[%s296 + $0x1e8] sm:$0xff] %v9739
        %9804 = vst [vmem:[%s296 + $0x1f0] sm:$0xff] %v9740
        %9805 = vst [vmem:[%s296 + $0x1f8] sm:$0xff] %v9741
        %s9806 = sand.u32 %s184, 1
        %s9807 = scalar_lea.sflag [#allocation5], %s9806
        %s9808 = sand.u32 %s184, 1
        %s9809 = smul.addr %s9808, 512
        %s9810 = scalar_lea.vmem [#allocation6], %s9809
        // Predicated region
        $region53: #{tpu_custom_call.1} parent=47 // pred_check
          %p9811 = pneg %p194
        $region54: #{tpu_custom_call.1} parent=47 // pred_check_branch
          %9813 = sbr.rel (%p9811) target = $region56
        $region55: #{tpu_custom_call.1} parent=47 // pred_region
          %s9814 = smul.u32 64, %s24
          %s9816 = ssub.s32 8192, 8192
          %9817 = vsyncadd %s9807, %s9816
          %s9818 = smul.addr %s9814, 128
          %s9819 = scalar_lea.hbm %s7, %s9818
          %s9820 = sshll.u32 %s9810, 4
          %s9821 = int_to_ptr.vmem [resolvable:$true] %s9820
          %9826 = dma.vmem_to_hbm [thread:$0]  %s9821, 8192, %s9819, %s9807, 128, 128, 8
        $region56: #{tpu_custom_call.1} parent=47 // pred_fallthru
          _
      $region48: #{tpu_custom_call.1} parent=5 // pred_fallthru
        _
      %p9827 = scmp.le.s32.totalorder 2, %s19
      // Predicated region
      $region57: #{tpu_custom_call.1} parent=5 // pred_check
        %p9828 = pneg %p9827
      $region58: #{tpu_custom_call.1} parent=5 // pred_check_branch
        %9830 = sbr.rel (%p9828) target = $region60
      $region59: #{tpu_custom_call.1} parent=5 // pred_region
        %s9831 = ssub.s32 %s19, 2
        // Predicated region
        $region61: #{tpu_custom_call.1} parent=59 // pred_check
          %p9832 = pneg %p200
        $region62: #{tpu_custom_call.1} parent=59 // pred_check_branch
          %9834 = sbr.rel (%p9832) target = $region64
        $region63: #{tpu_custom_call.1} parent=59 // pred_region
          %s9835 = sand.u32 %s185, 1
          %s9836 = scalar_lea.sflag [#allocation5], %s9835
          %s9837 = sand.u32 %s185, 1
          %s9838 = smul.addr %s9837, 512
          %s9839 = scalar_lea.vmem [#allocation6], %s9838
          %9840 = dma.done %s9836, 8192
        $region64: #{tpu_custom_call.1} parent=59 // pred_fallthru
          _
      $region60: #{tpu_custom_call.1} parent=5 // pred_fallthru
        _
    $region6: #{tpu_custom_call.1} parent=1 // loop_footer
      %s23 = sadd.s32 1, %s19
    $region7: #{tpu_custom_call.1} parent=1 // loop_footer_branch
      %18 = sbr.rel target = $region3
    $region8: #{tpu_custom_call.1} parent=1 // loop_exit
      _
    %9841 = vsyncpa [#allocation4], 1
    %s9842 = scalar_lea.sflag [#allocation4], 1
    %9843 = vsyncpa %s9842, 1
    %9844 = vsyncpa [#allocation5], 1
    %s9845 = scalar_lea.sflag [#allocation5], 1
    %9846 = vsyncpa %s9845, 1

</llo_original>
